<compile_context>
chip_gen: v7x
topology: tpu7x:2x2x1
jax: 0.10.0
libtpu: 0.0.40
codegen_flags: <defaults>
</compile_context>

<pallas_src>
import functools

import numpy as np
import jax
import jax.numpy as jnp
from jax.experimental import pallas as pl
from jax.experimental.pallas import tpu as pltpu

RGB_MEAN = jnp.array([0.4488, 0.4371, 0.4040], dtype=jnp.float32)  # MeanShift(1)


# ---------------------------------------------------------------------------
# Fused Pallas kernel: conv0 -> gated layers -> layer1 -> residual add
# ---------------------------------------------------------------------------
def _vdsr_fused_kernel(x_ref, mask_ref, w0_ref, wmid_ref, w1_ref, o_ref, *,
                       n_mid, ext_pad, taps):
    """Runs the whole VDSRGated trunk on one (batch, row-tile) block.

    x_ref   : (1, 1, P, Cin_p)   mean-subtracted, zero-padded flattened tile
    mask_ref: (1, P, 1)          1.0 on in-image non-border pixels, else 0.0
    w0_ref  : (9*Cin_p, Cp)      conv0 weight (gate prob folded in)
    wmid_ref: (n_mid', 9*Cp, Cp) gated VDSR layer weights (gate folded in)
    w1_ref  : (9*Cp, Cout)       layer1 weight (no gate)
    o_ref   : (1, 1, P, Cout)    mean-subtracted input + residual (padded grid)
    """
    x = x_ref[0, 0]                       # (P, Cin_p)
    mask = mask_ref[0]                    # (P, 1)
    P = x.shape[0]
    G = ext_pad

    def conv3x3(a, w_mat):
        # im2col: 9 sublane-shifted views of a zero-extended slab, lane-concat
        # into (P, 9*C), then ONE MXU matmul with K = 9*C.
        z = jnp.zeros((G, a.shape[1]), a.dtype)
        ext = jnp.concatenate([z, a, z], axis=0)                   # (P+2G, C)
        patch = jnp.concatenate(
            [ext[G + s:G + s + P, :] for s in taps], axis=1)       # (P, 9*C)
        return jnp.dot(patch, w_mat, preferred_element_type=jnp.float32)

    # conv0 (gated) + ReLU; re-apply zero-padding / out-of-image mask.
    cur = jnp.maximum(conv3x3(x, w0_ref[...]), 0.0) * mask
    # gated VDSR layers (gate reused from conv0, already folded into weights).
    for i in range(n_mid):
        cur = jnp.maximum(conv3x3(cur, wmid_ref[i]), 0.0) * mask
    # layer1: plain conv, no gate, no ReLU.
    res = conv3x3(cur, w1_ref[...])
    # residual add in mean-subtracted space (wrapper adds the RGB mean back).
    out_c = res.shape[1]
    o_ref[0, 0] = (x[:, :out_c] + res).astype(o_ref.dtype)


# ---------------------------------------------------------------------------
# Gate (dnas.Conv2d channel-search gate) -- deterministic approximation
# ---------------------------------------------------------------------------
# TODO(synk): dnas.Conv2d's exact Gumbel-softmax channel gate / FLOPs formula
# is not available; approximated as a softmax over channel-count choices
# (noise=False -> no Gumbel noise) giving a per-output-channel keep
# probability, with expected FLOPs = 9*H*W*sum(p_in)*sum(p_out).
def gate_channel_prob(logits, cout, tau):
    n_choices = logits.shape[0]
    q = jax.nn.softmax(logits / tau)                                  # (n_choices,)
    counts = jnp.round(jnp.arange(1, n_choices + 1) *
                       (cout / n_choices)).astype(jnp.int32)
    ch = jnp.arange(cout)
    keep = (ch[None, :] < counts[:, None]).astype(jnp.float32)        # (n_choices, cout)
    return (q[:, None] * keep).sum(0)                                 # (cout,)


# ---------------------------------------------------------------------------
# Parameters (deterministic synthetic init -- no checkpoint loading)
# ---------------------------------------------------------------------------
def init_params(key, num_layers, num_colors, num_planes):
    def he(k, shape, fan_in):
        return (jax.random.normal(k, shape, jnp.float32)
                * jnp.sqrt(2.0 / fan_in)).astype(jnp.float32)

    keys = jax.random.split(key, num_layers)
    return {
        "conv0_w": he(keys[0], (3, 3, num_colors, num_planes), 9 * num_colors),
        "layer_ws": [he(keys[i + 1], (3, 3, num_planes, num_planes),
                        9 * num_planes) for i in range(num_layers - 2)],
        "layer1_w": he(keys[num_layers - 1], (3, 3, num_planes, num_colors),
                       9 * num_planes),
        # dcfg.reuse_gate = conv0.gate -> one shared gate for all gated convs
        "gate_logits": jnp.linspace(-0.5, 0.5, 4).astype(jnp.float32),
    }


# ---------------------------------------------------------------------------
# VDSRGated forward
# ---------------------------------------------------------------------------
def vdsr_gated_forward(params, x_nchw, tau=1.0, noise=False, tile_h=None):
    del noise  # noise=False: deterministic gate (no Gumbel noise)
    x = jnp.transpose(x_nchw, (0, 2, 3, 1)).astype(jnp.float32)       # NCHW->NHWC
    N, H, W, Cin = x.shape
    Cp = params["conv0_w"].shape[3]
    n_mid = len(params["layer_ws"])
    L = 2 + n_mid                          # total number of fused 3x3 convs

    # ---- row tiling (halo = L rows per side) --------------------------------
    if tile_h is None:
        tile_h = H
        for cand in (128, 64, 32):         # bound per-tile VMEM; feed 2 TCs
            if H % cand == 0:
                tile_h = cand
                break
    assert H % tile_h == 0, "tile_h must divide H"
    n_tiles = H // tile_h
    Wp = W + 2
    H0 = tile_h + 2 * L                    # rows per tile incl. halo
    P = H0 * Wp                            # flattened padded pixels per tile
    G = ((Wp + 1 + 7) // 8) * 8            # sublane-aligned extension >= max tap shift
    taps = tuple((dh - 1) * Wp + (dw - 1) for dh in range(3) for dw in range(3))
    Cin_p = ((Cin + 7) // 8) * 8           # pad colors 3 -> 8 (zero channels)

    # ---- gate probabilities (dcfg.reuse_gate -> one shared gate) ------------
    prob = gate_channel_prob(params["gate_logits"], Cp, tau)

    # Fold the per-output-channel gate prob into weights; matmul form.
    w0 = jnp.pad(params["conv0_w"] * prob,
                 ((0, 0), (0, 0), (0, Cin_p - Cin), (0, 0))).reshape(9 * Cin_p, Cp)
    if n_mid > 0:
        wmid = jnp.stack([(w * prob).reshape(9 * Cp, Cp)
                          for w in params["layer_ws"]])
    else:
        wmid = jnp.zeros((1, 9 * Cp, Cp), jnp.float32)
    w1 = params["layer1_w"].reshape(9 * Cp, Cin)

    # ---- mean-subtracted, zero-padded, channel-padded, halo'd row tiles -----
    x_ms = x - RGB_MEAN                                               # sub_mean
    xpad = jnp.pad(x_ms, ((0, 0), (L, L), (1, 1), (0, Cin_p - Cin)))
    xt = jnp.stack([xpad[:, t * tile_h:t * tile_h + H0]
                    for t in range(n_tiles)], axis=1)                 # (N,T,H0,Wp,Cp_in)
    xt = xt.reshape(N, n_tiles, P, Cin_p)

    # Per-tile mask: zero-padding border columns + out-of-image halo rows.
    rows = np.arange(H0)
    cols = np.arange(Wp)
    col_ok = (cols > 0) & (cols < Wp - 1)
    mask_np = np.empty((n_tiles, P, 1), np.float32)
    for t in range(n_tiles):
        grow = t * tile_h - L + rows
        row_ok = (grow >= 0) & (grow < H)
        mask_np[t, :, 0] = (row_ok[:, None] & col_ok[None, :]).reshape(P)
    mask = jnp.asarray(mask_np)

    # ---- single fused pallas_call -------------------------------------------
    kernel = functools.partial(_vdsr_fused_kernel,
                               n_mid=n_mid, ext_pad=G, taps=taps)
    out_flat = pl.pallas_call(
        kernel,
        out_shape=jax.ShapeDtypeStruct((N, n_tiles, P, Cin), jnp.float32),
        grid_spec=pltpu.PrefetchScalarGridSpec(
            num_scalar_prefetch=0,
            grid=(N, n_tiles),
            in_specs=[
                pl.BlockSpec((1, 1, P, Cin_p), lambda n, t: (n, t, 0, 0)),
                pl.BlockSpec((1, P, 1), lambda n, t: (t, 0, 0)),
                pl.BlockSpec((9 * Cin_p, Cp), lambda n, t: (0, 0)),
                pl.BlockSpec((wmid.shape[0], 9 * Cp, Cp),
                             lambda n, t: (0, 0, 0)),
                pl.BlockSpec((9 * Cp, Cin), lambda n, t: (0, 0)),
            ],
            out_specs=pl.BlockSpec((1, 1, P, Cin), lambda n, t: (n, t, 0, 0)),
        ),
        compiler_params=pltpu.CompilerParams(
            dimension_semantics=("parallel", "parallel"),
            vmem_limit_bytes=64 * 1024 * 1024,
        ),
    )(xt, mask, w0, wmid, w1)

    # ---- extract interior, add_mean, back to NCHW ---------------------------
    out5 = out_flat.reshape(N, n_tiles, H0, Wp, Cin)
    y = out5[:, :, L:L + tile_h, 1:W + 1, :].reshape(N, H, W, Cin)
    y = y + RGB_MEAN                                                  # add_mean
    out = jnp.transpose(y, (0, 3, 1, 2))                              # NHWC->NCHW

    # ---- gate-prob / FLOPs bookkeeping (matches reference structure) --------
    prob_list = [prob]
    flops_list = [9.0 * H * W * Cin * jnp.sum(prob)]
    p_in = prob        # dcfg.reuse_gate: every gated conv sees conv0's prob
    for _ in range(n_mid):
        p0 = prob
        prob_list.append(p0)
        flops_list.append(9.0 * H * W * jnp.sum(p_in) * jnp.sum(p0))
    flops_sum = jnp.sum(jnp.stack(flops_list))
    return out, prob_list, flops_sum, flops_list


# ---------------------------------------------------------------------------
# Pure-JAX reference of the same (approximated) forward, for verification
# ---------------------------------------------------------------------------
def _reference_forward(params, x_nchw, tau=1.0):
    x = jnp.transpose(x_nchw, (0, 2, 3, 1)).astype(jnp.float32)
    Cp = params["conv0_w"].shape[3]
    prob = gate_channel_prob(params["gate_logits"], Cp, tau)

    def conv(v, w):
        return jax.lax.conv_general_dilated(
            v, w, (1, 1), ((1, 1), (1, 1)),
            dimension_numbers=("NHWC", "HWIO", "NHWC"),
            precision=jax.lax.Precision.HIGHEST)

    r = jax.nn.relu(conv(x - RGB_MEAN, params["conv0_w"] * prob))
    for w in params["layer_ws"]:
        r = jax.nn.relu(conv(r, w * prob))
    r = conv(r, params["layer1_w"])
    return jnp.transpose(x + r, (0, 3, 1, 2))


# ---------------------------------------------------------------------------
if __name__ == "__main__":
    num_layers = 4       # conv0 + 2 gated VDSR layers + layer1
    num_colors = 3
    num_planes = 32
    batch, spatial = 2, 16

    key = jax.random.PRNGKey(0)
    kp, kx = jax.random.split(key)
    params = init_params(kp, num_layers, num_colors, num_planes)
    x = jax.random.uniform(kx, (batch, num_colors, spatial, spatial),
                           dtype=jnp.float32)

    out, prob_list, flops_sum, flops_list = vdsr_gated_forward(
        params, x, tau=1.0, noise=False, tile_h=8)   # 2 row tiles -> halo path
    jax.block_until_ready(out)
    jax.block_until_ready(flops_sum)

    assert out.shape == x.shape
    assert len(prob_list) == num_layers - 1
    assert len(flops_list) == num_layers - 1

    # Correctness check against a pure-JAX lax.conv reference of the same math.
    ref = _reference_forward(params, x, tau=1.0)
    err = float(jnp.max(jnp.abs(out - ref)))
    assert err < 1e-1, f"mismatch vs reference: max abs err = {err}"

    print("KERNEL_OK")
</pallas_src>

<mosaic_0001>
module attributes {stable_mosaic.version = 11 : i64} {
  func.func @_vdsr_fused_kernel(%arg0: i32, %arg1: i32, %arg2: memref<1x1x288x8xf32, #tpu.memory_space<vmem>>, %arg3: memref<1x288x1xf32, #tpu.memory_space<vmem>>, %arg4: memref<72x32xf32, #tpu.memory_space<vmem>>, %arg5: memref<2x288x32xf32, #tpu.memory_space<vmem>>, %arg6: memref<288x3xf32, #tpu.memory_space<vmem>>, %arg7: memref<1x1x288x3xf32, #tpu.memory_space<vmem>>) attributes {dimension_semantics = [#tpu.dimension_semantics<parallel>, #tpu.dimension_semantics<parallel>], iteration_bounds = array<i64: 2, 2>, scalar_prefetch = 0 : i64, scratch_operands = 0 : i64, tpu.core_type = #tpu.core_type<tc>, window_params = [{transform_indices = @transform_0, window_bounds = array<i64: 1, 1, 288, 8>}, {transform_indices = @transform_1, window_bounds = array<i64: 1, 288, 1>}, {pipeline_mode = #tpu.pipeline_mode<synchronous>, transform_indices = @transform_2, window_bounds = array<i64: 72, 32>}, {pipeline_mode = #tpu.pipeline_mode<synchronous>, transform_indices = @transform_3, window_bounds = array<i64: 2, 288, 32>}, {pipeline_mode = #tpu.pipeline_mode<synchronous>, transform_indices = @transform_4, window_bounds = array<i64: 288, 3>}, {transform_indices = @transform_5, window_bounds = array<i64: 1, 1, 288, 3>}]} {
    %c0 = arith.constant 0 : index
    %c0_0 = arith.constant 0 : index
    %c0_1 = arith.constant 0 : index
    %c0_2 = arith.constant 0 : index
    %0 = vector.load %arg2[%c0, %c0_0, %c0_1, %c0_2] : memref<1x1x288x8xf32, #tpu.memory_space<vmem>>, vector<1x1x288x8xf32>
    %1 = vector.shape_cast %0 : vector<1x1x288x8xf32> to vector<288x8xf32>
    %c0_3 = arith.constant 0 : index
    %c0_4 = arith.constant 0 : index
    %c0_5 = arith.constant 0 : index
    %2 = vector.load %arg3[%c0_3, %c0_4, %c0_5] : memref<1x288x1xf32, #tpu.memory_space<vmem>>, vector<1x288x1xf32>
    %3 = vector.shape_cast %2 : vector<1x288x1xf32> to vector<288x1xf32>
    %c0_6 = arith.constant 0 : index
    %c0_7 = arith.constant 0 : index
    %4 = vector.load %arg4[%c0_6, %c0_7] : memref<72x32xf32, #tpu.memory_space<vmem>>, vector<72x32xf32>
    %cst = arith.constant 0.000000e+00 : f32
    %5 = vector.broadcast %cst : f32 to vector<24x8xf32>
    %6 = tpu.concatenate %5, %1, %5 in 0 : vector<24x8xf32>, vector<288x8xf32>, vector<24x8xf32> -> vector<336x8xf32>
    %7 = vector.extract_strided_slice %6 {offsets = [5, 0], sizes = [288, 8], strides = [1, 1]} : vector<336x8xf32> to vector<288x8xf32>
    %8 = vector.extract_strided_slice %6 {offsets = [6, 0], sizes = [288, 8], strides = [1, 1]} : vector<336x8xf32> to vector<288x8xf32>
    %9 = vector.extract_strided_slice %6 {offsets = [7, 0], sizes = [288, 8], strides = [1, 1]} : vector<336x8xf32> to vector<288x8xf32>
    %10 = vector.extract_strided_slice %6 {offsets = [23, 0], sizes = [288, 8], strides = [1, 1]} : vector<336x8xf32> to vector<288x8xf32>
    %11 = vector.extract_strided_slice %6 {offsets = [24, 0], sizes = [288, 8], strides = [1, 1]} : vector<336x8xf32> to vector<288x8xf32>
    %12 = vector.extract_strided_slice %6 {offsets = [25, 0], sizes = [288, 8], strides = [1, 1]} : vector<336x8xf32> to vector<288x8xf32>
    %13 = vector.extract_strided_slice %6 {offsets = [41, 0], sizes = [288, 8], strides = [1, 1]} : vector<336x8xf32> to vector<288x8xf32>
    %14 = vector.extract_strided_slice %6 {offsets = [42, 0], sizes = [288, 8], strides = [1, 1]} : vector<336x8xf32> to vector<288x8xf32>
    %15 = vector.extract_strided_slice %6 {offsets = [43, 0], sizes = [288, 8], strides = [1, 1]} : vector<336x8xf32> to vector<288x8xf32>
    %16 = tpu.concatenate %7, %8, %9, %10, %11, %12, %13, %14, %15 in 1 : vector<288x8xf32>, vector<288x8xf32>, vector<288x8xf32>, vector<288x8xf32>, vector<288x8xf32>, vector<288x8xf32>, vector<288x8xf32>, vector<288x8xf32>, vector<288x8xf32> -> vector<288x72xf32>
    %cst_8 = arith.constant dense<0.000000e+00> : vector<288x32xf32>
    %17 = tpu.matmul %16, %4, %cst_8 {dimension_numbers = #tpu.dot_dimension_numbers<[1], [0], [0], [1], [0, 0, 1, 1], [], []>} : vector<288x72xf32>, vector<72x32xf32>, vector<288x32xf32> -> vector<288x32xf32>
    %cst_9 = arith.constant 0.000000e+00 : f32
    %18 = vector.broadcast %cst_9 : f32 to vector<288x32xf32>
    %19 = arith.maximumf %17, %18 : vector<288x32xf32>
    %20 = vector.broadcast %3 : vector<288x1xf32> to vector<288x32xf32>
    %21 = arith.mulf %19, %20 : vector<288x32xf32>
    %c0_10 = arith.constant 0 : index
    %c0_11 = arith.constant 0 : index
    %c0_12 = arith.constant 0 : index
    %22 = vector.load %arg5[%c0_10, %c0_11, %c0_12] : memref<2x288x32xf32, #tpu.memory_space<vmem>>, vector<1x288x32xf32>
    %23 = vector.shape_cast %22 : vector<1x288x32xf32> to vector<288x32xf32>
    %cst_13 = arith.constant 0.000000e+00 : f32
    %24 = vector.broadcast %cst_13 : f32 to vector<24x32xf32>
    %25 = tpu.concatenate %24, %21, %24 in 0 : vector<24x32xf32>, vector<288x32xf32>, vector<24x32xf32> -> vector<336x32xf32>
    %26 = vector.extract_strided_slice %25 {offsets = [5, 0], sizes = [288, 32], strides = [1, 1]} : vector<336x32xf32> to vector<288x32xf32>
    %27 = vector.extract_strided_slice %25 {offsets = [6, 0], sizes = [288, 32], strides = [1, 1]} : vector<336x32xf32> to vector<288x32xf32>
    %28 = vector.extract_strided_slice %25 {offsets = [7, 0], sizes = [288, 32], strides = [1, 1]} : vector<336x32xf32> to vector<288x32xf32>
    %29 = vector.extract_strided_slice %25 {offsets = [23, 0], sizes = [288, 32], strides = [1, 1]} : vector<336x32xf32> to vector<288x32xf32>
    %30 = vector.extract_strided_slice %25 {offsets = [24, 0], sizes = [288, 32], strides = [1, 1]} : vector<336x32xf32> to vector<288x32xf32>
    %31 = vector.extract_strided_slice %25 {offsets = [25, 0], sizes = [288, 32], strides = [1, 1]} : vector<336x32xf32> to vector<288x32xf32>
    %32 = vector.extract_strided_slice %25 {offsets = [41, 0], sizes = [288, 32], strides = [1, 1]} : vector<336x32xf32> to vector<288x32xf32>
    %33 = vector.extract_strided_slice %25 {offsets = [42, 0], sizes = [288, 32], strides = [1, 1]} : vector<336x32xf32> to vector<288x32xf32>
    %34 = vector.extract_strided_slice %25 {offsets = [43, 0], sizes = [288, 32], strides = [1, 1]} : vector<336x32xf32> to vector<288x32xf32>
    %35 = tpu.concatenate %26, %27, %28, %29, %30, %31, %32, %33, %34 in 1 : vector<288x32xf32>, vector<288x32xf32>, vector<288x32xf32>, vector<288x32xf32>, vector<288x32xf32>, vector<288x32xf32>, vector<288x32xf32>, vector<288x32xf32>, vector<288x32xf32> -> vector<288x288xf32>
    %cst_14 = arith.constant dense<0.000000e+00> : vector<288x32xf32>
    %36 = tpu.matmul %35, %23, %cst_14 {dimension_numbers = #tpu.dot_dimension_numbers<[1], [0], [0], [1], [0, 0, 1, 1], [], []>} : vector<288x288xf32>, vector<288x32xf32>, vector<288x32xf32> -> vector<288x32xf32>
    %cst_15 = arith.constant 0.000000e+00 : f32
    %37 = vector.broadcast %cst_15 : f32 to vector<288x32xf32>
    %38 = arith.maximumf %36, %37 : vector<288x32xf32>
    %39 = vector.broadcast %3 : vector<288x1xf32> to vector<288x32xf32>
    %40 = arith.mulf %38, %39 : vector<288x32xf32>
    %c1 = arith.constant 1 : index
    %c0_16 = arith.constant 0 : index
    %c0_17 = arith.constant 0 : index
    %41 = vector.load %arg5[%c1, %c0_16, %c0_17] : memref<2x288x32xf32, #tpu.memory_space<vmem>>, vector<1x288x32xf32>
    %42 = vector.shape_cast %41 : vector<1x288x32xf32> to vector<288x32xf32>
    %cst_18 = arith.constant 0.000000e+00 : f32
    %43 = vector.broadcast %cst_18 : f32 to vector<24x32xf32>
    %44 = tpu.concatenate %43, %40, %43 in 0 : vector<24x32xf32>, vector<288x32xf32>, vector<24x32xf32> -> vector<336x32xf32>
    %45 = vector.extract_strided_slice %44 {offsets = [5, 0], sizes = [288, 32], strides = [1, 1]} : vector<336x32xf32> to vector<288x32xf32>
    %46 = vector.extract_strided_slice %44 {offsets = [6, 0], sizes = [288, 32], strides = [1, 1]} : vector<336x32xf32> to vector<288x32xf32>
    %47 = vector.extract_strided_slice %44 {offsets = [7, 0], sizes = [288, 32], strides = [1, 1]} : vector<336x32xf32> to vector<288x32xf32>
    %48 = vector.extract_strided_slice %44 {offsets = [23, 0], sizes = [288, 32], strides = [1, 1]} : vector<336x32xf32> to vector<288x32xf32>
    %49 = vector.extract_strided_slice %44 {offsets = [24, 0], sizes = [288, 32], strides = [1, 1]} : vector<336x32xf32> to vector<288x32xf32>
    %50 = vector.extract_strided_slice %44 {offsets = [25, 0], sizes = [288, 32], strides = [1, 1]} : vector<336x32xf32> to vector<288x32xf32>
    %51 = vector.extract_strided_slice %44 {offsets = [41, 0], sizes = [288, 32], strides = [1, 1]} : vector<336x32xf32> to vector<288x32xf32>
    %52 = vector.extract_strided_slice %44 {offsets = [42, 0], sizes = [288, 32], strides = [1, 1]} : vector<336x32xf32> to vector<288x32xf32>
    %53 = vector.extract_strided_slice %44 {offsets = [43, 0], sizes = [288, 32], strides = [1, 1]} : vector<336x32xf32> to vector<288x32xf32>
    %54 = tpu.concatenate %45, %46, %47, %48, %49, %50, %51, %52, %53 in 1 : vector<288x32xf32>, vector<288x32xf32>, vector<288x32xf32>, vector<288x32xf32>, vector<288x32xf32>, vector<288x32xf32>, vector<288x32xf32>, vector<288x32xf32>, vector<288x32xf32> -> vector<288x288xf32>
    %cst_19 = arith.constant dense<0.000000e+00> : vector<288x32xf32>
    %55 = tpu.matmul %54, %42, %cst_19 {dimension_numbers = #tpu.dot_dimension_numbers<[1], [0], [0], [1], [0, 0, 1, 1], [], []>} : vector<288x288xf32>, vector<288x32xf32>, vector<288x32xf32> -> vector<288x32xf32>
    %cst_20 = arith.constant 0.000000e+00 : f32
    %56 = vector.broadcast %cst_20 : f32 to vector<288x32xf32>
    %57 = arith.maximumf %55, %56 : vector<288x32xf32>
    %58 = vector.broadcast %3 : vector<288x1xf32> to vector<288x32xf32>
    %59 = arith.mulf %57, %58 : vector<288x32xf32>
    %c0_21 = arith.constant 0 : index
    %c0_22 = arith.constant 0 : index
    %60 = vector.load %arg6[%c0_21, %c0_22] : memref<288x3xf32, #tpu.memory_space<vmem>>, vector<288x3xf32>
    %cst_23 = arith.constant 0.000000e+00 : f32
    %61 = vector.broadcast %cst_23 : f32 to vector<24x32xf32>
    %62 = tpu.concatenate %61, %59, %61 in 0 : vector<24x32xf32>, vector<288x32xf32>, vector<24x32xf32> -> vector<336x32xf32>
    %63 = vector.extract_strided_slice %62 {offsets = [5, 0], sizes = [288, 32], strides = [1, 1]} : vector<336x32xf32> to vector<288x32xf32>
    %64 = vector.extract_strided_slice %62 {offsets = [6, 0], sizes = [288, 32], strides = [1, 1]} : vector<336x32xf32> to vector<288x32xf32>
    %65 = vector.extract_strided_slice %62 {offsets = [7, 0], sizes = [288, 32], strides = [1, 1]} : vector<336x32xf32> to vector<288x32xf32>
    %66 = vector.extract_strided_slice %62 {offsets = [23, 0], sizes = [288, 32], strides = [1, 1]} : vector<336x32xf32> to vector<288x32xf32>
    %67 = vector.extract_strided_slice %62 {offsets = [24, 0], sizes = [288, 32], strides = [1, 1]} : vector<336x32xf32> to vector<288x32xf32>
    %68 = vector.extract_strided_slice %62 {offsets = [25, 0], sizes = [288, 32], strides = [1, 1]} : vector<336x32xf32> to vector<288x32xf32>
    %69 = vector.extract_strided_slice %62 {offsets = [41, 0], sizes = [288, 32], strides = [1, 1]} : vector<336x32xf32> to vector<288x32xf32>
    %70 = vector.extract_strided_slice %62 {offsets = [42, 0], sizes = [288, 32], strides = [1, 1]} : vector<336x32xf32> to vector<288x32xf32>
    %71 = vector.extract_strided_slice %62 {offsets = [43, 0], sizes = [288, 32], strides = [1, 1]} : vector<336x32xf32> to vector<288x32xf32>
    %72 = tpu.concatenate %63, %64, %65, %66, %67, %68, %69, %70, %71 in 1 : vector<288x32xf32>, vector<288x32xf32>, vector<288x32xf32>, vector<288x32xf32>, vector<288x32xf32>, vector<288x32xf32>, vector<288x32xf32>, vector<288x32xf32>, vector<288x32xf32> -> vector<288x288xf32>
    %cst_24 = arith.constant dense<0.000000e+00> : vector<288x3xf32>
    %73 = tpu.matmul %72, %60, %cst_24 {dimension_numbers = #tpu.dot_dimension_numbers<[1], [0], [0], [1], [0, 0, 1, 1], [], []>} : vector<288x288xf32>, vector<288x3xf32>, vector<288x3xf32> -> vector<288x3xf32>
    %74 = vector.extract_strided_slice %1 {offsets = [0, 0], sizes = [288, 3], strides = [1, 1]} : vector<288x8xf32> to vector<288x3xf32>
    %75 = arith.addf %74, %73 : vector<288x3xf32>
    %c0_25 = arith.constant 0 : index
    %c0_26 = arith.constant 0 : index
    %c0_27 = arith.constant 0 : index
    %c0_28 = arith.constant 0 : index
    %76 = vector.load %arg7[%c0_25, %c0_26, %c0_27, %c0_28] : memref<1x1x288x3xf32, #tpu.memory_space<vmem>>, vector<1x1x288x3xf32>
    %77 = vector.shape_cast %76 : vector<1x1x288x3xf32> to vector<288x3xf32>
    %78 = vector.shape_cast %75 : vector<288x3xf32> to vector<1x1x288x3xf32>
    tpu.vector_store %arg7[%c0_25, %c0_26, %c0_27, %c0_28], %78 {strides = array<i32>} : memref<1x1x288x3xf32, #tpu.memory_space<vmem>>, vector<1x1x288x3xf32>,
    return
  }
  func.func @transform_0(%arg0: i32, %arg1: i32) -> (i32, i32, i32, i32) {
    %c0_i32 = arith.constant 0 : i32
    %c0_i32_0 = arith.constant 0 : i32
    %c0_i32_1 = arith.constant 0 : i32
    return %arg0, %arg1, %c0_i32, %c0_i32_0 : i32, i32, i32, i32
  }
  func.func @transform_1(%arg0: i32, %arg1: i32) -> (i32, i32, i32) {
    %c0_i32 = arith.constant 0 : i32
    %c0_i32_0 = arith.constant 0 : i32
    %c0_i32_1 = arith.constant 0 : i32
    return %arg1, %c0_i32, %c0_i32_0 : i32, i32, i32
  }
  func.func @transform_2(%arg0: i32, %arg1: i32) -> (i32, i32) {
    %c0_i32 = arith.constant 0 : i32
    %c0_i32_0 = arith.constant 0 : i32
    %c0_i32_1 = arith.constant 0 : i32
    return %c0_i32, %c0_i32_0 : i32, i32
  }
  func.func @transform_3(%arg0: i32, %arg1: i32) -> (i32, i32, i32) {
    %c0_i32 = arith.constant 0 : i32
    %c0_i32_0 = arith.constant 0 : i32
    %c0_i32_1 = arith.constant 0 : i32
    %c0_i32_2 = arith.constant 0 : i32
    return %c0_i32, %c0_i32_0, %c0_i32_1 : i32, i32, i32
  }
  func.func @transform_4(%arg0: i32, %arg1: i32) -> (i32, i32) {
    %c0_i32 = arith.constant 0 : i32
    %c0_i32_0 = arith.constant 0 : i32
    %c0_i32_1 = arith.constant 0 : i32
    return %c0_i32, %c0_i32_0 : i32, i32
  }
  func.func @transform_5(%arg0: i32, %arg1: i32) -> (i32, i32, i32, i32) {
    %c0_i32 = arith.constant 0 : i32
    %c0_i32_0 = arith.constant 0 : i32
    %c0_i32_1 = arith.constant 0 : i32
    return %arg0, %arg1, %c0_i32, %c0_i32_0 : i32, i32, i32, i32
  }
}

</mosaic_0001>

<llo_original>
// kernel: tpu_custom_call.1
$region0: #{tpu_custom_call.1}
  #allocation0 [shape = 'u32[]', space=smem, size = 0x4, offset = 0x4, fixed_abs, tag = 'smem constant byte address 0x4 - core index']
  #allocation1 [shape = 'u32[144,128]{1,0:T(1,128)}', space=vmem, size = 0x12000, scoped, tag = 'internal scratch']
  %s0 = inlined_call_operand.hbm [shape: f32[2,2,288,8], index: 0, kind: input, shape index: {}]
  %s1 = inlined_call_operand.hbm [shape: f32[2,288,1], index: 1, kind: input, shape index: {}]
  %s2 = inlined_call_operand.hbm [shape: f32[72,32], index: 2, kind: input, shape index: {}]
  %s3 = inlined_call_operand.hbm [shape: f32[2,288,32], index: 3, kind: input, shape index: {}]
  %s4 = inlined_call_operand.hbm [shape: f32[288,3], index: 4, kind: input, shape index: {}]
  %s5 = inlined_call_operand.hbm [shape: f32[2,2,288,3], index: 5, kind: output, shape index: {}]
  %s6 = sld [smem:[#allocation0]]
  $region73: #{tpu_custom_call.1} parent=0
    _
  %s8 = ssub.s32 1, %s6
  %s9 = scalar_select 0, %s8, %s6
  $region1: #{tpu_custom_call.1} parent=0
    #allocation2 [shape = 'u8[294912]{0}', space=vmem, size = 0x48000, scoped, tag = 'input window, operand 0']
    #allocation3 [shape = 's32[2]{0}', space=sflag, size = 0x8, scoped, tag = 'scoped memory for tpu_custom_call.1']
    #allocation4 [shape = 's32[2]{0}', space=sflag, size = 0x8, scoped, tag = 'scoped memory for tpu_custom_call.1']
    #allocation5 [shape = 'u8[294912]{0}', space=vmem, size = 0x48000, scoped, tag = 'input window, operand 1']
    #allocation6 [shape = 's32[2]{0}', space=sflag, size = 0x8, scoped, tag = 'scoped memory for tpu_custom_call.1']
    #allocation7 [shape = 'u8[36864]{0}', space=vmem, size = 0x9000, scoped, tag = 'input window, operand 2, single buffered']
    #allocation8 [shape = 'u8[294912]{0}', space=vmem, size = 0x48000, scoped, tag = 'input window, operand 3, single buffered']
    #allocation9 [shape = 's32[1]{0}', space=sflag, size = 0x4, scoped, tag = 'scoped memory for tpu_custom_call.1']
    #allocation10 [shape = 'u8[147456]{0}', space=vmem, size = 0x24000, scoped, tag = 'input window, operand 4, single buffered']
    #allocation11 [shape = 'u8[294912]{0}', space=vmem, size = 0x48000, scoped, tag = 'output window, operand 0']
    %10 = vsyncpa [#allocation3], 0
    %s11 = scalar_lea.sflag [#allocation3], 1
    %12 = vsyncpa %s11, 0
    %13 = vsyncpa [#allocation6], 0
    %s14 = scalar_lea.sflag [#allocation6], 1
    %15 = vsyncpa %s14, 0
    %16 = vsyncpa [#allocation9], 0
    %17 = vsyncpa [#allocation4], 0
    %s18 = scalar_lea.sflag [#allocation4], 1
    %19 = vsyncpa %s18, 0
    loop: start=0, step=1, limit=6
    $region2: #{tpu_custom_call.1} parent=1 // loop_pre_header
      _
    $region3: #{tpu_custom_call.1} parent=1 // loop_header
      %s21 = sphi 0, %s25
      %p22 = scmp.ge.s32.totalorder %s21, 6
      %s28 = sphi 0, %s40
      %s29 = sphi 0, %s36
      %s30 = sphi 0, %s28
      %s31 = sphi 0, %s29
      %s32 = sphi 0, %s30
      %s33 = sphi 0, %s31
      %s45 = sphi 0, %s47
      %s48 = sphi 0, %s45
      %s49 = sphi 0, %s48
      %s65 = sphi 0, %s49
      %s71 = sphi 0, %s73
      %s74 = sphi 0, %s71
      %s75 = sphi 0, %s74
      %s91 = sphi 0, %s75
      %s95 = sphi 0, %s95
      %s97 = sphi 0, %s95
      %s98 = sphi 0, %s97
      %s112 = sphi 0, %s98
      %s116 = sphi 0, %s116
      %s118 = sphi 0, %s116
      %s119 = sphi 0, %s118
      %s133 = sphi 0, %s119
      %s137 = sphi 0, %s137
      %s139 = sphi 0, %s137
      %s140 = sphi 0, %s139
      %s154 = sphi 0, %s140
      %s162 = sphi 0, %s164
      %s165 = sphi 0, %s162
      %s166 = sphi 0, %s165
      %s182 = sphi 0, %s166
    $region4: #{tpu_custom_call.1} parent=1 // loop_header_branch
      %24 = sbr.rel (%p22) target = $region8
    $region5: #{tpu_custom_call.1} parent=1 // loop_body
      %s26 = ssub.s32 %s21, 1
      %s27 = ssub.s32 %s21, 2
      %s34 = sadd.s32 1, %s29
      %p35 = scmp.ge.s32.totalorder %s34, 2
      %s36 = scalar_select %p35, 0, %s34
      %s37 = sadd.s32 1, %s28
      %s38 = scalar_select %p35, %s37, %s28
      %p39 = scmp.ge.s32.totalorder %s38, 2
      %s40 = scalar_select %p39, 0, %s38
      %s41 = ssub.s32 %s28, %s40
      %s42 = ssub.s32 %s29, %s36
      %s43 = sor.u32 %s41, %s42
      %p44 = scmp.eq.s32.totalorder %s43, 0
      %s46 = sadd.s32 %s45, 1
      %s47 = scalar_select %p44, %s45, %s46
      %p50 = pneg %p44
      %p51 = scmp.eq.s32.totalorder %s21, 3
      %p52 = por %p50, %p51
      %p53 = scmp.ne.s32.totalorder %s45, %s48
      %p54 = scmp.eq.s32.totalorder %s21, 0
      %p55 = por %p53, %p54
      %p56 = scmp.ne.s32.totalorder %s45, %s48
      %p57 = scmp.eq.s32.totalorder %s26, 3
      %p58 = por %p56, %p57
      %p59 = scmp.ne.s32.totalorder %s48, %s49
      %p60 = scmp.eq.s32.totalorder %s26, 0
      %p61 = por %p59, %p60
      %p62 = scmp.ne.s32.totalorder %s48, %s49
      %p63 = scmp.eq.s32.totalorder %s27, 3
      %p64 = por %p62, %p63
      %p66 = scmp.ne.s32.totalorder %s49, %s65
      %p67 = scmp.eq.s32.totalorder %s27, 0
      %p68 = por %p66, %p67
      %s69 = ssub.s32 %s29, %s36
      %p70 = scmp.eq.s32.totalorder %s69, 0
      %s72 = sadd.s32 %s71, 1
      %s73 = scalar_select %p70, %s71, %s72
      %p76 = pneg %p70
      %p77 = scmp.eq.s32.totalorder %s21, 3
      %p78 = por %p76, %p77
      %p79 = scmp.ne.s32.totalorder %s71, %s74
      %p80 = scmp.eq.s32.totalorder %s21, 0
      %p81 = por %p79, %p80
      %p82 = scmp.ne.s32.totalorder %s71, %s74
      %p83 = scmp.eq.s32.totalorder %s26, 3
      %p84 = por %p82, %p83
      %p85 = scmp.ne.s32.totalorder %s74, %s75
      %p86 = scmp.eq.s32.totalorder %s26, 0
      %p87 = por %p85, %p86
      %p88 = scmp.ne.s32.totalorder %s74, %s75
      %p89 = scmp.eq.s32.totalorder %s27, 3
      %p90 = por %p88, %p89
      %p92 = scmp.ne.s32.totalorder %s75, %s91
      %p93 = scmp.eq.s32.totalorder %s27, 0
      %p94 = por %p92, %p93
      %s96 = sadd.s32 %s95, 1
      %p99 = scmp.eq.s32.totalorder %s21, 3
      %p100 = scmp.ne.s32.totalorder %s95, %s97
      %p101 = scmp.eq.s32.totalorder %s21, 0
      %p102 = por %p100, %p101
      %p103 = scmp.ne.s32.totalorder %s95, %s97
      %p104 = scmp.eq.s32.totalorder %s26, 3
      %p105 = por %p103, %p104
      %p106 = scmp.ne.s32.totalorder %s97, %s98
      %p107 = scmp.eq.s32.totalorder %s26, 0
      %p108 = por %p106, %p107
      %p109 = scmp.ne.s32.totalorder %s97, %s98
      %p110 = scmp.eq.s32.totalorder %s27, 3
      %p111 = por %p109, %p110
      %p113 = scmp.ne.s32.totalorder %s98, %s112
      %p114 = scmp.eq.s32.totalorder %s27, 0
      %p115 = por %p113, %p114
      %s117 = sadd.s32 %s116, 1
      %p120 = scmp.eq.s32.totalorder %s21, 3
      %p121 = scmp.ne.s32.totalorder %s116, %s118
      %p122 = scmp.eq.s32.totalorder %s21, 0
      %p123 = por %p121, %p122
      %p124 = scmp.ne.s32.totalorder %s116, %s118
      %p125 = scmp.eq.s32.totalorder %s26, 3
      %p126 = por %p124, %p125
      %p127 = scmp.ne.s32.totalorder %s118, %s119
      %p128 = scmp.eq.s32.totalorder %s26, 0
      %p129 = por %p127, %p128
      %p130 = scmp.ne.s32.totalorder %s118, %s119
      %p131 = scmp.eq.s32.totalorder %s27, 3
      %p132 = por %p130, %p131
      %p134 = scmp.ne.s32.totalorder %s119, %s133
      %p135 = scmp.eq.s32.totalorder %s27, 0
      %p136 = por %p134, %p135
      %s138 = sadd.s32 %s137, 1
      %p141 = scmp.eq.s32.totalorder %s21, 3
      %p142 = scmp.ne.s32.totalorder %s137, %s139
      %p143 = scmp.eq.s32.totalorder %s21, 0
      %p144 = por %p142, %p143
      %p145 = scmp.ne.s32.totalorder %s137, %s139
      %p146 = scmp.eq.s32.totalorder %s26, 3
      %p147 = por %p145, %p146
      %p148 = scmp.ne.s32.totalorder %s139, %s140
      %p149 = scmp.eq.s32.totalorder %s26, 0
      %p150 = por %p148, %p149
      %p151 = scmp.ne.s32.totalorder %s139, %s140
      %p152 = scmp.eq.s32.totalorder %s27, 3
      %p153 = por %p151, %p152
      %p155 = scmp.ne.s32.totalorder %s140, %s154
      %p156 = scmp.eq.s32.totalorder %s27, 0
      %p157 = por %p155, %p156
      %s158 = ssub.s32 %s28, %s40
      %s159 = ssub.s32 %s29, %s36
      %s160 = sor.u32 %s158, %s159
      %p161 = scmp.eq.s32.totalorder %s160, 0
      %s163 = sadd.s32 %s162, 1
      %s164 = scalar_select %p161, %s162, %s163
      %p167 = pneg %p161
      %p168 = scmp.eq.s32.totalorder %s21, 3
      %p169 = por %p167, %p168
      %p170 = scmp.ne.s32.totalorder %s162, %s165
      %p171 = scmp.eq.s32.totalorder %s21, 0
      %p172 = por %p170, %p171
      %p173 = scmp.ne.s32.totalorder %s162, %s165
      %p174 = scmp.eq.s32.totalorder %s26, 3
      %p175 = por %p173, %p174
      %p176 = scmp.ne.s32.totalorder %s165, %s166
      %p177 = scmp.eq.s32.totalorder %s26, 0
      %p178 = por %p176, %p177
      %p179 = scmp.ne.s32.totalorder %s165, %s166
      %p180 = scmp.eq.s32.totalorder %s27, 3
      %p181 = por %p179, %p180
      %p183 = scmp.ne.s32.totalorder %s166, %s182
      %p184 = scmp.eq.s32.totalorder %s27, 0
      %p185 = por %p183, %p184
      %p186 = scmp.le.s32.totalorder 1, %s21
      %p187 = scmp.lt.s32.totalorder %s21, 5
      %p188 = pnand %p186, %p187
      %p189 = pneg %p188
      // Predicated region
      $region9: #{tpu_custom_call.1} parent=5 // pred_check
        _
      $region10: #{tpu_custom_call.1} parent=5 // pred_check_branch
        %191 = sbr.rel (%p188) target = $region12
      $region11: #{tpu_custom_call.1} parent=5 // pred_region
        %s192 = ssub.s32 %s21, 1
        // Predicated region
        $region13: #{tpu_custom_call.1} parent=11 // pred_check
          %p193 = pneg %p108
        $region14: #{tpu_custom_call.1} parent=11 // pred_check_branch
          %195 = sbr.rel (%p193) target = $region16
        $region15: #{tpu_custom_call.1} parent=11 // pred_region
          %s197 = ssub.s32 1152, 1152
          %198 = vsyncadd [#allocation6], %s197
          %s199 = sshll.u32 [#allocation7], 4
          %s200 = int_to_ptr.vmem [resolvable:$true] %s199
          %205 = dma.hbm_to_vmem [thread:$0]  %s2, 1152, %s200, [#allocation6], 128, 128, 8
        $region16: #{tpu_custom_call.1} parent=11 // pred_fallthru
          _
        // Predicated region
        $region17: #{tpu_custom_call.1} parent=11 // pred_check
          %p206 = pneg %p129
        $region18: #{tpu_custom_call.1} parent=11 // pred_check_branch
          %208 = sbr.rel (%p206) target = $region20
        $region19: #{tpu_custom_call.1} parent=11 // pred_region
          %s210 = ssub.s32 9216, 9216
          %211 = vsyncadd [#allocation9], %s210
          %s212 = sshll.u32 [#allocation8], 4
          %s213 = int_to_ptr.vmem [resolvable:$true] %s212
          %218 = dma.hbm_to_vmem [thread:$0]  %s3, 9216, %s213, [#allocation9], 128, 128, 8
        $region20: #{tpu_custom_call.1} parent=11 // pred_fallthru
          _
        // Predicated region
        $region21: #{tpu_custom_call.1} parent=11 // pred_check
          %p219 = pneg %p150
        $region22: #{tpu_custom_call.1} parent=11 // pred_check_branch
          %221 = sbr.rel (%p219) target = $region24
        $region23: #{tpu_custom_call.1} parent=11 // pred_region
          %s223 = ssub.s32 4608, 4608
          %224 = vsyncadd [#allocation9], %s223
          %s225 = sshll.u32 [#allocation10], 4
          %s226 = int_to_ptr.vmem [resolvable:$true] %s225
          %231 = dma.hbm_to_vmem [thread:$0]  %s4, 4608, %s226, [#allocation9], 128, 128, 8
        $region24: #{tpu_custom_call.1} parent=11 // pred_fallthru
          _
      $region12: #{tpu_custom_call.1} parent=5 // pred_fallthru
        _
      %p232 = scmp.lt.s32.totalorder %s21, 4
      // Predicated region
      $region25: #{tpu_custom_call.1} parent=5 // pred_check
        %p233 = pneg %p232
      $region26: #{tpu_custom_call.1} parent=5 // pred_check_branch
        %235 = sbr.rel (%p233) target = $region28
      $region27: #{tpu_custom_call.1} parent=5 // pred_region
        // Predicated region
        $region29: #{tpu_custom_call.1} parent=27 // pred_check
          %p236 = pneg %p55
        $region30: #{tpu_custom_call.1} parent=27 // pred_check_branch
          %238 = sbr.rel (%p236) target = $region32
        $region31: #{tpu_custom_call.1} parent=27 // pred_region
          %s239 = sand.u32 %s45, 1
          %s240 = scalar_lea.sflag [#allocation3], %s239
          %s241 = sand.u32 %s45, 1
          %s242 = smul.addr %s241, 288
          %s243 = scalar_lea.vmem [#allocation2], %s242
          %s245 = ssub.s32 4608, 4608
          %246 = vsyncadd %s240, %s245
          %s247 = smul.addr %s29, 36
          %s248 = smul.addr %s28, 72
          %s249 = sadd.s32 %s247, %s248
          %s250 = smul.addr %s249, 128
          %s251 = scalar_lea.hbm %s0, %s250
          %s252 = sshll.u32 %s243, 4
          %s253 = int_to_ptr.vmem [resolvable:$true] %s252
          %258 = dma.hbm_to_vmem [thread:$0]  %s251, 4608, %s253, %s240, 128, 128, 8
        $region32: #{tpu_custom_call.1} parent=27 // pred_fallthru
          _
        // Predicated region
        $region33: #{tpu_custom_call.1} parent=27 // pred_check
          %p259 = pneg %p81
        $region34: #{tpu_custom_call.1} parent=27 // pred_check_branch
          %261 = sbr.rel (%p259) target = $region36
        $region35: #{tpu_custom_call.1} parent=27 // pred_region
          %s262 = sand.u32 %s21, 1
          %s263 = scalar_lea.sflag [#allocation6], %s262
          %s264 = sand.u32 %s71, 1
          %s265 = smul.addr %s264, 288
          %s266 = scalar_lea.vmem [#allocation5], %s265
          %s268 = ssub.s32 4608, 4608
          %269 = vsyncadd %s263, %s268
          %s270 = smul.addr %s29, 36
          %s271 = smul.addr %s270, 128
          %s272 = scalar_lea.hbm %s1, %s271
          %s273 = sshll.u32 %s266, 4
          %s274 = int_to_ptr.vmem [resolvable:$true] %s273
          %279 = dma.hbm_to_vmem [thread:$0]  %s272, 4608, %s274, %s263, 128, 128, 8
        $region36: #{tpu_custom_call.1} parent=27 // pred_fallthru
          _
      $region28: #{tpu_custom_call.1} parent=5 // pred_fallthru
        _
      %p280 = scmp.le.s32.totalorder 1, %s21
      %p281 = scmp.lt.s32.totalorder %s21, 5
      %p282 = pnand %p280, %p281
      %p283 = pneg %p282
      // Predicated region
      $region37: #{tpu_custom_call.1} parent=5 // pred_check
        _
      $region38: #{tpu_custom_call.1} parent=5 // pred_check_branch
        %285 = sbr.rel (%p282) target = $region40
      $region39: #{tpu_custom_call.1} parent=5 // pred_region
        %s286 = ssub.s32 %s21, 1
        %s287 = sand.u32 %s48, 1
        %s288 = scalar_lea.sflag [#allocation3], %s287
        %s289 = sand.u32 %s48, 1
        %s290 = smul.addr %s289, 288
        %s291 = scalar_lea.vmem [#allocation2], %s290
        // Predicated region
        $region41: #{tpu_custom_call.1} parent=39 // pred_check
          %p292 = pneg %p61
        $region42: #{tpu_custom_call.1} parent=39 // pred_check_branch
          %294 = sbr.rel (%p292) target = $region44
        $region43: #{tpu_custom_call.1} parent=39 // pred_region
          %295 = dma.done %s288, 4608
        $region44: #{tpu_custom_call.1} parent=39 // pred_fallthru
          _
        %s296 = sand.u32 %s26, 1
        %s297 = scalar_lea.sflag [#allocation6], %s296
        %s298 = sand.u32 %s74, 1
        %s299 = smul.addr %s298, 288
        %s300 = scalar_lea.vmem [#allocation5], %s299
        // Predicated region
        $region45: #{tpu_custom_call.1} parent=39 // pred_check
          %p301 = pneg %p87
        $region46: #{tpu_custom_call.1} parent=39 // pred_check_branch
          %303 = sbr.rel (%p301) target = $region48
        $region47: #{tpu_custom_call.1} parent=39 // pred_region
          %304 = dma.done %s297, 4608
        $region48: #{tpu_custom_call.1} parent=39 // pred_fallthru
          _
        // Predicated region
        $region49: #{tpu_custom_call.1} parent=39 // pred_check
          %p305 = pneg %p108
        $region50: #{tpu_custom_call.1} parent=39 // pred_check_branch
          %307 = sbr.rel (%p305) target = $region52
        $region51: #{tpu_custom_call.1} parent=39 // pred_region
          %308 = dma.done [#allocation6], 1152
        $region52: #{tpu_custom_call.1} parent=39 // pred_fallthru
          _
        // Predicated region
        $region53: #{tpu_custom_call.1} parent=39 // pred_check
          %p309 = pneg %p129
        $region54: #{tpu_custom_call.1} parent=39 // pred_check_branch
          %311 = sbr.rel (%p309) target = $region56
        $region55: #{tpu_custom_call.1} parent=39 // pred_region
          %312 = dma.done [#allocation9], 9216
        $region56: #{tpu_custom_call.1} parent=39 // pred_fallthru
          _
        // Predicated region
        $region57: #{tpu_custom_call.1} parent=39 // pred_check
          %p313 = pneg %p150
        $region58: #{tpu_custom_call.1} parent=39 // pred_check_branch
          %315 = sbr.rel (%p313) target = $region60
        $region59: #{tpu_custom_call.1} parent=39 // pred_region
          %316 = dma.done [#allocation9], 4608
        $region60: #{tpu_custom_call.1} parent=39 // pred_fallthru
          _
        %s317 = sand.u32 %s48, 1
        %s318 = scalar_lea.sflag [#allocation3], %s317
        %s319 = sand.u32 %s48, 1
        %s320 = smul.addr %s319, 288
        %s321 = scalar_lea.vmem [#allocation2], %s320
        %p322 = pneg %p61
        %p323 = pneg %p58
        %s324 = sand.u32 %s26, 1
        %s325 = scalar_lea.sflag [#allocation6], %s324
        %s326 = sand.u32 %s74, 1
        %s327 = smul.addr %s326, 288
        %s328 = scalar_lea.vmem [#allocation5], %s327
        %p329 = pneg %p87
        %p330 = pneg %p84
        %p331 = pneg %p108
        %p332 = pneg %p105
        %p333 = pneg %p129
        %p334 = pneg %p126
        %p335 = pneg %p150
        %p336 = pneg %p147
        %p337 = pneg %p178
        %p338 = pneg %p175
        %s339 = sand.u32 %s165, 1
        %s340 = scalar_lea.sflag [#allocation4], %s339
        %s341 = sand.u32 %s165, 1
        %s342 = smul.addr %s341, 288
        %s343 = scalar_lea.vmem [#allocation11], %s342
        %v344 = vld [vmem:[%s291] sm:$0xff]
        %v345 = vld [vmem:[%s291 + $0x8] sm:$0xff]
        %v346 = vld [vmem:[%s291 + $0x10] sm:$0xff]
        %v347 = vld [vmem:[%s291 + $0x18] sm:$0xff]
        %v348 = vld [vmem:[%s291 + $0x20] sm:$0xff]
        %v349 = vld [vmem:[%s291 + $0x28] sm:$0xff]
        %v350 = vld [vmem:[%s291 + $0x30] sm:$0xff]
        %v351 = vld [vmem:[%s291 + $0x38] sm:$0xff]
        %v352 = vld [vmem:[%s291 + $0x40] sm:$0xff]
        %v353 = vld [vmem:[%s291 + $0x48] sm:$0xff]
        %v354 = vld [vmem:[%s291 + $0x50] sm:$0xff]
        %v355 = vld [vmem:[%s291 + $0x58] sm:$0xff]
        %v356 = vld [vmem:[%s291 + $0x60] sm:$0xff]
        %v357 = vld [vmem:[%s291 + $0x68] sm:$0xff]
        %v358 = vld [vmem:[%s291 + $0x70] sm:$0xff]
        %v359 = vld [vmem:[%s291 + $0x78] sm:$0xff]
        %v360 = vld [vmem:[%s291 + $0x80] sm:$0xff]
        %v361 = vld [vmem:[%s291 + $0x88] sm:$0xff]
        %v362 = vld [vmem:[%s291 + $0x90] sm:$0xff]
        %v363 = vld [vmem:[%s291 + $0x98] sm:$0xff]
        %v364 = vld [vmem:[%s291 + $0xa0] sm:$0xff]
        %v365 = vld [vmem:[%s291 + $0xa8] sm:$0xff]
        %v366 = vld [vmem:[%s291 + $0xb0] sm:$0xff]
        %v367 = vld [vmem:[%s291 + $0xb8] sm:$0xff]
        %v368 = vld [vmem:[%s291 + $0xc0] sm:$0xff]
        %v369 = vld [vmem:[%s291 + $0xc8] sm:$0xff]
        %v370 = vld [vmem:[%s291 + $0xd0] sm:$0xff]
        %v371 = vld [vmem:[%s291 + $0xd8] sm:$0xff]
        %v372 = vld [vmem:[%s291 + $0xe0] sm:$0xff]
        %v373 = vld [vmem:[%s291 + $0xe8] sm:$0xff]
        %v374 = vld [vmem:[%s291 + $0xf0] sm:$0xff]
        %v375 = vld [vmem:[%s291 + $0xf8] sm:$0xff]
        %v376 = vld [vmem:[%s291 + $0x100] sm:$0xff]
        %v377 = vld [vmem:[%s291 + $0x108] sm:$0xff]
        %v378 = vld [vmem:[%s291 + $0x110] sm:$0xff]
        %v379 = vld [vmem:[%s291 + $0x118] sm:$0xff]
        %v380 = vld [vmem:[%s300] sm:$0xff]
        %v381 = vld [vmem:[%s300 + $0x8] sm:$0xff]
        %v382 = vld [vmem:[%s300 + $0x10] sm:$0xff]
        %v383 = vld [vmem:[%s300 + $0x18] sm:$0xff]
        %v384 = vld [vmem:[%s300 + $0x20] sm:$0xff]
        %v385 = vld [vmem:[%s300 + $0x28] sm:$0xff]
        %v386 = vld [vmem:[%s300 + $0x30] sm:$0xff]
        %v387 = vld [vmem:[%s300 + $0x38] sm:$0xff]
        %v388 = vld [vmem:[%s300 + $0x40] sm:$0xff]
        %v389 = vld [vmem:[%s300 + $0x48] sm:$0xff]
        %v390 = vld [vmem:[%s300 + $0x50] sm:$0xff]
        %v391 = vld [vmem:[%s300 + $0x58] sm:$0xff]
        %v392 = vld [vmem:[%s300 + $0x60] sm:$0xff]
        %v393 = vld [vmem:[%s300 + $0x68] sm:$0xff]
        %v394 = vld [vmem:[%s300 + $0x70] sm:$0xff]
        %v395 = vld [vmem:[%s300 + $0x78] sm:$0xff]
        %v396 = vld [vmem:[%s300 + $0x80] sm:$0xff]
        %v397 = vld [vmem:[%s300 + $0x88] sm:$0xff]
        %v398 = vld [vmem:[%s300 + $0x90] sm:$0xff]
        %v399 = vld [vmem:[%s300 + $0x98] sm:$0xff]
        %v400 = vld [vmem:[%s300 + $0xa0] sm:$0xff]
        %v401 = vld [vmem:[%s300 + $0xa8] sm:$0xff]
        %v402 = vld [vmem:[%s300 + $0xb0] sm:$0xff]
        %v403 = vld [vmem:[%s300 + $0xb8] sm:$0xff]
        %v404 = vld [vmem:[%s300 + $0xc0] sm:$0xff]
        %v405 = vld [vmem:[%s300 + $0xc8] sm:$0xff]
        %v406 = vld [vmem:[%s300 + $0xd0] sm:$0xff]
        %v407 = vld [vmem:[%s300 + $0xd8] sm:$0xff]
        %v408 = vld [vmem:[%s300 + $0xe0] sm:$0xff]
        %v409 = vld [vmem:[%s300 + $0xe8] sm:$0xff]
        %v410 = vld [vmem:[%s300 + $0xf0] sm:$0xff]
        %v411 = vld [vmem:[%s300 + $0xf8] sm:$0xff]
        %v412 = vld [vmem:[%s300 + $0x100] sm:$0xff]
        %v413 = vld [vmem:[%s300 + $0x108] sm:$0xff]
        %v414 = vld [vmem:[%s300 + $0x110] sm:$0xff]
        %v415 = vld [vmem:[%s300 + $0x118] sm:$0xff]
        %v416 = vld [vmem:[#allocation7] sm:$0xff]
        %v417 = vld [vmem:[#allocation7 + $0x8] sm:$0xff]
        %v418 = vld [vmem:[#allocation7 + $0x10] sm:$0xff]
        %v419 = vld [vmem:[#allocation7 + $0x18] sm:$0xff]
        %v420 = vld [vmem:[#allocation7 + $0x20] sm:$0xff]
        %v421 = vld [vmem:[#allocation7 + $0x28] sm:$0xff]
        %v422 = vld [vmem:[#allocation7 + $0x30] sm:$0xff]
        %v423 = vld [vmem:[#allocation7 + $0x38] sm:$0xff]
        %v424 = vld [vmem:[#allocation7 + $0x40] sm:$0xff]
        %vm460 = vcmask 1046528
        %v461 = vrot.slane 0.0, 1
        %v462 = vsel %vm460, %v461, %v461
        %v463 = vrot.slane %v344, 1
        %v464 = vsel %vm460, %v461, %v463
        %v465 = vrot.slane %v345, 1
        %v466 = vsel %vm460, %v463, %v465
        %v467 = vrot.slane %v346, 1
        %v468 = vsel %vm460, %v465, %v467
        %v469 = vrot.slane %v347, 1
        %v470 = vsel %vm460, %v467, %v469
        %v471 = vrot.slane %v348, 1
        %v472 = vsel %vm460, %v469, %v471
        %v473 = vrot.slane %v349, 1
        %v474 = vsel %vm460, %v471, %v473
        %v475 = vrot.slane %v350, 1
        %v476 = vsel %vm460, %v473, %v475
        %v477 = vrot.slane %v351, 1
        %v478 = vsel %vm460, %v475, %v477
        %v479 = vrot.slane %v352, 1
        %v480 = vsel %vm460, %v477, %v479
        %v481 = vrot.slane %v353, 1
        %v482 = vsel %vm460, %v479, %v481
        %v483 = vrot.slane %v354, 1
        %v484 = vsel %vm460, %v481, %v483
        %v485 = vrot.slane %v355, 1
        %v486 = vsel %vm460, %v483, %v485
        %v487 = vrot.slane %v356, 1
        %v488 = vsel %vm460, %v485, %v487
        %v489 = vrot.slane %v357, 1
        %v490 = vsel %vm460, %v487, %v489
        %v491 = vrot.slane %v358, 1
        %v492 = vsel %vm460, %v489, %v491
        %v493 = vrot.slane %v359, 1
        %v494 = vsel %vm460, %v491, %v493
        %v495 = vrot.slane %v360, 1
        %v496 = vsel %vm460, %v493, %v495
        %v497 = vrot.slane %v361, 1
        %v498 = vsel %vm460, %v495, %v497
        %v499 = vrot.slane %v362, 1
        %v500 = vsel %vm460, %v497, %v499
        %v501 = vrot.slane %v363, 1
        %v502 = vsel %vm460, %v499, %v501
        %v503 = vrot.slane %v364, 1
        %v504 = vsel %vm460, %v501, %v503
        %v505 = vrot.slane %v365, 1
        %v506 = vsel %vm460, %v503, %v505
        %v507 = vrot.slane %v366, 1
        %v508 = vsel %vm460, %v505, %v507
        %v509 = vrot.slane %v367, 1
        %v510 = vsel %vm460, %v507, %v509
        %v511 = vrot.slane %v368, 1
        %v512 = vsel %vm460, %v509, %v511
        %v513 = vrot.slane %v369, 1
        %v514 = vsel %vm460, %v511, %v513
        %v515 = vrot.slane %v370, 1
        %v516 = vsel %vm460, %v513, %v515
        %v517 = vrot.slane %v371, 1
        %v518 = vsel %vm460, %v515, %v517
        %v519 = vrot.slane %v372, 1
        %v520 = vsel %vm460, %v517, %v519
        %v521 = vrot.slane %v373, 1
        %v522 = vsel %vm460, %v519, %v521
        %v523 = vrot.slane %v374, 1
        %v524 = vsel %vm460, %v521, %v523
        %v525 = vrot.slane %v375, 1
        %v526 = vsel %vm460, %v523, %v525
        %v527 = vrot.slane %v376, 1
        %v528 = vsel %vm460, %v525, %v527
        %v529 = vrot.slane %v377, 1
        %v530 = vsel %vm460, %v527, %v529
        %531 = vrot.lane.b32.xlu0 %v462, 8
        %v532 = vpop.permute.xlu0 %531
        %533 = vrot.lane.b32.xlu0 %v464, 8
        %v534 = vpop.permute.xlu0 %533
        %535 = vrot.lane.b32.xlu0 %v466, 8
        %v536 = vpop.permute.xlu0 %535
        %537 = vrot.lane.b32.xlu0 %v468, 8
        %v538 = vpop.permute.xlu0 %537
        %539 = vrot.lane.b32.xlu0 %v470, 8
        %v540 = vpop.permute.xlu0 %539
        %541 = vrot.lane.b32.xlu0 %v472, 8
        %v542 = vpop.permute.xlu0 %541
        %543 = vrot.lane.b32.xlu0 %v474, 8
        %v544 = vpop.permute.xlu0 %543
        %545 = vrot.lane.b32.xlu0 %v476, 8
        %v546 = vpop.permute.xlu0 %545
        %547 = vrot.lane.b32.xlu0 %v478, 8
        %v548 = vpop.permute.xlu0 %547
        %549 = vrot.lane.b32.xlu0 %v480, 8
        %v550 = vpop.permute.xlu0 %549
        %551 = vrot.lane.b32.xlu0 %v482, 8
        %v552 = vpop.permute.xlu0 %551
        %553 = vrot.lane.b32.xlu0 %v484, 8
        %v554 = vpop.permute.xlu0 %553
        %555 = vrot.lane.b32.xlu0 %v486, 8
        %v556 = vpop.permute.xlu0 %555
        %557 = vrot.lane.b32.xlu0 %v488, 8
        %v558 = vpop.permute.xlu0 %557
        %559 = vrot.lane.b32.xlu0 %v490, 8
        %v560 = vpop.permute.xlu0 %559
        %561 = vrot.lane.b32.xlu0 %v492, 8
        %v562 = vpop.permute.xlu0 %561
        %563 = vrot.lane.b32.xlu0 %v494, 8
        %v564 = vpop.permute.xlu0 %563
        %565 = vrot.lane.b32.xlu0 %v496, 8
        %v566 = vpop.permute.xlu0 %565
        %567 = vrot.lane.b32.xlu0 %v498, 8
        %v568 = vpop.permute.xlu0 %567
        %569 = vrot.lane.b32.xlu0 %v500, 8
        %v570 = vpop.permute.xlu0 %569
        %571 = vrot.lane.b32.xlu0 %v502, 8
        %v572 = vpop.permute.xlu0 %571
        %573 = vrot.lane.b32.xlu0 %v504, 8
        %v574 = vpop.permute.xlu0 %573
        %575 = vrot.lane.b32.xlu0 %v506, 8
        %v576 = vpop.permute.xlu0 %575
        %577 = vrot.lane.b32.xlu0 %v508, 8
        %v578 = vpop.permute.xlu0 %577
        %579 = vrot.lane.b32.xlu0 %v510, 8
        %v580 = vpop.permute.xlu0 %579
        %581 = vrot.lane.b32.xlu0 %v512, 8
        %v582 = vpop.permute.xlu0 %581
        %583 = vrot.lane.b32.xlu0 %v514, 8
        %v584 = vpop.permute.xlu0 %583
        %585 = vrot.lane.b32.xlu0 %v516, 8
        %v586 = vpop.permute.xlu0 %585
        %587 = vrot.lane.b32.xlu0 %v518, 8
        %v588 = vpop.permute.xlu0 %587
        %589 = vrot.lane.b32.xlu0 %v520, 8
        %v590 = vpop.permute.xlu0 %589
        %591 = vrot.lane.b32.xlu0 %v522, 8
        %v592 = vpop.permute.xlu0 %591
        %593 = vrot.lane.b32.xlu0 %v524, 8
        %v594 = vpop.permute.xlu0 %593
        %595 = vrot.lane.b32.xlu0 %v526, 8
        %v596 = vpop.permute.xlu0 %595
        %597 = vrot.lane.b32.xlu0 %v528, 8
        %v598 = vpop.permute.xlu0 %597
        %599 = vrot.lane.b32.xlu0 %v530, 8
        %v600 = vpop.permute.xlu0 %599
        %601 = vrot.lane.b32.xlu0 %v529, 8
        %v602 = vpop.permute.xlu0 %601
        %vm639 = vcmask 1045504
        %v640 = vrot.slane 0.0, 2
        %v641 = vsel %vm639, %v640, %v640
        %v642 = vrot.slane %v344, 2
        %v643 = vsel %vm639, %v640, %v642
        %v644 = vrot.slane %v345, 2
        %v645 = vsel %vm639, %v642, %v644
        %v646 = vrot.slane %v346, 2
        %v647 = vsel %vm639, %v644, %v646
        %v648 = vrot.slane %v347, 2
        %v649 = vsel %vm639, %v646, %v648
        %v650 = vrot.slane %v348, 2
        %v651 = vsel %vm639, %v648, %v650
        %v652 = vrot.slane %v349, 2
        %v653 = vsel %vm639, %v650, %v652
        %v654 = vrot.slane %v350, 2
        %v655 = vsel %vm639, %v652, %v654
        %v656 = vrot.slane %v351, 2
        %v657 = vsel %vm639, %v654, %v656
        %v658 = vrot.slane %v352, 2
        %v659 = vsel %vm639, %v656, %v658
        %v660 = vrot.slane %v353, 2
        %v661 = vsel %vm639, %v658, %v660
        %v662 = vrot.slane %v354, 2
        %v663 = vsel %vm639, %v660, %v662
        %v664 = vrot.slane %v355, 2
        %v665 = vsel %vm639, %v662, %v664
        %v666 = vrot.slane %v356, 2
        %v667 = vsel %vm639, %v664, %v666
        %v668 = vrot.slane %v357, 2
        %v669 = vsel %vm639, %v666, %v668
        %v670 = vrot.slane %v358, 2
        %v671 = vsel %vm639, %v668, %v670
        %v672 = vrot.slane %v359, 2
        %v673 = vsel %vm639, %v670, %v672
        %v674 = vrot.slane %v360, 2
        %v675 = vsel %vm639, %v672, %v674
        %v676 = vrot.slane %v361, 2
        %v677 = vsel %vm639, %v674, %v676
        %v678 = vrot.slane %v362, 2
        %v679 = vsel %vm639, %v676, %v678
        %v680 = vrot.slane %v363, 2
        %v681 = vsel %vm639, %v678, %v680
        %v682 = vrot.slane %v364, 2
        %v683 = vsel %vm639, %v680, %v682
        %v684 = vrot.slane %v365, 2
        %v685 = vsel %vm639, %v682, %v684
        %v686 = vrot.slane %v366, 2
        %v687 = vsel %vm639, %v684, %v686
        %v688 = vrot.slane %v367, 2
        %v689 = vsel %vm639, %v686, %v688
        %v690 = vrot.slane %v368, 2
        %v691 = vsel %vm639, %v688, %v690
        %v692 = vrot.slane %v369, 2
        %v693 = vsel %vm639, %v690, %v692
        %v694 = vrot.slane %v370, 2
        %v695 = vsel %vm639, %v692, %v694
        %v696 = vrot.slane %v371, 2
        %v697 = vsel %vm639, %v694, %v696
        %v698 = vrot.slane %v372, 2
        %v699 = vsel %vm639, %v696, %v698
        %v700 = vrot.slane %v373, 2
        %v701 = vsel %vm639, %v698, %v700
        %v702 = vrot.slane %v374, 2
        %v703 = vsel %vm639, %v700, %v702
        %v704 = vrot.slane %v375, 2
        %v705 = vsel %vm639, %v702, %v704
        %v706 = vrot.slane %v376, 2
        %v707 = vsel %vm639, %v704, %v706
        %v708 = vrot.slane %v377, 2
        %v709 = vsel %vm639, %v706, %v708
        %710 = vrot.lane.b32.xlu0 %v641, 16
        %v711 = vpop.permute.xlu0 %710
        %712 = vrot.lane.b32.xlu0 %v643, 16
        %v713 = vpop.permute.xlu0 %712
        %714 = vrot.lane.b32.xlu0 %v645, 16
        %v715 = vpop.permute.xlu0 %714
        %716 = vrot.lane.b32.xlu0 %v647, 16
        %v717 = vpop.permute.xlu0 %716
        %718 = vrot.lane.b32.xlu0 %v649, 16
        %v719 = vpop.permute.xlu0 %718
        %720 = vrot.lane.b32.xlu0 %v651, 16
        %v721 = vpop.permute.xlu0 %720
        %722 = vrot.lane.b32.xlu0 %v653, 16
        %v723 = vpop.permute.xlu0 %722
        %724 = vrot.lane.b32.xlu0 %v655, 16
        %v725 = vpop.permute.xlu0 %724
        %726 = vrot.lane.b32.xlu0 %v657, 16
        %v727 = vpop.permute.xlu0 %726
        %728 = vrot.lane.b32.xlu0 %v659, 16
        %v729 = vpop.permute.xlu0 %728
        %730 = vrot.lane.b32.xlu0 %v661, 16
        %v731 = vpop.permute.xlu0 %730
        %732 = vrot.lane.b32.xlu0 %v663, 16
        %v733 = vpop.permute.xlu0 %732
        %734 = vrot.lane.b32.xlu0 %v665, 16
        %v735 = vpop.permute.xlu0 %734
        %736 = vrot.lane.b32.xlu0 %v667, 16
        %v737 = vpop.permute.xlu0 %736
        %738 = vrot.lane.b32.xlu0 %v669, 16
        %v739 = vpop.permute.xlu0 %738
        %740 = vrot.lane.b32.xlu0 %v671, 16
        %v741 = vpop.permute.xlu0 %740
        %742 = vrot.lane.b32.xlu0 %v673, 16
        %v743 = vpop.permute.xlu0 %742
        %744 = vrot.lane.b32.xlu0 %v675, 16
        %v745 = vpop.permute.xlu0 %744
        %746 = vrot.lane.b32.xlu0 %v677, 16
        %v747 = vpop.permute.xlu0 %746
        %748 = vrot.lane.b32.xlu0 %v679, 16
        %v749 = vpop.permute.xlu0 %748
        %750 = vrot.lane.b32.xlu0 %v681, 16
        %v751 = vpop.permute.xlu0 %750
        %752 = vrot.lane.b32.xlu0 %v683, 16
        %v753 = vpop.permute.xlu0 %752
        %754 = vrot.lane.b32.xlu0 %v685, 16
        %v755 = vpop.permute.xlu0 %754
        %756 = vrot.lane.b32.xlu0 %v687, 16
        %v757 = vpop.permute.xlu0 %756
        %758 = vrot.lane.b32.xlu0 %v689, 16
        %v759 = vpop.permute.xlu0 %758
        %760 = vrot.lane.b32.xlu0 %v691, 16
        %v761 = vpop.permute.xlu0 %760
        %762 = vrot.lane.b32.xlu0 %v693, 16
        %v763 = vpop.permute.xlu0 %762
        %764 = vrot.lane.b32.xlu0 %v695, 16
        %v765 = vpop.permute.xlu0 %764
        %766 = vrot.lane.b32.xlu0 %v697, 16
        %v767 = vpop.permute.xlu0 %766
        %768 = vrot.lane.b32.xlu0 %v699, 16
        %v769 = vpop.permute.xlu0 %768
        %770 = vrot.lane.b32.xlu0 %v701, 16
        %v771 = vpop.permute.xlu0 %770
        %772 = vrot.lane.b32.xlu0 %v703, 16
        %v773 = vpop.permute.xlu0 %772
        %774 = vrot.lane.b32.xlu0 %v705, 16
        %v775 = vpop.permute.xlu0 %774
        %776 = vrot.lane.b32.xlu0 %v707, 16
        %v777 = vpop.permute.xlu0 %776
        %778 = vrot.lane.b32.xlu0 %v709, 16
        %v779 = vpop.permute.xlu0 %778
        %780 = vrot.lane.b32.xlu0 %v708, 16
        %v781 = vpop.permute.xlu0 %780
        %v820 = vrot.slane %v378, 2
        %v821 = vsel %vm639, %v708, %v820
        %v822 = vrot.slane %v379, 2
        %v823 = vsel %vm639, %v820, %v822
        %824 = vrot.lane.b32.xlu0 %v643, 24
        %v825 = vpop.permute.xlu0 %824
        %826 = vrot.lane.b32.xlu0 %v645, 24
        %v827 = vpop.permute.xlu0 %826
        %828 = vrot.lane.b32.xlu0 %v647, 24
        %v829 = vpop.permute.xlu0 %828
        %830 = vrot.lane.b32.xlu0 %v649, 24
        %v831 = vpop.permute.xlu0 %830
        %832 = vrot.lane.b32.xlu0 %v651, 24
        %v833 = vpop.permute.xlu0 %832
        %834 = vrot.lane.b32.xlu0 %v653, 24
        %v835 = vpop.permute.xlu0 %834
        %836 = vrot.lane.b32.xlu0 %v655, 24
        %v837 = vpop.permute.xlu0 %836
        %838 = vrot.lane.b32.xlu0 %v657, 24
        %v839 = vpop.permute.xlu0 %838
        %840 = vrot.lane.b32.xlu0 %v659, 24
        %v841 = vpop.permute.xlu0 %840
        %842 = vrot.lane.b32.xlu0 %v661, 24
        %v843 = vpop.permute.xlu0 %842
        %844 = vrot.lane.b32.xlu0 %v663, 24
        %v845 = vpop.permute.xlu0 %844
        %846 = vrot.lane.b32.xlu0 %v665, 24
        %v847 = vpop.permute.xlu0 %846
        %848 = vrot.lane.b32.xlu0 %v667, 24
        %v849 = vpop.permute.xlu0 %848
        %850 = vrot.lane.b32.xlu0 %v669, 24
        %v851 = vpop.permute.xlu0 %850
        %852 = vrot.lane.b32.xlu0 %v671, 24
        %v853 = vpop.permute.xlu0 %852
        %854 = vrot.lane.b32.xlu0 %v673, 24
        %v855 = vpop.permute.xlu0 %854
        %856 = vrot.lane.b32.xlu0 %v675, 24
        %v857 = vpop.permute.xlu0 %856
        %858 = vrot.lane.b32.xlu0 %v677, 24
        %v859 = vpop.permute.xlu0 %858
        %860 = vrot.lane.b32.xlu0 %v679, 24
        %v861 = vpop.permute.xlu0 %860
        %862 = vrot.lane.b32.xlu0 %v681, 24
        %v863 = vpop.permute.xlu0 %862
        %864 = vrot.lane.b32.xlu0 %v683, 24
        %v865 = vpop.permute.xlu0 %864
        %866 = vrot.lane.b32.xlu0 %v685, 24
        %v867 = vpop.permute.xlu0 %866
        %868 = vrot.lane.b32.xlu0 %v687, 24
        %v869 = vpop.permute.xlu0 %868
        %870 = vrot.lane.b32.xlu0 %v689, 24
        %v871 = vpop.permute.xlu0 %870
        %872 = vrot.lane.b32.xlu0 %v691, 24
        %v873 = vpop.permute.xlu0 %872
        %874 = vrot.lane.b32.xlu0 %v693, 24
        %v875 = vpop.permute.xlu0 %874
        %876 = vrot.lane.b32.xlu0 %v695, 24
        %v877 = vpop.permute.xlu0 %876
        %878 = vrot.lane.b32.xlu0 %v697, 24
        %v879 = vpop.permute.xlu0 %878
        %880 = vrot.lane.b32.xlu0 %v699, 24
        %v881 = vpop.permute.xlu0 %880
        %882 = vrot.lane.b32.xlu0 %v701, 24
        %v883 = vpop.permute.xlu0 %882
        %884 = vrot.lane.b32.xlu0 %v703, 24
        %v885 = vpop.permute.xlu0 %884
        %886 = vrot.lane.b32.xlu0 %v705, 24
        %v887 = vpop.permute.xlu0 %886
        %888 = vrot.lane.b32.xlu0 %v707, 24
        %v889 = vpop.permute.xlu0 %888
        %890 = vrot.lane.b32.xlu0 %v709, 24
        %v891 = vpop.permute.xlu0 %890
        %892 = vrot.lane.b32.xlu0 %v821, 24
        %v893 = vpop.permute.xlu0 %892
        %894 = vrot.lane.b32.xlu0 %v823, 24
        %v895 = vpop.permute.xlu0 %894
        %896 = vrot.lane.b32.xlu0 %v822, 24
        %v897 = vpop.permute.xlu0 %896
        %vm935 = vcmask 1044480
        %v936 = vrot.slane %v344, 3
        %v937 = vrot.slane %v345, 3
        %v938 = vsel %vm935, %v936, %v937
        %v939 = vrot.slane %v346, 3
        %v940 = vsel %vm935, %v937, %v939
        %v941 = vrot.slane %v347, 3
        %v942 = vsel %vm935, %v939, %v941
        %v943 = vrot.slane %v348, 3
        %v944 = vsel %vm935, %v941, %v943
        %v945 = vrot.slane %v349, 3
        %v946 = vsel %vm935, %v943, %v945
        %v947 = vrot.slane %v350, 3
        %v948 = vsel %vm935, %v945, %v947
        %v949 = vrot.slane %v351, 3
        %v950 = vsel %vm935, %v947, %v949
        %v951 = vrot.slane %v352, 3
        %v952 = vsel %vm935, %v949, %v951
        %v953 = vrot.slane %v353, 3
        %v954 = vsel %vm935, %v951, %v953
        %v955 = vrot.slane %v354, 3
        %v956 = vsel %vm935, %v953, %v955
        %v957 = vrot.slane %v355, 3
        %v958 = vsel %vm935, %v955, %v957
        %v959 = vrot.slane %v356, 3
        %v960 = vsel %vm935, %v957, %v959
        %v961 = vrot.slane %v357, 3
        %v962 = vsel %vm935, %v959, %v961
        %v963 = vrot.slane %v358, 3
        %v964 = vsel %vm935, %v961, %v963
        %v965 = vrot.slane %v359, 3
        %v966 = vsel %vm935, %v963, %v965
        %v967 = vrot.slane %v360, 3
        %v968 = vsel %vm935, %v965, %v967
        %v969 = vrot.slane %v361, 3
        %v970 = vsel %vm935, %v967, %v969
        %v971 = vrot.slane %v362, 3
        %v972 = vsel %vm935, %v969, %v971
        %v973 = vrot.slane %v363, 3
        %v974 = vsel %vm935, %v971, %v973
        %v975 = vrot.slane %v364, 3
        %v976 = vsel %vm935, %v973, %v975
        %v977 = vrot.slane %v365, 3
        %v978 = vsel %vm935, %v975, %v977
        %v979 = vrot.slane %v366, 3
        %v980 = vsel %vm935, %v977, %v979
        %v981 = vrot.slane %v367, 3
        %v982 = vsel %vm935, %v979, %v981
        %v983 = vrot.slane %v368, 3
        %v984 = vsel %vm935, %v981, %v983
        %v985 = vrot.slane %v369, 3
        %v986 = vsel %vm935, %v983, %v985
        %v987 = vrot.slane %v370, 3
        %v988 = vsel %vm935, %v985, %v987
        %v989 = vrot.slane %v371, 3
        %v990 = vsel %vm935, %v987, %v989
        %v991 = vrot.slane %v372, 3
        %v992 = vsel %vm935, %v989, %v991
        %v993 = vrot.slane %v373, 3
        %v994 = vsel %vm935, %v991, %v993
        %v995 = vrot.slane %v374, 3
        %v996 = vsel %vm935, %v993, %v995
        %v997 = vrot.slane %v375, 3
        %v998 = vsel %vm935, %v995, %v997
        %v999 = vrot.slane %v376, 3
        %v1000 = vsel %vm935, %v997, %v999
        %v1001 = vrot.slane %v377, 3
        %v1002 = vsel %vm935, %v999, %v1001
        %v1003 = vrot.slane %v378, 3
        %v1004 = vsel %vm935, %v1001, %v1003
        %v1005 = vrot.slane %v379, 3
        %v1006 = vsel %vm935, %v1003, %v1005
        %1007 = vrot.lane.b32.xlu0 %v936, 32
        %v1008 = vpop.permute.xlu0 %1007
        %1009 = vrot.lane.b32.xlu0 %v938, 32
        %v1010 = vpop.permute.xlu0 %1009
        %1011 = vrot.lane.b32.xlu0 %v940, 32
        %v1012 = vpop.permute.xlu0 %1011
        %1013 = vrot.lane.b32.xlu0 %v942, 32
        %v1014 = vpop.permute.xlu0 %1013
        %1015 = vrot.lane.b32.xlu0 %v944, 32
        %v1016 = vpop.permute.xlu0 %1015
        %1017 = vrot.lane.b32.xlu0 %v946, 32
        %v1018 = vpop.permute.xlu0 %1017
        %1019 = vrot.lane.b32.xlu0 %v948, 32
        %v1020 = vpop.permute.xlu0 %1019
        %1021 = vrot.lane.b32.xlu0 %v950, 32
        %v1022 = vpop.permute.xlu0 %1021
        %1023 = vrot.lane.b32.xlu0 %v952, 32
        %v1024 = vpop.permute.xlu0 %1023
        %1025 = vrot.lane.b32.xlu0 %v954, 32
        %v1026 = vpop.permute.xlu0 %1025
        %1027 = vrot.lane.b32.xlu0 %v956, 32
        %v1028 = vpop.permute.xlu0 %1027
        %1029 = vrot.lane.b32.xlu0 %v958, 32
        %v1030 = vpop.permute.xlu0 %1029
        %1031 = vrot.lane.b32.xlu0 %v960, 32
        %v1032 = vpop.permute.xlu0 %1031
        %1033 = vrot.lane.b32.xlu0 %v962, 32
        %v1034 = vpop.permute.xlu0 %1033
        %1035 = vrot.lane.b32.xlu0 %v964, 32
        %v1036 = vpop.permute.xlu0 %1035
        %1037 = vrot.lane.b32.xlu0 %v966, 32
        %v1038 = vpop.permute.xlu0 %1037
        %1039 = vrot.lane.b32.xlu0 %v968, 32
        %v1040 = vpop.permute.xlu0 %1039
        %1041 = vrot.lane.b32.xlu0 %v970, 32
        %v1042 = vpop.permute.xlu0 %1041
        %1043 = vrot.lane.b32.xlu0 %v972, 32
        %v1044 = vpop.permute.xlu0 %1043
        %1045 = vrot.lane.b32.xlu0 %v974, 32
        %v1046 = vpop.permute.xlu0 %1045
        %1047 = vrot.lane.b32.xlu0 %v976, 32
        %v1048 = vpop.permute.xlu0 %1047
        %1049 = vrot.lane.b32.xlu0 %v978, 32
        %v1050 = vpop.permute.xlu0 %1049
        %1051 = vrot.lane.b32.xlu0 %v980, 32
        %v1052 = vpop.permute.xlu0 %1051
        %1053 = vrot.lane.b32.xlu0 %v982, 32
        %v1054 = vpop.permute.xlu0 %1053
        %1055 = vrot.lane.b32.xlu0 %v984, 32
        %v1056 = vpop.permute.xlu0 %1055
        %1057 = vrot.lane.b32.xlu0 %v986, 32
        %v1058 = vpop.permute.xlu0 %1057
        %1059 = vrot.lane.b32.xlu0 %v988, 32
        %v1060 = vpop.permute.xlu0 %1059
        %1061 = vrot.lane.b32.xlu0 %v990, 32
        %v1062 = vpop.permute.xlu0 %1061
        %1063 = vrot.lane.b32.xlu0 %v992, 32
        %v1064 = vpop.permute.xlu0 %1063
        %1065 = vrot.lane.b32.xlu0 %v994, 32
        %v1066 = vpop.permute.xlu0 %1065
        %1067 = vrot.lane.b32.xlu0 %v996, 32
        %v1068 = vpop.permute.xlu0 %1067
        %1069 = vrot.lane.b32.xlu0 %v998, 32
        %v1070 = vpop.permute.xlu0 %1069
        %1071 = vrot.lane.b32.xlu0 %v1000, 32
        %v1072 = vpop.permute.xlu0 %1071
        %1073 = vrot.lane.b32.xlu0 %v1002, 32
        %v1074 = vpop.permute.xlu0 %1073
        %1075 = vrot.lane.b32.xlu0 %v1004, 32
        %v1076 = vpop.permute.xlu0 %1075
        %1077 = vrot.lane.b32.xlu0 %v1006, 32
        %v1078 = vpop.permute.xlu0 %1077
        %1079 = vrot.lane.b32.xlu0 %v1005, 32
        %v1080 = vpop.permute.xlu0 %1079
        %vm1118 = vcmask 1043456
        %v1119 = vrot.slane %v344, 4
        %v1120 = vrot.slane %v345, 4
        %v1121 = vsel %vm1118, %v1119, %v1120
        %v1122 = vrot.slane %v346, 4
        %v1123 = vsel %vm1118, %v1120, %v1122
        %v1124 = vrot.slane %v347, 4
        %v1125 = vsel %vm1118, %v1122, %v1124
        %v1126 = vrot.slane %v348, 4
        %v1127 = vsel %vm1118, %v1124, %v1126
        %v1128 = vrot.slane %v349, 4
        %v1129 = vsel %vm1118, %v1126, %v1128
        %v1130 = vrot.slane %v350, 4
        %v1131 = vsel %vm1118, %v1128, %v1130
        %v1132 = vrot.slane %v351, 4
        %v1133 = vsel %vm1118, %v1130, %v1132
        %v1134 = vrot.slane %v352, 4
        %v1135 = vsel %vm1118, %v1132, %v1134
        %v1136 = vrot.slane %v353, 4
        %v1137 = vsel %vm1118, %v1134, %v1136
        %v1138 = vrot.slane %v354, 4
        %v1139 = vsel %vm1118, %v1136, %v1138
        %v1140 = vrot.slane %v355, 4
        %v1141 = vsel %vm1118, %v1138, %v1140
        %v1142 = vrot.slane %v356, 4
        %v1143 = vsel %vm1118, %v1140, %v1142
        %v1144 = vrot.slane %v357, 4
        %v1145 = vsel %vm1118, %v1142, %v1144
        %v1146 = vrot.slane %v358, 4
        %v1147 = vsel %vm1118, %v1144, %v1146
        %v1148 = vrot.slane %v359, 4
        %v1149 = vsel %vm1118, %v1146, %v1148
        %v1150 = vrot.slane %v360, 4
        %v1151 = vsel %vm1118, %v1148, %v1150
        %v1152 = vrot.slane %v361, 4
        %v1153 = vsel %vm1118, %v1150, %v1152
        %v1154 = vrot.slane %v362, 4
        %v1155 = vsel %vm1118, %v1152, %v1154
        %v1156 = vrot.slane %v363, 4
        %v1157 = vsel %vm1118, %v1154, %v1156
        %v1158 = vrot.slane %v364, 4
        %v1159 = vsel %vm1118, %v1156, %v1158
        %v1160 = vrot.slane %v365, 4
        %v1161 = vsel %vm1118, %v1158, %v1160
        %v1162 = vrot.slane %v366, 4
        %v1163 = vsel %vm1118, %v1160, %v1162
        %v1164 = vrot.slane %v367, 4
        %v1165 = vsel %vm1118, %v1162, %v1164
        %v1166 = vrot.slane %v368, 4
        %v1167 = vsel %vm1118, %v1164, %v1166
        %v1168 = vrot.slane %v369, 4
        %v1169 = vsel %vm1118, %v1166, %v1168
        %v1170 = vrot.slane %v370, 4
        %v1171 = vsel %vm1118, %v1168, %v1170
        %v1172 = vrot.slane %v371, 4
        %v1173 = vsel %vm1118, %v1170, %v1172
        %v1174 = vrot.slane %v372, 4
        %v1175 = vsel %vm1118, %v1172, %v1174
        %v1176 = vrot.slane %v373, 4
        %v1177 = vsel %vm1118, %v1174, %v1176
        %v1178 = vrot.slane %v374, 4
        %v1179 = vsel %vm1118, %v1176, %v1178
        %v1180 = vrot.slane %v375, 4
        %v1181 = vsel %vm1118, %v1178, %v1180
        %v1182 = vrot.slane %v376, 4
        %v1183 = vsel %vm1118, %v1180, %v1182
        %v1184 = vrot.slane %v377, 4
        %v1185 = vsel %vm1118, %v1182, %v1184
        %v1186 = vrot.slane %v378, 4
        %v1187 = vsel %vm1118, %v1184, %v1186
        %v1188 = vrot.slane %v379, 4
        %v1189 = vsel %vm1118, %v1186, %v1188
        %v1190 = vrot.slane 0.0, 4
        %v1191 = vsel %vm1118, %v1188, %v1190
        %1192 = vrot.lane.b32.xlu0 %v1119, 40
        %v1193 = vpop.permute.xlu0 %1192
        %1194 = vrot.lane.b32.xlu0 %v1121, 40
        %v1195 = vpop.permute.xlu0 %1194
        %1196 = vrot.lane.b32.xlu0 %v1123, 40
        %v1197 = vpop.permute.xlu0 %1196
        %1198 = vrot.lane.b32.xlu0 %v1125, 40
        %v1199 = vpop.permute.xlu0 %1198
        %1200 = vrot.lane.b32.xlu0 %v1127, 40
        %v1201 = vpop.permute.xlu0 %1200
        %1202 = vrot.lane.b32.xlu0 %v1129, 40
        %v1203 = vpop.permute.xlu0 %1202
        %1204 = vrot.lane.b32.xlu0 %v1131, 40
        %v1205 = vpop.permute.xlu0 %1204
        %1206 = vrot.lane.b32.xlu0 %v1133, 40
        %v1207 = vpop.permute.xlu0 %1206
        %1208 = vrot.lane.b32.xlu0 %v1135, 40
        %v1209 = vpop.permute.xlu0 %1208
        %1210 = vrot.lane.b32.xlu0 %v1137, 40
        %v1211 = vpop.permute.xlu0 %1210
        %1212 = vrot.lane.b32.xlu0 %v1139, 40
        %v1213 = vpop.permute.xlu0 %1212
        %1214 = vrot.lane.b32.xlu0 %v1141, 40
        %v1215 = vpop.permute.xlu0 %1214
        %1216 = vrot.lane.b32.xlu0 %v1143, 40
        %v1217 = vpop.permute.xlu0 %1216
        %1218 = vrot.lane.b32.xlu0 %v1145, 40
        %v1219 = vpop.permute.xlu0 %1218
        %1220 = vrot.lane.b32.xlu0 %v1147, 40
        %v1221 = vpop.permute.xlu0 %1220
        %1222 = vrot.lane.b32.xlu0 %v1149, 40
        %v1223 = vpop.permute.xlu0 %1222
        %1224 = vrot.lane.b32.xlu0 %v1151, 40
        %v1225 = vpop.permute.xlu0 %1224
        %1226 = vrot.lane.b32.xlu0 %v1153, 40
        %v1227 = vpop.permute.xlu0 %1226
        %1228 = vrot.lane.b32.xlu0 %v1155, 40
        %v1229 = vpop.permute.xlu0 %1228
        %1230 = vrot.lane.b32.xlu0 %v1157, 40
        %v1231 = vpop.permute.xlu0 %1230
        %1232 = vrot.lane.b32.xlu0 %v1159, 40
        %v1233 = vpop.permute.xlu0 %1232
        %1234 = vrot.lane.b32.xlu0 %v1161, 40
        %v1235 = vpop.permute.xlu0 %1234
        %1236 = vrot.lane.b32.xlu0 %v1163, 40
        %v1237 = vpop.permute.xlu0 %1236
        %1238 = vrot.lane.b32.xlu0 %v1165, 40
        %v1239 = vpop.permute.xlu0 %1238
        %1240 = vrot.lane.b32.xlu0 %v1167, 40
        %v1241 = vpop.permute.xlu0 %1240
        %1242 = vrot.lane.b32.xlu0 %v1169, 40
        %v1243 = vpop.permute.xlu0 %1242
        %1244 = vrot.lane.b32.xlu0 %v1171, 40
        %v1245 = vpop.permute.xlu0 %1244
        %1246 = vrot.lane.b32.xlu0 %v1173, 40
        %v1247 = vpop.permute.xlu0 %1246
        %1248 = vrot.lane.b32.xlu0 %v1175, 40
        %v1249 = vpop.permute.xlu0 %1248
        %1250 = vrot.lane.b32.xlu0 %v1177, 40
        %v1251 = vpop.permute.xlu0 %1250
        %1252 = vrot.lane.b32.xlu0 %v1179, 40
        %v1253 = vpop.permute.xlu0 %1252
        %1254 = vrot.lane.b32.xlu0 %v1181, 40
        %v1255 = vpop.permute.xlu0 %1254
        %1256 = vrot.lane.b32.xlu0 %v1183, 40
        %v1257 = vpop.permute.xlu0 %1256
        %1258 = vrot.lane.b32.xlu0 %v1185, 40
        %v1259 = vpop.permute.xlu0 %1258
        %1260 = vrot.lane.b32.xlu0 %v1187, 40
        %v1261 = vpop.permute.xlu0 %1260
        %1262 = vrot.lane.b32.xlu0 %v1189, 40
        %v1263 = vpop.permute.xlu0 %1262
        %1264 = vrot.lane.b32.xlu0 %v1191, 40
        %v1265 = vpop.permute.xlu0 %1264
        %v1303 = vsel %vm1118, %v1190, %v1190
        %1304 = vrot.lane.b32.xlu0 %v1122, 48
        %v1305 = vpop.permute.xlu0 %1304
        %1306 = vrot.lane.b32.xlu0 %v1125, 48
        %v1307 = vpop.permute.xlu0 %1306
        %1308 = vrot.lane.b32.xlu0 %v1127, 48
        %v1309 = vpop.permute.xlu0 %1308
        %1310 = vrot.lane.b32.xlu0 %v1129, 48
        %v1311 = vpop.permute.xlu0 %1310
        %1312 = vrot.lane.b32.xlu0 %v1131, 48
        %v1313 = vpop.permute.xlu0 %1312
        %1314 = vrot.lane.b32.xlu0 %v1133, 48
        %v1315 = vpop.permute.xlu0 %1314
        %1316 = vrot.lane.b32.xlu0 %v1135, 48
        %v1317 = vpop.permute.xlu0 %1316
        %1318 = vrot.lane.b32.xlu0 %v1137, 48
        %v1319 = vpop.permute.xlu0 %1318
        %1320 = vrot.lane.b32.xlu0 %v1139, 48
        %v1321 = vpop.permute.xlu0 %1320
        %1322 = vrot.lane.b32.xlu0 %v1141, 48
        %v1323 = vpop.permute.xlu0 %1322
        %1324 = vrot.lane.b32.xlu0 %v1143, 48
        %v1325 = vpop.permute.xlu0 %1324
        %1326 = vrot.lane.b32.xlu0 %v1145, 48
        %v1327 = vpop.permute.xlu0 %1326
        %1328 = vrot.lane.b32.xlu0 %v1147, 48
        %v1329 = vpop.permute.xlu0 %1328
        %1330 = vrot.lane.b32.xlu0 %v1149, 48
        %v1331 = vpop.permute.xlu0 %1330
        %1332 = vrot.lane.b32.xlu0 %v1151, 48
        %v1333 = vpop.permute.xlu0 %1332
        %1334 = vrot.lane.b32.xlu0 %v1153, 48
        %v1335 = vpop.permute.xlu0 %1334
        %1336 = vrot.lane.b32.xlu0 %v1155, 48
        %v1337 = vpop.permute.xlu0 %1336
        %1338 = vrot.lane.b32.xlu0 %v1157, 48
        %v1339 = vpop.permute.xlu0 %1338
        %1340 = vrot.lane.b32.xlu0 %v1159, 48
        %v1341 = vpop.permute.xlu0 %1340
        %1342 = vrot.lane.b32.xlu0 %v1161, 48
        %v1343 = vpop.permute.xlu0 %1342
        %1344 = vrot.lane.b32.xlu0 %v1163, 48
        %v1345 = vpop.permute.xlu0 %1344
        %1346 = vrot.lane.b32.xlu0 %v1165, 48
        %v1347 = vpop.permute.xlu0 %1346
        %1348 = vrot.lane.b32.xlu0 %v1167, 48
        %v1349 = vpop.permute.xlu0 %1348
        %1350 = vrot.lane.b32.xlu0 %v1169, 48
        %v1351 = vpop.permute.xlu0 %1350
        %1352 = vrot.lane.b32.xlu0 %v1171, 48
        %v1353 = vpop.permute.xlu0 %1352
        %1354 = vrot.lane.b32.xlu0 %v1173, 48
        %v1355 = vpop.permute.xlu0 %1354
        %1356 = vrot.lane.b32.xlu0 %v1175, 48
        %v1357 = vpop.permute.xlu0 %1356
        %1358 = vrot.lane.b32.xlu0 %v1177, 48
        %v1359 = vpop.permute.xlu0 %1358
        %1360 = vrot.lane.b32.xlu0 %v1179, 48
        %v1361 = vpop.permute.xlu0 %1360
        %1362 = vrot.lane.b32.xlu0 %v1181, 48
        %v1363 = vpop.permute.xlu0 %1362
        %1364 = vrot.lane.b32.xlu0 %v1183, 48
        %v1365 = vpop.permute.xlu0 %1364
        %1366 = vrot.lane.b32.xlu0 %v1185, 48
        %v1367 = vpop.permute.xlu0 %1366
        %1368 = vrot.lane.b32.xlu0 %v1187, 48
        %v1369 = vpop.permute.xlu0 %1368
        %1370 = vrot.lane.b32.xlu0 %v1189, 48
        %v1371 = vpop.permute.xlu0 %1370
        %1372 = vrot.lane.b32.xlu0 %v1191, 48
        %v1373 = vpop.permute.xlu0 %1372
        %1374 = vrot.lane.b32.xlu0 %v1303, 48
        %v1375 = vpop.permute.xlu0 %1374
        %vm1412 = vcmask 1042432
        %v1413 = vrot.slane %v346, 5
        %v1414 = vrot.slane %v347, 5
        %v1415 = vsel %vm1412, %v1413, %v1414
        %v1416 = vrot.slane %v348, 5
        %v1417 = vsel %vm1412, %v1414, %v1416
        %v1418 = vrot.slane %v349, 5
        %v1419 = vsel %vm1412, %v1416, %v1418
        %v1420 = vrot.slane %v350, 5
        %v1421 = vsel %vm1412, %v1418, %v1420
        %v1422 = vrot.slane %v351, 5
        %v1423 = vsel %vm1412, %v1420, %v1422
        %v1424 = vrot.slane %v352, 5
        %v1425 = vsel %vm1412, %v1422, %v1424
        %v1426 = vrot.slane %v353, 5
        %v1427 = vsel %vm1412, %v1424, %v1426
        %v1428 = vrot.slane %v354, 5
        %v1429 = vsel %vm1412, %v1426, %v1428
        %v1430 = vrot.slane %v355, 5
        %v1431 = vsel %vm1412, %v1428, %v1430
        %v1432 = vrot.slane %v356, 5
        %v1433 = vsel %vm1412, %v1430, %v1432
        %v1434 = vrot.slane %v357, 5
        %v1435 = vsel %vm1412, %v1432, %v1434
        %v1436 = vrot.slane %v358, 5
        %v1437 = vsel %vm1412, %v1434, %v1436
        %v1438 = vrot.slane %v359, 5
        %v1439 = vsel %vm1412, %v1436, %v1438
        %v1440 = vrot.slane %v360, 5
        %v1441 = vsel %vm1412, %v1438, %v1440
        %v1442 = vrot.slane %v361, 5
        %v1443 = vsel %vm1412, %v1440, %v1442
        %v1444 = vrot.slane %v362, 5
        %v1445 = vsel %vm1412, %v1442, %v1444
        %v1446 = vrot.slane %v363, 5
        %v1447 = vsel %vm1412, %v1444, %v1446
        %v1448 = vrot.slane %v364, 5
        %v1449 = vsel %vm1412, %v1446, %v1448
        %v1450 = vrot.slane %v365, 5
        %v1451 = vsel %vm1412, %v1448, %v1450
        %v1452 = vrot.slane %v366, 5
        %v1453 = vsel %vm1412, %v1450, %v1452
        %v1454 = vrot.slane %v367, 5
        %v1455 = vsel %vm1412, %v1452, %v1454
        %v1456 = vrot.slane %v368, 5
        %v1457 = vsel %vm1412, %v1454, %v1456
        %v1458 = vrot.slane %v369, 5
        %v1459 = vsel %vm1412, %v1456, %v1458
        %v1460 = vrot.slane %v370, 5
        %v1461 = vsel %vm1412, %v1458, %v1460
        %v1462 = vrot.slane %v371, 5
        %v1463 = vsel %vm1412, %v1460, %v1462
        %v1464 = vrot.slane %v372, 5
        %v1465 = vsel %vm1412, %v1462, %v1464
        %v1466 = vrot.slane %v373, 5
        %v1467 = vsel %vm1412, %v1464, %v1466
        %v1468 = vrot.slane %v374, 5
        %v1469 = vsel %vm1412, %v1466, %v1468
        %v1470 = vrot.slane %v375, 5
        %v1471 = vsel %vm1412, %v1468, %v1470
        %v1472 = vrot.slane %v376, 5
        %v1473 = vsel %vm1412, %v1470, %v1472
        %v1474 = vrot.slane %v377, 5
        %v1475 = vsel %vm1412, %v1472, %v1474
        %v1476 = vrot.slane %v378, 5
        %v1477 = vsel %vm1412, %v1474, %v1476
        %v1478 = vrot.slane %v379, 5
        %v1479 = vsel %vm1412, %v1476, %v1478
        %v1480 = vrot.slane 0.0, 5
        %v1481 = vsel %vm1412, %v1478, %v1480
        %v1482 = vsel %vm1412, %v1480, %v1480
        %1483 = vrot.lane.b32.xlu0 %v1413, 56
        %v1484 = vpop.permute.xlu0 %1483
        %1485 = vrot.lane.b32.xlu0 %v1415, 56
        %v1486 = vpop.permute.xlu0 %1485
        %1487 = vrot.lane.b32.xlu0 %v1417, 56
        %v1488 = vpop.permute.xlu0 %1487
        %1489 = vrot.lane.b32.xlu0 %v1419, 56
        %v1490 = vpop.permute.xlu0 %1489
        %1491 = vrot.lane.b32.xlu0 %v1421, 56
        %v1492 = vpop.permute.xlu0 %1491
        %1493 = vrot.lane.b32.xlu0 %v1423, 56
        %v1494 = vpop.permute.xlu0 %1493
        %1495 = vrot.lane.b32.xlu0 %v1425, 56
        %v1496 = vpop.permute.xlu0 %1495
        %1497 = vrot.lane.b32.xlu0 %v1427, 56
        %v1498 = vpop.permute.xlu0 %1497
        %1499 = vrot.lane.b32.xlu0 %v1429, 56
        %v1500 = vpop.permute.xlu0 %1499
        %1501 = vrot.lane.b32.xlu0 %v1431, 56
        %v1502 = vpop.permute.xlu0 %1501
        %1503 = vrot.lane.b32.xlu0 %v1433, 56
        %v1504 = vpop.permute.xlu0 %1503
        %1505 = vrot.lane.b32.xlu0 %v1435, 56
        %v1506 = vpop.permute.xlu0 %1505
        %1507 = vrot.lane.b32.xlu0 %v1437, 56
        %v1508 = vpop.permute.xlu0 %1507
        %1509 = vrot.lane.b32.xlu0 %v1439, 56
        %v1510 = vpop.permute.xlu0 %1509
        %1511 = vrot.lane.b32.xlu0 %v1441, 56
        %v1512 = vpop.permute.xlu0 %1511
        %1513 = vrot.lane.b32.xlu0 %v1443, 56
        %v1514 = vpop.permute.xlu0 %1513
        %1515 = vrot.lane.b32.xlu0 %v1445, 56
        %v1516 = vpop.permute.xlu0 %1515
        %1517 = vrot.lane.b32.xlu0 %v1447, 56
        %v1518 = vpop.permute.xlu0 %1517
        %1519 = vrot.lane.b32.xlu0 %v1449, 56
        %v1520 = vpop.permute.xlu0 %1519
        %1521 = vrot.lane.b32.xlu0 %v1451, 56
        %v1522 = vpop.permute.xlu0 %1521
        %1523 = vrot.lane.b32.xlu0 %v1453, 56
        %v1524 = vpop.permute.xlu0 %1523
        %1525 = vrot.lane.b32.xlu0 %v1455, 56
        %v1526 = vpop.permute.xlu0 %1525
        %1527 = vrot.lane.b32.xlu0 %v1457, 56
        %v1528 = vpop.permute.xlu0 %1527
        %1529 = vrot.lane.b32.xlu0 %v1459, 56
        %v1530 = vpop.permute.xlu0 %1529
        %1531 = vrot.lane.b32.xlu0 %v1461, 56
        %v1532 = vpop.permute.xlu0 %1531
        %1533 = vrot.lane.b32.xlu0 %v1463, 56
        %v1534 = vpop.permute.xlu0 %1533
        %1535 = vrot.lane.b32.xlu0 %v1465, 56
        %v1536 = vpop.permute.xlu0 %1535
        %1537 = vrot.lane.b32.xlu0 %v1467, 56
        %v1538 = vpop.permute.xlu0 %1537
        %1539 = vrot.lane.b32.xlu0 %v1469, 56
        %v1540 = vpop.permute.xlu0 %1539
        %1541 = vrot.lane.b32.xlu0 %v1471, 56
        %v1542 = vpop.permute.xlu0 %1541
        %1543 = vrot.lane.b32.xlu0 %v1473, 56
        %v1544 = vpop.permute.xlu0 %1543
        %1545 = vrot.lane.b32.xlu0 %v1475, 56
        %v1546 = vpop.permute.xlu0 %1545
        %1547 = vrot.lane.b32.xlu0 %v1477, 56
        %v1548 = vpop.permute.xlu0 %1547
        %1549 = vrot.lane.b32.xlu0 %v1479, 56
        %v1550 = vpop.permute.xlu0 %1549
        %1551 = vrot.lane.b32.xlu0 %v1481, 56
        %v1552 = vpop.permute.xlu0 %1551
        %1553 = vrot.lane.b32.xlu0 %v1482, 56
        %v1554 = vpop.permute.xlu0 %1553
        %vm1591 = vcmask 1041408
        %v1592 = vrot.slane %v346, 6
        %v1593 = vrot.slane %v347, 6
        %v1594 = vsel %vm1591, %v1592, %v1593
        %v1595 = vrot.slane %v348, 6
        %v1596 = vsel %vm1591, %v1593, %v1595
        %v1597 = vrot.slane %v349, 6
        %v1598 = vsel %vm1591, %v1595, %v1597
        %v1599 = vrot.slane %v350, 6
        %v1600 = vsel %vm1591, %v1597, %v1599
        %v1601 = vrot.slane %v351, 6
        %v1602 = vsel %vm1591, %v1599, %v1601
        %v1603 = vrot.slane %v352, 6
        %v1604 = vsel %vm1591, %v1601, %v1603
        %v1605 = vrot.slane %v353, 6
        %v1606 = vsel %vm1591, %v1603, %v1605
        %v1607 = vrot.slane %v354, 6
        %v1608 = vsel %vm1591, %v1605, %v1607
        %v1609 = vrot.slane %v355, 6
        %v1610 = vsel %vm1591, %v1607, %v1609
        %v1611 = vrot.slane %v356, 6
        %v1612 = vsel %vm1591, %v1609, %v1611
        %v1613 = vrot.slane %v357, 6
        %v1614 = vsel %vm1591, %v1611, %v1613
        %v1615 = vrot.slane %v358, 6
        %v1616 = vsel %vm1591, %v1613, %v1615
        %v1617 = vrot.slane %v359, 6
        %v1618 = vsel %vm1591, %v1615, %v1617
        %v1619 = vrot.slane %v360, 6
        %v1620 = vsel %vm1591, %v1617, %v1619
        %v1621 = vrot.slane %v361, 6
        %v1622 = vsel %vm1591, %v1619, %v1621
        %v1623 = vrot.slane %v362, 6
        %v1624 = vsel %vm1591, %v1621, %v1623
        %v1625 = vrot.slane %v363, 6
        %v1626 = vsel %vm1591, %v1623, %v1625
        %v1627 = vrot.slane %v364, 6
        %v1628 = vsel %vm1591, %v1625, %v1627
        %v1629 = vrot.slane %v365, 6
        %v1630 = vsel %vm1591, %v1627, %v1629
        %v1631 = vrot.slane %v366, 6
        %v1632 = vsel %vm1591, %v1629, %v1631
        %v1633 = vrot.slane %v367, 6
        %v1634 = vsel %vm1591, %v1631, %v1633
        %v1635 = vrot.slane %v368, 6
        %v1636 = vsel %vm1591, %v1633, %v1635
        %v1637 = vrot.slane %v369, 6
        %v1638 = vsel %vm1591, %v1635, %v1637
        %v1639 = vrot.slane %v370, 6
        %v1640 = vsel %vm1591, %v1637, %v1639
        %v1641 = vrot.slane %v371, 6
        %v1642 = vsel %vm1591, %v1639, %v1641
        %v1643 = vrot.slane %v372, 6
        %v1644 = vsel %vm1591, %v1641, %v1643
        %v1645 = vrot.slane %v373, 6
        %v1646 = vsel %vm1591, %v1643, %v1645
        %v1647 = vrot.slane %v374, 6
        %v1648 = vsel %vm1591, %v1645, %v1647
        %v1649 = vrot.slane %v375, 6
        %v1650 = vsel %vm1591, %v1647, %v1649
        %v1651 = vrot.slane %v376, 6
        %v1652 = vsel %vm1591, %v1649, %v1651
        %v1653 = vrot.slane %v377, 6
        %v1654 = vsel %vm1591, %v1651, %v1653
        %v1655 = vrot.slane %v378, 6
        %v1656 = vsel %vm1591, %v1653, %v1655
        %v1657 = vrot.slane %v379, 6
        %v1658 = vsel %vm1591, %v1655, %v1657
        %v1659 = vrot.slane 0.0, 6
        %v1660 = vsel %vm1591, %v1657, %v1659
        %v1661 = vsel %vm1591, %v1659, %v1659
        %1662 = vrot.lane.b32.xlu0 %v1592, 64
        %v1663 = vpop.permute.xlu0 %1662
        %1664 = vrot.lane.b32.xlu0 %v1594, 64
        %v1665 = vpop.permute.xlu0 %1664
        %1666 = vrot.lane.b32.xlu0 %v1596, 64
        %v1667 = vpop.permute.xlu0 %1666
        %1668 = vrot.lane.b32.xlu0 %v1598, 64
        %v1669 = vpop.permute.xlu0 %1668
        %1670 = vrot.lane.b32.xlu0 %v1600, 64
        %v1671 = vpop.permute.xlu0 %1670
        %1672 = vrot.lane.b32.xlu0 %v1602, 64
        %v1673 = vpop.permute.xlu0 %1672
        %1674 = vrot.lane.b32.xlu0 %v1604, 64
        %v1675 = vpop.permute.xlu0 %1674
        %1676 = vrot.lane.b32.xlu0 %v1606, 64
        %v1677 = vpop.permute.xlu0 %1676
        %1678 = vrot.lane.b32.xlu0 %v1608, 64
        %v1679 = vpop.permute.xlu0 %1678
        %1680 = vrot.lane.b32.xlu0 %v1610, 64
        %v1681 = vpop.permute.xlu0 %1680
        %1682 = vrot.lane.b32.xlu0 %v1612, 64
        %v1683 = vpop.permute.xlu0 %1682
        %1684 = vrot.lane.b32.xlu0 %v1614, 64
        %v1685 = vpop.permute.xlu0 %1684
        %1686 = vrot.lane.b32.xlu0 %v1616, 64
        %v1687 = vpop.permute.xlu0 %1686
        %1688 = vrot.lane.b32.xlu0 %v1618, 64
        %v1689 = vpop.permute.xlu0 %1688
        %1690 = vrot.lane.b32.xlu0 %v1620, 64
        %v1691 = vpop.permute.xlu0 %1690
        %1692 = vrot.lane.b32.xlu0 %v1622, 64
        %v1693 = vpop.permute.xlu0 %1692
        %1694 = vrot.lane.b32.xlu0 %v1624, 64
        %v1695 = vpop.permute.xlu0 %1694
        %1696 = vrot.lane.b32.xlu0 %v1626, 64
        %v1697 = vpop.permute.xlu0 %1696
        %1698 = vrot.lane.b32.xlu0 %v1628, 64
        %v1699 = vpop.permute.xlu0 %1698
        %1700 = vrot.lane.b32.xlu0 %v1630, 64
        %v1701 = vpop.permute.xlu0 %1700
        %1702 = vrot.lane.b32.xlu0 %v1632, 64
        %v1703 = vpop.permute.xlu0 %1702
        %1704 = vrot.lane.b32.xlu0 %v1634, 64
        %v1705 = vpop.permute.xlu0 %1704
        %1706 = vrot.lane.b32.xlu0 %v1636, 64
        %v1707 = vpop.permute.xlu0 %1706
        %1708 = vrot.lane.b32.xlu0 %v1638, 64
        %v1709 = vpop.permute.xlu0 %1708
        %1710 = vrot.lane.b32.xlu0 %v1640, 64
        %v1711 = vpop.permute.xlu0 %1710
        %1712 = vrot.lane.b32.xlu0 %v1642, 64
        %v1713 = vpop.permute.xlu0 %1712
        %1714 = vrot.lane.b32.xlu0 %v1644, 64
        %v1715 = vpop.permute.xlu0 %1714
        %1716 = vrot.lane.b32.xlu0 %v1646, 64
        %v1717 = vpop.permute.xlu0 %1716
        %1718 = vrot.lane.b32.xlu0 %v1648, 64
        %v1719 = vpop.permute.xlu0 %1718
        %1720 = vrot.lane.b32.xlu0 %v1650, 64
        %v1721 = vpop.permute.xlu0 %1720
        %1722 = vrot.lane.b32.xlu0 %v1652, 64
        %v1723 = vpop.permute.xlu0 %1722
        %1724 = vrot.lane.b32.xlu0 %v1654, 64
        %v1725 = vpop.permute.xlu0 %1724
        %1726 = vrot.lane.b32.xlu0 %v1656, 64
        %v1727 = vpop.permute.xlu0 %1726
        %1728 = vrot.lane.b32.xlu0 %v1658, 64
        %v1729 = vpop.permute.xlu0 %1728
        %1730 = vrot.lane.b32.xlu0 %v1660, 64
        %v1731 = vpop.permute.xlu0 %1730
        %1732 = vrot.lane.b32.xlu0 %v1661, 64
        %v1733 = vpop.permute.xlu0 %1732
        %vm1770 = vcmask 64512
        %v1771 = vsel %vm1770, 0.0, %v532
        %v1772 = vsel %vm1770, 0.0, %v534
        %v1773 = vsel %vm1770, %v344, %v536
        %v1774 = vsel %vm1770, %v345, %v538
        %v1775 = vsel %vm1770, %v346, %v540
        %v1776 = vsel %vm1770, %v347, %v542
        %v1777 = vsel %vm1770, %v348, %v544
        %v1778 = vsel %vm1770, %v349, %v546
        %v1779 = vsel %vm1770, %v350, %v548
        %v1780 = vsel %vm1770, %v351, %v550
        %v1781 = vsel %vm1770, %v352, %v552
        %v1782 = vsel %vm1770, %v353, %v554
        %v1783 = vsel %vm1770, %v354, %v556
        %v1784 = vsel %vm1770, %v355, %v558
        %v1785 = vsel %vm1770, %v356, %v560
        %v1786 = vsel %vm1770, %v357, %v562
        %v1787 = vsel %vm1770, %v358, %v564
        %v1788 = vsel %vm1770, %v359, %v566
        %v1789 = vsel %vm1770, %v360, %v568
        %v1790 = vsel %vm1770, %v361, %v570
        %v1791 = vsel %vm1770, %v362, %v572
        %v1792 = vsel %vm1770, %v363, %v574
        %v1793 = vsel %vm1770, %v364, %v576
        %v1794 = vsel %vm1770, %v365, %v578
        %v1795 = vsel %vm1770, %v366, %v580
        %v1796 = vsel %vm1770, %v367, %v582
        %v1797 = vsel %vm1770, %v368, %v584
        %v1798 = vsel %vm1770, %v369, %v586
        %v1799 = vsel %vm1770, %v370, %v588
        %v1800 = vsel %vm1770, %v371, %v590
        %v1801 = vsel %vm1770, %v372, %v592
        %v1802 = vsel %vm1770, %v373, %v594
        %v1803 = vsel %vm1770, %v374, %v596
        %v1804 = vsel %vm1770, %v375, %v598
        %v1805 = vsel %vm1770, %v376, %v600
        %v1806 = vsel %vm1770, %v377, %v602
        %vm1807 = vcmask 130048
        %v1808 = vsel %vm1807, %v1771, %v711
        %v1809 = vsel %vm1807, %v1772, %v713
        %v1810 = vsel %vm1807, %v1773, %v715
        %v1811 = vsel %vm1807, %v1774, %v717
        %v1812 = vsel %vm1807, %v1775, %v719
        %v1813 = vsel %vm1807, %v1776, %v721
        %v1814 = vsel %vm1807, %v1777, %v723
        %v1815 = vsel %vm1807, %v1778, %v725
        %v1816 = vsel %vm1807, %v1779, %v727
        %v1817 = vsel %vm1807, %v1780, %v729
        %v1818 = vsel %vm1807, %v1781, %v731
        %v1819 = vsel %vm1807, %v1782, %v733
        %v1820 = vsel %vm1807, %v1783, %v735
        %v1821 = vsel %vm1807, %v1784, %v737
        %v1822 = vsel %vm1807, %v1785, %v739
        %v1823 = vsel %vm1807, %v1786, %v741
        %v1824 = vsel %vm1807, %v1787, %v743
        %v1825 = vsel %vm1807, %v1788, %v745
        %v1826 = vsel %vm1807, %v1789, %v747
        %v1827 = vsel %vm1807, %v1790, %v749
        %v1828 = vsel %vm1807, %v1791, %v751
        %v1829 = vsel %vm1807, %v1792, %v753
        %v1830 = vsel %vm1807, %v1793, %v755
        %v1831 = vsel %vm1807, %v1794, %v757
        %v1832 = vsel %vm1807, %v1795, %v759
        %v1833 = vsel %vm1807, %v1796, %v761
        %v1834 = vsel %vm1807, %v1797, %v763
        %v1835 = vsel %vm1807, %v1798, %v765
        %v1836 = vsel %vm1807, %v1799, %v767
        %v1837 = vsel %vm1807, %v1800, %v769
        %v1838 = vsel %vm1807, %v1801, %v771
        %v1839 = vsel %vm1807, %v1802, %v773
        %v1840 = vsel %vm1807, %v1803, %v775
        %v1841 = vsel %vm1807, %v1804, %v777
        %v1842 = vsel %vm1807, %v1805, %v779
        %v1843 = vsel %vm1807, %v1806, %v781
        %vm1844 = vcmask 195584
        %v1845 = vsel %vm1844, %v1808, %v825
        %v1846 = vsel %vm1844, %v1808, %v827
        %v1847 = vsel %vm1844, %v1809, %v829
        %v1848 = vsel %vm1844, %v1810, %v831
        %v1849 = vsel %vm1844, %v1811, %v833
        %v1850 = vsel %vm1844, %v1812, %v835
        %v1851 = vsel %vm1844, %v1813, %v837
        %v1852 = vsel %vm1844, %v1814, %v839
        %v1853 = vsel %vm1844, %v1815, %v841
        %v1854 = vsel %vm1844, %v1816, %v843
        %v1855 = vsel %vm1844, %v1817, %v845
        %v1856 = vsel %vm1844, %v1818, %v847
        %v1857 = vsel %vm1844, %v1819, %v849
        %v1858 = vsel %vm1844, %v1820, %v851
        %v1859 = vsel %vm1844, %v1821, %v853
        %v1860 = vsel %vm1844, %v1822, %v855
        %v1861 = vsel %vm1844, %v1823, %v857
        %v1862 = vsel %vm1844, %v1824, %v859
        %v1863 = vsel %vm1844, %v1825, %v861
        %v1864 = vsel %vm1844, %v1826, %v863
        %v1865 = vsel %vm1844, %v1827, %v865
        %v1866 = vsel %vm1844, %v1828, %v867
        %v1867 = vsel %vm1844, %v1829, %v869
        %v1868 = vsel %vm1844, %v1830, %v871
        %v1869 = vsel %vm1844, %v1831, %v873
        %v1870 = vsel %vm1844, %v1832, %v875
        %v1871 = vsel %vm1844, %v1833, %v877
        %v1872 = vsel %vm1844, %v1834, %v879
        %v1873 = vsel %vm1844, %v1835, %v881
        %v1874 = vsel %vm1844, %v1836, %v883
        %v1875 = vsel %vm1844, %v1837, %v885
        %v1876 = vsel %vm1844, %v1838, %v887
        %v1877 = vsel %vm1844, %v1839, %v889
        %v1878 = vsel %vm1844, %v1840, %v891
        %v1879 = vsel %vm1844, %v1841, %v893
        %v1880 = vsel %vm1844, %v1842, %v895
        %v1881 = vsel %vm1844, %v1843, %v897
        %vm1882 = vcmask 261120
        %v1883 = vsel %vm1882, %v1845, %v1008
        %v1884 = vsel %vm1882, %v1846, %v1010
        %v1885 = vsel %vm1882, %v1847, %v1012
        %v1886 = vsel %vm1882, %v1848, %v1014
        %v1887 = vsel %vm1882, %v1849, %v1016
        %v1888 = vsel %vm1882, %v1850, %v1018
        %v1889 = vsel %vm1882, %v1851, %v1020
        %v1890 = vsel %vm1882, %v1852, %v1022
        %v1891 = vsel %vm1882, %v1853, %v1024
        %v1892 = vsel %vm1882, %v1854, %v1026
        %v1893 = vsel %vm1882, %v1855, %v1028
        %v1894 = vsel %vm1882, %v1856, %v1030
        %v1895 = vsel %vm1882, %v1857, %v1032
        %v1896 = vsel %vm1882, %v1858, %v1034
        %v1897 = vsel %vm1882, %v1859, %v1036
        %v1898 = vsel %vm1882, %v1860, %v1038
        %v1899 = vsel %vm1882, %v1861, %v1040
        %v1900 = vsel %vm1882, %v1862, %v1042
        %v1901 = vsel %vm1882, %v1863, %v1044
        %v1902 = vsel %vm1882, %v1864, %v1046
        %v1903 = vsel %vm1882, %v1865, %v1048
        %v1904 = vsel %vm1882, %v1866, %v1050
        %v1905 = vsel %vm1882, %v1867, %v1052
        %v1906 = vsel %vm1882, %v1868, %v1054
        %v1907 = vsel %vm1882, %v1869, %v1056
        %v1908 = vsel %vm1882, %v1870, %v1058
        %v1909 = vsel %vm1882, %v1871, %v1060
        %v1910 = vsel %vm1882, %v1872, %v1062
        %v1911 = vsel %vm1882, %v1873, %v1064
        %v1912 = vsel %vm1882, %v1874, %v1066
        %v1913 = vsel %vm1882, %v1875, %v1068
        %v1914 = vsel %vm1882, %v1876, %v1070
        %v1915 = vsel %vm1882, %v1877, %v1072
        %v1916 = vsel %vm1882, %v1878, %v1074
        %v1917 = vsel %vm1882, %v1879, %v1076
        %v1918 = vsel %vm1882, %v1880, %v1078
        %v1919 = vsel %vm1882, %v1881, %v1080
        %vm1920 = vcmask 326656
        %v1921 = vsel %vm1920, %v1883, %v1193
        %v1922 = vsel %vm1920, %v1884, %v1195
        %v1923 = vsel %vm1920, %v1885, %v1197
        %v1924 = vsel %vm1920, %v1886, %v1199
        %v1925 = vsel %vm1920, %v1887, %v1201
        %v1926 = vsel %vm1920, %v1888, %v1203
        %v1927 = vsel %vm1920, %v1889, %v1205
        %v1928 = vsel %vm1920, %v1890, %v1207
        %v1929 = vsel %vm1920, %v1891, %v1209
        %v1930 = vsel %vm1920, %v1892, %v1211
        %v1931 = vsel %vm1920, %v1893, %v1213
        %v1932 = vsel %vm1920, %v1894, %v1215
        %v1933 = vsel %vm1920, %v1895, %v1217
        %v1934 = vsel %vm1920, %v1896, %v1219
        %v1935 = vsel %vm1920, %v1897, %v1221
        %v1936 = vsel %vm1920, %v1898, %v1223
        %v1937 = vsel %vm1920, %v1899, %v1225
        %v1938 = vsel %vm1920, %v1900, %v1227
        %v1939 = vsel %vm1920, %v1901, %v1229
        %v1940 = vsel %vm1920, %v1902, %v1231
        %v1941 = vsel %vm1920, %v1903, %v1233
        %v1942 = vsel %vm1920, %v1904, %v1235
        %v1943 = vsel %vm1920, %v1905, %v1237
        %v1944 = vsel %vm1920, %v1906, %v1239
        %v1945 = vsel %vm1920, %v1907, %v1241
        %v1946 = vsel %vm1920, %v1908, %v1243
        %v1947 = vsel %vm1920, %v1909, %v1245
        %v1948 = vsel %vm1920, %v1910, %v1247
        %v1949 = vsel %vm1920, %v1911, %v1249
        %v1950 = vsel %vm1920, %v1912, %v1251
        %v1951 = vsel %vm1920, %v1913, %v1253
        %v1952 = vsel %vm1920, %v1914, %v1255
        %v1953 = vsel %vm1920, %v1915, %v1257
        %v1954 = vsel %vm1920, %v1916, %v1259
        %v1955 = vsel %vm1920, %v1917, %v1261
        %v1956 = vsel %vm1920, %v1918, %v1263
        %v1957 = vsel %vm1920, %v1919, %v1265
        %vm1958 = vcmask 392192
        %v1959 = vsel %vm1958, %v1921, %v1305
        %v1960 = vsel %vm1958, %v1922, %v1307
        %v1961 = vsel %vm1958, %v1923, %v1309
        %v1962 = vsel %vm1958, %v1924, %v1311
        %v1963 = vsel %vm1958, %v1925, %v1313
        %v1964 = vsel %vm1958, %v1926, %v1315
        %v1965 = vsel %vm1958, %v1927, %v1317
        %v1966 = vsel %vm1958, %v1928, %v1319
        %v1967 = vsel %vm1958, %v1929, %v1321
        %v1968 = vsel %vm1958, %v1930, %v1323
        %v1969 = vsel %vm1958, %v1931, %v1325
        %v1970 = vsel %vm1958, %v1932, %v1327
        %v1971 = vsel %vm1958, %v1933, %v1329
        %v1972 = vsel %vm1958, %v1934, %v1331
        %v1973 = vsel %vm1958, %v1935, %v1333
        %v1974 = vsel %vm1958, %v1936, %v1335
        %v1975 = vsel %vm1958, %v1937, %v1337
        %v1976 = vsel %vm1958, %v1938, %v1339
        %v1977 = vsel %vm1958, %v1939, %v1341
        %v1978 = vsel %vm1958, %v1940, %v1343
        %v1979 = vsel %vm1958, %v1941, %v1345
        %v1980 = vsel %vm1958, %v1942, %v1347
        %v1981 = vsel %vm1958, %v1943, %v1349
        %v1982 = vsel %vm1958, %v1944, %v1351
        %v1983 = vsel %vm1958, %v1945, %v1353
        %v1984 = vsel %vm1958, %v1946, %v1355
        %v1985 = vsel %vm1958, %v1947, %v1357
        %v1986 = vsel %vm1958, %v1948, %v1359
        %v1987 = vsel %vm1958, %v1949, %v1361
        %v1988 = vsel %vm1958, %v1950, %v1363
        %v1989 = vsel %vm1958, %v1951, %v1365
        %v1990 = vsel %vm1958, %v1952, %v1367
        %v1991 = vsel %vm1958, %v1953, %v1369
        %v1992 = vsel %vm1958, %v1954, %v1371
        %v1993 = vsel %vm1958, %v1955, %v1373
        %v1994 = vsel %vm1958, %v1956, %v1375
        %v1995 = vsel %vm1958, %v1957, %v1375
        %vm1996 = vcmask 457728
        %v1997 = vsel %vm1996, %v1959, %v1484
        %v1998 = vsel %vm1996, %v1960, %v1486
        %v1999 = vsel %vm1996, %v1961, %v1488
        %v2000 = vsel %vm1996, %v1962, %v1490
        %v2001 = vsel %vm1996, %v1963, %v1492
        %v2002 = vsel %vm1996, %v1964, %v1494
        %v2003 = vsel %vm1996, %v1965, %v1496
        %v2004 = vsel %vm1996, %v1966, %v1498
        %v2005 = vsel %vm1996, %v1967, %v1500
        %v2006 = vsel %vm1996, %v1968, %v1502
        %v2007 = vsel %vm1996, %v1969, %v1504
        %v2008 = vsel %vm1996, %v1970, %v1506
        %v2009 = vsel %vm1996, %v1971, %v1508
        %v2010 = vsel %vm1996, %v1972, %v1510
        %v2011 = vsel %vm1996, %v1973, %v1512
        %v2012 = vsel %vm1996, %v1974, %v1514
        %v2013 = vsel %vm1996, %v1975, %v1516
        %v2014 = vsel %vm1996, %v1976, %v1518
        %v2015 = vsel %vm1996, %v1977, %v1520
        %v2016 = vsel %vm1996, %v1978, %v1522
        %v2017 = vsel %vm1996, %v1979, %v1524
        %v2018 = vsel %vm1996, %v1980, %v1526
        %v2019 = vsel %vm1996, %v1981, %v1528
        %v2020 = vsel %vm1996, %v1982, %v1530
        %v2021 = vsel %vm1996, %v1983, %v1532
        %v2022 = vsel %vm1996, %v1984, %v1534
        %v2023 = vsel %vm1996, %v1985, %v1536
        %v2024 = vsel %vm1996, %v1986, %v1538
        %v2025 = vsel %vm1996, %v1987, %v1540
        %v2026 = vsel %vm1996, %v1988, %v1542
        %v2027 = vsel %vm1996, %v1989, %v1544
        %v2028 = vsel %vm1996, %v1990, %v1546
        %v2029 = vsel %vm1996, %v1991, %v1548
        %v2030 = vsel %vm1996, %v1992, %v1550
        %v2031 = vsel %vm1996, %v1993, %v1552
        %v2032 = vsel %vm1996, %v1994, %v1554
        %v2033 = vsel %vm1996, %v1995, %v1554
        %vm2034 = vcmask 523264
        %v2035 = vsel %vm2034, %v1997, %v1663
        %v2036 = vsel %vm2034, %v1998, %v1665
        %v2037 = vsel %vm2034, %v1999, %v1667
        %v2038 = vsel %vm2034, %v2000, %v1669
        %v2039 = vsel %vm2034, %v2001, %v1671
        %v2040 = vsel %vm2034, %v2002, %v1673
        %v2041 = vsel %vm2034, %v2003, %v1675
        %v2042 = vsel %vm2034, %v2004, %v1677
        %v2043 = vsel %vm2034, %v2005, %v1679
        %v2044 = vsel %vm2034, %v2006, %v1681
        %v2045 = vsel %vm2034, %v2007, %v1683
        %v2046 = vsel %vm2034, %v2008, %v1685
        %v2047 = vsel %vm2034, %v2009, %v1687
        %v2048 = vsel %vm2034, %v2010, %v1689
        %v2049 = vsel %vm2034, %v2011, %v1691
        %v2050 = vsel %vm2034, %v2012, %v1693
        %v2051 = vsel %vm2034, %v2013, %v1695
        %v2052 = vsel %vm2034, %v2014, %v1697
        %v2053 = vsel %vm2034, %v2015, %v1699
        %v2054 = vsel %vm2034, %v2016, %v1701
        %v2055 = vsel %vm2034, %v2017, %v1703
        %v2056 = vsel %vm2034, %v2018, %v1705
        %v2057 = vsel %vm2034, %v2019, %v1707
        %v2058 = vsel %vm2034, %v2020, %v1709
        %v2059 = vsel %vm2034, %v2021, %v1711
        %v2060 = vsel %vm2034, %v2022, %v1713
        %v2061 = vsel %vm2034, %v2023, %v1715
        %v2062 = vsel %vm2034, %v2024, %v1717
        %v2063 = vsel %vm2034, %v2025, %v1719
        %v2064 = vsel %vm2034, %v2026, %v1721
        %v2065 = vsel %vm2034, %v2027, %v1723
        %v2066 = vsel %vm2034, %v2028, %v1725
        %v2067 = vsel %vm2034, %v2029, %v1727
        %v2068 = vsel %vm2034, %v2030, %v1729
        %v2069 = vsel %vm2034, %v2031, %v1731
        %v2070 = vsel %vm2034, %v2032, %v1733
        %v2071 = vsel %vm2034, %v2033, %v1733
        %v2109 = vrot.slane %v2035, 5
        %v2110 = vrot.slane %v2036, 5
        %v2111 = vsel %vm1412, %v2109, %v2110
        %v2112 = vrot.slane %v2037, 5
        %v2113 = vsel %vm1412, %v2110, %v2112
        %v2114 = vrot.slane %v2038, 5
        %v2115 = vsel %vm1412, %v2112, %v2114
        %v2116 = vrot.slane %v2039, 5
        %v2117 = vsel %vm1412, %v2114, %v2116
        %v2118 = vrot.slane %v2040, 5
        %v2119 = vsel %vm1412, %v2116, %v2118
        %v2120 = vrot.slane %v2041, 5
        %v2121 = vsel %vm1412, %v2118, %v2120
        %v2122 = vrot.slane %v2042, 5
        %v2123 = vsel %vm1412, %v2120, %v2122
        %v2124 = vrot.slane %v2043, 5
        %v2125 = vsel %vm1412, %v2122, %v2124
        %v2126 = vrot.slane %v2044, 5
        %v2127 = vsel %vm1412, %v2124, %v2126
        %v2128 = vrot.slane %v2045, 5
        %v2129 = vsel %vm1412, %v2126, %v2128
        %v2130 = vrot.slane %v2046, 5
        %v2131 = vsel %vm1412, %v2128, %v2130
        %v2132 = vrot.slane %v2047, 5
        %v2133 = vsel %vm1412, %v2130, %v2132
        %v2134 = vrot.slane %v2048, 5
        %v2135 = vsel %vm1412, %v2132, %v2134
        %v2136 = vrot.slane %v2049, 5
        %v2137 = vsel %vm1412, %v2134, %v2136
        %v2138 = vrot.slane %v2050, 5
        %v2139 = vsel %vm1412, %v2136, %v2138
        %v2140 = vrot.slane %v2051, 5
        %v2141 = vsel %vm1412, %v2138, %v2140
        %v2142 = vrot.slane %v2052, 5
        %v2143 = vsel %vm1412, %v2140, %v2142
        %v2144 = vrot.slane %v2053, 5
        %v2145 = vsel %vm1412, %v2142, %v2144
        %v2146 = vrot.slane %v2054, 5
        %v2147 = vsel %vm1412, %v2144, %v2146
        %v2148 = vrot.slane %v2055, 5
        %v2149 = vsel %vm1412, %v2146, %v2148
        %v2150 = vrot.slane %v2056, 5
        %v2151 = vsel %vm1412, %v2148, %v2150
        %v2152 = vrot.slane %v2057, 5
        %v2153 = vsel %vm1412, %v2150, %v2152
        %v2154 = vrot.slane %v2058, 5
        %v2155 = vsel %vm1412, %v2152, %v2154
        %v2156 = vrot.slane %v2059, 5
        %v2157 = vsel %vm1412, %v2154, %v2156
        %v2158 = vrot.slane %v2060, 5
        %v2159 = vsel %vm1412, %v2156, %v2158
        %v2160 = vrot.slane %v2061, 5
        %v2161 = vsel %vm1412, %v2158, %v2160
        %v2162 = vrot.slane %v2062, 5
        %v2163 = vsel %vm1412, %v2160, %v2162
        %v2164 = vrot.slane %v2063, 5
        %v2165 = vsel %vm1412, %v2162, %v2164
        %v2166 = vrot.slane %v2064, 5
        %v2167 = vsel %vm1412, %v2164, %v2166
        %v2168 = vrot.slane %v2065, 5
        %v2169 = vsel %vm1412, %v2166, %v2168
        %v2170 = vrot.slane %v2066, 5
        %v2171 = vsel %vm1412, %v2168, %v2170
        %v2172 = vrot.slane %v2067, 5
        %v2173 = vsel %vm1412, %v2170, %v2172
        %v2174 = vrot.slane %v2068, 5
        %v2175 = vsel %vm1412, %v2172, %v2174
        %v2176 = vrot.slane %v2069, 5
        %v2177 = vsel %vm1412, %v2174, %v2176
        %v2178 = vrot.slane %v2070, 5
        %v2179 = vsel %vm1412, %v2176, %v2178
        %v2180 = vrot.slane %v2071, 5
        %v2181 = vsel %vm1412, %v2178, %v2180
        %vm2182 = vcmask 588800
        %v2183 = vsel %vm2182, %v2111, 0
        %v2185 = vsel %vm2182, %v2113, 0
        %v2187 = vsel %vm2182, %v2115, 0
        %v2189 = vsel %vm2182, %v2117, 0
        %v2191 = vsel %vm2182, %v2119, 0
        %v2193 = vsel %vm2182, %v2121, 0
        %v2195 = vsel %vm2182, %v2123, 0
        %v2197 = vsel %vm2182, %v2125, 0
        %v2199 = vsel %vm2182, %v2127, 0
        %v2201 = vsel %vm2182, %v2129, 0
        %v2203 = vsel %vm2182, %v2131, 0
        %v2205 = vsel %vm2182, %v2133, 0
        %v2207 = vsel %vm2182, %v2135, 0
        %v2209 = vsel %vm2182, %v2137, 0
        %v2211 = vsel %vm2182, %v2139, 0
        %v2213 = vsel %vm2182, %v2141, 0
        %v2215 = vsel %vm2182, %v2143, 0
        %v2217 = vsel %vm2182, %v2145, 0
        %v2219 = vsel %vm2182, %v2147, 0
        %v2221 = vsel %vm2182, %v2149, 0
        %v2223 = vsel %vm2182, %v2151, 0
        %v2225 = vsel %vm2182, %v2153, 0
        %v2227 = vsel %vm2182, %v2155, 0
        %v2229 = vsel %vm2182, %v2157, 0
        %v2231 = vsel %vm2182, %v2159, 0
        %v2233 = vsel %vm2182, %v2161, 0
        %v2235 = vsel %vm2182, %v2163, 0
        %v2237 = vsel %vm2182, %v2165, 0
        %v2239 = vsel %vm2182, %v2167, 0
        %v2241 = vsel %vm2182, %v2169, 0
        %v2243 = vsel %vm2182, %v2171, 0
        %v2245 = vsel %vm2182, %v2173, 0
        %v2247 = vsel %vm2182, %v2175, 0
        %v2249 = vsel %vm2182, %v2177, 0
        %v2251 = vsel %vm2182, %v2179, 0
        %v2253 = vsel %vm2182, %v2181, 0
        %2255 = vmatprep.subr.mxu0 0.0
        %2256 = vmatpush1.msra.mxu0 %v416
        %2257 = vmatprep.subr.mxu0 0.0
        %2258 = vmatpush1.msra.mxu0 %v417
        %2259 = vmatprep.subr.mxu0 0.0
        %2260 = vmatpush1.msra.mxu0 %v418
        %2261 = vmatprep.subr.mxu0 0.0
        %2262 = vmatpush1.msra.mxu0 %v419
        %2263 = vmatprep.subr.mxu0 0.0
        %2264 = vmatpush1.msra.mxu0 %v420
        %2265 = vmatprep.subr.mxu0 0.0
        %2266 = vmatpush1.msra.mxu0 %v421
        %2267 = vmatprep.subr.mxu0 0.0
        %2268 = vmatpush1.msra.mxu0 %v422
        %2269 = vmatprep.subr.mxu0 0.0
        %2270 = vmatpush1.msra.mxu0 %v423
        %2271 = vmatprep.subr.mxu0 0.0
        %2272 = vmatpush1.msra.mxu0 %v424
        %2273 = vmatprep.subr.mxu0 0.0
        %2274 = vmatpush1.msra.mxu0 0.0
        %2275 = vmatprep.subr.mxu0 0.0
        %2276 = vmatpush1.msra.mxu0 0.0
        %2277 = vmatprep.subr.mxu0 0.0
        %2278 = vmatpush1.msra.mxu0 0.0
        %2279 = vmatprep.subr.mxu0 0.0
        %2280 = vmatpush1.msra.mxu0 0.0
        %2281 = vmatprep.subr.mxu0 0.0
        %2282 = vmatpush1.msra.mxu0 0.0
        %2283 = vmatprep.subr.mxu0 0.0
        %2284 = vmatpush1.msra.mxu0 0.0
        %2285 = vmatprep.subr.mxu0 0.0
        %2286 = vmatpush1.msra.mxu0 0.0
        %2287 = vmatprep.subr.mxu0 0.0
        %2288 = vmatpush1.msra.mxu0 0.0
        %2289 = vmatprep.subr.mxu0 0.0
        %2290 = vmatpush1.msra.mxu0 0.0
        %2291 = vmatprep.subr.mxu0 0.0
        %2292 = vmatpush1.msra.mxu0 0.0
        %2293 = vmatprep.subr.mxu0 0.0
        %2294 = vmatpush1.msra.mxu0 0.0
        %2295 = vmatprep.subr.mxu0 0.0
        %2296 = vmatpush1.msra.mxu0 0.0
        %2297 = vmatprep.subr.mxu0 0.0
        %2298 = vmatpush1.msra.mxu0 0.0
        %2299 = vmatprep.subr.mxu0 0.0
        %2300 = vmatpush1.msra.mxu0 0.0
        %2301 = vmatprep.subr.mxu0 0.0
        %2302 = vmatpush1.msra.mxu0 0.0
        %2303 = vmatprep.subr.mxu0 0.0
        %2304 = vmatpush1.msra.mxu0 0.0
        %2305 = vmatprep.subr.mxu0 0.0
        %2306 = vmatpush1.msra.mxu0 0.0
        %2307 = vmatprep.subr.mxu0 0.0
        %2308 = vmatpush1.msra.mxu0 0.0
        %2309 = vmatprep.subr.mxu0 0.0
        %2310 = vmatpush1.msra.mxu0 0.0
        %2311 = vmatprep.subr.mxu0 0.0
        %2312 = vmatpush1.msra.mxu0 0.0
        %2313 = vmatprep.subr.mxu0 0.0
        %2314 = vmatpush1.msra.mxu0 0.0
        %2315 = vmatprep.subr.mxu0 0.0
        %2316 = vmatpush1.msra.mxu0 0.0
        %2317 = vmatprep.subr.mxu0 0.0
        %2318 = vmatpush1.msra.mxu0 0.0
        %2319 = vmatprep.mubr.f32.mxu0 0.0
        %2320 = vmatmul.mubr.f32.gmra.mrb[0].mxu0 %v2183
        %v2321 = vpop.f32.mrb[0].mxu0
        %v2322 = vadd.f32 0.0, %v2321
        %v2323 = vpop.f32.mrb[0].mxu0
        %2324 = vmatprep.mubr.f32.mxu0 0.0
        %2325 = vmatmul.mubr.f32.gmra.mrb[0].mxu0 %v2185
        %v2326 = vpop.f32.mrb[0].mxu0
        %v2327 = vadd.f32 0.0, %v2326
        %v2328 = vpop.f32.mrb[0].mxu0
        %2329 = vmatprep.mubr.f32.mxu0 0.0
        %2330 = vmatmul.mubr.f32.gmra.mrb[0].mxu0 %v2187
        %v2331 = vpop.f32.mrb[0].mxu0
        %v2332 = vadd.f32 0.0, %v2331
        %v2333 = vpop.f32.mrb[0].mxu0
        %2334 = vmatprep.mubr.f32.mxu0 0.0
        %2335 = vmatmul.mubr.f32.gmra.mrb[0].mxu0 %v2189
        %v2336 = vpop.f32.mrb[0].mxu0
        %v2337 = vadd.f32 0.0, %v2336
        %v2338 = vpop.f32.mrb[0].mxu0
        %2339 = vmatprep.mubr.f32.mxu0 0.0
        %2340 = vmatmul.mubr.f32.gmra.mrb[0].mxu0 %v2191
        %v2341 = vpop.f32.mrb[0].mxu0
        %v2342 = vadd.f32 0.0, %v2341
        %v2343 = vpop.f32.mrb[0].mxu0
        %2344 = vmatprep.mubr.f32.mxu0 0.0
        %2345 = vmatmul.mubr.f32.gmra.mrb[0].mxu0 %v2193
        %v2346 = vpop.f32.mrb[0].mxu0
        %v2347 = vadd.f32 0.0, %v2346
        %v2348 = vpop.f32.mrb[0].mxu0
        %2349 = vmatprep.mubr.f32.mxu0 0.0
        %2350 = vmatmul.mubr.f32.gmra.mrb[0].mxu0 %v2195
        %v2351 = vpop.f32.mrb[0].mxu0
        %v2352 = vadd.f32 0.0, %v2351
        %v2353 = vpop.f32.mrb[0].mxu0
        %2354 = vmatprep.mubr.f32.mxu0 0.0
        %2355 = vmatmul.mubr.f32.gmra.mrb[0].mxu0 %v2197
        %v2356 = vpop.f32.mrb[0].mxu0
        %v2357 = vadd.f32 0.0, %v2356
        %v2358 = vpop.f32.mrb[0].mxu0
        %2359 = vmatprep.mubr.f32.mxu0 0.0
        %2360 = vmatmul.mubr.f32.gmra.mrb[0].mxu0 %v2199
        %v2361 = vpop.f32.mrb[0].mxu0
        %v2362 = vadd.f32 0.0, %v2361
        %v2363 = vpop.f32.mrb[0].mxu0
        %2364 = vmatprep.mubr.f32.mxu0 0.0
        %2365 = vmatmul.mubr.f32.gmra.mrb[0].mxu0 %v2201
        %v2366 = vpop.f32.mrb[0].mxu0
        %v2367 = vadd.f32 0.0, %v2366
        %v2368 = vpop.f32.mrb[0].mxu0
        %2369 = vmatprep.mubr.f32.mxu0 0.0
        %2370 = vmatmul.mubr.f32.gmra.mrb[0].mxu0 %v2203
        %v2371 = vpop.f32.mrb[0].mxu0
        %v2372 = vadd.f32 0.0, %v2371
        %v2373 = vpop.f32.mrb[0].mxu0
        %2374 = vmatprep.mubr.f32.mxu0 0.0
        %2375 = vmatmul.mubr.f32.gmra.mrb[0].mxu0 %v2205
        %v2376 = vpop.f32.mrb[0].mxu0
        %v2377 = vadd.f32 0.0, %v2376
        %v2378 = vpop.f32.mrb[0].mxu0
        %2379 = vmatprep.mubr.f32.mxu0 0.0
        %2380 = vmatmul.mubr.f32.gmra.mrb[0].mxu0 %v2207
        %v2381 = vpop.f32.mrb[0].mxu0
        %v2382 = vadd.f32 0.0, %v2381
        %v2383 = vpop.f32.mrb[0].mxu0
        %2384 = vmatprep.mubr.f32.mxu0 0.0
        %2385 = vmatmul.mubr.f32.gmra.mrb[0].mxu0 %v2209
        %v2386 = vpop.f32.mrb[0].mxu0
        %v2387 = vadd.f32 0.0, %v2386
        %v2388 = vpop.f32.mrb[0].mxu0
        %2389 = vmatprep.mubr.f32.mxu0 0.0
        %2390 = vmatmul.mubr.f32.gmra.mrb[0].mxu0 %v2211
        %v2391 = vpop.f32.mrb[0].mxu0
        %v2392 = vadd.f32 0.0, %v2391
        %v2393 = vpop.f32.mrb[0].mxu0
        %2394 = vmatprep.mubr.f32.mxu0 0.0
        %2395 = vmatmul.mubr.f32.gmra.mrb[0].mxu0 %v2213
        %v2396 = vpop.f32.mrb[0].mxu0
        %v2397 = vadd.f32 0.0, %v2396
        %v2398 = vpop.f32.mrb[0].mxu0
        %2399 = vmatprep.mubr.f32.mxu0 0.0
        %2400 = vmatmul.mubr.f32.gmra.mrb[0].mxu0 %v2215
        %v2401 = vpop.f32.mrb[0].mxu0
        %v2402 = vadd.f32 0.0, %v2401
        %v2403 = vpop.f32.mrb[0].mxu0
        %2404 = vmatprep.mubr.f32.mxu0 0.0
        %2405 = vmatmul.mubr.f32.gmra.mrb[0].mxu0 %v2217
        %v2406 = vpop.f32.mrb[0].mxu0
        %v2407 = vadd.f32 0.0, %v2406
        %v2408 = vpop.f32.mrb[0].mxu0
        %2409 = vmatprep.mubr.f32.mxu0 0.0
        %2410 = vmatmul.mubr.f32.gmra.mrb[0].mxu0 %v2219
        %v2411 = vpop.f32.mrb[0].mxu0
        %v2412 = vadd.f32 0.0, %v2411
        %v2413 = vpop.f32.mrb[0].mxu0
        %2414 = vmatprep.mubr.f32.mxu0 0.0
        %2415 = vmatmul.mubr.f32.gmra.mrb[0].mxu0 %v2221
        %v2416 = vpop.f32.mrb[0].mxu0
        %v2417 = vadd.f32 0.0, %v2416
        %v2418 = vpop.f32.mrb[0].mxu0
        %2419 = vmatprep.mubr.f32.mxu0 0.0
        %2420 = vmatmul.mubr.f32.gmra.mrb[0].mxu0 %v2223
        %v2421 = vpop.f32.mrb[0].mxu0
        %v2422 = vadd.f32 0.0, %v2421
        %v2423 = vpop.f32.mrb[0].mxu0
        %2424 = vmatprep.mubr.f32.mxu0 0.0
        %2425 = vmatmul.mubr.f32.gmra.mrb[0].mxu0 %v2225
        %v2426 = vpop.f32.mrb[0].mxu0
        %v2427 = vadd.f32 0.0, %v2426
        %v2428 = vpop.f32.mrb[0].mxu0
        %2429 = vmatprep.mubr.f32.mxu0 0.0
        %2430 = vmatmul.mubr.f32.gmra.mrb[0].mxu0 %v2227
        %v2431 = vpop.f32.mrb[0].mxu0
        %v2432 = vadd.f32 0.0, %v2431
        %v2433 = vpop.f32.mrb[0].mxu0
        %2434 = vmatprep.mubr.f32.mxu0 0.0
        %2435 = vmatmul.mubr.f32.gmra.mrb[0].mxu0 %v2229
        %v2436 = vpop.f32.mrb[0].mxu0
        %v2437 = vadd.f32 0.0, %v2436
        %v2438 = vpop.f32.mrb[0].mxu0
        %2439 = vmatprep.mubr.f32.mxu0 0.0
        %2440 = vmatmul.mubr.f32.gmra.mrb[0].mxu0 %v2231
        %v2441 = vpop.f32.mrb[0].mxu0
        %v2442 = vadd.f32 0.0, %v2441
        %v2443 = vpop.f32.mrb[0].mxu0
        %2444 = vmatprep.mubr.f32.mxu0 0.0
        %2445 = vmatmul.mubr.f32.gmra.mrb[0].mxu0 %v2233
        %v2446 = vpop.f32.mrb[0].mxu0
        %v2447 = vadd.f32 0.0, %v2446
        %v2448 = vpop.f32.mrb[0].mxu0
        %2449 = vmatprep.mubr.f32.mxu0 0.0
        %2450 = vmatmul.mubr.f32.gmra.mrb[0].mxu0 %v2235
        %v2451 = vpop.f32.mrb[0].mxu0
        %v2452 = vadd.f32 0.0, %v2451
        %v2453 = vpop.f32.mrb[0].mxu0
        %2454 = vmatprep.mubr.f32.mxu0 0.0
        %2455 = vmatmul.mubr.f32.gmra.mrb[0].mxu0 %v2237
        %v2456 = vpop.f32.mrb[0].mxu0
        %v2457 = vadd.f32 0.0, %v2456
        %v2458 = vpop.f32.mrb[0].mxu0
        %2459 = vmatprep.mubr.f32.mxu0 0.0
        %2460 = vmatmul.mubr.f32.gmra.mrb[0].mxu0 %v2239
        %v2461 = vpop.f32.mrb[0].mxu0
        %v2462 = vadd.f32 0.0, %v2461
        %v2463 = vpop.f32.mrb[0].mxu0
        %2464 = vmatprep.mubr.f32.mxu0 0.0
        %2465 = vmatmul.mubr.f32.gmra.mrb[0].mxu0 %v2241
        %v2466 = vpop.f32.mrb[0].mxu0
        %v2467 = vadd.f32 0.0, %v2466
        %v2468 = vpop.f32.mrb[0].mxu0
        %2469 = vmatprep.mubr.f32.mxu0 0.0
        %2470 = vmatmul.mubr.f32.gmra.mrb[0].mxu0 %v2243
        %v2471 = vpop.f32.mrb[0].mxu0
        %v2472 = vadd.f32 0.0, %v2471
        %v2473 = vpop.f32.mrb[0].mxu0
        %2474 = vmatprep.mubr.f32.mxu0 0.0
        %2475 = vmatmul.mubr.f32.gmra.mrb[0].mxu0 %v2245
        %v2476 = vpop.f32.mrb[0].mxu0
        %v2477 = vadd.f32 0.0, %v2476
        %v2478 = vpop.f32.mrb[0].mxu0
        %2479 = vmatprep.mubr.f32.mxu0 0.0
        %2480 = vmatmul.mubr.f32.gmra.mrb[0].mxu0 %v2247
        %v2481 = vpop.f32.mrb[0].mxu0
        %v2482 = vadd.f32 0.0, %v2481
        %v2483 = vpop.f32.mrb[0].mxu0
        %2484 = vmatprep.mubr.f32.mxu0 0.0
        %2485 = vmatmul.mubr.f32.gmra.mrb[0].mxu0 %v2249
        %v2486 = vpop.f32.mrb[0].mxu0
        %v2487 = vadd.f32 0.0, %v2486
        %v2488 = vpop.f32.mrb[0].mxu0
        %2489 = vmatprep.mubr.f32.mxu0 0.0
        %2490 = vmatmul.mubr.f32.gmra.mrb[0].mxu0 %v2251
        %v2491 = vpop.f32.mrb[0].mxu0
        %v2492 = vadd.f32 0.0, %v2491
        %v2493 = vpop.f32.mrb[0].mxu0
        %2494 = vmatprep.mubr.f32.mxu0 0.0
        %2495 = vmatmul.mubr.f32.gmra.mrb[0].mxu0 %v2253
        %v2496 = vpop.f32.mrb[0].mxu0
        %v2497 = vadd.f32 0.0, %v2496
        %v2498 = vpop.f32.mrb[0].mxu0
        %2499 = vdwg.mxu0
        %v2500 = vmax.f32 %v2322, 0.0
        %v2501 = vmax.f32 %v2327, 0.0
        %v2502 = vmax.f32 %v2332, 0.0
        %v2503 = vmax.f32 %v2337, 0.0
        %v2504 = vmax.f32 %v2342, 0.0
        %v2505 = vmax.f32 %v2347, 0.0
        %v2506 = vmax.f32 %v2352, 0.0
        %v2507 = vmax.f32 %v2357, 0.0
        %v2508 = vmax.f32 %v2362, 0.0
        %v2509 = vmax.f32 %v2367, 0.0
        %v2510 = vmax.f32 %v2372, 0.0
        %v2511 = vmax.f32 %v2377, 0.0
        %v2512 = vmax.f32 %v2382, 0.0
        %v2513 = vmax.f32 %v2387, 0.0
        %v2514 = vmax.f32 %v2392, 0.0
        %v2515 = vmax.f32 %v2397, 0.0
        %v2516 = vmax.f32 %v2402, 0.0
        %v2517 = vmax.f32 %v2407, 0.0
        %v2518 = vmax.f32 %v2412, 0.0
        %v2519 = vmax.f32 %v2417, 0.0
        %v2520 = vmax.f32 %v2422, 0.0
        %v2521 = vmax.f32 %v2427, 0.0
        %v2522 = vmax.f32 %v2432, 0.0
        %v2523 = vmax.f32 %v2437, 0.0
        %v2524 = vmax.f32 %v2442, 0.0
        %v2525 = vmax.f32 %v2447, 0.0
        %v2526 = vmax.f32 %v2452, 0.0
        %v2527 = vmax.f32 %v2457, 0.0
        %v2528 = vmax.f32 %v2462, 0.0
        %v2529 = vmax.f32 %v2467, 0.0
        %v2530 = vmax.f32 %v2472, 0.0
        %v2531 = vmax.f32 %v2477, 0.0
        %v2532 = vmax.f32 %v2482, 0.0
        %v2533 = vmax.f32 %v2487, 0.0
        %v2534 = vmax.f32 %v2492, 0.0
        %v2535 = vmax.f32 %v2497, 0.0
        %2537 = vset.pattern.permute.xlu0 0
        %2538 = vperm.xlu0 %2537, %v380
        %v2539 = vpop.permute.xlu0 %2538
        %2542 = vset.pattern.permute.xlu0 0
        %2543 = vperm.xlu0 %2542, %v381
        %v2544 = vpop.permute.xlu0 %2543
        %2547 = vset.pattern.permute.xlu0 0
        %2548 = vperm.xlu0 %2547, %v382
        %v2549 = vpop.permute.xlu0 %2548
        %2552 = vset.pattern.permute.xlu0 0
        %2553 = vperm.xlu0 %2552, %v383
        %v2554 = vpop.permute.xlu0 %2553
        %2557 = vset.pattern.permute.xlu0 0
        %2558 = vperm.xlu0 %2557, %v384
        %v2559 = vpop.permute.xlu0 %2558
        %2562 = vset.pattern.permute.xlu0 0
        %2563 = vperm.xlu0 %2562, %v385
        %v2564 = vpop.permute.xlu0 %2563
        %2567 = vset.pattern.permute.xlu0 0
        %2568 = vperm.xlu0 %2567, %v386
        %v2569 = vpop.permute.xlu0 %2568
        %2572 = vset.pattern.permute.xlu0 0
        %2573 = vperm.xlu0 %2572, %v387
        %v2574 = vpop.permute.xlu0 %2573
        %2577 = vset.pattern.permute.xlu0 0
        %2578 = vperm.xlu0 %2577, %v388
        %v2579 = vpop.permute.xlu0 %2578
        %2582 = vset.pattern.permute.xlu0 0
        %2583 = vperm.xlu0 %2582, %v389
        %v2584 = vpop.permute.xlu0 %2583
        %2587 = vset.pattern.permute.xlu0 0
        %2588 = vperm.xlu0 %2587, %v390
        %v2589 = vpop.permute.xlu0 %2588
        %2592 = vset.pattern.permute.xlu0 0
        %2593 = vperm.xlu0 %2592, %v391
        %v2594 = vpop.permute.xlu0 %2593
        %2597 = vset.pattern.permute.xlu0 0
        %2598 = vperm.xlu0 %2597, %v392
        %v2599 = vpop.permute.xlu0 %2598
        %2602 = vset.pattern.permute.xlu0 0
        %2603 = vperm.xlu0 %2602, %v393
        %v2604 = vpop.permute.xlu0 %2603
        %2607 = vset.pattern.permute.xlu0 0
        %2608 = vperm.xlu0 %2607, %v394
        %v2609 = vpop.permute.xlu0 %2608
        %2612 = vset.pattern.permute.xlu0 0
        %2613 = vperm.xlu0 %2612, %v395
        %v2614 = vpop.permute.xlu0 %2613
        %2617 = vset.pattern.permute.xlu0 0
        %2618 = vperm.xlu0 %2617, %v396
        %v2619 = vpop.permute.xlu0 %2618
        %2622 = vset.pattern.permute.xlu0 0
        %2623 = vperm.xlu0 %2622, %v397
        %v2624 = vpop.permute.xlu0 %2623
        %2627 = vset.pattern.permute.xlu0 0
        %2628 = vperm.xlu0 %2627, %v398
        %v2629 = vpop.permute.xlu0 %2628
        %2632 = vset.pattern.permute.xlu0 0
        %2633 = vperm.xlu0 %2632, %v399
        %v2634 = vpop.permute.xlu0 %2633
        %2637 = vset.pattern.permute.xlu0 0
        %2638 = vperm.xlu0 %2637, %v400
        %v2639 = vpop.permute.xlu0 %2638
        %2642 = vset.pattern.permute.xlu0 0
        %2643 = vperm.xlu0 %2642, %v401
        %v2644 = vpop.permute.xlu0 %2643
        %2647 = vset.pattern.permute.xlu0 0
        %2648 = vperm.xlu0 %2647, %v402
        %v2649 = vpop.permute.xlu0 %2648
        %2652 = vset.pattern.permute.xlu0 0
        %2653 = vperm.xlu0 %2652, %v403
        %v2654 = vpop.permute.xlu0 %2653
        %2657 = vset.pattern.permute.xlu0 0
        %2658 = vperm.xlu0 %2657, %v404
        %v2659 = vpop.permute.xlu0 %2658
        %2662 = vset.pattern.permute.xlu0 0
        %2663 = vperm.xlu0 %2662, %v405
        %v2664 = vpop.permute.xlu0 %2663
        %2667 = vset.pattern.permute.xlu0 0
        %2668 = vperm.xlu0 %2667, %v406
        %v2669 = vpop.permute.xlu0 %2668
        %2672 = vset.pattern.permute.xlu0 0
        %2673 = vperm.xlu0 %2672, %v407
        %v2674 = vpop.permute.xlu0 %2673
        %2677 = vset.pattern.permute.xlu0 0
        %2678 = vperm.xlu0 %2677, %v408
        %v2679 = vpop.permute.xlu0 %2678
        %2682 = vset.pattern.permute.xlu0 0
        %2683 = vperm.xlu0 %2682, %v409
        %v2684 = vpop.permute.xlu0 %2683
        %2687 = vset.pattern.permute.xlu0 0
        %2688 = vperm.xlu0 %2687, %v410
        %v2689 = vpop.permute.xlu0 %2688
        %2692 = vset.pattern.permute.xlu0 0
        %2693 = vperm.xlu0 %2692, %v411
        %v2694 = vpop.permute.xlu0 %2693
        %2697 = vset.pattern.permute.xlu0 0
        %2698 = vperm.xlu0 %2697, %v412
        %v2699 = vpop.permute.xlu0 %2698
        %2702 = vset.pattern.permute.xlu0 0
        %2703 = vperm.xlu0 %2702, %v413
        %v2704 = vpop.permute.xlu0 %2703
        %2707 = vset.pattern.permute.xlu0 0
        %2708 = vperm.xlu0 %2707, %v414
        %v2709 = vpop.permute.xlu0 %2708
        %2712 = vset.pattern.permute.xlu0 0
        %2713 = vperm.xlu0 %2712, %v415
        %v2714 = vpop.permute.xlu0 %2713
        %v2716 = vmul.f32 %v2500, %v2539
        %v2717 = vmul.f32 %v2501, %v2544
        %v2718 = vmul.f32 %v2502, %v2549
        %v2719 = vmul.f32 %v2503, %v2554
        %v2720 = vmul.f32 %v2504, %v2559
        %v2721 = vmul.f32 %v2505, %v2564
        %v2722 = vmul.f32 %v2506, %v2569
        %v2723 = vmul.f32 %v2507, %v2574
        %v2724 = vmul.f32 %v2508, %v2579
        %v2725 = vmul.f32 %v2509, %v2584
        %v2726 = vmul.f32 %v2510, %v2589
        %v2727 = vmul.f32 %v2511, %v2594
        %v2728 = vmul.f32 %v2512, %v2599
        %v2729 = vmul.f32 %v2513, %v2604
        %v2730 = vmul.f32 %v2514, %v2609
        %v2731 = vmul.f32 %v2515, %v2614
        %v2732 = vmul.f32 %v2516, %v2619
        %v2733 = vmul.f32 %v2517, %v2624
        %v2734 = vmul.f32 %v2518, %v2629
        %v2735 = vmul.f32 %v2519, %v2634
        %v2736 = vmul.f32 %v2520, %v2639
        %v2737 = vmul.f32 %v2521, %v2644
        %v2738 = vmul.f32 %v2522, %v2649
        %v2739 = vmul.f32 %v2523, %v2654
        %v2740 = vmul.f32 %v2524, %v2659
        %v2741 = vmul.f32 %v2525, %v2664
        %v2742 = vmul.f32 %v2526, %v2669
        %v2743 = vmul.f32 %v2527, %v2674
        %v2744 = vmul.f32 %v2528, %v2679
        %v2745 = vmul.f32 %v2529, %v2684
        %v2746 = vmul.f32 %v2530, %v2689
        %v2747 = vmul.f32 %v2531, %v2694
        %v2748 = vmul.f32 %v2532, %v2699
        %v2749 = vmul.f32 %v2533, %v2704
        %v2750 = vmul.f32 %v2534, %v2709
        %v2751 = vmul.f32 %v2535, %v2714
        %v2752 = vld [vmem:[#allocation8] sm:$0xff]
        %v2753 = vld [vmem:[#allocation8 + $0x8] sm:$0xff]
        %v2754 = vld [vmem:[#allocation8 + $0x10] sm:$0xff]
        %v2755 = vld [vmem:[#allocation8 + $0x18] sm:$0xff]
        %v2756 = vld [vmem:[#allocation8 + $0x20] sm:$0xff]
        %v2757 = vld [vmem:[#allocation8 + $0x28] sm:$0xff]
        %v2758 = vld [vmem:[#allocation8 + $0x30] sm:$0xff]
        %v2759 = vld [vmem:[#allocation8 + $0x38] sm:$0xff]
        %v2760 = vld [vmem:[#allocation8 + $0x40] sm:$0xff]
        %v2761 = vld [vmem:[#allocation8 + $0x48] sm:$0xff]
        %v2762 = vld [vmem:[#allocation8 + $0x50] sm:$0xff]
        %v2763 = vld [vmem:[#allocation8 + $0x58] sm:$0xff]
        %v2764 = vld [vmem:[#allocation8 + $0x60] sm:$0xff]
        %v2765 = vld [vmem:[#allocation8 + $0x68] sm:$0xff]
        %v2766 = vld [vmem:[#allocation8 + $0x70] sm:$0xff]
        %v2767 = vld [vmem:[#allocation8 + $0x78] sm:$0xff]
        %v2768 = vld [vmem:[#allocation8 + $0x80] sm:$0xff]
        %v2769 = vld [vmem:[#allocation8 + $0x88] sm:$0xff]
        %v2770 = vld [vmem:[#allocation8 + $0x90] sm:$0xff]
        %v2771 = vld [vmem:[#allocation8 + $0x98] sm:$0xff]
        %v2772 = vld [vmem:[#allocation8 + $0xa0] sm:$0xff]
        %v2773 = vld [vmem:[#allocation8 + $0xa8] sm:$0xff]
        %v2774 = vld [vmem:[#allocation8 + $0xb0] sm:$0xff]
        %v2775 = vld [vmem:[#allocation8 + $0xb8] sm:$0xff]
        %v2776 = vld [vmem:[#allocation8 + $0xc0] sm:$0xff]
        %v2777 = vld [vmem:[#allocation8 + $0xc8] sm:$0xff]
        %v2778 = vld [vmem:[#allocation8 + $0xd0] sm:$0xff]
        %v2779 = vld [vmem:[#allocation8 + $0xd8] sm:$0xff]
        %v2780 = vld [vmem:[#allocation8 + $0xe0] sm:$0xff]
        %v2781 = vld [vmem:[#allocation8 + $0xe8] sm:$0xff]
        %v2782 = vld [vmem:[#allocation8 + $0xf0] sm:$0xff]
        %v2783 = vld [vmem:[#allocation8 + $0xf8] sm:$0xff]
        %v2784 = vld [vmem:[#allocation8 + $0x100] sm:$0xff]
        %v2785 = vld [vmem:[#allocation8 + $0x108] sm:$0xff]
        %v2786 = vld [vmem:[#allocation8 + $0x110] sm:$0xff]
        %v2787 = vld [vmem:[#allocation8 + $0x118] sm:$0xff]
        %v2822 = vrot.slane %v2716, 1
        %v2823 = vsel %vm460, %v461, %v2822
        %v2824 = vrot.slane %v2717, 1
        %v2825 = vsel %vm460, %v2822, %v2824
        %v2826 = vrot.slane %v2718, 1
        %v2827 = vsel %vm460, %v2824, %v2826
        %v2828 = vrot.slane %v2719, 1
        %v2829 = vsel %vm460, %v2826, %v2828
        %v2830 = vrot.slane %v2720, 1
        %v2831 = vsel %vm460, %v2828, %v2830
        %v2832 = vrot.slane %v2721, 1
        %v2833 = vsel %vm460, %v2830, %v2832
        %v2834 = vrot.slane %v2722, 1
        %v2835 = vsel %vm460, %v2832, %v2834
        %v2836 = vrot.slane %v2723, 1
        %v2837 = vsel %vm460, %v2834, %v2836
        %v2838 = vrot.slane %v2724, 1
        %v2839 = vsel %vm460, %v2836, %v2838
        %v2840 = vrot.slane %v2725, 1
        %v2841 = vsel %vm460, %v2838, %v2840
        %v2842 = vrot.slane %v2726, 1
        %v2843 = vsel %vm460, %v2840, %v2842
        %v2844 = vrot.slane %v2727, 1
        %v2845 = vsel %vm460, %v2842, %v2844
        %v2846 = vrot.slane %v2728, 1
        %v2847 = vsel %vm460, %v2844, %v2846
        %v2848 = vrot.slane %v2729, 1
        %v2849 = vsel %vm460, %v2846, %v2848
        %v2850 = vrot.slane %v2730, 1
        %v2851 = vsel %vm460, %v2848, %v2850
        %v2852 = vrot.slane %v2731, 1
        %v2853 = vsel %vm460, %v2850, %v2852
        %v2854 = vrot.slane %v2732, 1
        %v2855 = vsel %vm460, %v2852, %v2854
        %v2856 = vrot.slane %v2733, 1
        %v2857 = vsel %vm460, %v2854, %v2856
        %v2858 = vrot.slane %v2734, 1
        %v2859 = vsel %vm460, %v2856, %v2858
        %v2860 = vrot.slane %v2735, 1
        %v2861 = vsel %vm460, %v2858, %v2860
        %v2862 = vrot.slane %v2736, 1
        %v2863 = vsel %vm460, %v2860, %v2862
        %v2864 = vrot.slane %v2737, 1
        %v2865 = vsel %vm460, %v2862, %v2864
        %v2866 = vrot.slane %v2738, 1
        %v2867 = vsel %vm460, %v2864, %v2866
        %v2868 = vrot.slane %v2739, 1
        %v2869 = vsel %vm460, %v2866, %v2868
        %v2870 = vrot.slane %v2740, 1
        %v2871 = vsel %vm460, %v2868, %v2870
        %v2872 = vrot.slane %v2741, 1
        %v2873 = vsel %vm460, %v2870, %v2872
        %v2874 = vrot.slane %v2742, 1
        %v2875 = vsel %vm460, %v2872, %v2874
        %v2876 = vrot.slane %v2743, 1
        %v2877 = vsel %vm460, %v2874, %v2876
        %v2878 = vrot.slane %v2744, 1
        %v2879 = vsel %vm460, %v2876, %v2878
        %v2880 = vrot.slane %v2745, 1
        %v2881 = vsel %vm460, %v2878, %v2880
        %v2882 = vrot.slane %v2746, 1
        %v2883 = vsel %vm460, %v2880, %v2882
        %v2884 = vrot.slane %v2747, 1
        %v2885 = vsel %vm460, %v2882, %v2884
        %v2886 = vrot.slane %v2748, 1
        %v2887 = vsel %vm460, %v2884, %v2886
        %v2888 = vrot.slane %v2749, 1
        %v2889 = vsel %vm460, %v2886, %v2888
        %2890 = vrot.lane.b32.xlu0 %v462, 32
        %v2891 = vpop.permute.xlu0 %2890
        %2892 = vrot.lane.b32.xlu0 %v2823, 32
        %v2893 = vpop.permute.xlu0 %2892
        %2894 = vrot.lane.b32.xlu0 %v2825, 32
        %v2895 = vpop.permute.xlu0 %2894
        %2896 = vrot.lane.b32.xlu0 %v2827, 32
        %v2897 = vpop.permute.xlu0 %2896
        %2898 = vrot.lane.b32.xlu0 %v2829, 32
        %v2899 = vpop.permute.xlu0 %2898
        %2900 = vrot.lane.b32.xlu0 %v2831, 32
        %v2901 = vpop.permute.xlu0 %2900
        %2902 = vrot.lane.b32.xlu0 %v2833, 32
        %v2903 = vpop.permute.xlu0 %2902
        %2904 = vrot.lane.b32.xlu0 %v2835, 32
        %v2905 = vpop.permute.xlu0 %2904
        %2906 = vrot.lane.b32.xlu0 %v2837, 32
        %v2907 = vpop.permute.xlu0 %2906
        %2908 = vrot.lane.b32.xlu0 %v2839, 32
        %v2909 = vpop.permute.xlu0 %2908
        %2910 = vrot.lane.b32.xlu0 %v2841, 32
        %v2911 = vpop.permute.xlu0 %2910
        %2912 = vrot.lane.b32.xlu0 %v2843, 32
        %v2913 = vpop.permute.xlu0 %2912
        %2914 = vrot.lane.b32.xlu0 %v2845, 32
        %v2915 = vpop.permute.xlu0 %2914
        %2916 = vrot.lane.b32.xlu0 %v2847, 32
        %v2917 = vpop.permute.xlu0 %2916
        %2918 = vrot.lane.b32.xlu0 %v2849, 32
        %v2919 = vpop.permute.xlu0 %2918
        %2920 = vrot.lane.b32.xlu0 %v2851, 32
        %v2921 = vpop.permute.xlu0 %2920
        %2922 = vrot.lane.b32.xlu0 %v2853, 32
        %v2923 = vpop.permute.xlu0 %2922
        %2924 = vrot.lane.b32.xlu0 %v2855, 32
        %v2925 = vpop.permute.xlu0 %2924
        %2926 = vrot.lane.b32.xlu0 %v2857, 32
        %v2927 = vpop.permute.xlu0 %2926
        %2928 = vrot.lane.b32.xlu0 %v2859, 32
        %v2929 = vpop.permute.xlu0 %2928
        %2930 = vrot.lane.b32.xlu0 %v2861, 32
        %v2931 = vpop.permute.xlu0 %2930
        %2932 = vrot.lane.b32.xlu0 %v2863, 32
        %v2933 = vpop.permute.xlu0 %2932
        %2934 = vrot.lane.b32.xlu0 %v2865, 32
        %v2935 = vpop.permute.xlu0 %2934
        %2936 = vrot.lane.b32.xlu0 %v2867, 32
        %v2937 = vpop.permute.xlu0 %2936
        %2938 = vrot.lane.b32.xlu0 %v2869, 32
        %v2939 = vpop.permute.xlu0 %2938
        %2940 = vrot.lane.b32.xlu0 %v2871, 32
        %v2941 = vpop.permute.xlu0 %2940
        %2942 = vrot.lane.b32.xlu0 %v2873, 32
        %v2943 = vpop.permute.xlu0 %2942
        %2944 = vrot.lane.b32.xlu0 %v2875, 32
        %v2945 = vpop.permute.xlu0 %2944
        %2946 = vrot.lane.b32.xlu0 %v2877, 32
        %v2947 = vpop.permute.xlu0 %2946
        %2948 = vrot.lane.b32.xlu0 %v2879, 32
        %v2949 = vpop.permute.xlu0 %2948
        %2950 = vrot.lane.b32.xlu0 %v2881, 32
        %v2951 = vpop.permute.xlu0 %2950
        %2952 = vrot.lane.b32.xlu0 %v2883, 32
        %v2953 = vpop.permute.xlu0 %2952
        %2954 = vrot.lane.b32.xlu0 %v2885, 32
        %v2955 = vpop.permute.xlu0 %2954
        %2956 = vrot.lane.b32.xlu0 %v2887, 32
        %v2957 = vpop.permute.xlu0 %2956
        %2958 = vrot.lane.b32.xlu0 %v2889, 32
        %v2959 = vpop.permute.xlu0 %2958
        %2960 = vrot.lane.b32.xlu0 %v2888, 32
        %v2961 = vpop.permute.xlu0 %2960
        %v2998 = vrot.slane %v2716, 2
        %v2999 = vsel %vm639, %v640, %v2998
        %v3000 = vrot.slane %v2717, 2
        %v3001 = vsel %vm639, %v2998, %v3000
        %v3002 = vrot.slane %v2718, 2
        %v3003 = vsel %vm639, %v3000, %v3002
        %v3004 = vrot.slane %v2719, 2
        %v3005 = vsel %vm639, %v3002, %v3004
        %v3006 = vrot.slane %v2720, 2
        %v3007 = vsel %vm639, %v3004, %v3006
        %v3008 = vrot.slane %v2721, 2
        %v3009 = vsel %vm639, %v3006, %v3008
        %v3010 = vrot.slane %v2722, 2
        %v3011 = vsel %vm639, %v3008, %v3010
        %v3012 = vrot.slane %v2723, 2
        %v3013 = vsel %vm639, %v3010, %v3012
        %v3014 = vrot.slane %v2724, 2
        %v3015 = vsel %vm639, %v3012, %v3014
        %v3016 = vrot.slane %v2725, 2
        %v3017 = vsel %vm639, %v3014, %v3016
        %v3018 = vrot.slane %v2726, 2
        %v3019 = vsel %vm639, %v3016, %v3018
        %v3020 = vrot.slane %v2727, 2
        %v3021 = vsel %vm639, %v3018, %v3020
        %v3022 = vrot.slane %v2728, 2
        %v3023 = vsel %vm639, %v3020, %v3022
        %v3024 = vrot.slane %v2729, 2
        %v3025 = vsel %vm639, %v3022, %v3024
        %v3026 = vrot.slane %v2730, 2
        %v3027 = vsel %vm639, %v3024, %v3026
        %v3028 = vrot.slane %v2731, 2
        %v3029 = vsel %vm639, %v3026, %v3028
        %v3030 = vrot.slane %v2732, 2
        %v3031 = vsel %vm639, %v3028, %v3030
        %v3032 = vrot.slane %v2733, 2
        %v3033 = vsel %vm639, %v3030, %v3032
        %v3034 = vrot.slane %v2734, 2
        %v3035 = vsel %vm639, %v3032, %v3034
        %v3036 = vrot.slane %v2735, 2
        %v3037 = vsel %vm639, %v3034, %v3036
        %v3038 = vrot.slane %v2736, 2
        %v3039 = vsel %vm639, %v3036, %v3038
        %v3040 = vrot.slane %v2737, 2
        %v3041 = vsel %vm639, %v3038, %v3040
        %v3042 = vrot.slane %v2738, 2
        %v3043 = vsel %vm639, %v3040, %v3042
        %v3044 = vrot.slane %v2739, 2
        %v3045 = vsel %vm639, %v3042, %v3044
        %v3046 = vrot.slane %v2740, 2
        %v3047 = vsel %vm639, %v3044, %v3046
        %v3048 = vrot.slane %v2741, 2
        %v3049 = vsel %vm639, %v3046, %v3048
        %v3050 = vrot.slane %v2742, 2
        %v3051 = vsel %vm639, %v3048, %v3050
        %v3052 = vrot.slane %v2743, 2
        %v3053 = vsel %vm639, %v3050, %v3052
        %v3054 = vrot.slane %v2744, 2
        %v3055 = vsel %vm639, %v3052, %v3054
        %v3056 = vrot.slane %v2745, 2
        %v3057 = vsel %vm639, %v3054, %v3056
        %v3058 = vrot.slane %v2746, 2
        %v3059 = vsel %vm639, %v3056, %v3058
        %v3060 = vrot.slane %v2747, 2
        %v3061 = vsel %vm639, %v3058, %v3060
        %v3062 = vrot.slane %v2748, 2
        %v3063 = vsel %vm639, %v3060, %v3062
        %v3064 = vrot.slane %v2749, 2
        %v3065 = vsel %vm639, %v3062, %v3064
        %3066 = vrot.lane.b32.xlu0 %v641, 64
        %v3067 = vpop.permute.xlu0 %3066
        %3068 = vrot.lane.b32.xlu0 %v2999, 64
        %v3069 = vpop.permute.xlu0 %3068
        %3070 = vrot.lane.b32.xlu0 %v3001, 64
        %v3071 = vpop.permute.xlu0 %3070
        %3072 = vrot.lane.b32.xlu0 %v3003, 64
        %v3073 = vpop.permute.xlu0 %3072
        %3074 = vrot.lane.b32.xlu0 %v3005, 64
        %v3075 = vpop.permute.xlu0 %3074
        %3076 = vrot.lane.b32.xlu0 %v3007, 64
        %v3077 = vpop.permute.xlu0 %3076
        %3078 = vrot.lane.b32.xlu0 %v3009, 64
        %v3079 = vpop.permute.xlu0 %3078
        %3080 = vrot.lane.b32.xlu0 %v3011, 64
        %v3081 = vpop.permute.xlu0 %3080
        %3082 = vrot.lane.b32.xlu0 %v3013, 64
        %v3083 = vpop.permute.xlu0 %3082
        %3084 = vrot.lane.b32.xlu0 %v3015, 64
        %v3085 = vpop.permute.xlu0 %3084
        %3086 = vrot.lane.b32.xlu0 %v3017, 64
        %v3087 = vpop.permute.xlu0 %3086
        %3088 = vrot.lane.b32.xlu0 %v3019, 64
        %v3089 = vpop.permute.xlu0 %3088
        %3090 = vrot.lane.b32.xlu0 %v3021, 64
        %v3091 = vpop.permute.xlu0 %3090
        %3092 = vrot.lane.b32.xlu0 %v3023, 64
        %v3093 = vpop.permute.xlu0 %3092
        %3094 = vrot.lane.b32.xlu0 %v3025, 64
        %v3095 = vpop.permute.xlu0 %3094
        %3096 = vrot.lane.b32.xlu0 %v3027, 64
        %v3097 = vpop.permute.xlu0 %3096
        %3098 = vrot.lane.b32.xlu0 %v3029, 64
        %v3099 = vpop.permute.xlu0 %3098
        %3100 = vrot.lane.b32.xlu0 %v3031, 64
        %v3101 = vpop.permute.xlu0 %3100
        %3102 = vrot.lane.b32.xlu0 %v3033, 64
        %v3103 = vpop.permute.xlu0 %3102
        %3104 = vrot.lane.b32.xlu0 %v3035, 64
        %v3105 = vpop.permute.xlu0 %3104
        %3106 = vrot.lane.b32.xlu0 %v3037, 64
        %v3107 = vpop.permute.xlu0 %3106
        %3108 = vrot.lane.b32.xlu0 %v3039, 64
        %v3109 = vpop.permute.xlu0 %3108
        %3110 = vrot.lane.b32.xlu0 %v3041, 64
        %v3111 = vpop.permute.xlu0 %3110
        %3112 = vrot.lane.b32.xlu0 %v3043, 64
        %v3113 = vpop.permute.xlu0 %3112
        %3114 = vrot.lane.b32.xlu0 %v3045, 64
        %v3115 = vpop.permute.xlu0 %3114
        %3116 = vrot.lane.b32.xlu0 %v3047, 64
        %v3117 = vpop.permute.xlu0 %3116
        %3118 = vrot.lane.b32.xlu0 %v3049, 64
        %v3119 = vpop.permute.xlu0 %3118
        %3120 = vrot.lane.b32.xlu0 %v3051, 64
        %v3121 = vpop.permute.xlu0 %3120
        %3122 = vrot.lane.b32.xlu0 %v3053, 64
        %v3123 = vpop.permute.xlu0 %3122
        %3124 = vrot.lane.b32.xlu0 %v3055, 64
        %v3125 = vpop.permute.xlu0 %3124
        %3126 = vrot.lane.b32.xlu0 %v3057, 64
        %v3127 = vpop.permute.xlu0 %3126
        %3128 = vrot.lane.b32.xlu0 %v3059, 64
        %v3129 = vpop.permute.xlu0 %3128
        %3130 = vrot.lane.b32.xlu0 %v3061, 64
        %v3131 = vpop.permute.xlu0 %3130
        %3132 = vrot.lane.b32.xlu0 %v3063, 64
        %v3133 = vpop.permute.xlu0 %3132
        %3134 = vrot.lane.b32.xlu0 %v3065, 64
        %v3135 = vpop.permute.xlu0 %3134
        %3136 = vrot.lane.b32.xlu0 %v3064, 64
        %v3137 = vpop.permute.xlu0 %3136
        %v3176 = vrot.slane %v2750, 2
        %v3177 = vsel %vm639, %v3064, %v3176
        %v3178 = vrot.slane %v2751, 2
        %v3179 = vsel %vm639, %v3176, %v3178
        %3180 = vrot.lane.b32.xlu0 %v2999, 96
        %v3181 = vpop.permute.xlu0 %3180
        %3182 = vrot.lane.b32.xlu0 %v3001, 96
        %v3183 = vpop.permute.xlu0 %3182
        %3184 = vrot.lane.b32.xlu0 %v3003, 96
        %v3185 = vpop.permute.xlu0 %3184
        %3186 = vrot.lane.b32.xlu0 %v3005, 96
        %v3187 = vpop.permute.xlu0 %3186
        %3188 = vrot.lane.b32.xlu0 %v3007, 96
        %v3189 = vpop.permute.xlu0 %3188
        %3190 = vrot.lane.b32.xlu0 %v3009, 96
        %v3191 = vpop.permute.xlu0 %3190
        %3192 = vrot.lane.b32.xlu0 %v3011, 96
        %v3193 = vpop.permute.xlu0 %3192
        %3194 = vrot.lane.b32.xlu0 %v3013, 96
        %v3195 = vpop.permute.xlu0 %3194
        %3196 = vrot.lane.b32.xlu0 %v3015, 96
        %v3197 = vpop.permute.xlu0 %3196
        %3198 = vrot.lane.b32.xlu0 %v3017, 96
        %v3199 = vpop.permute.xlu0 %3198
        %3200 = vrot.lane.b32.xlu0 %v3019, 96
        %v3201 = vpop.permute.xlu0 %3200
        %3202 = vrot.lane.b32.xlu0 %v3021, 96
        %v3203 = vpop.permute.xlu0 %3202
        %3204 = vrot.lane.b32.xlu0 %v3023, 96
        %v3205 = vpop.permute.xlu0 %3204
        %3206 = vrot.lane.b32.xlu0 %v3025, 96
        %v3207 = vpop.permute.xlu0 %3206
        %3208 = vrot.lane.b32.xlu0 %v3027, 96
        %v3209 = vpop.permute.xlu0 %3208
        %3210 = vrot.lane.b32.xlu0 %v3029, 96
        %v3211 = vpop.permute.xlu0 %3210
        %3212 = vrot.lane.b32.xlu0 %v3031, 96
        %v3213 = vpop.permute.xlu0 %3212
        %3214 = vrot.lane.b32.xlu0 %v3033, 96
        %v3215 = vpop.permute.xlu0 %3214
        %3216 = vrot.lane.b32.xlu0 %v3035, 96
        %v3217 = vpop.permute.xlu0 %3216
        %3218 = vrot.lane.b32.xlu0 %v3037, 96
        %v3219 = vpop.permute.xlu0 %3218
        %3220 = vrot.lane.b32.xlu0 %v3039, 96
        %v3221 = vpop.permute.xlu0 %3220
        %3222 = vrot.lane.b32.xlu0 %v3041, 96
        %v3223 = vpop.permute.xlu0 %3222
        %3224 = vrot.lane.b32.xlu0 %v3043, 96
        %v3225 = vpop.permute.xlu0 %3224
        %3226 = vrot.lane.b32.xlu0 %v3045, 96
        %v3227 = vpop.permute.xlu0 %3226
        %3228 = vrot.lane.b32.xlu0 %v3047, 96
        %v3229 = vpop.permute.xlu0 %3228
        %3230 = vrot.lane.b32.xlu0 %v3049, 96
        %v3231 = vpop.permute.xlu0 %3230
        %3232 = vrot.lane.b32.xlu0 %v3051, 96
        %v3233 = vpop.permute.xlu0 %3232
        %3234 = vrot.lane.b32.xlu0 %v3053, 96
        %v3235 = vpop.permute.xlu0 %3234
        %3236 = vrot.lane.b32.xlu0 %v3055, 96
        %v3237 = vpop.permute.xlu0 %3236
        %3238 = vrot.lane.b32.xlu0 %v3057, 96
        %v3239 = vpop.permute.xlu0 %3238
        %3240 = vrot.lane.b32.xlu0 %v3059, 96
        %v3241 = vpop.permute.xlu0 %3240
        %3242 = vrot.lane.b32.xlu0 %v3061, 96
        %v3243 = vpop.permute.xlu0 %3242
        %3244 = vrot.lane.b32.xlu0 %v3063, 96
        %v3245 = vpop.permute.xlu0 %3244
        %3246 = vrot.lane.b32.xlu0 %v3065, 96
        %v3247 = vpop.permute.xlu0 %3246
        %3248 = vrot.lane.b32.xlu0 %v3177, 96
        %v3249 = vpop.permute.xlu0 %3248
        %3250 = vrot.lane.b32.xlu0 %v3179, 96
        %v3251 = vpop.permute.xlu0 %3250
        %3252 = vrot.lane.b32.xlu0 %v3178, 96
        %v3253 = vpop.permute.xlu0 %3252
        %v3291 = vrot.slane %v2716, 3
        %v3292 = vrot.slane %v2717, 3
        %v3293 = vsel %vm935, %v3291, %v3292
        %v3294 = vrot.slane %v2718, 3
        %v3295 = vsel %vm935, %v3292, %v3294
        %v3296 = vrot.slane %v2719, 3
        %v3297 = vsel %vm935, %v3294, %v3296
        %v3298 = vrot.slane %v2720, 3
        %v3299 = vsel %vm935, %v3296, %v3298
        %v3300 = vrot.slane %v2721, 3
        %v3301 = vsel %vm935, %v3298, %v3300
        %v3302 = vrot.slane %v2722, 3
        %v3303 = vsel %vm935, %v3300, %v3302
        %v3304 = vrot.slane %v2723, 3
        %v3305 = vsel %vm935, %v3302, %v3304
        %v3306 = vrot.slane %v2724, 3
        %v3307 = vsel %vm935, %v3304, %v3306
        %v3308 = vrot.slane %v2725, 3
        %v3309 = vsel %vm935, %v3306, %v3308
        %v3310 = vrot.slane %v2726, 3
        %v3311 = vsel %vm935, %v3308, %v3310
        %v3312 = vrot.slane %v2727, 3
        %v3313 = vsel %vm935, %v3310, %v3312
        %v3314 = vrot.slane %v2728, 3
        %v3315 = vsel %vm935, %v3312, %v3314
        %v3316 = vrot.slane %v2729, 3
        %v3317 = vsel %vm935, %v3314, %v3316
        %v3318 = vrot.slane %v2730, 3
        %v3319 = vsel %vm935, %v3316, %v3318
        %v3320 = vrot.slane %v2731, 3
        %v3321 = vsel %vm935, %v3318, %v3320
        %v3322 = vrot.slane %v2732, 3
        %v3323 = vsel %vm935, %v3320, %v3322
        %v3324 = vrot.slane %v2733, 3
        %v3325 = vsel %vm935, %v3322, %v3324
        %v3326 = vrot.slane %v2734, 3
        %v3327 = vsel %vm935, %v3324, %v3326
        %v3328 = vrot.slane %v2735, 3
        %v3329 = vsel %vm935, %v3326, %v3328
        %v3330 = vrot.slane %v2736, 3
        %v3331 = vsel %vm935, %v3328, %v3330
        %v3332 = vrot.slane %v2737, 3
        %v3333 = vsel %vm935, %v3330, %v3332
        %v3334 = vrot.slane %v2738, 3
        %v3335 = vsel %vm935, %v3332, %v3334
        %v3336 = vrot.slane %v2739, 3
        %v3337 = vsel %vm935, %v3334, %v3336
        %v3338 = vrot.slane %v2740, 3
        %v3339 = vsel %vm935, %v3336, %v3338
        %v3340 = vrot.slane %v2741, 3
        %v3341 = vsel %vm935, %v3338, %v3340
        %v3342 = vrot.slane %v2742, 3
        %v3343 = vsel %vm935, %v3340, %v3342
        %v3344 = vrot.slane %v2743, 3
        %v3345 = vsel %vm935, %v3342, %v3344
        %v3346 = vrot.slane %v2744, 3
        %v3347 = vsel %vm935, %v3344, %v3346
        %v3348 = vrot.slane %v2745, 3
        %v3349 = vsel %vm935, %v3346, %v3348
        %v3350 = vrot.slane %v2746, 3
        %v3351 = vsel %vm935, %v3348, %v3350
        %v3352 = vrot.slane %v2747, 3
        %v3353 = vsel %vm935, %v3350, %v3352
        %v3354 = vrot.slane %v2748, 3
        %v3355 = vsel %vm935, %v3352, %v3354
        %v3356 = vrot.slane %v2749, 3
        %v3357 = vsel %vm935, %v3354, %v3356
        %v3358 = vrot.slane %v2750, 3
        %v3359 = vsel %vm935, %v3356, %v3358
        %v3360 = vrot.slane %v2751, 3
        %v3361 = vsel %vm935, %v3358, %v3360
        %v3399 = vrot.slane %v2716, 4
        %v3400 = vrot.slane %v2717, 4
        %v3401 = vsel %vm1118, %v3399, %v3400
        %v3402 = vrot.slane %v2718, 4
        %v3403 = vsel %vm1118, %v3400, %v3402
        %v3404 = vrot.slane %v2719, 4
        %v3405 = vsel %vm1118, %v3402, %v3404
        %v3406 = vrot.slane %v2720, 4
        %v3407 = vsel %vm1118, %v3404, %v3406
        %v3408 = vrot.slane %v2721, 4
        %v3409 = vsel %vm1118, %v3406, %v3408
        %v3410 = vrot.slane %v2722, 4
        %v3411 = vsel %vm1118, %v3408, %v3410
        %v3412 = vrot.slane %v2723, 4
        %v3413 = vsel %vm1118, %v3410, %v3412
        %v3414 = vrot.slane %v2724, 4
        %v3415 = vsel %vm1118, %v3412, %v3414
        %v3416 = vrot.slane %v2725, 4
        %v3417 = vsel %vm1118, %v3414, %v3416
        %v3418 = vrot.slane %v2726, 4
        %v3419 = vsel %vm1118, %v3416, %v3418
        %v3420 = vrot.slane %v2727, 4
        %v3421 = vsel %vm1118, %v3418, %v3420
        %v3422 = vrot.slane %v2728, 4
        %v3423 = vsel %vm1118, %v3420, %v3422
        %v3424 = vrot.slane %v2729, 4
        %v3425 = vsel %vm1118, %v3422, %v3424
        %v3426 = vrot.slane %v2730, 4
        %v3427 = vsel %vm1118, %v3424, %v3426
        %v3428 = vrot.slane %v2731, 4
        %v3429 = vsel %vm1118, %v3426, %v3428
        %v3430 = vrot.slane %v2732, 4
        %v3431 = vsel %vm1118, %v3428, %v3430
        %v3432 = vrot.slane %v2733, 4
        %v3433 = vsel %vm1118, %v3430, %v3432
        %v3434 = vrot.slane %v2734, 4
        %v3435 = vsel %vm1118, %v3432, %v3434
        %v3436 = vrot.slane %v2735, 4
        %v3437 = vsel %vm1118, %v3434, %v3436
        %v3438 = vrot.slane %v2736, 4
        %v3439 = vsel %vm1118, %v3436, %v3438
        %v3440 = vrot.slane %v2737, 4
        %v3441 = vsel %vm1118, %v3438, %v3440
        %v3442 = vrot.slane %v2738, 4
        %v3443 = vsel %vm1118, %v3440, %v3442
        %v3444 = vrot.slane %v2739, 4
        %v3445 = vsel %vm1118, %v3442, %v3444
        %v3446 = vrot.slane %v2740, 4
        %v3447 = vsel %vm1118, %v3444, %v3446
        %v3448 = vrot.slane %v2741, 4
        %v3449 = vsel %vm1118, %v3446, %v3448
        %v3450 = vrot.slane %v2742, 4
        %v3451 = vsel %vm1118, %v3448, %v3450
        %v3452 = vrot.slane %v2743, 4
        %v3453 = vsel %vm1118, %v3450, %v3452
        %v3454 = vrot.slane %v2744, 4
        %v3455 = vsel %vm1118, %v3452, %v3454
        %v3456 = vrot.slane %v2745, 4
        %v3457 = vsel %vm1118, %v3454, %v3456
        %v3458 = vrot.slane %v2746, 4
        %v3459 = vsel %vm1118, %v3456, %v3458
        %v3460 = vrot.slane %v2747, 4
        %v3461 = vsel %vm1118, %v3458, %v3460
        %v3462 = vrot.slane %v2748, 4
        %v3463 = vsel %vm1118, %v3460, %v3462
        %v3464 = vrot.slane %v2749, 4
        %v3465 = vsel %vm1118, %v3462, %v3464
        %v3466 = vrot.slane %v2750, 4
        %v3467 = vsel %vm1118, %v3464, %v3466
        %v3468 = vrot.slane %v2751, 4
        %v3469 = vsel %vm1118, %v3466, %v3468
        %v3470 = vsel %vm1118, %v3468, %v1190
        %3471 = vrot.lane.b32.xlu0 %v3399, 32
        %v3472 = vpop.permute.xlu0 %3471
        %3473 = vrot.lane.b32.xlu0 %v3401, 32
        %v3474 = vpop.permute.xlu0 %3473
        %3475 = vrot.lane.b32.xlu0 %v3403, 32
        %v3476 = vpop.permute.xlu0 %3475
        %3477 = vrot.lane.b32.xlu0 %v3405, 32
        %v3478 = vpop.permute.xlu0 %3477
        %3479 = vrot.lane.b32.xlu0 %v3407, 32
        %v3480 = vpop.permute.xlu0 %3479
        %3481 = vrot.lane.b32.xlu0 %v3409, 32
        %v3482 = vpop.permute.xlu0 %3481
        %3483 = vrot.lane.b32.xlu0 %v3411, 32
        %v3484 = vpop.permute.xlu0 %3483
        %3485 = vrot.lane.b32.xlu0 %v3413, 32
        %v3486 = vpop.permute.xlu0 %3485
        %3487 = vrot.lane.b32.xlu0 %v3415, 32
        %v3488 = vpop.permute.xlu0 %3487
        %3489 = vrot.lane.b32.xlu0 %v3417, 32
        %v3490 = vpop.permute.xlu0 %3489
        %3491 = vrot.lane.b32.xlu0 %v3419, 32
        %v3492 = vpop.permute.xlu0 %3491
        %3493 = vrot.lane.b32.xlu0 %v3421, 32
        %v3494 = vpop.permute.xlu0 %3493
        %3495 = vrot.lane.b32.xlu0 %v3423, 32
        %v3496 = vpop.permute.xlu0 %3495
        %3497 = vrot.lane.b32.xlu0 %v3425, 32
        %v3498 = vpop.permute.xlu0 %3497
        %3499 = vrot.lane.b32.xlu0 %v3427, 32
        %v3500 = vpop.permute.xlu0 %3499
        %3501 = vrot.lane.b32.xlu0 %v3429, 32
        %v3502 = vpop.permute.xlu0 %3501
        %3503 = vrot.lane.b32.xlu0 %v3431, 32
        %v3504 = vpop.permute.xlu0 %3503
        %3505 = vrot.lane.b32.xlu0 %v3433, 32
        %v3506 = vpop.permute.xlu0 %3505
        %3507 = vrot.lane.b32.xlu0 %v3435, 32
        %v3508 = vpop.permute.xlu0 %3507
        %3509 = vrot.lane.b32.xlu0 %v3437, 32
        %v3510 = vpop.permute.xlu0 %3509
        %3511 = vrot.lane.b32.xlu0 %v3439, 32
        %v3512 = vpop.permute.xlu0 %3511
        %3513 = vrot.lane.b32.xlu0 %v3441, 32
        %v3514 = vpop.permute.xlu0 %3513
        %3515 = vrot.lane.b32.xlu0 %v3443, 32
        %v3516 = vpop.permute.xlu0 %3515
        %3517 = vrot.lane.b32.xlu0 %v3445, 32
        %v3518 = vpop.permute.xlu0 %3517
        %3519 = vrot.lane.b32.xlu0 %v3447, 32
        %v3520 = vpop.permute.xlu0 %3519
        %3521 = vrot.lane.b32.xlu0 %v3449, 32
        %v3522 = vpop.permute.xlu0 %3521
        %3523 = vrot.lane.b32.xlu0 %v3451, 32
        %v3524 = vpop.permute.xlu0 %3523
        %3525 = vrot.lane.b32.xlu0 %v3453, 32
        %v3526 = vpop.permute.xlu0 %3525
        %3527 = vrot.lane.b32.xlu0 %v3455, 32
        %v3528 = vpop.permute.xlu0 %3527
        %3529 = vrot.lane.b32.xlu0 %v3457, 32
        %v3530 = vpop.permute.xlu0 %3529
        %3531 = vrot.lane.b32.xlu0 %v3459, 32
        %v3532 = vpop.permute.xlu0 %3531
        %3533 = vrot.lane.b32.xlu0 %v3461, 32
        %v3534 = vpop.permute.xlu0 %3533
        %3535 = vrot.lane.b32.xlu0 %v3463, 32
        %v3536 = vpop.permute.xlu0 %3535
        %3537 = vrot.lane.b32.xlu0 %v3465, 32
        %v3538 = vpop.permute.xlu0 %3537
        %3539 = vrot.lane.b32.xlu0 %v3467, 32
        %v3540 = vpop.permute.xlu0 %3539
        %3541 = vrot.lane.b32.xlu0 %v3469, 32
        %v3542 = vpop.permute.xlu0 %3541
        %3543 = vrot.lane.b32.xlu0 %v3470, 32
        %v3544 = vpop.permute.xlu0 %3543
        %3582 = vrot.lane.b32.xlu0 %v3402, 64
        %v3583 = vpop.permute.xlu0 %3582
        %3584 = vrot.lane.b32.xlu0 %v3405, 64
        %v3585 = vpop.permute.xlu0 %3584
        %3586 = vrot.lane.b32.xlu0 %v3407, 64
        %v3587 = vpop.permute.xlu0 %3586
        %3588 = vrot.lane.b32.xlu0 %v3409, 64
        %v3589 = vpop.permute.xlu0 %3588
        %3590 = vrot.lane.b32.xlu0 %v3411, 64
        %v3591 = vpop.permute.xlu0 %3590
        %3592 = vrot.lane.b32.xlu0 %v3413, 64
        %v3593 = vpop.permute.xlu0 %3592
        %3594 = vrot.lane.b32.xlu0 %v3415, 64
        %v3595 = vpop.permute.xlu0 %3594
        %3596 = vrot.lane.b32.xlu0 %v3417, 64
        %v3597 = vpop.permute.xlu0 %3596
        %3598 = vrot.lane.b32.xlu0 %v3419, 64
        %v3599 = vpop.permute.xlu0 %3598
        %3600 = vrot.lane.b32.xlu0 %v3421, 64
        %v3601 = vpop.permute.xlu0 %3600
        %3602 = vrot.lane.b32.xlu0 %v3423, 64
        %v3603 = vpop.permute.xlu0 %3602
        %3604 = vrot.lane.b32.xlu0 %v3425, 64
        %v3605 = vpop.permute.xlu0 %3604
        %3606 = vrot.lane.b32.xlu0 %v3427, 64
        %v3607 = vpop.permute.xlu0 %3606
        %3608 = vrot.lane.b32.xlu0 %v3429, 64
        %v3609 = vpop.permute.xlu0 %3608
        %3610 = vrot.lane.b32.xlu0 %v3431, 64
        %v3611 = vpop.permute.xlu0 %3610
        %3612 = vrot.lane.b32.xlu0 %v3433, 64
        %v3613 = vpop.permute.xlu0 %3612
        %3614 = vrot.lane.b32.xlu0 %v3435, 64
        %v3615 = vpop.permute.xlu0 %3614
        %3616 = vrot.lane.b32.xlu0 %v3437, 64
        %v3617 = vpop.permute.xlu0 %3616
        %3618 = vrot.lane.b32.xlu0 %v3439, 64
        %v3619 = vpop.permute.xlu0 %3618
        %3620 = vrot.lane.b32.xlu0 %v3441, 64
        %v3621 = vpop.permute.xlu0 %3620
        %3622 = vrot.lane.b32.xlu0 %v3443, 64
        %v3623 = vpop.permute.xlu0 %3622
        %3624 = vrot.lane.b32.xlu0 %v3445, 64
        %v3625 = vpop.permute.xlu0 %3624
        %3626 = vrot.lane.b32.xlu0 %v3447, 64
        %v3627 = vpop.permute.xlu0 %3626
        %3628 = vrot.lane.b32.xlu0 %v3449, 64
        %v3629 = vpop.permute.xlu0 %3628
        %3630 = vrot.lane.b32.xlu0 %v3451, 64
        %v3631 = vpop.permute.xlu0 %3630
        %3632 = vrot.lane.b32.xlu0 %v3453, 64
        %v3633 = vpop.permute.xlu0 %3632
        %3634 = vrot.lane.b32.xlu0 %v3455, 64
        %v3635 = vpop.permute.xlu0 %3634
        %3636 = vrot.lane.b32.xlu0 %v3457, 64
        %v3637 = vpop.permute.xlu0 %3636
        %3638 = vrot.lane.b32.xlu0 %v3459, 64
        %v3639 = vpop.permute.xlu0 %3638
        %3640 = vrot.lane.b32.xlu0 %v3461, 64
        %v3641 = vpop.permute.xlu0 %3640
        %3642 = vrot.lane.b32.xlu0 %v3463, 64
        %v3643 = vpop.permute.xlu0 %3642
        %3644 = vrot.lane.b32.xlu0 %v3465, 64
        %v3645 = vpop.permute.xlu0 %3644
        %3646 = vrot.lane.b32.xlu0 %v3467, 64
        %v3647 = vpop.permute.xlu0 %3646
        %3648 = vrot.lane.b32.xlu0 %v3469, 64
        %v3649 = vpop.permute.xlu0 %3648
        %3650 = vrot.lane.b32.xlu0 %v3470, 64
        %v3651 = vpop.permute.xlu0 %3650
        %3652 = vrot.lane.b32.xlu0 %v1303, 64
        %v3653 = vpop.permute.xlu0 %3652
        %v3690 = vrot.slane %v2718, 5
        %v3691 = vrot.slane %v2719, 5
        %v3692 = vsel %vm1412, %v3690, %v3691
        %v3693 = vrot.slane %v2720, 5
        %v3694 = vsel %vm1412, %v3691, %v3693
        %v3695 = vrot.slane %v2721, 5
        %v3696 = vsel %vm1412, %v3693, %v3695
        %v3697 = vrot.slane %v2722, 5
        %v3698 = vsel %vm1412, %v3695, %v3697
        %v3699 = vrot.slane %v2723, 5
        %v3700 = vsel %vm1412, %v3697, %v3699
        %v3701 = vrot.slane %v2724, 5
        %v3702 = vsel %vm1412, %v3699, %v3701
        %v3703 = vrot.slane %v2725, 5
        %v3704 = vsel %vm1412, %v3701, %v3703
        %v3705 = vrot.slane %v2726, 5
        %v3706 = vsel %vm1412, %v3703, %v3705
        %v3707 = vrot.slane %v2727, 5
        %v3708 = vsel %vm1412, %v3705, %v3707
        %v3709 = vrot.slane %v2728, 5
        %v3710 = vsel %vm1412, %v3707, %v3709
        %v3711 = vrot.slane %v2729, 5
        %v3712 = vsel %vm1412, %v3709, %v3711
        %v3713 = vrot.slane %v2730, 5
        %v3714 = vsel %vm1412, %v3711, %v3713
        %v3715 = vrot.slane %v2731, 5
        %v3716 = vsel %vm1412, %v3713, %v3715
        %v3717 = vrot.slane %v2732, 5
        %v3718 = vsel %vm1412, %v3715, %v3717
        %v3719 = vrot.slane %v2733, 5
        %v3720 = vsel %vm1412, %v3717, %v3719
        %v3721 = vrot.slane %v2734, 5
        %v3722 = vsel %vm1412, %v3719, %v3721
        %v3723 = vrot.slane %v2735, 5
        %v3724 = vsel %vm1412, %v3721, %v3723
        %v3725 = vrot.slane %v2736, 5
        %v3726 = vsel %vm1412, %v3723, %v3725
        %v3727 = vrot.slane %v2737, 5
        %v3728 = vsel %vm1412, %v3725, %v3727
        %v3729 = vrot.slane %v2738, 5
        %v3730 = vsel %vm1412, %v3727, %v3729
        %v3731 = vrot.slane %v2739, 5
        %v3732 = vsel %vm1412, %v3729, %v3731
        %v3733 = vrot.slane %v2740, 5
        %v3734 = vsel %vm1412, %v3731, %v3733
        %v3735 = vrot.slane %v2741, 5
        %v3736 = vsel %vm1412, %v3733, %v3735
        %v3737 = vrot.slane %v2742, 5
        %v3738 = vsel %vm1412, %v3735, %v3737
        %v3739 = vrot.slane %v2743, 5
        %v3740 = vsel %vm1412, %v3737, %v3739
        %v3741 = vrot.slane %v2744, 5
        %v3742 = vsel %vm1412, %v3739, %v3741
        %v3743 = vrot.slane %v2745, 5
        %v3744 = vsel %vm1412, %v3741, %v3743
        %v3745 = vrot.slane %v2746, 5
        %v3746 = vsel %vm1412, %v3743, %v3745
        %v3747 = vrot.slane %v2747, 5
        %v3748 = vsel %vm1412, %v3745, %v3747
        %v3749 = vrot.slane %v2748, 5
        %v3750 = vsel %vm1412, %v3747, %v3749
        %v3751 = vrot.slane %v2749, 5
        %v3752 = vsel %vm1412, %v3749, %v3751
        %v3753 = vrot.slane %v2750, 5
        %v3754 = vsel %vm1412, %v3751, %v3753
        %v3755 = vrot.slane %v2751, 5
        %v3756 = vsel %vm1412, %v3753, %v3755
        %v3757 = vsel %vm1412, %v3755, %v1480
        %3758 = vrot.lane.b32.xlu0 %v3690, 96
        %v3759 = vpop.permute.xlu0 %3758
        %3760 = vrot.lane.b32.xlu0 %v3692, 96
        %v3761 = vpop.permute.xlu0 %3760
        %3762 = vrot.lane.b32.xlu0 %v3694, 96
        %v3763 = vpop.permute.xlu0 %3762
        %3764 = vrot.lane.b32.xlu0 %v3696, 96
        %v3765 = vpop.permute.xlu0 %3764
        %3766 = vrot.lane.b32.xlu0 %v3698, 96
        %v3767 = vpop.permute.xlu0 %3766
        %3768 = vrot.lane.b32.xlu0 %v3700, 96
        %v3769 = vpop.permute.xlu0 %3768
        %3770 = vrot.lane.b32.xlu0 %v3702, 96
        %v3771 = vpop.permute.xlu0 %3770
        %3772 = vrot.lane.b32.xlu0 %v3704, 96
        %v3773 = vpop.permute.xlu0 %3772
        %3774 = vrot.lane.b32.xlu0 %v3706, 96
        %v3775 = vpop.permute.xlu0 %3774
        %3776 = vrot.lane.b32.xlu0 %v3708, 96
        %v3777 = vpop.permute.xlu0 %3776
        %3778 = vrot.lane.b32.xlu0 %v3710, 96
        %v3779 = vpop.permute.xlu0 %3778
        %3780 = vrot.lane.b32.xlu0 %v3712, 96
        %v3781 = vpop.permute.xlu0 %3780
        %3782 = vrot.lane.b32.xlu0 %v3714, 96
        %v3783 = vpop.permute.xlu0 %3782
        %3784 = vrot.lane.b32.xlu0 %v3716, 96
        %v3785 = vpop.permute.xlu0 %3784
        %3786 = vrot.lane.b32.xlu0 %v3718, 96
        %v3787 = vpop.permute.xlu0 %3786
        %3788 = vrot.lane.b32.xlu0 %v3720, 96
        %v3789 = vpop.permute.xlu0 %3788
        %3790 = vrot.lane.b32.xlu0 %v3722, 96
        %v3791 = vpop.permute.xlu0 %3790
        %3792 = vrot.lane.b32.xlu0 %v3724, 96
        %v3793 = vpop.permute.xlu0 %3792
        %3794 = vrot.lane.b32.xlu0 %v3726, 96
        %v3795 = vpop.permute.xlu0 %3794
        %3796 = vrot.lane.b32.xlu0 %v3728, 96
        %v3797 = vpop.permute.xlu0 %3796
        %3798 = vrot.lane.b32.xlu0 %v3730, 96
        %v3799 = vpop.permute.xlu0 %3798
        %3800 = vrot.lane.b32.xlu0 %v3732, 96
        %v3801 = vpop.permute.xlu0 %3800
        %3802 = vrot.lane.b32.xlu0 %v3734, 96
        %v3803 = vpop.permute.xlu0 %3802
        %3804 = vrot.lane.b32.xlu0 %v3736, 96
        %v3805 = vpop.permute.xlu0 %3804
        %3806 = vrot.lane.b32.xlu0 %v3738, 96
        %v3807 = vpop.permute.xlu0 %3806
        %3808 = vrot.lane.b32.xlu0 %v3740, 96
        %v3809 = vpop.permute.xlu0 %3808
        %3810 = vrot.lane.b32.xlu0 %v3742, 96
        %v3811 = vpop.permute.xlu0 %3810
        %3812 = vrot.lane.b32.xlu0 %v3744, 96
        %v3813 = vpop.permute.xlu0 %3812
        %3814 = vrot.lane.b32.xlu0 %v3746, 96
        %v3815 = vpop.permute.xlu0 %3814
        %3816 = vrot.lane.b32.xlu0 %v3748, 96
        %v3817 = vpop.permute.xlu0 %3816
        %3818 = vrot.lane.b32.xlu0 %v3750, 96
        %v3819 = vpop.permute.xlu0 %3818
        %3820 = vrot.lane.b32.xlu0 %v3752, 96
        %v3821 = vpop.permute.xlu0 %3820
        %3822 = vrot.lane.b32.xlu0 %v3754, 96
        %v3823 = vpop.permute.xlu0 %3822
        %3824 = vrot.lane.b32.xlu0 %v3756, 96
        %v3825 = vpop.permute.xlu0 %3824
        %3826 = vrot.lane.b32.xlu0 %v3757, 96
        %v3827 = vpop.permute.xlu0 %3826
        %3828 = vrot.lane.b32.xlu0 %v1482, 96
        %v3829 = vpop.permute.xlu0 %3828
        %v3866 = vrot.slane %v2718, 6
        %v3867 = vrot.slane %v2719, 6
        %v3868 = vsel %vm1591, %v3866, %v3867
        %v3869 = vrot.slane %v2720, 6
        %v3870 = vsel %vm1591, %v3867, %v3869
        %v3871 = vrot.slane %v2721, 6
        %v3872 = vsel %vm1591, %v3869, %v3871
        %v3873 = vrot.slane %v2722, 6
        %v3874 = vsel %vm1591, %v3871, %v3873
        %v3875 = vrot.slane %v2723, 6
        %v3876 = vsel %vm1591, %v3873, %v3875
        %v3877 = vrot.slane %v2724, 6
        %v3878 = vsel %vm1591, %v3875, %v3877
        %v3879 = vrot.slane %v2725, 6
        %v3880 = vsel %vm1591, %v3877, %v3879
        %v3881 = vrot.slane %v2726, 6
        %v3882 = vsel %vm1591, %v3879, %v3881
        %v3883 = vrot.slane %v2727, 6
        %v3884 = vsel %vm1591, %v3881, %v3883
        %v3885 = vrot.slane %v2728, 6
        %v3886 = vsel %vm1591, %v3883, %v3885
        %v3887 = vrot.slane %v2729, 6
        %v3888 = vsel %vm1591, %v3885, %v3887
        %v3889 = vrot.slane %v2730, 6
        %v3890 = vsel %vm1591, %v3887, %v3889
        %v3891 = vrot.slane %v2731, 6
        %v3892 = vsel %vm1591, %v3889, %v3891
        %v3893 = vrot.slane %v2732, 6
        %v3894 = vsel %vm1591, %v3891, %v3893
        %v3895 = vrot.slane %v2733, 6
        %v3896 = vsel %vm1591, %v3893, %v3895
        %v3897 = vrot.slane %v2734, 6
        %v3898 = vsel %vm1591, %v3895, %v3897
        %v3899 = vrot.slane %v2735, 6
        %v3900 = vsel %vm1591, %v3897, %v3899
        %v3901 = vrot.slane %v2736, 6
        %v3902 = vsel %vm1591, %v3899, %v3901
        %v3903 = vrot.slane %v2737, 6
        %v3904 = vsel %vm1591, %v3901, %v3903
        %v3905 = vrot.slane %v2738, 6
        %v3906 = vsel %vm1591, %v3903, %v3905
        %v3907 = vrot.slane %v2739, 6
        %v3908 = vsel %vm1591, %v3905, %v3907
        %v3909 = vrot.slane %v2740, 6
        %v3910 = vsel %vm1591, %v3907, %v3909
        %v3911 = vrot.slane %v2741, 6
        %v3912 = vsel %vm1591, %v3909, %v3911
        %v3913 = vrot.slane %v2742, 6
        %v3914 = vsel %vm1591, %v3911, %v3913
        %v3915 = vrot.slane %v2743, 6
        %v3916 = vsel %vm1591, %v3913, %v3915
        %v3917 = vrot.slane %v2744, 6
        %v3918 = vsel %vm1591, %v3915, %v3917
        %v3919 = vrot.slane %v2745, 6
        %v3920 = vsel %vm1591, %v3917, %v3919
        %v3921 = vrot.slane %v2746, 6
        %v3922 = vsel %vm1591, %v3919, %v3921
        %v3923 = vrot.slane %v2747, 6
        %v3924 = vsel %vm1591, %v3921, %v3923
        %v3925 = vrot.slane %v2748, 6
        %v3926 = vsel %vm1591, %v3923, %v3925
        %v3927 = vrot.slane %v2749, 6
        %v3928 = vsel %vm1591, %v3925, %v3927
        %v3929 = vrot.slane %v2750, 6
        %v3930 = vsel %vm1591, %v3927, %v3929
        %v3931 = vrot.slane %v2751, 6
        %v3932 = vsel %vm1591, %v3929, %v3931
        %v3933 = vsel %vm1591, %v3931, %v1659
        %v3934 = vsel %vm1882, 0.0, %v2891
        %v3935 = vsel %vm1882, 0.0, %v2893
        %v3936 = vsel %vm1882, %v2716, %v2895
        %v3937 = vsel %vm1882, %v2717, %v2897
        %v3938 = vsel %vm1882, %v2718, %v2899
        %v3939 = vsel %vm1882, %v2719, %v2901
        %v3940 = vsel %vm1882, %v2720, %v2903
        %v3941 = vsel %vm1882, %v2721, %v2905
        %v3942 = vsel %vm1882, %v2722, %v2907
        %v3943 = vsel %vm1882, %v2723, %v2909
        %v3944 = vsel %vm1882, %v2724, %v2911
        %v3945 = vsel %vm1882, %v2725, %v2913
        %v3946 = vsel %vm1882, %v2726, %v2915
        %v3947 = vsel %vm1882, %v2727, %v2917
        %v3948 = vsel %vm1882, %v2728, %v2919
        %v3949 = vsel %vm1882, %v2729, %v2921
        %v3950 = vsel %vm1882, %v2730, %v2923
        %v3951 = vsel %vm1882, %v2731, %v2925
        %v3952 = vsel %vm1882, %v2732, %v2927
        %v3953 = vsel %vm1882, %v2733, %v2929
        %v3954 = vsel %vm1882, %v2734, %v2931
        %v3955 = vsel %vm1882, %v2735, %v2933
        %v3956 = vsel %vm1882, %v2736, %v2935
        %v3957 = vsel %vm1882, %v2737, %v2937
        %v3958 = vsel %vm1882, %v2738, %v2939
        %v3959 = vsel %vm1882, %v2739, %v2941
        %v3960 = vsel %vm1882, %v2740, %v2943
        %v3961 = vsel %vm1882, %v2741, %v2945
        %v3962 = vsel %vm1882, %v2742, %v2947
        %v3963 = vsel %vm1882, %v2743, %v2949
        %v3964 = vsel %vm1882, %v2744, %v2951
        %v3965 = vsel %vm1882, %v2745, %v2953
        %v3966 = vsel %vm1882, %v2746, %v2955
        %v3967 = vsel %vm1882, %v2747, %v2957
        %v3968 = vsel %vm1882, %v2748, %v2959
        %v3969 = vsel %vm1882, %v2749, %v2961
        %v3970 = vsel %vm2034, %v3934, %v3067
        %v3971 = vsel %vm2034, %v3935, %v3069
        %v3972 = vsel %vm2034, %v3936, %v3071
        %v3973 = vsel %vm2034, %v3937, %v3073
        %v3974 = vsel %vm2034, %v3938, %v3075
        %v3975 = vsel %vm2034, %v3939, %v3077
        %v3976 = vsel %vm2034, %v3940, %v3079
        %v3977 = vsel %vm2034, %v3941, %v3081
        %v3978 = vsel %vm2034, %v3942, %v3083
        %v3979 = vsel %vm2034, %v3943, %v3085
        %v3980 = vsel %vm2034, %v3944, %v3087
        %v3981 = vsel %vm2034, %v3945, %v3089
        %v3982 = vsel %vm2034, %v3946, %v3091
        %v3983 = vsel %vm2034, %v3947, %v3093
        %v3984 = vsel %vm2034, %v3948, %v3095
        %v3985 = vsel %vm2034, %v3949, %v3097
        %v3986 = vsel %vm2034, %v3950, %v3099
        %v3987 = vsel %vm2034, %v3951, %v3101
        %v3988 = vsel %vm2034, %v3952, %v3103
        %v3989 = vsel %vm2034, %v3953, %v3105
        %v3990 = vsel %vm2034, %v3954, %v3107
        %v3991 = vsel %vm2034, %v3955, %v3109
        %v3992 = vsel %vm2034, %v3956, %v3111
        %v3993 = vsel %vm2034, %v3957, %v3113
        %v3994 = vsel %vm2034, %v3958, %v3115
        %v3995 = vsel %vm2034, %v3959, %v3117
        %v3996 = vsel %vm2034, %v3960, %v3119
        %v3997 = vsel %vm2034, %v3961, %v3121
        %v3998 = vsel %vm2034, %v3962, %v3123
        %v3999 = vsel %vm2034, %v3963, %v3125
        %v4000 = vsel %vm2034, %v3964, %v3127
        %v4001 = vsel %vm2034, %v3965, %v3129
        %v4002 = vsel %vm2034, %v3966, %v3131
        %v4003 = vsel %vm2034, %v3967, %v3133
        %v4004 = vsel %vm2034, %v3968, %v3135
        %v4005 = vsel %vm2034, %v3969, %v3137
        %vm4006 = vcmask 785408
        %v4007 = vsel %vm4006, %v3970, %v3181
        %v4008 = vsel %vm4006, %v3970, %v3183
        %v4009 = vsel %vm4006, %v3971, %v3185
        %v4010 = vsel %vm4006, %v3972, %v3187
        %v4011 = vsel %vm4006, %v3973, %v3189
        %v4012 = vsel %vm4006, %v3974, %v3191
        %v4013 = vsel %vm4006, %v3975, %v3193
        %v4014 = vsel %vm4006, %v3976, %v3195
        %v4015 = vsel %vm4006, %v3977, %v3197
        %v4016 = vsel %vm4006, %v3978, %v3199
        %v4017 = vsel %vm4006, %v3979, %v3201
        %v4018 = vsel %vm4006, %v3980, %v3203
        %v4019 = vsel %vm4006, %v3981, %v3205
        %v4020 = vsel %vm4006, %v3982, %v3207
        %v4021 = vsel %vm4006, %v3983, %v3209
        %v4022 = vsel %vm4006, %v3984, %v3211
        %v4023 = vsel %vm4006, %v3985, %v3213
        %v4024 = vsel %vm4006, %v3986, %v3215
        %v4025 = vsel %vm4006, %v3987, %v3217
        %v4026 = vsel %vm4006, %v3988, %v3219
        %v4027 = vsel %vm4006, %v3989, %v3221
        %v4028 = vsel %vm4006, %v3990, %v3223
        %v4029 = vsel %vm4006, %v3991, %v3225
        %v4030 = vsel %vm4006, %v3992, %v3227
        %v4031 = vsel %vm4006, %v3993, %v3229
        %v4032 = vsel %vm4006, %v3994, %v3231
        %v4033 = vsel %vm4006, %v3995, %v3233
        %v4034 = vsel %vm4006, %v3996, %v3235
        %v4035 = vsel %vm4006, %v3997, %v3237
        %v4036 = vsel %vm4006, %v3998, %v3239
        %v4037 = vsel %vm4006, %v3999, %v3241
        %v4038 = vsel %vm4006, %v4000, %v3243
        %v4039 = vsel %vm4006, %v4001, %v3245
        %v4040 = vsel %vm4006, %v4002, %v3247
        %v4041 = vsel %vm4006, %v4003, %v3249
        %v4042 = vsel %vm4006, %v4004, %v3251
        %v4043 = vsel %vm4006, %v4005, %v3253
        %v4044 = vsel %vm1882, %v3291, %v3472
        %v4045 = vsel %vm1882, %v3293, %v3474
        %v4046 = vsel %vm1882, %v3295, %v3476
        %v4047 = vsel %vm1882, %v3297, %v3478
        %v4048 = vsel %vm1882, %v3299, %v3480
        %v4049 = vsel %vm1882, %v3301, %v3482
        %v4050 = vsel %vm1882, %v3303, %v3484
        %v4051 = vsel %vm1882, %v3305, %v3486
        %v4052 = vsel %vm1882, %v3307, %v3488
        %v4053 = vsel %vm1882, %v3309, %v3490
        %v4054 = vsel %vm1882, %v3311, %v3492
        %v4055 = vsel %vm1882, %v3313, %v3494
        %v4056 = vsel %vm1882, %v3315, %v3496
        %v4057 = vsel %vm1882, %v3317, %v3498
        %v4058 = vsel %vm1882, %v3319, %v3500
        %v4059 = vsel %vm1882, %v3321, %v3502
        %v4060 = vsel %vm1882, %v3323, %v3504
        %v4061 = vsel %vm1882, %v3325, %v3506
        %v4062 = vsel %vm1882, %v3327, %v3508
        %v4063 = vsel %vm1882, %v3329, %v3510
        %v4064 = vsel %vm1882, %v3331, %v3512
        %v4065 = vsel %vm1882, %v3333, %v3514
        %v4066 = vsel %vm1882, %v3335, %v3516
        %v4067 = vsel %vm1882, %v3337, %v3518
        %v4068 = vsel %vm1882, %v3339, %v3520
        %v4069 = vsel %vm1882, %v3341, %v3522
        %v4070 = vsel %vm1882, %v3343, %v3524
        %v4071 = vsel %vm1882, %v3345, %v3526
        %v4072 = vsel %vm1882, %v3347, %v3528
        %v4073 = vsel %vm1882, %v3349, %v3530
        %v4074 = vsel %vm1882, %v3351, %v3532
        %v4075 = vsel %vm1882, %v3353, %v3534
        %v4076 = vsel %vm1882, %v3355, %v3536
        %v4077 = vsel %vm1882, %v3357, %v3538
        %v4078 = vsel %vm1882, %v3359, %v3540
        %v4079 = vsel %vm1882, %v3361, %v3542
        %v4080 = vsel %vm1882, %v3360, %v3544
        %v4081 = vsel %vm2034, %v4044, %v3583
        %v4082 = vsel %vm2034, %v4045, %v3585
        %v4083 = vsel %vm2034, %v4046, %v3587
        %v4084 = vsel %vm2034, %v4047, %v3589
        %v4085 = vsel %vm2034, %v4048, %v3591
        %v4086 = vsel %vm2034, %v4049, %v3593
        %v4087 = vsel %vm2034, %v4050, %v3595
        %v4088 = vsel %vm2034, %v4051, %v3597
        %v4089 = vsel %vm2034, %v4052, %v3599
        %v4090 = vsel %vm2034, %v4053, %v3601
        %v4091 = vsel %vm2034, %v4054, %v3603
        %v4092 = vsel %vm2034, %v4055, %v3605
        %v4093 = vsel %vm2034, %v4056, %v3607
        %v4094 = vsel %vm2034, %v4057, %v3609
        %v4095 = vsel %vm2034, %v4058, %v3611
        %v4096 = vsel %vm2034, %v4059, %v3613
        %v4097 = vsel %vm2034, %v4060, %v3615
        %v4098 = vsel %vm2034, %v4061, %v3617
        %v4099 = vsel %vm2034, %v4062, %v3619
        %v4100 = vsel %vm2034, %v4063, %v3621
        %v4101 = vsel %vm2034, %v4064, %v3623
        %v4102 = vsel %vm2034, %v4065, %v3625
        %v4103 = vsel %vm2034, %v4066, %v3627
        %v4104 = vsel %vm2034, %v4067, %v3629
        %v4105 = vsel %vm2034, %v4068, %v3631
        %v4106 = vsel %vm2034, %v4069, %v3633
        %v4107 = vsel %vm2034, %v4070, %v3635
        %v4108 = vsel %vm2034, %v4071, %v3637
        %v4109 = vsel %vm2034, %v4072, %v3639
        %v4110 = vsel %vm2034, %v4073, %v3641
        %v4111 = vsel %vm2034, %v4074, %v3643
        %v4112 = vsel %vm2034, %v4075, %v3645
        %v4113 = vsel %vm2034, %v4076, %v3647
        %v4114 = vsel %vm2034, %v4077, %v3649
        %v4115 = vsel %vm2034, %v4078, %v3651
        %v4116 = vsel %vm2034, %v4079, %v3653
        %v4117 = vsel %vm2034, %v4080, %v3653
        %v4118 = vsel %vm4006, %v4081, %v3759
        %v4119 = vsel %vm4006, %v4082, %v3761
        %v4120 = vsel %vm4006, %v4083, %v3763
        %v4121 = vsel %vm4006, %v4084, %v3765
        %v4122 = vsel %vm4006, %v4085, %v3767
        %v4123 = vsel %vm4006, %v4086, %v3769
        %v4124 = vsel %vm4006, %v4087, %v3771
        %v4125 = vsel %vm4006, %v4088, %v3773
        %v4126 = vsel %vm4006, %v4089, %v3775
        %v4127 = vsel %vm4006, %v4090, %v3777
        %v4128 = vsel %vm4006, %v4091, %v3779
        %v4129 = vsel %vm4006, %v4092, %v3781
        %v4130 = vsel %vm4006, %v4093, %v3783
        %v4131 = vsel %vm4006, %v4094, %v3785
        %v4132 = vsel %vm4006, %v4095, %v3787
        %v4133 = vsel %vm4006, %v4096, %v3789
        %v4134 = vsel %vm4006, %v4097, %v3791
        %v4135 = vsel %vm4006, %v4098, %v3793
        %v4136 = vsel %vm4006, %v4099, %v3795
        %v4137 = vsel %vm4006, %v4100, %v3797
        %v4138 = vsel %vm4006, %v4101, %v3799
        %v4139 = vsel %vm4006, %v4102, %v3801
        %v4140 = vsel %vm4006, %v4103, %v3803
        %v4141 = vsel %vm4006, %v4104, %v3805
        %v4142 = vsel %vm4006, %v4105, %v3807
        %v4143 = vsel %vm4006, %v4106, %v3809
        %v4144 = vsel %vm4006, %v4107, %v3811
        %v4145 = vsel %vm4006, %v4108, %v3813
        %v4146 = vsel %vm4006, %v4109, %v3815
        %v4147 = vsel %vm4006, %v4110, %v3817
        %v4148 = vsel %vm4006, %v4111, %v3819
        %v4149 = vsel %vm4006, %v4112, %v3821
        %v4150 = vsel %vm4006, %v4113, %v3823
        %v4151 = vsel %vm4006, %v4114, %v3825
        %v4152 = vsel %vm4006, %v4115, %v3827
        %v4153 = vsel %vm4006, %v4116, %v3829
        %v4154 = vsel %vm4006, %v4117, %v3829
        %v4229 = vrot.slane %v4007, 5
        %v4230 = vrot.slane %v4008, 5
        %v4231 = vsel %vm1412, %v4229, %v4230
        %v4232 = vrot.slane %v4118, 5
        %v4233 = vrot.slane %v4119, 5
        %v4234 = vsel %vm1412, %v4232, %v4233
        %v4235 = vrot.slane %v3866, 5
        %v4236 = vrot.slane %v3868, 5
        %v4237 = vsel %vm1412, %v4235, %v4236
        %v4238 = vrot.slane %v4009, 5
        %v4239 = vsel %vm1412, %v4230, %v4238
        %v4240 = vrot.slane %v4120, 5
        %v4241 = vsel %vm1412, %v4233, %v4240
        %v4242 = vrot.slane %v3870, 5
        %v4243 = vsel %vm1412, %v4236, %v4242
        %v4244 = vrot.slane %v4010, 5
        %v4245 = vsel %vm1412, %v4238, %v4244
        %v4246 = vrot.slane %v4121, 5
        %v4247 = vsel %vm1412, %v4240, %v4246
        %v4248 = vrot.slane %v3872, 5
        %v4249 = vsel %vm1412, %v4242, %v4248
        %v4250 = vrot.slane %v4011, 5
        %v4251 = vsel %vm1412, %v4244, %v4250
        %v4252 = vrot.slane %v4122, 5
        %v4253 = vsel %vm1412, %v4246, %v4252
        %v4254 = vrot.slane %v3874, 5
        %v4255 = vsel %vm1412, %v4248, %v4254
        %v4256 = vrot.slane %v4012, 5
        %v4257 = vsel %vm1412, %v4250, %v4256
        %v4258 = vrot.slane %v4123, 5
        %v4259 = vsel %vm1412, %v4252, %v4258
        %v4260 = vrot.slane %v3876, 5
        %v4261 = vsel %vm1412, %v4254, %v4260
        %v4262 = vrot.slane %v4013, 5
        %v4263 = vsel %vm1412, %v4256, %v4262
        %v4264 = vrot.slane %v4124, 5
        %v4265 = vsel %vm1412, %v4258, %v4264
        %v4266 = vrot.slane %v3878, 5
        %v4267 = vsel %vm1412, %v4260, %v4266
        %v4268 = vrot.slane %v4014, 5
        %v4269 = vsel %vm1412, %v4262, %v4268
        %v4270 = vrot.slane %v4125, 5
        %v4271 = vsel %vm1412, %v4264, %v4270
        %v4272 = vrot.slane %v3880, 5
        %v4273 = vsel %vm1412, %v4266, %v4272
        %v4274 = vrot.slane %v4015, 5
        %v4275 = vsel %vm1412, %v4268, %v4274
        %v4276 = vrot.slane %v4126, 5
        %v4277 = vsel %vm1412, %v4270, %v4276
        %v4278 = vrot.slane %v3882, 5
        %v4279 = vsel %vm1412, %v4272, %v4278
        %v4280 = vrot.slane %v4016, 5
        %v4281 = vsel %vm1412, %v4274, %v4280
        %v4282 = vrot.slane %v4127, 5
        %v4283 = vsel %vm1412, %v4276, %v4282
        %v4284 = vrot.slane %v3884, 5
        %v4285 = vsel %vm1412, %v4278, %v4284
        %v4286 = vrot.slane %v4017, 5
        %v4287 = vsel %vm1412, %v4280, %v4286
        %v4288 = vrot.slane %v4128, 5
        %v4289 = vsel %vm1412, %v4282, %v4288
        %v4290 = vrot.slane %v3886, 5
        %v4291 = vsel %vm1412, %v4284, %v4290
        %v4292 = vrot.slane %v4018, 5
        %v4293 = vsel %vm1412, %v4286, %v4292
        %v4294 = vrot.slane %v4129, 5
        %v4295 = vsel %vm1412, %v4288, %v4294
        %v4296 = vrot.slane %v3888, 5
        %v4297 = vsel %vm1412, %v4290, %v4296
        %v4298 = vrot.slane %v4019, 5
        %v4299 = vsel %vm1412, %v4292, %v4298
        %v4300 = vrot.slane %v4130, 5
        %v4301 = vsel %vm1412, %v4294, %v4300
        %v4302 = vrot.slane %v3890, 5
        %v4303 = vsel %vm1412, %v4296, %v4302
        %v4304 = vrot.slane %v4020, 5
        %v4305 = vsel %vm1412, %v4298, %v4304
        %v4306 = vrot.slane %v4131, 5
        %v4307 = vsel %vm1412, %v4300, %v4306
        %v4308 = vrot.slane %v3892, 5
        %v4309 = vsel %vm1412, %v4302, %v4308
        %v4310 = vrot.slane %v4021, 5
        %v4311 = vsel %vm1412, %v4304, %v4310
        %v4312 = vrot.slane %v4132, 5
        %v4313 = vsel %vm1412, %v4306, %v4312
        %v4314 = vrot.slane %v3894, 5
        %v4315 = vsel %vm1412, %v4308, %v4314
        %v4316 = vrot.slane %v4022, 5
        %v4317 = vsel %vm1412, %v4310, %v4316
        %v4318 = vrot.slane %v4133, 5
        %v4319 = vsel %vm1412, %v4312, %v4318
        %v4320 = vrot.slane %v3896, 5
        %v4321 = vsel %vm1412, %v4314, %v4320
        %v4322 = vrot.slane %v4023, 5
        %v4323 = vsel %vm1412, %v4316, %v4322
        %v4324 = vrot.slane %v4134, 5
        %v4325 = vsel %vm1412, %v4318, %v4324
        %v4326 = vrot.slane %v3898, 5
        %v4327 = vsel %vm1412, %v4320, %v4326
        %v4328 = vrot.slane %v4024, 5
        %v4329 = vsel %vm1412, %v4322, %v4328
        %v4330 = vrot.slane %v4135, 5
        %v4331 = vsel %vm1412, %v4324, %v4330
        %v4332 = vrot.slane %v3900, 5
        %v4333 = vsel %vm1412, %v4326, %v4332
        %v4334 = vrot.slane %v4025, 5
        %v4335 = vsel %vm1412, %v4328, %v4334
        %v4336 = vrot.slane %v4136, 5
        %v4337 = vsel %vm1412, %v4330, %v4336
        %v4338 = vrot.slane %v3902, 5
        %v4339 = vsel %vm1412, %v4332, %v4338
        %v4340 = vrot.slane %v4026, 5
        %v4341 = vsel %vm1412, %v4334, %v4340
        %v4342 = vrot.slane %v4137, 5
        %v4343 = vsel %vm1412, %v4336, %v4342
        %v4344 = vrot.slane %v3904, 5
        %v4345 = vsel %vm1412, %v4338, %v4344
        %v4346 = vrot.slane %v4027, 5
        %v4347 = vsel %vm1412, %v4340, %v4346
        %v4348 = vrot.slane %v4138, 5
        %v4349 = vsel %vm1412, %v4342, %v4348
        %v4350 = vrot.slane %v3906, 5
        %v4351 = vsel %vm1412, %v4344, %v4350
        %v4352 = vrot.slane %v4028, 5
        %v4353 = vsel %vm1412, %v4346, %v4352
        %v4354 = vrot.slane %v4139, 5
        %v4355 = vsel %vm1412, %v4348, %v4354
        %v4356 = vrot.slane %v3908, 5
        %v4357 = vsel %vm1412, %v4350, %v4356
        %v4358 = vrot.slane %v4029, 5
        %v4359 = vsel %vm1412, %v4352, %v4358
        %v4360 = vrot.slane %v4140, 5
        %v4361 = vsel %vm1412, %v4354, %v4360
        %v4362 = vrot.slane %v3910, 5
        %v4363 = vsel %vm1412, %v4356, %v4362
        %v4364 = vrot.slane %v4030, 5
        %v4365 = vsel %vm1412, %v4358, %v4364
        %v4366 = vrot.slane %v4141, 5
        %v4367 = vsel %vm1412, %v4360, %v4366
        %v4368 = vrot.slane %v3912, 5
        %v4369 = vsel %vm1412, %v4362, %v4368
        %v4370 = vrot.slane %v4031, 5
        %v4371 = vsel %vm1412, %v4364, %v4370
        %v4372 = vrot.slane %v4142, 5
        %v4373 = vsel %vm1412, %v4366, %v4372
        %v4374 = vrot.slane %v3914, 5
        %v4375 = vsel %vm1412, %v4368, %v4374
        %v4376 = vrot.slane %v4032, 5
        %v4377 = vsel %vm1412, %v4370, %v4376
        %v4378 = vrot.slane %v4143, 5
        %v4379 = vsel %vm1412, %v4372, %v4378
        %v4380 = vrot.slane %v3916, 5
        %v4381 = vsel %vm1412, %v4374, %v4380
        %v4382 = vrot.slane %v4033, 5
        %v4383 = vsel %vm1412, %v4376, %v4382
        %v4384 = vrot.slane %v4144, 5
        %v4385 = vsel %vm1412, %v4378, %v4384
        %v4386 = vrot.slane %v3918, 5
        %v4387 = vsel %vm1412, %v4380, %v4386
        %v4388 = vrot.slane %v4034, 5
        %v4389 = vsel %vm1412, %v4382, %v4388
        %v4390 = vrot.slane %v4145, 5
        %v4391 = vsel %vm1412, %v4384, %v4390
        %v4392 = vrot.slane %v3920, 5
        %v4393 = vsel %vm1412, %v4386, %v4392
        %v4394 = vrot.slane %v4035, 5
        %v4395 = vsel %vm1412, %v4388, %v4394
        %v4396 = vrot.slane %v4146, 5
        %v4397 = vsel %vm1412, %v4390, %v4396
        %v4398 = vrot.slane %v3922, 5
        %v4399 = vsel %vm1412, %v4392, %v4398
        %v4400 = vrot.slane %v4036, 5
        %v4401 = vsel %vm1412, %v4394, %v4400
        %v4402 = vrot.slane %v4147, 5
        %v4403 = vsel %vm1412, %v4396, %v4402
        %v4404 = vrot.slane %v3924, 5
        %v4405 = vsel %vm1412, %v4398, %v4404
        %v4406 = vrot.slane %v4037, 5
        %v4407 = vsel %vm1412, %v4400, %v4406
        %v4408 = vrot.slane %v4148, 5
        %v4409 = vsel %vm1412, %v4402, %v4408
        %v4410 = vrot.slane %v3926, 5
        %v4411 = vsel %vm1412, %v4404, %v4410
        %v4412 = vrot.slane %v4038, 5
        %v4413 = vsel %vm1412, %v4406, %v4412
        %v4414 = vrot.slane %v4149, 5
        %v4415 = vsel %vm1412, %v4408, %v4414
        %v4416 = vrot.slane %v3928, 5
        %v4417 = vsel %vm1412, %v4410, %v4416
        %v4418 = vrot.slane %v4039, 5
        %v4419 = vsel %vm1412, %v4412, %v4418
        %v4420 = vrot.slane %v4150, 5
        %v4421 = vsel %vm1412, %v4414, %v4420
        %v4422 = vrot.slane %v3930, 5
        %v4423 = vsel %vm1412, %v4416, %v4422
        %v4424 = vrot.slane %v4040, 5
        %v4425 = vsel %vm1412, %v4418, %v4424
        %v4426 = vrot.slane %v4151, 5
        %v4427 = vsel %vm1412, %v4420, %v4426
        %v4428 = vrot.slane %v3932, 5
        %v4429 = vsel %vm1412, %v4422, %v4428
        %v4430 = vrot.slane %v4041, 5
        %v4431 = vsel %vm1412, %v4424, %v4430
        %v4432 = vrot.slane %v4152, 5
        %v4433 = vsel %vm1412, %v4426, %v4432
        %v4434 = vrot.slane %v3933, 5
        %v4435 = vsel %vm1412, %v4428, %v4434
        %v4436 = vrot.slane %v4042, 5
        %v4437 = vsel %vm1412, %v4430, %v4436
        %v4438 = vrot.slane %v4153, 5
        %v4439 = vsel %vm1412, %v4432, %v4438
        %v4440 = vrot.slane %v1661, 5
        %v4441 = vsel %vm1412, %v4434, %v4440
        %v4442 = vrot.slane %v4043, 5
        %v4443 = vsel %vm1412, %v4436, %v4442
        %v4444 = vrot.slane %v4154, 5
        %v4445 = vsel %vm1412, %v4438, %v4444
        %v4446 = vsel %vm1412, %v4440, %v4440
        %v4519 = vsel %vm1882, %v4237, 0
        %v4521 = vsel %vm1882, %v4243, 0
        %v4523 = vsel %vm1882, %v4249, 0
        %v4525 = vsel %vm1882, %v4255, 0
        %v4527 = vsel %vm1882, %v4261, 0
        %v4529 = vsel %vm1882, %v4267, 0
        %v4531 = vsel %vm1882, %v4273, 0
        %v4533 = vsel %vm1882, %v4279, 0
        %v4535 = vsel %vm1882, %v4285, 0
        %v4537 = vsel %vm1882, %v4291, 0
        %v4539 = vsel %vm1882, %v4297, 0
        %v4541 = vsel %vm1882, %v4303, 0
        %v4543 = vsel %vm1882, %v4309, 0
        %v4545 = vsel %vm1882, %v4315, 0
        %v4547 = vsel %vm1882, %v4321, 0
        %v4549 = vsel %vm1882, %v4327, 0
        %v4551 = vsel %vm1882, %v4333, 0
        %v4553 = vsel %vm1882, %v4339, 0
        %v4555 = vsel %vm1882, %v4345, 0
        %v4557 = vsel %vm1882, %v4351, 0
        %v4559 = vsel %vm1882, %v4357, 0
        %v4561 = vsel %vm1882, %v4363, 0
        %v4563 = vsel %vm1882, %v4369, 0
        %v4565 = vsel %vm1882, %v4375, 0
        %v4567 = vsel %vm1882, %v4381, 0
        %v4569 = vsel %vm1882, %v4387, 0
        %v4571 = vsel %vm1882, %v4393, 0
        %v4573 = vsel %vm1882, %v4399, 0
        %v4575 = vsel %vm1882, %v4405, 0
        %v4577 = vsel %vm1882, %v4411, 0
        %v4579 = vsel %vm1882, %v4417, 0
        %v4581 = vsel %vm1882, %v4423, 0
        %v4583 = vsel %vm1882, %v4429, 0
        %v4585 = vsel %vm1882, %v4435, 0
        %v4587 = vsel %vm1882, %v4441, 0
        %v4589 = vsel %vm1882, %v4446, 0
        %4591 = vmatprep.subr.mxu0 0.0
        %4592 = vmatpush1.msra.mxu0 %v2752
        %4593 = vmatprep.subr.mxu0 0.0
        %4594 = vmatpush1.msra.mxu0 %v2753
        %4595 = vmatprep.subr.mxu0 0.0
        %4596 = vmatpush1.msra.mxu0 %v2754
        %4597 = vmatprep.subr.mxu0 0.0
        %4598 = vmatpush1.msra.mxu0 %v2755
        %4599 = vmatprep.subr.mxu0 0.0
        %4600 = vmatpush1.msra.mxu0 %v2756
        %4601 = vmatprep.subr.mxu0 0.0
        %4602 = vmatpush1.msra.mxu0 %v2757
        %4603 = vmatprep.subr.mxu0 0.0
        %4604 = vmatpush1.msra.mxu0 %v2758
        %4605 = vmatprep.subr.mxu0 0.0
        %4606 = vmatpush1.msra.mxu0 %v2759
        %4607 = vmatprep.subr.mxu0 0.0
        %4608 = vmatpush1.msra.mxu0 %v2760
        %4609 = vmatprep.subr.mxu0 0.0
        %4610 = vmatpush1.msra.mxu0 %v2761
        %4611 = vmatprep.subr.mxu0 0.0
        %4612 = vmatpush1.msra.mxu0 %v2762
        %4613 = vmatprep.subr.mxu0 0.0
        %4614 = vmatpush1.msra.mxu0 %v2763
        %4615 = vmatprep.subr.mxu0 0.0
        %4616 = vmatpush1.msra.mxu0 %v2764
        %4617 = vmatprep.subr.mxu0 0.0
        %4618 = vmatpush1.msra.mxu0 %v2765
        %4619 = vmatprep.subr.mxu0 0.0
        %4620 = vmatpush1.msra.mxu0 %v2766
        %4621 = vmatprep.subr.mxu0 0.0
        %4622 = vmatpush1.msra.mxu0 %v2767
        %4623 = vmatprep.subr.mxu0 0.0
        %4624 = vmatpush1.msra.mxu0 %v2768
        %4625 = vmatprep.subr.mxu0 0.0
        %4626 = vmatpush1.msra.mxu0 %v2769
        %4627 = vmatprep.subr.mxu0 0.0
        %4628 = vmatpush1.msra.mxu0 %v2770
        %4629 = vmatprep.subr.mxu0 0.0
        %4630 = vmatpush1.msra.mxu0 %v2771
        %4631 = vmatprep.subr.mxu0 0.0
        %4632 = vmatpush1.msra.mxu0 %v2772
        %4633 = vmatprep.subr.mxu0 0.0
        %4634 = vmatpush1.msra.mxu0 %v2773
        %4635 = vmatprep.subr.mxu0 0.0
        %4636 = vmatpush1.msra.mxu0 %v2774
        %4637 = vmatprep.subr.mxu0 0.0
        %4638 = vmatpush1.msra.mxu0 %v2775
        %4639 = vmatprep.subr.mxu0 0.0
        %4640 = vmatpush1.msra.mxu0 %v2776
        %4641 = vmatprep.subr.mxu0 0.0
        %4642 = vmatpush1.msra.mxu0 %v2777
        %4643 = vmatprep.subr.mxu0 0.0
        %4644 = vmatpush1.msra.mxu0 %v2778
        %4645 = vmatprep.subr.mxu0 0.0
        %4646 = vmatpush1.msra.mxu0 %v2779
        %4647 = vmatprep.subr.mxu0 0.0
        %4648 = vmatpush1.msra.mxu0 %v2780
        %4649 = vmatprep.subr.mxu0 0.0
        %4650 = vmatpush1.msra.mxu0 %v2781
        %4651 = vmatprep.subr.mxu0 0.0
        %4652 = vmatpush1.msra.mxu0 %v2782
        %4653 = vmatprep.subr.mxu0 0.0
        %4654 = vmatpush1.msra.mxu0 %v2783
        %4655 = vmatprep.mubr.f32.mxu0 %v4234
        %4656 = vmatmul.mubr.f32.gmra.mrb[0].mxu0 %v4231
        %v4657 = vpop.f32.mrb[0].mxu0
        %v4658 = vadd.f32 0.0, %v4657
        %v4659 = vpop.f32.mrb[0].mxu0
        %4660 = vmatprep.mubr.f32.mxu0 %v4241
        %4661 = vmatmul.mubr.f32.gmra.mrb[0].mxu0 %v4239
        %v4662 = vpop.f32.mrb[0].mxu0
        %v4663 = vadd.f32 0.0, %v4662
        %v4664 = vpop.f32.mrb[0].mxu0
        %4665 = vmatprep.mubr.f32.mxu0 %v4247
        %4666 = vmatmul.mubr.f32.gmra.mrb[0].mxu0 %v4245
        %v4667 = vpop.f32.mrb[0].mxu0
        %v4668 = vadd.f32 0.0, %v4667
        %v4669 = vpop.f32.mrb[0].mxu0
        %4670 = vmatprep.mubr.f32.mxu0 %v4253
        %4671 = vmatmul.mubr.f32.gmra.mrb[0].mxu0 %v4251
        %v4672 = vpop.f32.mrb[0].mxu0
        %v4673 = vadd.f32 0.0, %v4672
        %v4674 = vpop.f32.mrb[0].mxu0
        %4675 = vmatprep.mubr.f32.mxu0 %v4259
        %4676 = vmatmul.mubr.f32.gmra.mrb[0].mxu0 %v4257
        %v4677 = vpop.f32.mrb[0].mxu0
        %v4678 = vadd.f32 0.0, %v4677
        %v4679 = vpop.f32.mrb[0].mxu0
        %4680 = vmatprep.mubr.f32.mxu0 %v4265
        %4681 = vmatmul.mubr.f32.gmra.mrb[0].mxu0 %v4263
        %v4682 = vpop.f32.mrb[0].mxu0
        %v4683 = vadd.f32 0.0, %v4682
        %v4684 = vpop.f32.mrb[0].mxu0
        %4685 = vmatprep.mubr.f32.mxu0 %v4271
        %4686 = vmatmul.mubr.f32.gmra.mrb[0].mxu0 %v4269
        %v4687 = vpop.f32.mrb[0].mxu0
        %v4688 = vadd.f32 0.0, %v4687
        %v4689 = vpop.f32.mrb[0].mxu0
        %4690 = vmatprep.mubr.f32.mxu0 %v4277
        %4691 = vmatmul.mubr.f32.gmra.mrb[0].mxu0 %v4275
        %v4692 = vpop.f32.mrb[0].mxu0
        %v4693 = vadd.f32 0.0, %v4692
        %v4694 = vpop.f32.mrb[0].mxu0
        %4695 = vmatprep.mubr.f32.mxu0 %v4283
        %4696 = vmatmul.mubr.f32.gmra.mrb[0].mxu0 %v4281
        %v4697 = vpop.f32.mrb[0].mxu0
        %v4698 = vadd.f32 0.0, %v4697
        %v4699 = vpop.f32.mrb[0].mxu0
        %4700 = vmatprep.mubr.f32.mxu0 %v4289
        %4701 = vmatmul.mubr.f32.gmra.mrb[0].mxu0 %v4287
        %v4702 = vpop.f32.mrb[0].mxu0
        %v4703 = vadd.f32 0.0, %v4702
        %v4704 = vpop.f32.mrb[0].mxu0
        %4705 = vmatprep.mubr.f32.mxu0 %v4295
        %4706 = vmatmul.mubr.f32.gmra.mrb[0].mxu0 %v4293
        %v4707 = vpop.f32.mrb[0].mxu0
        %v4708 = vadd.f32 0.0, %v4707
        %v4709 = vpop.f32.mrb[0].mxu0
        %4710 = vmatprep.mubr.f32.mxu0 %v4301
        %4711 = vmatmul.mubr.f32.gmra.mrb[0].mxu0 %v4299
        %v4712 = vpop.f32.mrb[0].mxu0
        %v4713 = vadd.f32 0.0, %v4712
        %v4714 = vpop.f32.mrb[0].mxu0
        %4715 = vmatprep.mubr.f32.mxu0 %v4307
        %4716 = vmatmul.mubr.f32.gmra.mrb[0].mxu0 %v4305
        %v4717 = vpop.f32.mrb[0].mxu0
        %v4718 = vadd.f32 0.0, %v4717
        %v4719 = vpop.f32.mrb[0].mxu0
        %4720 = vmatprep.mubr.f32.mxu0 %v4313
        %4721 = vmatmul.mubr.f32.gmra.mrb[0].mxu0 %v4311
        %v4722 = vpop.f32.mrb[0].mxu0
        %v4723 = vadd.f32 0.0, %v4722
        %v4724 = vpop.f32.mrb[0].mxu0
        %4725 = vmatprep.mubr.f32.mxu0 %v4319
        %4726 = vmatmul.mubr.f32.gmra.mrb[0].mxu0 %v4317
        %v4727 = vpop.f32.mrb[0].mxu0
        %v4728 = vadd.f32 0.0, %v4727
        %v4729 = vpop.f32.mrb[0].mxu0
        %4730 = vmatprep.mubr.f32.mxu0 %v4325
        %4731 = vmatmul.mubr.f32.gmra.mrb[0].mxu0 %v4323
        %v4732 = vpop.f32.mrb[0].mxu0
        %v4733 = vadd.f32 0.0, %v4732
        %v4734 = vpop.f32.mrb[0].mxu0
        %4735 = vmatprep.mubr.f32.mxu0 %v4331
        %4736 = vmatmul.mubr.f32.gmra.mrb[0].mxu0 %v4329
        %v4737 = vpop.f32.mrb[0].mxu0
        %v4738 = vadd.f32 0.0, %v4737
        %v4739 = vpop.f32.mrb[0].mxu0
        %4740 = vmatprep.mubr.f32.mxu0 %v4337
        %4741 = vmatmul.mubr.f32.gmra.mrb[0].mxu0 %v4335
        %v4742 = vpop.f32.mrb[0].mxu0
        %v4743 = vadd.f32 0.0, %v4742
        %v4744 = vpop.f32.mrb[0].mxu0
        %4745 = vmatprep.mubr.f32.mxu0 %v4343
        %4746 = vmatmul.mubr.f32.gmra.mrb[0].mxu0 %v4341
        %v4747 = vpop.f32.mrb[0].mxu0
        %v4748 = vadd.f32 0.0, %v4747
        %v4749 = vpop.f32.mrb[0].mxu0
        %4750 = vmatprep.mubr.f32.mxu0 %v4349
        %4751 = vmatmul.mubr.f32.gmra.mrb[0].mxu0 %v4347
        %v4752 = vpop.f32.mrb[0].mxu0
        %v4753 = vadd.f32 0.0, %v4752
        %v4754 = vpop.f32.mrb[0].mxu0
        %4755 = vmatprep.mubr.f32.mxu0 %v4355
        %4756 = vmatmul.mubr.f32.gmra.mrb[0].mxu0 %v4353
        %v4757 = vpop.f32.mrb[0].mxu0
        %v4758 = vadd.f32 0.0, %v4757
        %v4759 = vpop.f32.mrb[0].mxu0
        %4760 = vmatprep.mubr.f32.mxu0 %v4361
        %4761 = vmatmul.mubr.f32.gmra.mrb[0].mxu0 %v4359
        %v4762 = vpop.f32.mrb[0].mxu0
        %v4763 = vadd.f32 0.0, %v4762
        %v4764 = vpop.f32.mrb[0].mxu0
        %4765 = vmatprep.mubr.f32.mxu0 %v4367
        %4766 = vmatmul.mubr.f32.gmra.mrb[0].mxu0 %v4365
        %v4767 = vpop.f32.mrb[0].mxu0
        %v4768 = vadd.f32 0.0, %v4767
        %v4769 = vpop.f32.mrb[0].mxu0
        %4770 = vmatprep.mubr.f32.mxu0 %v4373
        %4771 = vmatmul.mubr.f32.gmra.mrb[0].mxu0 %v4371
        %v4772 = vpop.f32.mrb[0].mxu0
        %v4773 = vadd.f32 0.0, %v4772
        %v4774 = vpop.f32.mrb[0].mxu0
        %4775 = vmatprep.mubr.f32.mxu0 %v4379
        %4776 = vmatmul.mubr.f32.gmra.mrb[0].mxu0 %v4377
        %v4777 = vpop.f32.mrb[0].mxu0
        %v4778 = vadd.f32 0.0, %v4777
        %v4779 = vpop.f32.mrb[0].mxu0
        %4780 = vmatprep.mubr.f32.mxu0 %v4385
        %4781 = vmatmul.mubr.f32.gmra.mrb[0].mxu0 %v4383
        %v4782 = vpop.f32.mrb[0].mxu0
        %v4783 = vadd.f32 0.0, %v4782
        %v4784 = vpop.f32.mrb[0].mxu0
        %4785 = vmatprep.mubr.f32.mxu0 %v4391
        %4786 = vmatmul.mubr.f32.gmra.mrb[0].mxu0 %v4389
        %v4787 = vpop.f32.mrb[0].mxu0
        %v4788 = vadd.f32 0.0, %v4787
        %v4789 = vpop.f32.mrb[0].mxu0
        %4790 = vmatprep.mubr.f32.mxu0 %v4397
        %4791 = vmatmul.mubr.f32.gmra.mrb[0].mxu0 %v4395
        %v4792 = vpop.f32.mrb[0].mxu0
        %v4793 = vadd.f32 0.0, %v4792
        %v4794 = vpop.f32.mrb[0].mxu0
        %4795 = vmatprep.mubr.f32.mxu0 %v4403
        %4796 = vmatmul.mubr.f32.gmra.mrb[0].mxu0 %v4401
        %v4797 = vpop.f32.mrb[0].mxu0
        %v4798 = vadd.f32 0.0, %v4797
        %v4799 = vpop.f32.mrb[0].mxu0
        %4800 = vmatprep.mubr.f32.mxu0 %v4409
        %4801 = vmatmul.mubr.f32.gmra.mrb[0].mxu0 %v4407
        %v4802 = vpop.f32.mrb[0].mxu0
        %v4803 = vadd.f32 0.0, %v4802
        %v4804 = vpop.f32.mrb[0].mxu0
        %4805 = vmatprep.mubr.f32.mxu0 %v4415
        %4806 = vmatmul.mubr.f32.gmra.mrb[0].mxu0 %v4413
        %v4807 = vpop.f32.mrb[0].mxu0
        %v4808 = vadd.f32 0.0, %v4807
        %v4809 = vpop.f32.mrb[0].mxu0
        %4810 = vmatprep.mubr.f32.mxu0 %v4421
        %4811 = vmatmul.mubr.f32.gmra.mrb[0].mxu0 %v4419
        %v4812 = vpop.f32.mrb[0].mxu0
        %v4813 = vadd.f32 0.0, %v4812
        %v4814 = vpop.f32.mrb[0].mxu0
        %4815 = vmatprep.mubr.f32.mxu0 %v4427
        %4816 = vmatmul.mubr.f32.gmra.mrb[0].mxu0 %v4425
        %v4817 = vpop.f32.mrb[0].mxu0
        %v4818 = vadd.f32 0.0, %v4817
        %v4819 = vpop.f32.mrb[0].mxu0
        %4820 = vmatprep.mubr.f32.mxu0 %v4433
        %4821 = vmatmul.mubr.f32.gmra.mrb[0].mxu0 %v4431
        %v4822 = vpop.f32.mrb[0].mxu0
        %v4823 = vadd.f32 0.0, %v4822
        %v4824 = vpop.f32.mrb[0].mxu0
        %4825 = vmatprep.mubr.f32.mxu0 %v4439
        %4826 = vmatmul.mubr.f32.gmra.mrb[0].mxu0 %v4437
        %v4827 = vpop.f32.mrb[0].mxu0
        %v4828 = vadd.f32 0.0, %v4827
        %v4829 = vpop.f32.mrb[0].mxu0
        %4830 = vmatprep.mubr.f32.mxu0 %v4445
        %4831 = vmatmul.mubr.f32.gmra.mrb[0].mxu0 %v4443
        %v4832 = vpop.f32.mrb[0].mxu0
        %v4833 = vadd.f32 0.0, %v4832
        %v4834 = vpop.f32.mrb[0].mxu0
        %4835 = vdwg.mxu0
        %4836 = vmatprep.subr.mxu0 0.0
        %4837 = vmatpush1.msra.mxu0 %v2784
        %4838 = vmatprep.subr.mxu0 0.0
        %4839 = vmatpush1.msra.mxu0 %v2785
        %4840 = vmatprep.subr.mxu0 0.0
        %4841 = vmatpush1.msra.mxu0 %v2786
        %4842 = vmatprep.subr.mxu0 0.0
        %4843 = vmatpush1.msra.mxu0 %v2787
        %4844 = vmatprep.subr.mxu0 0.0
        %4845 = vmatpush1.msra.mxu0 0.0
        %4846 = vmatprep.subr.mxu0 0.0
        %4847 = vmatpush1.msra.mxu0 0.0
        %4848 = vmatprep.subr.mxu0 0.0
        %4849 = vmatpush1.msra.mxu0 0.0
        %4850 = vmatprep.subr.mxu0 0.0
        %4851 = vmatpush1.msra.mxu0 0.0
        %4852 = vmatprep.subr.mxu0 0.0
        %4853 = vmatpush1.msra.mxu0 0.0
        %4854 = vmatprep.subr.mxu0 0.0
        %4855 = vmatpush1.msra.mxu0 0.0
        %4856 = vmatprep.subr.mxu0 0.0
        %4857 = vmatpush1.msra.mxu0 0.0
        %4858 = vmatprep.subr.mxu0 0.0
        %4859 = vmatpush1.msra.mxu0 0.0
        %4860 = vmatprep.subr.mxu0 0.0
        %4861 = vmatpush1.msra.mxu0 0.0
        %4862 = vmatprep.subr.mxu0 0.0
        %4863 = vmatpush1.msra.mxu0 0.0
        %4864 = vmatprep.subr.mxu0 0.0
        %4865 = vmatpush1.msra.mxu0 0.0
        %4866 = vmatprep.subr.mxu0 0.0
        %4867 = vmatpush1.msra.mxu0 0.0
        %4868 = vmatprep.subr.mxu0 0.0
        %4869 = vmatpush1.msra.mxu0 0.0
        %4870 = vmatprep.subr.mxu0 0.0
        %4871 = vmatpush1.msra.mxu0 0.0
        %4872 = vmatprep.subr.mxu0 0.0
        %4873 = vmatpush1.msra.mxu0 0.0
        %4874 = vmatprep.subr.mxu0 0.0
        %4875 = vmatpush1.msra.mxu0 0.0
        %4876 = vmatprep.subr.mxu0 0.0
        %4877 = vmatpush1.msra.mxu0 0.0
        %4878 = vmatprep.subr.mxu0 0.0
        %4879 = vmatpush1.msra.mxu0 0.0
        %4880 = vmatprep.subr.mxu0 0.0
        %4881 = vmatpush1.msra.mxu0 0.0
        %4882 = vmatprep.subr.mxu0 0.0
        %4883 = vmatpush1.msra.mxu0 0.0
        %4884 = vmatprep.subr.mxu0 0.0
        %4885 = vmatpush1.msra.mxu0 0.0
        %4886 = vmatprep.subr.mxu0 0.0
        %4887 = vmatpush1.msra.mxu0 0.0
        %4888 = vmatprep.subr.mxu0 0.0
        %4889 = vmatpush1.msra.mxu0 0.0
        %4890 = vmatprep.subr.mxu0 0.0
        %4891 = vmatpush1.msra.mxu0 0.0
        %4892 = vmatprep.subr.mxu0 0.0
        %4893 = vmatpush1.msra.mxu0 0.0
        %4894 = vmatprep.subr.mxu0 0.0
        %4895 = vmatpush1.msra.mxu0 0.0
        %4896 = vmatprep.subr.mxu0 0.0
        %4897 = vmatpush1.msra.mxu0 0.0
        %4898 = vmatprep.subr.mxu0 0.0
        %4899 = vmatpush1.msra.mxu0 0.0
        %4900 = vmatprep.mubr.f32.mxu0 0.0
        %4901 = vmatmul.mubr.f32.gmra.mrb[0].mxu0 %v4519
        %v4902 = vpop.f32.mrb[0].mxu0
        %v4903 = vadd.f32 %v4658, %v4902
        %v4904 = vpop.f32.mrb[0].mxu0
        %4905 = vmatprep.mubr.f32.mxu0 0.0
        %4906 = vmatmul.mubr.f32.gmra.mrb[0].mxu0 %v4521
        %v4907 = vpop.f32.mrb[0].mxu0
        %v4908 = vadd.f32 %v4663, %v4907
        %v4909 = vpop.f32.mrb[0].mxu0
        %4910 = vmatprep.mubr.f32.mxu0 0.0
        %4911 = vmatmul.mubr.f32.gmra.mrb[0].mxu0 %v4523
        %v4912 = vpop.f32.mrb[0].mxu0
        %v4913 = vadd.f32 %v4668, %v4912
        %v4914 = vpop.f32.mrb[0].mxu0
        %4915 = vmatprep.mubr.f32.mxu0 0.0
        %4916 = vmatmul.mubr.f32.gmra.mrb[0].mxu0 %v4525
        %v4917 = vpop.f32.mrb[0].mxu0
        %v4918 = vadd.f32 %v4673, %v4917
        %v4919 = vpop.f32.mrb[0].mxu0
        %4920 = vmatprep.mubr.f32.mxu0 0.0
        %4921 = vmatmul.mubr.f32.gmra.mrb[0].mxu0 %v4527
        %v4922 = vpop.f32.mrb[0].mxu0
        %v4923 = vadd.f32 %v4678, %v4922
        %v4924 = vpop.f32.mrb[0].mxu0
        %4925 = vmatprep.mubr.f32.mxu0 0.0
        %4926 = vmatmul.mubr.f32.gmra.mrb[0].mxu0 %v4529
        %v4927 = vpop.f32.mrb[0].mxu0
        %v4928 = vadd.f32 %v4683, %v4927
        %v4929 = vpop.f32.mrb[0].mxu0
        %4930 = vmatprep.mubr.f32.mxu0 0.0
        %4931 = vmatmul.mubr.f32.gmra.mrb[0].mxu0 %v4531
        %v4932 = vpop.f32.mrb[0].mxu0
        %v4933 = vadd.f32 %v4688, %v4932
        %v4934 = vpop.f32.mrb[0].mxu0
        %4935 = vmatprep.mubr.f32.mxu0 0.0
        %4936 = vmatmul.mubr.f32.gmra.mrb[0].mxu0 %v4533
        %v4937 = vpop.f32.mrb[0].mxu0
        %v4938 = vadd.f32 %v4693, %v4937
        %v4939 = vpop.f32.mrb[0].mxu0
        %4940 = vmatprep.mubr.f32.mxu0 0.0
        %4941 = vmatmul.mubr.f32.gmra.mrb[0].mxu0 %v4535
        %v4942 = vpop.f32.mrb[0].mxu0
        %v4943 = vadd.f32 %v4698, %v4942
        %v4944 = vpop.f32.mrb[0].mxu0
        %4945 = vmatprep.mubr.f32.mxu0 0.0
        %4946 = vmatmul.mubr.f32.gmra.mrb[0].mxu0 %v4537
        %v4947 = vpop.f32.mrb[0].mxu0
        %v4948 = vadd.f32 %v4703, %v4947
        %v4949 = vpop.f32.mrb[0].mxu0
        %4950 = vmatprep.mubr.f32.mxu0 0.0
        %4951 = vmatmul.mubr.f32.gmra.mrb[0].mxu0 %v4539
        %v4952 = vpop.f32.mrb[0].mxu0
        %v4953 = vadd.f32 %v4708, %v4952
        %v4954 = vpop.f32.mrb[0].mxu0
        %4955 = vmatprep.mubr.f32.mxu0 0.0
        %4956 = vmatmul.mubr.f32.gmra.mrb[0].mxu0 %v4541
        %v4957 = vpop.f32.mrb[0].mxu0
        %v4958 = vadd.f32 %v4713, %v4957
        %v4959 = vpop.f32.mrb[0].mxu0
        %4960 = vmatprep.mubr.f32.mxu0 0.0
        %4961 = vmatmul.mubr.f32.gmra.mrb[0].mxu0 %v4543
        %v4962 = vpop.f32.mrb[0].mxu0
        %v4963 = vadd.f32 %v4718, %v4962
        %v4964 = vpop.f32.mrb[0].mxu0
        %4965 = vmatprep.mubr.f32.mxu0 0.0
        %4966 = vmatmul.mubr.f32.gmra.mrb[0].mxu0 %v4545
        %v4967 = vpop.f32.mrb[0].mxu0
        %v4968 = vadd.f32 %v4723, %v4967
        %v4969 = vpop.f32.mrb[0].mxu0
        %4970 = vmatprep.mubr.f32.mxu0 0.0
        %4971 = vmatmul.mubr.f32.gmra.mrb[0].mxu0 %v4547
        %v4972 = vpop.f32.mrb[0].mxu0
        %v4973 = vadd.f32 %v4728, %v4972
        %v4974 = vpop.f32.mrb[0].mxu0
        %4975 = vmatprep.mubr.f32.mxu0 0.0
        %4976 = vmatmul.mubr.f32.gmra.mrb[0].mxu0 %v4549
        %v4977 = vpop.f32.mrb[0].mxu0
        %v4978 = vadd.f32 %v4733, %v4977
        %v4979 = vpop.f32.mrb[0].mxu0
        %4980 = vmatprep.mubr.f32.mxu0 0.0
        %4981 = vmatmul.mubr.f32.gmra.mrb[0].mxu0 %v4551
        %v4982 = vpop.f32.mrb[0].mxu0
        %v4983 = vadd.f32 %v4738, %v4982
        %v4984 = vpop.f32.mrb[0].mxu0
        %4985 = vmatprep.mubr.f32.mxu0 0.0
        %4986 = vmatmul.mubr.f32.gmra.mrb[0].mxu0 %v4553
        %v4987 = vpop.f32.mrb[0].mxu0
        %v4988 = vadd.f32 %v4743, %v4987
        %v4989 = vpop.f32.mrb[0].mxu0
        %4990 = vmatprep.mubr.f32.mxu0 0.0
        %4991 = vmatmul.mubr.f32.gmra.mrb[0].mxu0 %v4555
        %v4992 = vpop.f32.mrb[0].mxu0
        %v4993 = vadd.f32 %v4748, %v4992
        %v4994 = vpop.f32.mrb[0].mxu0
        %4995 = vmatprep.mubr.f32.mxu0 0.0
        %4996 = vmatmul.mubr.f32.gmra.mrb[0].mxu0 %v4557
        %v4997 = vpop.f32.mrb[0].mxu0
        %v4998 = vadd.f32 %v4753, %v4997
        %v4999 = vpop.f32.mrb[0].mxu0
        %5000 = vmatprep.mubr.f32.mxu0 0.0
        %5001 = vmatmul.mubr.f32.gmra.mrb[0].mxu0 %v4559
        %v5002 = vpop.f32.mrb[0].mxu0
        %v5003 = vadd.f32 %v4758, %v5002
        %v5004 = vpop.f32.mrb[0].mxu0
        %5005 = vmatprep.mubr.f32.mxu0 0.0
        %5006 = vmatmul.mubr.f32.gmra.mrb[0].mxu0 %v4561
        %v5007 = vpop.f32.mrb[0].mxu0
        %v5008 = vadd.f32 %v4763, %v5007
        %v5009 = vpop.f32.mrb[0].mxu0
        %5010 = vmatprep.mubr.f32.mxu0 0.0
        %5011 = vmatmul.mubr.f32.gmra.mrb[0].mxu0 %v4563
        %v5012 = vpop.f32.mrb[0].mxu0
        %v5013 = vadd.f32 %v4768, %v5012
        %v5014 = vpop.f32.mrb[0].mxu0
        %5015 = vmatprep.mubr.f32.mxu0 0.0
        %5016 = vmatmul.mubr.f32.gmra.mrb[0].mxu0 %v4565
        %v5017 = vpop.f32.mrb[0].mxu0
        %v5018 = vadd.f32 %v4773, %v5017
        %v5019 = vpop.f32.mrb[0].mxu0
        %5020 = vmatprep.mubr.f32.mxu0 0.0
        %5021 = vmatmul.mubr.f32.gmra.mrb[0].mxu0 %v4567
        %v5022 = vpop.f32.mrb[0].mxu0
        %v5023 = vadd.f32 %v4778, %v5022
        %v5024 = vpop.f32.mrb[0].mxu0
        %5025 = vmatprep.mubr.f32.mxu0 0.0
        %5026 = vmatmul.mubr.f32.gmra.mrb[0].mxu0 %v4569
        %v5027 = vpop.f32.mrb[0].mxu0
        %v5028 = vadd.f32 %v4783, %v5027
        %v5029 = vpop.f32.mrb[0].mxu0
        %5030 = vmatprep.mubr.f32.mxu0 0.0
        %5031 = vmatmul.mubr.f32.gmra.mrb[0].mxu0 %v4571
        %v5032 = vpop.f32.mrb[0].mxu0
        %v5033 = vadd.f32 %v4788, %v5032
        %v5034 = vpop.f32.mrb[0].mxu0
        %5035 = vmatprep.mubr.f32.mxu0 0.0
        %5036 = vmatmul.mubr.f32.gmra.mrb[0].mxu0 %v4573
        %v5037 = vpop.f32.mrb[0].mxu0
        %v5038 = vadd.f32 %v4793, %v5037
        %v5039 = vpop.f32.mrb[0].mxu0
        %5040 = vmatprep.mubr.f32.mxu0 0.0
        %5041 = vmatmul.mubr.f32.gmra.mrb[0].mxu0 %v4575
        %v5042 = vpop.f32.mrb[0].mxu0
        %v5043 = vadd.f32 %v4798, %v5042
        %v5044 = vpop.f32.mrb[0].mxu0
        %5045 = vmatprep.mubr.f32.mxu0 0.0
        %5046 = vmatmul.mubr.f32.gmra.mrb[0].mxu0 %v4577
        %v5047 = vpop.f32.mrb[0].mxu0
        %v5048 = vadd.f32 %v4803, %v5047
        %v5049 = vpop.f32.mrb[0].mxu0
        %5050 = vmatprep.mubr.f32.mxu0 0.0
        %5051 = vmatmul.mubr.f32.gmra.mrb[0].mxu0 %v4579
        %v5052 = vpop.f32.mrb[0].mxu0
        %v5053 = vadd.f32 %v4808, %v5052
        %v5054 = vpop.f32.mrb[0].mxu0
        %5055 = vmatprep.mubr.f32.mxu0 0.0
        %5056 = vmatmul.mubr.f32.gmra.mrb[0].mxu0 %v4581
        %v5057 = vpop.f32.mrb[0].mxu0
        %v5058 = vadd.f32 %v4813, %v5057
        %v5059 = vpop.f32.mrb[0].mxu0
        %5060 = vmatprep.mubr.f32.mxu0 0.0
        %5061 = vmatmul.mubr.f32.gmra.mrb[0].mxu0 %v4583
        %v5062 = vpop.f32.mrb[0].mxu0
        %v5063 = vadd.f32 %v4818, %v5062
        %v5064 = vpop.f32.mrb[0].mxu0
        %5065 = vmatprep.mubr.f32.mxu0 0.0
        %5066 = vmatmul.mubr.f32.gmra.mrb[0].mxu0 %v4585
        %v5067 = vpop.f32.mrb[0].mxu0
        %v5068 = vadd.f32 %v4823, %v5067
        %v5069 = vpop.f32.mrb[0].mxu0
        %5070 = vmatprep.mubr.f32.mxu0 0.0
        %5071 = vmatmul.mubr.f32.gmra.mrb[0].mxu0 %v4587
        %v5072 = vpop.f32.mrb[0].mxu0
        %v5073 = vadd.f32 %v4828, %v5072
        %v5074 = vpop.f32.mrb[0].mxu0
        %5075 = vmatprep.mubr.f32.mxu0 0.0
        %5076 = vmatmul.mubr.f32.gmra.mrb[0].mxu0 %v4589
        %v5077 = vpop.f32.mrb[0].mxu0
        %v5078 = vadd.f32 %v4833, %v5077
        %v5079 = vpop.f32.mrb[0].mxu0
        %5080 = vdwg.mxu0
        %v5081 = vmax.f32 %v4903, 0.0
        %v5082 = vmax.f32 %v4908, 0.0
        %v5083 = vmax.f32 %v4913, 0.0
        %v5084 = vmax.f32 %v4918, 0.0
        %v5085 = vmax.f32 %v4923, 0.0
        %v5086 = vmax.f32 %v4928, 0.0
        %v5087 = vmax.f32 %v4933, 0.0
        %v5088 = vmax.f32 %v4938, 0.0
        %v5089 = vmax.f32 %v4943, 0.0
        %v5090 = vmax.f32 %v4948, 0.0
        %v5091 = vmax.f32 %v4953, 0.0
        %v5092 = vmax.f32 %v4958, 0.0
        %v5093 = vmax.f32 %v4963, 0.0
        %v5094 = vmax.f32 %v4968, 0.0
        %v5095 = vmax.f32 %v4973, 0.0
        %v5096 = vmax.f32 %v4978, 0.0
        %v5097 = vmax.f32 %v4983, 0.0
        %v5098 = vmax.f32 %v4988, 0.0
        %v5099 = vmax.f32 %v4993, 0.0
        %v5100 = vmax.f32 %v4998, 0.0
        %v5101 = vmax.f32 %v5003, 0.0
        %v5102 = vmax.f32 %v5008, 0.0
        %v5103 = vmax.f32 %v5013, 0.0
        %v5104 = vmax.f32 %v5018, 0.0
        %v5105 = vmax.f32 %v5023, 0.0
        %v5106 = vmax.f32 %v5028, 0.0
        %v5107 = vmax.f32 %v5033, 0.0
        %v5108 = vmax.f32 %v5038, 0.0
        %v5109 = vmax.f32 %v5043, 0.0
        %v5110 = vmax.f32 %v5048, 0.0
        %v5111 = vmax.f32 %v5053, 0.0
        %v5112 = vmax.f32 %v5058, 0.0
        %v5113 = vmax.f32 %v5063, 0.0
        %v5114 = vmax.f32 %v5068, 0.0
        %v5115 = vmax.f32 %v5073, 0.0
        %v5116 = vmax.f32 %v5078, 0.0
        %v5117 = vmul.f32 %v5081, %v2539
        %v5118 = vmul.f32 %v5082, %v2544
        %v5119 = vmul.f32 %v5083, %v2549
        %v5120 = vmul.f32 %v5084, %v2554
        %v5121 = vmul.f32 %v5085, %v2559
        %v5122 = vmul.f32 %v5086, %v2564
        %v5123 = vmul.f32 %v5087, %v2569
        %v5124 = vmul.f32 %v5088, %v2574
        %v5125 = vmul.f32 %v5089, %v2579
        %v5126 = vmul.f32 %v5090, %v2584
        %v5127 = vmul.f32 %v5091, %v2589
        %v5128 = vmul.f32 %v5092, %v2594
        %v5129 = vmul.f32 %v5093, %v2599
        %v5130 = vmul.f32 %v5094, %v2604
        %v5131 = vmul.f32 %v5095, %v2609
        %v5132 = vmul.f32 %v5096, %v2614
        %v5133 = vmul.f32 %v5097, %v2619
        %v5134 = vmul.f32 %v5098, %v2624
        %v5135 = vmul.f32 %v5099, %v2629
        %v5136 = vmul.f32 %v5100, %v2634
        %v5137 = vmul.f32 %v5101, %v2639
        %v5138 = vmul.f32 %v5102, %v2644
        %v5139 = vmul.f32 %v5103, %v2649
        %v5140 = vmul.f32 %v5104, %v2654
        %v5141 = vmul.f32 %v5105, %v2659
        %v5142 = vmul.f32 %v5106, %v2664
        %v5143 = vmul.f32 %v5107, %v2669
        %v5144 = vmul.f32 %v5108, %v2674
        %v5145 = vmul.f32 %v5109, %v2679
        %v5146 = vmul.f32 %v5110, %v2684
        %v5147 = vmul.f32 %v5111, %v2689
        %v5148 = vmul.f32 %v5112, %v2694
        %v5149 = vmul.f32 %v5113, %v2699
        %v5150 = vmul.f32 %v5114, %v2704
        %v5151 = vmul.f32 %v5115, %v2709
        %v5152 = vmul.f32 %v5116, %v2714
        %s5153 = scalar_lea.vmem [#allocation8], 288
        %v5154 = vld [vmem:[%s5153] sm:$0xff]
        %v5155 = vld [vmem:[%s5153 + $0x8] sm:$0xff]
        %v5156 = vld [vmem:[%s5153 + $0x10] sm:$0xff]
        %v5157 = vld [vmem:[%s5153 + $0x18] sm:$0xff]
        %v5158 = vld [vmem:[%s5153 + $0x20] sm:$0xff]
        %v5159 = vld [vmem:[%s5153 + $0x28] sm:$0xff]
        %v5160 = vld [vmem:[%s5153 + $0x30] sm:$0xff]
        %v5161 = vld [vmem:[%s5153 + $0x38] sm:$0xff]
        %v5162 = vld [vmem:[%s5153 + $0x40] sm:$0xff]
        %v5163 = vld [vmem:[%s5153 + $0x48] sm:$0xff]
        %v5164 = vld [vmem:[%s5153 + $0x50] sm:$0xff]
        %v5165 = vld [vmem:[%s5153 + $0x58] sm:$0xff]
        %v5166 = vld [vmem:[%s5153 + $0x60] sm:$0xff]
        %v5167 = vld [vmem:[%s5153 + $0x68] sm:$0xff]
        %v5168 = vld [vmem:[%s5153 + $0x70] sm:$0xff]
        %v5169 = vld [vmem:[%s5153 + $0x78] sm:$0xff]
        %v5170 = vld [vmem:[%s5153 + $0x80] sm:$0xff]
        %v5171 = vld [vmem:[%s5153 + $0x88] sm:$0xff]
        %v5172 = vld [vmem:[%s5153 + $0x90] sm:$0xff]
        %v5173 = vld [vmem:[%s5153 + $0x98] sm:$0xff]
        %v5174 = vld [vmem:[%s5153 + $0xa0] sm:$0xff]
        %v5175 = vld [vmem:[%s5153 + $0xa8] sm:$0xff]
        %v5176 = vld [vmem:[%s5153 + $0xb0] sm:$0xff]
        %v5177 = vld [vmem:[%s5153 + $0xb8] sm:$0xff]
        %v5178 = vld [vmem:[%s5153 + $0xc0] sm:$0xff]
        %v5179 = vld [vmem:[%s5153 + $0xc8] sm:$0xff]
        %v5180 = vld [vmem:[%s5153 + $0xd0] sm:$0xff]
        %v5181 = vld [vmem:[%s5153 + $0xd8] sm:$0xff]
        %v5182 = vld [vmem:[%s5153 + $0xe0] sm:$0xff]
        %v5183 = vld [vmem:[%s5153 + $0xe8] sm:$0xff]
        %v5184 = vld [vmem:[%s5153 + $0xf0] sm:$0xff]
        %v5185 = vld [vmem:[%s5153 + $0xf8] sm:$0xff]
        %v5186 = vld [vmem:[%s5153 + $0x100] sm:$0xff]
        %v5187 = vld [vmem:[%s5153 + $0x108] sm:$0xff]
        %v5188 = vld [vmem:[%s5153 + $0x110] sm:$0xff]
        %v5189 = vld [vmem:[%s5153 + $0x118] sm:$0xff]
        %v5224 = vrot.slane %v5117, 1
        %v5225 = vsel %vm460, %v461, %v5224
        %v5226 = vrot.slane %v5118, 1
        %v5227 = vsel %vm460, %v5224, %v5226
        %v5228 = vrot.slane %v5119, 1
        %v5229 = vsel %vm460, %v5226, %v5228
        %v5230 = vrot.slane %v5120, 1
        %v5231 = vsel %vm460, %v5228, %v5230
        %v5232 = vrot.slane %v5121, 1
        %v5233 = vsel %vm460, %v5230, %v5232
        %v5234 = vrot.slane %v5122, 1
        %v5235 = vsel %vm460, %v5232, %v5234
        %v5236 = vrot.slane %v5123, 1
        %v5237 = vsel %vm460, %v5234, %v5236
        %v5238 = vrot.slane %v5124, 1
        %v5239 = vsel %vm460, %v5236, %v5238
        %v5240 = vrot.slane %v5125, 1
        %v5241 = vsel %vm460, %v5238, %v5240
        %v5242 = vrot.slane %v5126, 1
        %v5243 = vsel %vm460, %v5240, %v5242
        %v5244 = vrot.slane %v5127, 1
        %v5245 = vsel %vm460, %v5242, %v5244
        %v5246 = vrot.slane %v5128, 1
        %v5247 = vsel %vm460, %v5244, %v5246
        %v5248 = vrot.slane %v5129, 1
        %v5249 = vsel %vm460, %v5246, %v5248
        %v5250 = vrot.slane %v5130, 1
        %v5251 = vsel %vm460, %v5248, %v5250
        %v5252 = vrot.slane %v5131, 1
        %v5253 = vsel %vm460, %v5250, %v5252
        %v5254 = vrot.slane %v5132, 1
        %v5255 = vsel %vm460, %v5252, %v5254
        %v5256 = vrot.slane %v5133, 1
        %v5257 = vsel %vm460, %v5254, %v5256
        %v5258 = vrot.slane %v5134, 1
        %v5259 = vsel %vm460, %v5256, %v5258
        %v5260 = vrot.slane %v5135, 1
        %v5261 = vsel %vm460, %v5258, %v5260
        %v5262 = vrot.slane %v5136, 1
        %v5263 = vsel %vm460, %v5260, %v5262
        %v5264 = vrot.slane %v5137, 1
        %v5265 = vsel %vm460, %v5262, %v5264
        %v5266 = vrot.slane %v5138, 1
        %v5267 = vsel %vm460, %v5264, %v5266
        %v5268 = vrot.slane %v5139, 1
        %v5269 = vsel %vm460, %v5266, %v5268
        %v5270 = vrot.slane %v5140, 1
        %v5271 = vsel %vm460, %v5268, %v5270
        %v5272 = vrot.slane %v5141, 1
        %v5273 = vsel %vm460, %v5270, %v5272
        %v5274 = vrot.slane %v5142, 1
        %v5275 = vsel %vm460, %v5272, %v5274
        %v5276 = vrot.slane %v5143, 1
        %v5277 = vsel %vm460, %v5274, %v5276
        %v5278 = vrot.slane %v5144, 1
        %v5279 = vsel %vm460, %v5276, %v5278
        %v5280 = vrot.slane %v5145, 1
        %v5281 = vsel %vm460, %v5278, %v5280
        %v5282 = vrot.slane %v5146, 1
        %v5283 = vsel %vm460, %v5280, %v5282
        %v5284 = vrot.slane %v5147, 1
        %v5285 = vsel %vm460, %v5282, %v5284
        %v5286 = vrot.slane %v5148, 1
        %v5287 = vsel %vm460, %v5284, %v5286
        %v5288 = vrot.slane %v5149, 1
        %v5289 = vsel %vm460, %v5286, %v5288
        %v5290 = vrot.slane %v5150, 1
        %v5291 = vsel %vm460, %v5288, %v5290
        %5292 = vrot.lane.b32.xlu0 %v5225, 32
        %v5293 = vpop.permute.xlu0 %5292
        %5294 = vrot.lane.b32.xlu0 %v5227, 32
        %v5295 = vpop.permute.xlu0 %5294
        %5296 = vrot.lane.b32.xlu0 %v5229, 32
        %v5297 = vpop.permute.xlu0 %5296
        %5298 = vrot.lane.b32.xlu0 %v5231, 32
        %v5299 = vpop.permute.xlu0 %5298
        %5300 = vrot.lane.b32.xlu0 %v5233, 32
        %v5301 = vpop.permute.xlu0 %5300
        %5302 = vrot.lane.b32.xlu0 %v5235, 32
        %v5303 = vpop.permute.xlu0 %5302
        %5304 = vrot.lane.b32.xlu0 %v5237, 32
        %v5305 = vpop.permute.xlu0 %5304
        %5306 = vrot.lane.b32.xlu0 %v5239, 32
        %v5307 = vpop.permute.xlu0 %5306
        %5308 = vrot.lane.b32.xlu0 %v5241, 32
        %v5309 = vpop.permute.xlu0 %5308
        %5310 = vrot.lane.b32.xlu0 %v5243, 32
        %v5311 = vpop.permute.xlu0 %5310
        %5312 = vrot.lane.b32.xlu0 %v5245, 32
        %v5313 = vpop.permute.xlu0 %5312
        %5314 = vrot.lane.b32.xlu0 %v5247, 32
        %v5315 = vpop.permute.xlu0 %5314
        %5316 = vrot.lane.b32.xlu0 %v5249, 32
        %v5317 = vpop.permute.xlu0 %5316
        %5318 = vrot.lane.b32.xlu0 %v5251, 32
        %v5319 = vpop.permute.xlu0 %5318
        %5320 = vrot.lane.b32.xlu0 %v5253, 32
        %v5321 = vpop.permute.xlu0 %5320
        %5322 = vrot.lane.b32.xlu0 %v5255, 32
        %v5323 = vpop.permute.xlu0 %5322
        %5324 = vrot.lane.b32.xlu0 %v5257, 32
        %v5325 = vpop.permute.xlu0 %5324
        %5326 = vrot.lane.b32.xlu0 %v5259, 32
        %v5327 = vpop.permute.xlu0 %5326
        %5328 = vrot.lane.b32.xlu0 %v5261, 32
        %v5329 = vpop.permute.xlu0 %5328
        %5330 = vrot.lane.b32.xlu0 %v5263, 32
        %v5331 = vpop.permute.xlu0 %5330
        %5332 = vrot.lane.b32.xlu0 %v5265, 32
        %v5333 = vpop.permute.xlu0 %5332
        %5334 = vrot.lane.b32.xlu0 %v5267, 32
        %v5335 = vpop.permute.xlu0 %5334
        %5336 = vrot.lane.b32.xlu0 %v5269, 32
        %v5337 = vpop.permute.xlu0 %5336
        %5338 = vrot.lane.b32.xlu0 %v5271, 32
        %v5339 = vpop.permute.xlu0 %5338
        %5340 = vrot.lane.b32.xlu0 %v5273, 32
        %v5341 = vpop.permute.xlu0 %5340
        %5342 = vrot.lane.b32.xlu0 %v5275, 32
        %v5343 = vpop.permute.xlu0 %5342
        %5344 = vrot.lane.b32.xlu0 %v5277, 32
        %v5345 = vpop.permute.xlu0 %5344
        %5346 = vrot.lane.b32.xlu0 %v5279, 32
        %v5347 = vpop.permute.xlu0 %5346
        %5348 = vrot.lane.b32.xlu0 %v5281, 32
        %v5349 = vpop.permute.xlu0 %5348
        %5350 = vrot.lane.b32.xlu0 %v5283, 32
        %v5351 = vpop.permute.xlu0 %5350
        %5352 = vrot.lane.b32.xlu0 %v5285, 32
        %v5353 = vpop.permute.xlu0 %5352
        %5354 = vrot.lane.b32.xlu0 %v5287, 32
        %v5355 = vpop.permute.xlu0 %5354
        %5356 = vrot.lane.b32.xlu0 %v5289, 32
        %v5357 = vpop.permute.xlu0 %5356
        %5358 = vrot.lane.b32.xlu0 %v5291, 32
        %v5359 = vpop.permute.xlu0 %5358
        %5360 = vrot.lane.b32.xlu0 %v5290, 32
        %v5361 = vpop.permute.xlu0 %5360
        %v5397 = vrot.slane %v5117, 2
        %v5398 = vsel %vm639, %v640, %v5397
        %v5399 = vrot.slane %v5118, 2
        %v5400 = vsel %vm639, %v5397, %v5399
        %v5401 = vrot.slane %v5119, 2
        %v5402 = vsel %vm639, %v5399, %v5401
        %v5403 = vrot.slane %v5120, 2
        %v5404 = vsel %vm639, %v5401, %v5403
        %v5405 = vrot.slane %v5121, 2
        %v5406 = vsel %vm639, %v5403, %v5405
        %v5407 = vrot.slane %v5122, 2
        %v5408 = vsel %vm639, %v5405, %v5407
        %v5409 = vrot.slane %v5123, 2
        %v5410 = vsel %vm639, %v5407, %v5409
        %v5411 = vrot.slane %v5124, 2
        %v5412 = vsel %vm639, %v5409, %v5411
        %v5413 = vrot.slane %v5125, 2
        %v5414 = vsel %vm639, %v5411, %v5413
        %v5415 = vrot.slane %v5126, 2
        %v5416 = vsel %vm639, %v5413, %v5415
        %v5417 = vrot.slane %v5127, 2
        %v5418 = vsel %vm639, %v5415, %v5417
        %v5419 = vrot.slane %v5128, 2
        %v5420 = vsel %vm639, %v5417, %v5419
        %v5421 = vrot.slane %v5129, 2
        %v5422 = vsel %vm639, %v5419, %v5421
        %v5423 = vrot.slane %v5130, 2
        %v5424 = vsel %vm639, %v5421, %v5423
        %v5425 = vrot.slane %v5131, 2
        %v5426 = vsel %vm639, %v5423, %v5425
        %v5427 = vrot.slane %v5132, 2
        %v5428 = vsel %vm639, %v5425, %v5427
        %v5429 = vrot.slane %v5133, 2
        %v5430 = vsel %vm639, %v5427, %v5429
        %v5431 = vrot.slane %v5134, 2
        %v5432 = vsel %vm639, %v5429, %v5431
        %v5433 = vrot.slane %v5135, 2
        %v5434 = vsel %vm639, %v5431, %v5433
        %v5435 = vrot.slane %v5136, 2
        %v5436 = vsel %vm639, %v5433, %v5435
        %v5437 = vrot.slane %v5137, 2
        %v5438 = vsel %vm639, %v5435, %v5437
        %v5439 = vrot.slane %v5138, 2
        %v5440 = vsel %vm639, %v5437, %v5439
        %v5441 = vrot.slane %v5139, 2
        %v5442 = vsel %vm639, %v5439, %v5441
        %v5443 = vrot.slane %v5140, 2
        %v5444 = vsel %vm639, %v5441, %v5443
        %v5445 = vrot.slane %v5141, 2
        %v5446 = vsel %vm639, %v5443, %v5445
        %v5447 = vrot.slane %v5142, 2
        %v5448 = vsel %vm639, %v5445, %v5447
        %v5449 = vrot.slane %v5143, 2
        %v5450 = vsel %vm639, %v5447, %v5449
        %v5451 = vrot.slane %v5144, 2
        %v5452 = vsel %vm639, %v5449, %v5451
        %v5453 = vrot.slane %v5145, 2
        %v5454 = vsel %vm639, %v5451, %v5453
        %v5455 = vrot.slane %v5146, 2
        %v5456 = vsel %vm639, %v5453, %v5455
        %v5457 = vrot.slane %v5147, 2
        %v5458 = vsel %vm639, %v5455, %v5457
        %v5459 = vrot.slane %v5148, 2
        %v5460 = vsel %vm639, %v5457, %v5459
        %v5461 = vrot.slane %v5149, 2
        %v5462 = vsel %vm639, %v5459, %v5461
        %v5463 = vrot.slane %v5150, 2
        %v5464 = vsel %vm639, %v5461, %v5463
        %5465 = vrot.lane.b32.xlu0 %v5398, 64
        %v5466 = vpop.permute.xlu0 %5465
        %5467 = vrot.lane.b32.xlu0 %v5400, 64
        %v5468 = vpop.permute.xlu0 %5467
        %5469 = vrot.lane.b32.xlu0 %v5402, 64
        %v5470 = vpop.permute.xlu0 %5469
        %5471 = vrot.lane.b32.xlu0 %v5404, 64
        %v5472 = vpop.permute.xlu0 %5471
        %5473 = vrot.lane.b32.xlu0 %v5406, 64
        %v5474 = vpop.permute.xlu0 %5473
        %5475 = vrot.lane.b32.xlu0 %v5408, 64
        %v5476 = vpop.permute.xlu0 %5475
        %5477 = vrot.lane.b32.xlu0 %v5410, 64
        %v5478 = vpop.permute.xlu0 %5477
        %5479 = vrot.lane.b32.xlu0 %v5412, 64
        %v5480 = vpop.permute.xlu0 %5479
        %5481 = vrot.lane.b32.xlu0 %v5414, 64
        %v5482 = vpop.permute.xlu0 %5481
        %5483 = vrot.lane.b32.xlu0 %v5416, 64
        %v5484 = vpop.permute.xlu0 %5483
        %5485 = vrot.lane.b32.xlu0 %v5418, 64
        %v5486 = vpop.permute.xlu0 %5485
        %5487 = vrot.lane.b32.xlu0 %v5420, 64
        %v5488 = vpop.permute.xlu0 %5487
        %5489 = vrot.lane.b32.xlu0 %v5422, 64
        %v5490 = vpop.permute.xlu0 %5489
        %5491 = vrot.lane.b32.xlu0 %v5424, 64
        %v5492 = vpop.permute.xlu0 %5491
        %5493 = vrot.lane.b32.xlu0 %v5426, 64
        %v5494 = vpop.permute.xlu0 %5493
        %5495 = vrot.lane.b32.xlu0 %v5428, 64
        %v5496 = vpop.permute.xlu0 %5495
        %5497 = vrot.lane.b32.xlu0 %v5430, 64
        %v5498 = vpop.permute.xlu0 %5497
        %5499 = vrot.lane.b32.xlu0 %v5432, 64
        %v5500 = vpop.permute.xlu0 %5499
        %5501 = vrot.lane.b32.xlu0 %v5434, 64
        %v5502 = vpop.permute.xlu0 %5501
        %5503 = vrot.lane.b32.xlu0 %v5436, 64
        %v5504 = vpop.permute.xlu0 %5503
        %5505 = vrot.lane.b32.xlu0 %v5438, 64
        %v5506 = vpop.permute.xlu0 %5505
        %5507 = vrot.lane.b32.xlu0 %v5440, 64
        %v5508 = vpop.permute.xlu0 %5507
        %5509 = vrot.lane.b32.xlu0 %v5442, 64
        %v5510 = vpop.permute.xlu0 %5509
        %5511 = vrot.lane.b32.xlu0 %v5444, 64
        %v5512 = vpop.permute.xlu0 %5511
        %5513 = vrot.lane.b32.xlu0 %v5446, 64
        %v5514 = vpop.permute.xlu0 %5513
        %5515 = vrot.lane.b32.xlu0 %v5448, 64
        %v5516 = vpop.permute.xlu0 %5515
        %5517 = vrot.lane.b32.xlu0 %v5450, 64
        %v5518 = vpop.permute.xlu0 %5517
        %5519 = vrot.lane.b32.xlu0 %v5452, 64
        %v5520 = vpop.permute.xlu0 %5519
        %5521 = vrot.lane.b32.xlu0 %v5454, 64
        %v5522 = vpop.permute.xlu0 %5521
        %5523 = vrot.lane.b32.xlu0 %v5456, 64
        %v5524 = vpop.permute.xlu0 %5523
        %5525 = vrot.lane.b32.xlu0 %v5458, 64
        %v5526 = vpop.permute.xlu0 %5525
        %5527 = vrot.lane.b32.xlu0 %v5460, 64
        %v5528 = vpop.permute.xlu0 %5527
        %5529 = vrot.lane.b32.xlu0 %v5462, 64
        %v5530 = vpop.permute.xlu0 %5529
        %5531 = vrot.lane.b32.xlu0 %v5464, 64
        %v5532 = vpop.permute.xlu0 %5531
        %5533 = vrot.lane.b32.xlu0 %v5463, 64
        %v5534 = vpop.permute.xlu0 %5533
        %v5572 = vrot.slane %v5151, 2
        %v5573 = vsel %vm639, %v5463, %v5572
        %v5574 = vrot.slane %v5152, 2
        %v5575 = vsel %vm639, %v5572, %v5574
        %5576 = vrot.lane.b32.xlu0 %v5398, 96
        %v5577 = vpop.permute.xlu0 %5576
        %5578 = vrot.lane.b32.xlu0 %v5400, 96
        %v5579 = vpop.permute.xlu0 %5578
        %5580 = vrot.lane.b32.xlu0 %v5402, 96
        %v5581 = vpop.permute.xlu0 %5580
        %5582 = vrot.lane.b32.xlu0 %v5404, 96
        %v5583 = vpop.permute.xlu0 %5582
        %5584 = vrot.lane.b32.xlu0 %v5406, 96
        %v5585 = vpop.permute.xlu0 %5584
        %5586 = vrot.lane.b32.xlu0 %v5408, 96
        %v5587 = vpop.permute.xlu0 %5586
        %5588 = vrot.lane.b32.xlu0 %v5410, 96
        %v5589 = vpop.permute.xlu0 %5588
        %5590 = vrot.lane.b32.xlu0 %v5412, 96
        %v5591 = vpop.permute.xlu0 %5590
        %5592 = vrot.lane.b32.xlu0 %v5414, 96
        %v5593 = vpop.permute.xlu0 %5592
        %5594 = vrot.lane.b32.xlu0 %v5416, 96
        %v5595 = vpop.permute.xlu0 %5594
        %5596 = vrot.lane.b32.xlu0 %v5418, 96
        %v5597 = vpop.permute.xlu0 %5596
        %5598 = vrot.lane.b32.xlu0 %v5420, 96
        %v5599 = vpop.permute.xlu0 %5598
        %5600 = vrot.lane.b32.xlu0 %v5422, 96
        %v5601 = vpop.permute.xlu0 %5600
        %5602 = vrot.lane.b32.xlu0 %v5424, 96
        %v5603 = vpop.permute.xlu0 %5602
        %5604 = vrot.lane.b32.xlu0 %v5426, 96
        %v5605 = vpop.permute.xlu0 %5604
        %5606 = vrot.lane.b32.xlu0 %v5428, 96
        %v5607 = vpop.permute.xlu0 %5606
        %5608 = vrot.lane.b32.xlu0 %v5430, 96
        %v5609 = vpop.permute.xlu0 %5608
        %5610 = vrot.lane.b32.xlu0 %v5432, 96
        %v5611 = vpop.permute.xlu0 %5610
        %5612 = vrot.lane.b32.xlu0 %v5434, 96
        %v5613 = vpop.permute.xlu0 %5612
        %5614 = vrot.lane.b32.xlu0 %v5436, 96
        %v5615 = vpop.permute.xlu0 %5614
        %5616 = vrot.lane.b32.xlu0 %v5438, 96
        %v5617 = vpop.permute.xlu0 %5616
        %5618 = vrot.lane.b32.xlu0 %v5440, 96
        %v5619 = vpop.permute.xlu0 %5618
        %5620 = vrot.lane.b32.xlu0 %v5442, 96
        %v5621 = vpop.permute.xlu0 %5620
        %5622 = vrot.lane.b32.xlu0 %v5444, 96
        %v5623 = vpop.permute.xlu0 %5622
        %5624 = vrot.lane.b32.xlu0 %v5446, 96
        %v5625 = vpop.permute.xlu0 %5624
        %5626 = vrot.lane.b32.xlu0 %v5448, 96
        %v5627 = vpop.permute.xlu0 %5626
        %5628 = vrot.lane.b32.xlu0 %v5450, 96
        %v5629 = vpop.permute.xlu0 %5628
        %5630 = vrot.lane.b32.xlu0 %v5452, 96
        %v5631 = vpop.permute.xlu0 %5630
        %5632 = vrot.lane.b32.xlu0 %v5454, 96
        %v5633 = vpop.permute.xlu0 %5632
        %5634 = vrot.lane.b32.xlu0 %v5456, 96
        %v5635 = vpop.permute.xlu0 %5634
        %5636 = vrot.lane.b32.xlu0 %v5458, 96
        %v5637 = vpop.permute.xlu0 %5636
        %5638 = vrot.lane.b32.xlu0 %v5460, 96
        %v5639 = vpop.permute.xlu0 %5638
        %5640 = vrot.lane.b32.xlu0 %v5462, 96
        %v5641 = vpop.permute.xlu0 %5640
        %5642 = vrot.lane.b32.xlu0 %v5464, 96
        %v5643 = vpop.permute.xlu0 %5642
        %5644 = vrot.lane.b32.xlu0 %v5573, 96
        %v5645 = vpop.permute.xlu0 %5644
        %5646 = vrot.lane.b32.xlu0 %v5575, 96
        %v5647 = vpop.permute.xlu0 %5646
        %5648 = vrot.lane.b32.xlu0 %v5574, 96
        %v5649 = vpop.permute.xlu0 %5648
        %v5687 = vrot.slane %v5117, 3
        %v5688 = vrot.slane %v5118, 3
        %v5689 = vsel %vm935, %v5687, %v5688
        %v5690 = vrot.slane %v5119, 3
        %v5691 = vsel %vm935, %v5688, %v5690
        %v5692 = vrot.slane %v5120, 3
        %v5693 = vsel %vm935, %v5690, %v5692
        %v5694 = vrot.slane %v5121, 3
        %v5695 = vsel %vm935, %v5692, %v5694
        %v5696 = vrot.slane %v5122, 3
        %v5697 = vsel %vm935, %v5694, %v5696
        %v5698 = vrot.slane %v5123, 3
        %v5699 = vsel %vm935, %v5696, %v5698
        %v5700 = vrot.slane %v5124, 3
        %v5701 = vsel %vm935, %v5698, %v5700
        %v5702 = vrot.slane %v5125, 3
        %v5703 = vsel %vm935, %v5700, %v5702
        %v5704 = vrot.slane %v5126, 3
        %v5705 = vsel %vm935, %v5702, %v5704
        %v5706 = vrot.slane %v5127, 3
        %v5707 = vsel %vm935, %v5704, %v5706
        %v5708 = vrot.slane %v5128, 3
        %v5709 = vsel %vm935, %v5706, %v5708
        %v5710 = vrot.slane %v5129, 3
        %v5711 = vsel %vm935, %v5708, %v5710
        %v5712 = vrot.slane %v5130, 3
        %v5713 = vsel %vm935, %v5710, %v5712
        %v5714 = vrot.slane %v5131, 3
        %v5715 = vsel %vm935, %v5712, %v5714
        %v5716 = vrot.slane %v5132, 3
        %v5717 = vsel %vm935, %v5714, %v5716
        %v5718 = vrot.slane %v5133, 3
        %v5719 = vsel %vm935, %v5716, %v5718
        %v5720 = vrot.slane %v5134, 3
        %v5721 = vsel %vm935, %v5718, %v5720
        %v5722 = vrot.slane %v5135, 3
        %v5723 = vsel %vm935, %v5720, %v5722
        %v5724 = vrot.slane %v5136, 3
        %v5725 = vsel %vm935, %v5722, %v5724
        %v5726 = vrot.slane %v5137, 3
        %v5727 = vsel %vm935, %v5724, %v5726
        %v5728 = vrot.slane %v5138, 3
        %v5729 = vsel %vm935, %v5726, %v5728
        %v5730 = vrot.slane %v5139, 3
        %v5731 = vsel %vm935, %v5728, %v5730
        %v5732 = vrot.slane %v5140, 3
        %v5733 = vsel %vm935, %v5730, %v5732
        %v5734 = vrot.slane %v5141, 3
        %v5735 = vsel %vm935, %v5732, %v5734
        %v5736 = vrot.slane %v5142, 3
        %v5737 = vsel %vm935, %v5734, %v5736
        %v5738 = vrot.slane %v5143, 3
        %v5739 = vsel %vm935, %v5736, %v5738
        %v5740 = vrot.slane %v5144, 3
        %v5741 = vsel %vm935, %v5738, %v5740
        %v5742 = vrot.slane %v5145, 3
        %v5743 = vsel %vm935, %v5740, %v5742
        %v5744 = vrot.slane %v5146, 3
        %v5745 = vsel %vm935, %v5742, %v5744
        %v5746 = vrot.slane %v5147, 3
        %v5747 = vsel %vm935, %v5744, %v5746
        %v5748 = vrot.slane %v5148, 3
        %v5749 = vsel %vm935, %v5746, %v5748
        %v5750 = vrot.slane %v5149, 3
        %v5751 = vsel %vm935, %v5748, %v5750
        %v5752 = vrot.slane %v5150, 3
        %v5753 = vsel %vm935, %v5750, %v5752
        %v5754 = vrot.slane %v5151, 3
        %v5755 = vsel %vm935, %v5752, %v5754
        %v5756 = vrot.slane %v5152, 3
        %v5757 = vsel %vm935, %v5754, %v5756
        %v5795 = vrot.slane %v5117, 4
        %v5796 = vrot.slane %v5118, 4
        %v5797 = vsel %vm1118, %v5795, %v5796
        %v5798 = vrot.slane %v5119, 4
        %v5799 = vsel %vm1118, %v5796, %v5798
        %v5800 = vrot.slane %v5120, 4
        %v5801 = vsel %vm1118, %v5798, %v5800
        %v5802 = vrot.slane %v5121, 4
        %v5803 = vsel %vm1118, %v5800, %v5802
        %v5804 = vrot.slane %v5122, 4
        %v5805 = vsel %vm1118, %v5802, %v5804
        %v5806 = vrot.slane %v5123, 4
        %v5807 = vsel %vm1118, %v5804, %v5806
        %v5808 = vrot.slane %v5124, 4
        %v5809 = vsel %vm1118, %v5806, %v5808
        %v5810 = vrot.slane %v5125, 4
        %v5811 = vsel %vm1118, %v5808, %v5810
        %v5812 = vrot.slane %v5126, 4
        %v5813 = vsel %vm1118, %v5810, %v5812
        %v5814 = vrot.slane %v5127, 4
        %v5815 = vsel %vm1118, %v5812, %v5814
        %v5816 = vrot.slane %v5128, 4
        %v5817 = vsel %vm1118, %v5814, %v5816
        %v5818 = vrot.slane %v5129, 4
        %v5819 = vsel %vm1118, %v5816, %v5818
        %v5820 = vrot.slane %v5130, 4
        %v5821 = vsel %vm1118, %v5818, %v5820
        %v5822 = vrot.slane %v5131, 4
        %v5823 = vsel %vm1118, %v5820, %v5822
        %v5824 = vrot.slane %v5132, 4
        %v5825 = vsel %vm1118, %v5822, %v5824
        %v5826 = vrot.slane %v5133, 4
        %v5827 = vsel %vm1118, %v5824, %v5826
        %v5828 = vrot.slane %v5134, 4
        %v5829 = vsel %vm1118, %v5826, %v5828
        %v5830 = vrot.slane %v5135, 4
        %v5831 = vsel %vm1118, %v5828, %v5830
        %v5832 = vrot.slane %v5136, 4
        %v5833 = vsel %vm1118, %v5830, %v5832
        %v5834 = vrot.slane %v5137, 4
        %v5835 = vsel %vm1118, %v5832, %v5834
        %v5836 = vrot.slane %v5138, 4
        %v5837 = vsel %vm1118, %v5834, %v5836
        %v5838 = vrot.slane %v5139, 4
        %v5839 = vsel %vm1118, %v5836, %v5838
        %v5840 = vrot.slane %v5140, 4
        %v5841 = vsel %vm1118, %v5838, %v5840
        %v5842 = vrot.slane %v5141, 4
        %v5843 = vsel %vm1118, %v5840, %v5842
        %v5844 = vrot.slane %v5142, 4
        %v5845 = vsel %vm1118, %v5842, %v5844
        %v5846 = vrot.slane %v5143, 4
        %v5847 = vsel %vm1118, %v5844, %v5846
        %v5848 = vrot.slane %v5144, 4
        %v5849 = vsel %vm1118, %v5846, %v5848
        %v5850 = vrot.slane %v5145, 4
        %v5851 = vsel %vm1118, %v5848, %v5850
        %v5852 = vrot.slane %v5146, 4
        %v5853 = vsel %vm1118, %v5850, %v5852
        %v5854 = vrot.slane %v5147, 4
        %v5855 = vsel %vm1118, %v5852, %v5854
        %v5856 = vrot.slane %v5148, 4
        %v5857 = vsel %vm1118, %v5854, %v5856
        %v5858 = vrot.slane %v5149, 4
        %v5859 = vsel %vm1118, %v5856, %v5858
        %v5860 = vrot.slane %v5150, 4
        %v5861 = vsel %vm1118, %v5858, %v5860
        %v5862 = vrot.slane %v5151, 4
        %v5863 = vsel %vm1118, %v5860, %v5862
        %v5864 = vrot.slane %v5152, 4
        %v5865 = vsel %vm1118, %v5862, %v5864
        %v5866 = vsel %vm1118, %v5864, %v1190
        %5867 = vrot.lane.b32.xlu0 %v5795, 32
        %v5868 = vpop.permute.xlu0 %5867
        %5869 = vrot.lane.b32.xlu0 %v5797, 32
        %v5870 = vpop.permute.xlu0 %5869
        %5871 = vrot.lane.b32.xlu0 %v5799, 32
        %v5872 = vpop.permute.xlu0 %5871
        %5873 = vrot.lane.b32.xlu0 %v5801, 32
        %v5874 = vpop.permute.xlu0 %5873
        %5875 = vrot.lane.b32.xlu0 %v5803, 32
        %v5876 = vpop.permute.xlu0 %5875
        %5877 = vrot.lane.b32.xlu0 %v5805, 32
        %v5878 = vpop.permute.xlu0 %5877
        %5879 = vrot.lane.b32.xlu0 %v5807, 32
        %v5880 = vpop.permute.xlu0 %5879
        %5881 = vrot.lane.b32.xlu0 %v5809, 32
        %v5882 = vpop.permute.xlu0 %5881
        %5883 = vrot.lane.b32.xlu0 %v5811, 32
        %v5884 = vpop.permute.xlu0 %5883
        %5885 = vrot.lane.b32.xlu0 %v5813, 32
        %v5886 = vpop.permute.xlu0 %5885
        %5887 = vrot.lane.b32.xlu0 %v5815, 32
        %v5888 = vpop.permute.xlu0 %5887
        %5889 = vrot.lane.b32.xlu0 %v5817, 32
        %v5890 = vpop.permute.xlu0 %5889
        %5891 = vrot.lane.b32.xlu0 %v5819, 32
        %v5892 = vpop.permute.xlu0 %5891
        %5893 = vrot.lane.b32.xlu0 %v5821, 32
        %v5894 = vpop.permute.xlu0 %5893
        %5895 = vrot.lane.b32.xlu0 %v5823, 32
        %v5896 = vpop.permute.xlu0 %5895
        %5897 = vrot.lane.b32.xlu0 %v5825, 32
        %v5898 = vpop.permute.xlu0 %5897
        %5899 = vrot.lane.b32.xlu0 %v5827, 32
        %v5900 = vpop.permute.xlu0 %5899
        %5901 = vrot.lane.b32.xlu0 %v5829, 32
        %v5902 = vpop.permute.xlu0 %5901
        %5903 = vrot.lane.b32.xlu0 %v5831, 32
        %v5904 = vpop.permute.xlu0 %5903
        %5905 = vrot.lane.b32.xlu0 %v5833, 32
        %v5906 = vpop.permute.xlu0 %5905
        %5907 = vrot.lane.b32.xlu0 %v5835, 32
        %v5908 = vpop.permute.xlu0 %5907
        %5909 = vrot.lane.b32.xlu0 %v5837, 32
        %v5910 = vpop.permute.xlu0 %5909
        %5911 = vrot.lane.b32.xlu0 %v5839, 32
        %v5912 = vpop.permute.xlu0 %5911
        %5913 = vrot.lane.b32.xlu0 %v5841, 32
        %v5914 = vpop.permute.xlu0 %5913
        %5915 = vrot.lane.b32.xlu0 %v5843, 32
        %v5916 = vpop.permute.xlu0 %5915
        %5917 = vrot.lane.b32.xlu0 %v5845, 32
        %v5918 = vpop.permute.xlu0 %5917
        %5919 = vrot.lane.b32.xlu0 %v5847, 32
        %v5920 = vpop.permute.xlu0 %5919
        %5921 = vrot.lane.b32.xlu0 %v5849, 32
        %v5922 = vpop.permute.xlu0 %5921
        %5923 = vrot.lane.b32.xlu0 %v5851, 32
        %v5924 = vpop.permute.xlu0 %5923
        %5925 = vrot.lane.b32.xlu0 %v5853, 32
        %v5926 = vpop.permute.xlu0 %5925
        %5927 = vrot.lane.b32.xlu0 %v5855, 32
        %v5928 = vpop.permute.xlu0 %5927
        %5929 = vrot.lane.b32.xlu0 %v5857, 32
        %v5930 = vpop.permute.xlu0 %5929
        %5931 = vrot.lane.b32.xlu0 %v5859, 32
        %v5932 = vpop.permute.xlu0 %5931
        %5933 = vrot.lane.b32.xlu0 %v5861, 32
        %v5934 = vpop.permute.xlu0 %5933
        %5935 = vrot.lane.b32.xlu0 %v5863, 32
        %v5936 = vpop.permute.xlu0 %5935
        %5937 = vrot.lane.b32.xlu0 %v5865, 32
        %v5938 = vpop.permute.xlu0 %5937
        %5939 = vrot.lane.b32.xlu0 %v5866, 32
        %v5940 = vpop.permute.xlu0 %5939
        %5978 = vrot.lane.b32.xlu0 %v5798, 64
        %v5979 = vpop.permute.xlu0 %5978
        %5980 = vrot.lane.b32.xlu0 %v5801, 64
        %v5981 = vpop.permute.xlu0 %5980
        %5982 = vrot.lane.b32.xlu0 %v5803, 64
        %v5983 = vpop.permute.xlu0 %5982
        %5984 = vrot.lane.b32.xlu0 %v5805, 64
        %v5985 = vpop.permute.xlu0 %5984
        %5986 = vrot.lane.b32.xlu0 %v5807, 64
        %v5987 = vpop.permute.xlu0 %5986
        %5988 = vrot.lane.b32.xlu0 %v5809, 64
        %v5989 = vpop.permute.xlu0 %5988
        %5990 = vrot.lane.b32.xlu0 %v5811, 64
        %v5991 = vpop.permute.xlu0 %5990
        %5992 = vrot.lane.b32.xlu0 %v5813, 64
        %v5993 = vpop.permute.xlu0 %5992
        %5994 = vrot.lane.b32.xlu0 %v5815, 64
        %v5995 = vpop.permute.xlu0 %5994
        %5996 = vrot.lane.b32.xlu0 %v5817, 64
        %v5997 = vpop.permute.xlu0 %5996
        %5998 = vrot.lane.b32.xlu0 %v5819, 64
        %v5999 = vpop.permute.xlu0 %5998
        %6000 = vrot.lane.b32.xlu0 %v5821, 64
        %v6001 = vpop.permute.xlu0 %6000
        %6002 = vrot.lane.b32.xlu0 %v5823, 64
        %v6003 = vpop.permute.xlu0 %6002
        %6004 = vrot.lane.b32.xlu0 %v5825, 64
        %v6005 = vpop.permute.xlu0 %6004
        %6006 = vrot.lane.b32.xlu0 %v5827, 64
        %v6007 = vpop.permute.xlu0 %6006
        %6008 = vrot.lane.b32.xlu0 %v5829, 64
        %v6009 = vpop.permute.xlu0 %6008
        %6010 = vrot.lane.b32.xlu0 %v5831, 64
        %v6011 = vpop.permute.xlu0 %6010
        %6012 = vrot.lane.b32.xlu0 %v5833, 64
        %v6013 = vpop.permute.xlu0 %6012
        %6014 = vrot.lane.b32.xlu0 %v5835, 64
        %v6015 = vpop.permute.xlu0 %6014
        %6016 = vrot.lane.b32.xlu0 %v5837, 64
        %v6017 = vpop.permute.xlu0 %6016
        %6018 = vrot.lane.b32.xlu0 %v5839, 64
        %v6019 = vpop.permute.xlu0 %6018
        %6020 = vrot.lane.b32.xlu0 %v5841, 64
        %v6021 = vpop.permute.xlu0 %6020
        %6022 = vrot.lane.b32.xlu0 %v5843, 64
        %v6023 = vpop.permute.xlu0 %6022
        %6024 = vrot.lane.b32.xlu0 %v5845, 64
        %v6025 = vpop.permute.xlu0 %6024
        %6026 = vrot.lane.b32.xlu0 %v5847, 64
        %v6027 = vpop.permute.xlu0 %6026
        %6028 = vrot.lane.b32.xlu0 %v5849, 64
        %v6029 = vpop.permute.xlu0 %6028
        %6030 = vrot.lane.b32.xlu0 %v5851, 64
        %v6031 = vpop.permute.xlu0 %6030
        %6032 = vrot.lane.b32.xlu0 %v5853, 64
        %v6033 = vpop.permute.xlu0 %6032
        %6034 = vrot.lane.b32.xlu0 %v5855, 64
        %v6035 = vpop.permute.xlu0 %6034
        %6036 = vrot.lane.b32.xlu0 %v5857, 64
        %v6037 = vpop.permute.xlu0 %6036
        %6038 = vrot.lane.b32.xlu0 %v5859, 64
        %v6039 = vpop.permute.xlu0 %6038
        %6040 = vrot.lane.b32.xlu0 %v5861, 64
        %v6041 = vpop.permute.xlu0 %6040
        %6042 = vrot.lane.b32.xlu0 %v5863, 64
        %v6043 = vpop.permute.xlu0 %6042
        %6044 = vrot.lane.b32.xlu0 %v5865, 64
        %v6045 = vpop.permute.xlu0 %6044
        %6046 = vrot.lane.b32.xlu0 %v5866, 64
        %v6047 = vpop.permute.xlu0 %6046
        %v6083 = vrot.slane %v5119, 5
        %v6084 = vrot.slane %v5120, 5
        %v6085 = vsel %vm1412, %v6083, %v6084
        %v6086 = vrot.slane %v5121, 5
        %v6087 = vsel %vm1412, %v6084, %v6086
        %v6088 = vrot.slane %v5122, 5
        %v6089 = vsel %vm1412, %v6086, %v6088
        %v6090 = vrot.slane %v5123, 5
        %v6091 = vsel %vm1412, %v6088, %v6090
        %v6092 = vrot.slane %v5124, 5
        %v6093 = vsel %vm1412, %v6090, %v6092
        %v6094 = vrot.slane %v5125, 5
        %v6095 = vsel %vm1412, %v6092, %v6094
        %v6096 = vrot.slane %v5126, 5
        %v6097 = vsel %vm1412, %v6094, %v6096
        %v6098 = vrot.slane %v5127, 5
        %v6099 = vsel %vm1412, %v6096, %v6098
        %v6100 = vrot.slane %v5128, 5
        %v6101 = vsel %vm1412, %v6098, %v6100
        %v6102 = vrot.slane %v5129, 5
        %v6103 = vsel %vm1412, %v6100, %v6102
        %v6104 = vrot.slane %v5130, 5
        %v6105 = vsel %vm1412, %v6102, %v6104
        %v6106 = vrot.slane %v5131, 5
        %v6107 = vsel %vm1412, %v6104, %v6106
        %v6108 = vrot.slane %v5132, 5
        %v6109 = vsel %vm1412, %v6106, %v6108
        %v6110 = vrot.slane %v5133, 5
        %v6111 = vsel %vm1412, %v6108, %v6110
        %v6112 = vrot.slane %v5134, 5
        %v6113 = vsel %vm1412, %v6110, %v6112
        %v6114 = vrot.slane %v5135, 5
        %v6115 = vsel %vm1412, %v6112, %v6114
        %v6116 = vrot.slane %v5136, 5
        %v6117 = vsel %vm1412, %v6114, %v6116
        %v6118 = vrot.slane %v5137, 5
        %v6119 = vsel %vm1412, %v6116, %v6118
        %v6120 = vrot.slane %v5138, 5
        %v6121 = vsel %vm1412, %v6118, %v6120
        %v6122 = vrot.slane %v5139, 5
        %v6123 = vsel %vm1412, %v6120, %v6122
        %v6124 = vrot.slane %v5140, 5
        %v6125 = vsel %vm1412, %v6122, %v6124
        %v6126 = vrot.slane %v5141, 5
        %v6127 = vsel %vm1412, %v6124, %v6126
        %v6128 = vrot.slane %v5142, 5
        %v6129 = vsel %vm1412, %v6126, %v6128
        %v6130 = vrot.slane %v5143, 5
        %v6131 = vsel %vm1412, %v6128, %v6130
        %v6132 = vrot.slane %v5144, 5
        %v6133 = vsel %vm1412, %v6130, %v6132
        %v6134 = vrot.slane %v5145, 5
        %v6135 = vsel %vm1412, %v6132, %v6134
        %v6136 = vrot.slane %v5146, 5
        %v6137 = vsel %vm1412, %v6134, %v6136
        %v6138 = vrot.slane %v5147, 5
        %v6139 = vsel %vm1412, %v6136, %v6138
        %v6140 = vrot.slane %v5148, 5
        %v6141 = vsel %vm1412, %v6138, %v6140
        %v6142 = vrot.slane %v5149, 5
        %v6143 = vsel %vm1412, %v6140, %v6142
        %v6144 = vrot.slane %v5150, 5
        %v6145 = vsel %vm1412, %v6142, %v6144
        %v6146 = vrot.slane %v5151, 5
        %v6147 = vsel %vm1412, %v6144, %v6146
        %v6148 = vrot.slane %v5152, 5
        %v6149 = vsel %vm1412, %v6146, %v6148
        %v6150 = vsel %vm1412, %v6148, %v1480
        %6151 = vrot.lane.b32.xlu0 %v6083, 96
        %v6152 = vpop.permute.xlu0 %6151
        %6153 = vrot.lane.b32.xlu0 %v6085, 96
        %v6154 = vpop.permute.xlu0 %6153
        %6155 = vrot.lane.b32.xlu0 %v6087, 96
        %v6156 = vpop.permute.xlu0 %6155
        %6157 = vrot.lane.b32.xlu0 %v6089, 96
        %v6158 = vpop.permute.xlu0 %6157
        %6159 = vrot.lane.b32.xlu0 %v6091, 96
        %v6160 = vpop.permute.xlu0 %6159
        %6161 = vrot.lane.b32.xlu0 %v6093, 96
        %v6162 = vpop.permute.xlu0 %6161
        %6163 = vrot.lane.b32.xlu0 %v6095, 96
        %v6164 = vpop.permute.xlu0 %6163
        %6165 = vrot.lane.b32.xlu0 %v6097, 96
        %v6166 = vpop.permute.xlu0 %6165
        %6167 = vrot.lane.b32.xlu0 %v6099, 96
        %v6168 = vpop.permute.xlu0 %6167
        %6169 = vrot.lane.b32.xlu0 %v6101, 96
        %v6170 = vpop.permute.xlu0 %6169
        %6171 = vrot.lane.b32.xlu0 %v6103, 96
        %v6172 = vpop.permute.xlu0 %6171
        %6173 = vrot.lane.b32.xlu0 %v6105, 96
        %v6174 = vpop.permute.xlu0 %6173
        %6175 = vrot.lane.b32.xlu0 %v6107, 96
        %v6176 = vpop.permute.xlu0 %6175
        %6177 = vrot.lane.b32.xlu0 %v6109, 96
        %v6178 = vpop.permute.xlu0 %6177
        %6179 = vrot.lane.b32.xlu0 %v6111, 96
        %v6180 = vpop.permute.xlu0 %6179
        %6181 = vrot.lane.b32.xlu0 %v6113, 96
        %v6182 = vpop.permute.xlu0 %6181
        %6183 = vrot.lane.b32.xlu0 %v6115, 96
        %v6184 = vpop.permute.xlu0 %6183
        %6185 = vrot.lane.b32.xlu0 %v6117, 96
        %v6186 = vpop.permute.xlu0 %6185
        %6187 = vrot.lane.b32.xlu0 %v6119, 96
        %v6188 = vpop.permute.xlu0 %6187
        %6189 = vrot.lane.b32.xlu0 %v6121, 96
        %v6190 = vpop.permute.xlu0 %6189
        %6191 = vrot.lane.b32.xlu0 %v6123, 96
        %v6192 = vpop.permute.xlu0 %6191
        %6193 = vrot.lane.b32.xlu0 %v6125, 96
        %v6194 = vpop.permute.xlu0 %6193
        %6195 = vrot.lane.b32.xlu0 %v6127, 96
        %v6196 = vpop.permute.xlu0 %6195
        %6197 = vrot.lane.b32.xlu0 %v6129, 96
        %v6198 = vpop.permute.xlu0 %6197
        %6199 = vrot.lane.b32.xlu0 %v6131, 96
        %v6200 = vpop.permute.xlu0 %6199
        %6201 = vrot.lane.b32.xlu0 %v6133, 96
        %v6202 = vpop.permute.xlu0 %6201
        %6203 = vrot.lane.b32.xlu0 %v6135, 96
        %v6204 = vpop.permute.xlu0 %6203
        %6205 = vrot.lane.b32.xlu0 %v6137, 96
        %v6206 = vpop.permute.xlu0 %6205
        %6207 = vrot.lane.b32.xlu0 %v6139, 96
        %v6208 = vpop.permute.xlu0 %6207
        %6209 = vrot.lane.b32.xlu0 %v6141, 96
        %v6210 = vpop.permute.xlu0 %6209
        %6211 = vrot.lane.b32.xlu0 %v6143, 96
        %v6212 = vpop.permute.xlu0 %6211
        %6213 = vrot.lane.b32.xlu0 %v6145, 96
        %v6214 = vpop.permute.xlu0 %6213
        %6215 = vrot.lane.b32.xlu0 %v6147, 96
        %v6216 = vpop.permute.xlu0 %6215
        %6217 = vrot.lane.b32.xlu0 %v6149, 96
        %v6218 = vpop.permute.xlu0 %6217
        %6219 = vrot.lane.b32.xlu0 %v6150, 96
        %v6220 = vpop.permute.xlu0 %6219
        %v6256 = vrot.slane %v5119, 6
        %v6257 = vrot.slane %v5120, 6
        %v6258 = vsel %vm1591, %v6256, %v6257
        %v6259 = vrot.slane %v5121, 6
        %v6260 = vsel %vm1591, %v6257, %v6259
        %v6261 = vrot.slane %v5122, 6
        %v6262 = vsel %vm1591, %v6259, %v6261
        %v6263 = vrot.slane %v5123, 6
        %v6264 = vsel %vm1591, %v6261, %v6263
        %v6265 = vrot.slane %v5124, 6
        %v6266 = vsel %vm1591, %v6263, %v6265
        %v6267 = vrot.slane %v5125, 6
        %v6268 = vsel %vm1591, %v6265, %v6267
        %v6269 = vrot.slane %v5126, 6
        %v6270 = vsel %vm1591, %v6267, %v6269
        %v6271 = vrot.slane %v5127, 6
        %v6272 = vsel %vm1591, %v6269, %v6271
        %v6273 = vrot.slane %v5128, 6
        %v6274 = vsel %vm1591, %v6271, %v6273
        %v6275 = vrot.slane %v5129, 6
        %v6276 = vsel %vm1591, %v6273, %v6275
        %v6277 = vrot.slane %v5130, 6
        %v6278 = vsel %vm1591, %v6275, %v6277
        %v6279 = vrot.slane %v5131, 6
        %v6280 = vsel %vm1591, %v6277, %v6279
        %v6281 = vrot.slane %v5132, 6
        %v6282 = vsel %vm1591, %v6279, %v6281
        %v6283 = vrot.slane %v5133, 6
        %v6284 = vsel %vm1591, %v6281, %v6283
        %v6285 = vrot.slane %v5134, 6
        %v6286 = vsel %vm1591, %v6283, %v6285
        %v6287 = vrot.slane %v5135, 6
        %v6288 = vsel %vm1591, %v6285, %v6287
        %v6289 = vrot.slane %v5136, 6
        %v6290 = vsel %vm1591, %v6287, %v6289
        %v6291 = vrot.slane %v5137, 6
        %v6292 = vsel %vm1591, %v6289, %v6291
        %v6293 = vrot.slane %v5138, 6
        %v6294 = vsel %vm1591, %v6291, %v6293
        %v6295 = vrot.slane %v5139, 6
        %v6296 = vsel %vm1591, %v6293, %v6295
        %v6297 = vrot.slane %v5140, 6
        %v6298 = vsel %vm1591, %v6295, %v6297
        %v6299 = vrot.slane %v5141, 6
        %v6300 = vsel %vm1591, %v6297, %v6299
        %v6301 = vrot.slane %v5142, 6
        %v6302 = vsel %vm1591, %v6299, %v6301
        %v6303 = vrot.slane %v5143, 6
        %v6304 = vsel %vm1591, %v6301, %v6303
        %v6305 = vrot.slane %v5144, 6
        %v6306 = vsel %vm1591, %v6303, %v6305
        %v6307 = vrot.slane %v5145, 6
        %v6308 = vsel %vm1591, %v6305, %v6307
        %v6309 = vrot.slane %v5146, 6
        %v6310 = vsel %vm1591, %v6307, %v6309
        %v6311 = vrot.slane %v5147, 6
        %v6312 = vsel %vm1591, %v6309, %v6311
        %v6313 = vrot.slane %v5148, 6
        %v6314 = vsel %vm1591, %v6311, %v6313
        %v6315 = vrot.slane %v5149, 6
        %v6316 = vsel %vm1591, %v6313, %v6315
        %v6317 = vrot.slane %v5150, 6
        %v6318 = vsel %vm1591, %v6315, %v6317
        %v6319 = vrot.slane %v5151, 6
        %v6320 = vsel %vm1591, %v6317, %v6319
        %v6321 = vrot.slane %v5152, 6
        %v6322 = vsel %vm1591, %v6319, %v6321
        %v6323 = vsel %vm1591, %v6321, %v1659
        %v6324 = vsel %vm1882, 0.0, %v5293
        %v6325 = vsel %vm1882, %v5117, %v5295
        %v6326 = vsel %vm1882, %v5118, %v5297
        %v6327 = vsel %vm1882, %v5119, %v5299
        %v6328 = vsel %vm1882, %v5120, %v5301
        %v6329 = vsel %vm1882, %v5121, %v5303
        %v6330 = vsel %vm1882, %v5122, %v5305
        %v6331 = vsel %vm1882, %v5123, %v5307
        %v6332 = vsel %vm1882, %v5124, %v5309
        %v6333 = vsel %vm1882, %v5125, %v5311
        %v6334 = vsel %vm1882, %v5126, %v5313
        %v6335 = vsel %vm1882, %v5127, %v5315
        %v6336 = vsel %vm1882, %v5128, %v5317
        %v6337 = vsel %vm1882, %v5129, %v5319
        %v6338 = vsel %vm1882, %v5130, %v5321
        %v6339 = vsel %vm1882, %v5131, %v5323
        %v6340 = vsel %vm1882, %v5132, %v5325
        %v6341 = vsel %vm1882, %v5133, %v5327
        %v6342 = vsel %vm1882, %v5134, %v5329
        %v6343 = vsel %vm1882, %v5135, %v5331
        %v6344 = vsel %vm1882, %v5136, %v5333
        %v6345 = vsel %vm1882, %v5137, %v5335
        %v6346 = vsel %vm1882, %v5138, %v5337
        %v6347 = vsel %vm1882, %v5139, %v5339
        %v6348 = vsel %vm1882, %v5140, %v5341
        %v6349 = vsel %vm1882, %v5141, %v5343
        %v6350 = vsel %vm1882, %v5142, %v5345
        %v6351 = vsel %vm1882, %v5143, %v5347
        %v6352 = vsel %vm1882, %v5144, %v5349
        %v6353 = vsel %vm1882, %v5145, %v5351
        %v6354 = vsel %vm1882, %v5146, %v5353
        %v6355 = vsel %vm1882, %v5147, %v5355
        %v6356 = vsel %vm1882, %v5148, %v5357
        %v6357 = vsel %vm1882, %v5149, %v5359
        %v6358 = vsel %vm1882, %v5150, %v5361
        %v6359 = vsel %vm2034, %v6324, %v5466
        %v6360 = vsel %vm2034, %v6325, %v5468
        %v6361 = vsel %vm2034, %v6326, %v5470
        %v6362 = vsel %vm2034, %v6327, %v5472
        %v6363 = vsel %vm2034, %v6328, %v5474
        %v6364 = vsel %vm2034, %v6329, %v5476
        %v6365 = vsel %vm2034, %v6330, %v5478
        %v6366 = vsel %vm2034, %v6331, %v5480
        %v6367 = vsel %vm2034, %v6332, %v5482
        %v6368 = vsel %vm2034, %v6333, %v5484
        %v6369 = vsel %vm2034, %v6334, %v5486
        %v6370 = vsel %vm2034, %v6335, %v5488
        %v6371 = vsel %vm2034, %v6336, %v5490
        %v6372 = vsel %vm2034, %v6337, %v5492
        %v6373 = vsel %vm2034, %v6338, %v5494
        %v6374 = vsel %vm2034, %v6339, %v5496
        %v6375 = vsel %vm2034, %v6340, %v5498
        %v6376 = vsel %vm2034, %v6341, %v5500
        %v6377 = vsel %vm2034, %v6342, %v5502
        %v6378 = vsel %vm2034, %v6343, %v5504
        %v6379 = vsel %vm2034, %v6344, %v5506
        %v6380 = vsel %vm2034, %v6345, %v5508
        %v6381 = vsel %vm2034, %v6346, %v5510
        %v6382 = vsel %vm2034, %v6347, %v5512
        %v6383 = vsel %vm2034, %v6348, %v5514
        %v6384 = vsel %vm2034, %v6349, %v5516
        %v6385 = vsel %vm2034, %v6350, %v5518
        %v6386 = vsel %vm2034, %v6351, %v5520
        %v6387 = vsel %vm2034, %v6352, %v5522
        %v6388 = vsel %vm2034, %v6353, %v5524
        %v6389 = vsel %vm2034, %v6354, %v5526
        %v6390 = vsel %vm2034, %v6355, %v5528
        %v6391 = vsel %vm2034, %v6356, %v5530
        %v6392 = vsel %vm2034, %v6357, %v5532
        %v6393 = vsel %vm2034, %v6358, %v5534
        %v6394 = vsel %vm4006, %v3970, %v5577
        %v6395 = vsel %vm4006, %v3970, %v5579
        %v6396 = vsel %vm4006, %v6359, %v5581
        %v6397 = vsel %vm4006, %v6360, %v5583
        %v6398 = vsel %vm4006, %v6361, %v5585
        %v6399 = vsel %vm4006, %v6362, %v5587
        %v6400 = vsel %vm4006, %v6363, %v5589
        %v6401 = vsel %vm4006, %v6364, %v5591
        %v6402 = vsel %vm4006, %v6365, %v5593
        %v6403 = vsel %vm4006, %v6366, %v5595
        %v6404 = vsel %vm4006, %v6367, %v5597
        %v6405 = vsel %vm4006, %v6368, %v5599
        %v6406 = vsel %vm4006, %v6369, %v5601
        %v6407 = vsel %vm4006, %v6370, %v5603
        %v6408 = vsel %vm4006, %v6371, %v5605
        %v6409 = vsel %vm4006, %v6372, %v5607
        %v6410 = vsel %vm4006, %v6373, %v5609
        %v6411 = vsel %vm4006, %v6374, %v5611
        %v6412 = vsel %vm4006, %v6375, %v5613
        %v6413 = vsel %vm4006, %v6376, %v5615
        %v6414 = vsel %vm4006, %v6377, %v5617
        %v6415 = vsel %vm4006, %v6378, %v5619
        %v6416 = vsel %vm4006, %v6379, %v5621
        %v6417 = vsel %vm4006, %v6380, %v5623
        %v6418 = vsel %vm4006, %v6381, %v5625
        %v6419 = vsel %vm4006, %v6382, %v5627
        %v6420 = vsel %vm4006, %v6383, %v5629
        %v6421 = vsel %vm4006, %v6384, %v5631
        %v6422 = vsel %vm4006, %v6385, %v5633
        %v6423 = vsel %vm4006, %v6386, %v5635
        %v6424 = vsel %vm4006, %v6387, %v5637
        %v6425 = vsel %vm4006, %v6388, %v5639
        %v6426 = vsel %vm4006, %v6389, %v5641
        %v6427 = vsel %vm4006, %v6390, %v5643
        %v6428 = vsel %vm4006, %v6391, %v5645
        %v6429 = vsel %vm4006, %v6392, %v5647
        %v6430 = vsel %vm4006, %v6393, %v5649
        %v6431 = vsel %vm1882, %v5687, %v5868
        %v6432 = vsel %vm1882, %v5689, %v5870
        %v6433 = vsel %vm1882, %v5691, %v5872
        %v6434 = vsel %vm1882, %v5693, %v5874
        %v6435 = vsel %vm1882, %v5695, %v5876
        %v6436 = vsel %vm1882, %v5697, %v5878
        %v6437 = vsel %vm1882, %v5699, %v5880
        %v6438 = vsel %vm1882, %v5701, %v5882
        %v6439 = vsel %vm1882, %v5703, %v5884
        %v6440 = vsel %vm1882, %v5705, %v5886
        %v6441 = vsel %vm1882, %v5707, %v5888
        %v6442 = vsel %vm1882, %v5709, %v5890
        %v6443 = vsel %vm1882, %v5711, %v5892
        %v6444 = vsel %vm1882, %v5713, %v5894
        %v6445 = vsel %vm1882, %v5715, %v5896
        %v6446 = vsel %vm1882, %v5717, %v5898
        %v6447 = vsel %vm1882, %v5719, %v5900
        %v6448 = vsel %vm1882, %v5721, %v5902
        %v6449 = vsel %vm1882, %v5723, %v5904
        %v6450 = vsel %vm1882, %v5725, %v5906
        %v6451 = vsel %vm1882, %v5727, %v5908
        %v6452 = vsel %vm1882, %v5729, %v5910
        %v6453 = vsel %vm1882, %v5731, %v5912
        %v6454 = vsel %vm1882, %v5733, %v5914
        %v6455 = vsel %vm1882, %v5735, %v5916
        %v6456 = vsel %vm1882, %v5737, %v5918
        %v6457 = vsel %vm1882, %v5739, %v5920
        %v6458 = vsel %vm1882, %v5741, %v5922
        %v6459 = vsel %vm1882, %v5743, %v5924
        %v6460 = vsel %vm1882, %v5745, %v5926
        %v6461 = vsel %vm1882, %v5747, %v5928
        %v6462 = vsel %vm1882, %v5749, %v5930
        %v6463 = vsel %vm1882, %v5751, %v5932
        %v6464 = vsel %vm1882, %v5753, %v5934
        %v6465 = vsel %vm1882, %v5755, %v5936
        %v6466 = vsel %vm1882, %v5757, %v5938
        %v6467 = vsel %vm1882, %v5756, %v5940
        %v6468 = vsel %vm2034, %v6431, %v5979
        %v6469 = vsel %vm2034, %v6432, %v5981
        %v6470 = vsel %vm2034, %v6433, %v5983
        %v6471 = vsel %vm2034, %v6434, %v5985
        %v6472 = vsel %vm2034, %v6435, %v5987
        %v6473 = vsel %vm2034, %v6436, %v5989
        %v6474 = vsel %vm2034, %v6437, %v5991
        %v6475 = vsel %vm2034, %v6438, %v5993
        %v6476 = vsel %vm2034, %v6439, %v5995
        %v6477 = vsel %vm2034, %v6440, %v5997
        %v6478 = vsel %vm2034, %v6441, %v5999
        %v6479 = vsel %vm2034, %v6442, %v6001
        %v6480 = vsel %vm2034, %v6443, %v6003
        %v6481 = vsel %vm2034, %v6444, %v6005
        %v6482 = vsel %vm2034, %v6445, %v6007
        %v6483 = vsel %vm2034, %v6446, %v6009
        %v6484 = vsel %vm2034, %v6447, %v6011
        %v6485 = vsel %vm2034, %v6448, %v6013
        %v6486 = vsel %vm2034, %v6449, %v6015
        %v6487 = vsel %vm2034, %v6450, %v6017
        %v6488 = vsel %vm2034, %v6451, %v6019
        %v6489 = vsel %vm2034, %v6452, %v6021
        %v6490 = vsel %vm2034, %v6453, %v6023
        %v6491 = vsel %vm2034, %v6454, %v6025
        %v6492 = vsel %vm2034, %v6455, %v6027
        %v6493 = vsel %vm2034, %v6456, %v6029
        %v6494 = vsel %vm2034, %v6457, %v6031
        %v6495 = vsel %vm2034, %v6458, %v6033
        %v6496 = vsel %vm2034, %v6459, %v6035
        %v6497 = vsel %vm2034, %v6460, %v6037
        %v6498 = vsel %vm2034, %v6461, %v6039
        %v6499 = vsel %vm2034, %v6462, %v6041
        %v6500 = vsel %vm2034, %v6463, %v6043
        %v6501 = vsel %vm2034, %v6464, %v6045
        %v6502 = vsel %vm2034, %v6465, %v6047
        %v6503 = vsel %vm2034, %v6466, %v3653
        %v6504 = vsel %vm2034, %v6467, %v3653
        %v6505 = vsel %vm4006, %v6468, %v6152
        %v6506 = vsel %vm4006, %v6469, %v6154
        %v6507 = vsel %vm4006, %v6470, %v6156
        %v6508 = vsel %vm4006, %v6471, %v6158
        %v6509 = vsel %vm4006, %v6472, %v6160
        %v6510 = vsel %vm4006, %v6473, %v6162
        %v6511 = vsel %vm4006, %v6474, %v6164
        %v6512 = vsel %vm4006, %v6475, %v6166
        %v6513 = vsel %vm4006, %v6476, %v6168
        %v6514 = vsel %vm4006, %v6477, %v6170
        %v6515 = vsel %vm4006, %v6478, %v6172
        %v6516 = vsel %vm4006, %v6479, %v6174
        %v6517 = vsel %vm4006, %v6480, %v6176
        %v6518 = vsel %vm4006, %v6481, %v6178
        %v6519 = vsel %vm4006, %v6482, %v6180
        %v6520 = vsel %vm4006, %v6483, %v6182
        %v6521 = vsel %vm4006, %v6484, %v6184
        %v6522 = vsel %vm4006, %v6485, %v6186
        %v6523 = vsel %vm4006, %v6486, %v6188
        %v6524 = vsel %vm4006, %v6487, %v6190
        %v6525 = vsel %vm4006, %v6488, %v6192
        %v6526 = vsel %vm4006, %v6489, %v6194
        %v6527 = vsel %vm4006, %v6490, %v6196
        %v6528 = vsel %vm4006, %v6491, %v6198
        %v6529 = vsel %vm4006, %v6492, %v6200
        %v6530 = vsel %vm4006, %v6493, %v6202
        %v6531 = vsel %vm4006, %v6494, %v6204
        %v6532 = vsel %vm4006, %v6495, %v6206
        %v6533 = vsel %vm4006, %v6496, %v6208
        %v6534 = vsel %vm4006, %v6497, %v6210
        %v6535 = vsel %vm4006, %v6498, %v6212
        %v6536 = vsel %vm4006, %v6499, %v6214
        %v6537 = vsel %vm4006, %v6500, %v6216
        %v6538 = vsel %vm4006, %v6501, %v6218
        %v6539 = vsel %vm4006, %v6502, %v6220
        %v6540 = vsel %vm4006, %v6503, %v3829
        %v6541 = vsel %vm4006, %v6504, %v3829
        %v6616 = vrot.slane %v6394, 5
        %v6617 = vrot.slane %v6395, 5
        %v6618 = vsel %vm1412, %v6616, %v6617
        %v6619 = vrot.slane %v6505, 5
        %v6620 = vrot.slane %v6506, 5
        %v6621 = vsel %vm1412, %v6619, %v6620
        %v6622 = vrot.slane %v6256, 5
        %v6623 = vrot.slane %v6258, 5
        %v6624 = vsel %vm1412, %v6622, %v6623
        %v6625 = vrot.slane %v6396, 5
        %v6626 = vsel %vm1412, %v6617, %v6625
        %v6627 = vrot.slane %v6507, 5
        %v6628 = vsel %vm1412, %v6620, %v6627
        %v6629 = vrot.slane %v6260, 5
        %v6630 = vsel %vm1412, %v6623, %v6629
        %v6631 = vrot.slane %v6397, 5
        %v6632 = vsel %vm1412, %v6625, %v6631
        %v6633 = vrot.slane %v6508, 5
        %v6634 = vsel %vm1412, %v6627, %v6633
        %v6635 = vrot.slane %v6262, 5
        %v6636 = vsel %vm1412, %v6629, %v6635
        %v6637 = vrot.slane %v6398, 5
        %v6638 = vsel %vm1412, %v6631, %v6637
        %v6639 = vrot.slane %v6509, 5
        %v6640 = vsel %vm1412, %v6633, %v6639
        %v6641 = vrot.slane %v6264, 5
        %v6642 = vsel %vm1412, %v6635, %v6641
        %v6643 = vrot.slane %v6399, 5
        %v6644 = vsel %vm1412, %v6637, %v6643
        %v6645 = vrot.slane %v6510, 5
        %v6646 = vsel %vm1412, %v6639, %v6645
        %v6647 = vrot.slane %v6266, 5
        %v6648 = vsel %vm1412, %v6641, %v6647
        %v6649 = vrot.slane %v6400, 5
        %v6650 = vsel %vm1412, %v6643, %v6649
        %v6651 = vrot.slane %v6511, 5
        %v6652 = vsel %vm1412, %v6645, %v6651
        %v6653 = vrot.slane %v6268, 5
        %v6654 = vsel %vm1412, %v6647, %v6653
        %v6655 = vrot.slane %v6401, 5
        %v6656 = vsel %vm1412, %v6649, %v6655
        %v6657 = vrot.slane %v6512, 5
        %v6658 = vsel %vm1412, %v6651, %v6657
        %v6659 = vrot.slane %v6270, 5
        %v6660 = vsel %vm1412, %v6653, %v6659
        %v6661 = vrot.slane %v6402, 5
        %v6662 = vsel %vm1412, %v6655, %v6661
        %v6663 = vrot.slane %v6513, 5
        %v6664 = vsel %vm1412, %v6657, %v6663
        %v6665 = vrot.slane %v6272, 5
        %v6666 = vsel %vm1412, %v6659, %v6665
        %v6667 = vrot.slane %v6403, 5
        %v6668 = vsel %vm1412, %v6661, %v6667
        %v6669 = vrot.slane %v6514, 5
        %v6670 = vsel %vm1412, %v6663, %v6669
        %v6671 = vrot.slane %v6274, 5
        %v6672 = vsel %vm1412, %v6665, %v6671
        %v6673 = vrot.slane %v6404, 5
        %v6674 = vsel %vm1412, %v6667, %v6673
        %v6675 = vrot.slane %v6515, 5
        %v6676 = vsel %vm1412, %v6669, %v6675
        %v6677 = vrot.slane %v6276, 5
        %v6678 = vsel %vm1412, %v6671, %v6677
        %v6679 = vrot.slane %v6405, 5
        %v6680 = vsel %vm1412, %v6673, %v6679
        %v6681 = vrot.slane %v6516, 5
        %v6682 = vsel %vm1412, %v6675, %v6681
        %v6683 = vrot.slane %v6278, 5
        %v6684 = vsel %vm1412, %v6677, %v6683
        %v6685 = vrot.slane %v6406, 5
        %v6686 = vsel %vm1412, %v6679, %v6685
        %v6687 = vrot.slane %v6517, 5
        %v6688 = vsel %vm1412, %v6681, %v6687
        %v6689 = vrot.slane %v6280, 5
        %v6690 = vsel %vm1412, %v6683, %v6689
        %v6691 = vrot.slane %v6407, 5
        %v6692 = vsel %vm1412, %v6685, %v6691
        %v6693 = vrot.slane %v6518, 5
        %v6694 = vsel %vm1412, %v6687, %v6693
        %v6695 = vrot.slane %v6282, 5
        %v6696 = vsel %vm1412, %v6689, %v6695
        %v6697 = vrot.slane %v6408, 5
        %v6698 = vsel %vm1412, %v6691, %v6697
        %v6699 = vrot.slane %v6519, 5
        %v6700 = vsel %vm1412, %v6693, %v6699
        %v6701 = vrot.slane %v6284, 5
        %v6702 = vsel %vm1412, %v6695, %v6701
        %v6703 = vrot.slane %v6409, 5
        %v6704 = vsel %vm1412, %v6697, %v6703
        %v6705 = vrot.slane %v6520, 5
        %v6706 = vsel %vm1412, %v6699, %v6705
        %v6707 = vrot.slane %v6286, 5
        %v6708 = vsel %vm1412, %v6701, %v6707
        %v6709 = vrot.slane %v6410, 5
        %v6710 = vsel %vm1412, %v6703, %v6709
        %v6711 = vrot.slane %v6521, 5
        %v6712 = vsel %vm1412, %v6705, %v6711
        %v6713 = vrot.slane %v6288, 5
        %v6714 = vsel %vm1412, %v6707, %v6713
        %v6715 = vrot.slane %v6411, 5
        %v6716 = vsel %vm1412, %v6709, %v6715
        %v6717 = vrot.slane %v6522, 5
        %v6718 = vsel %vm1412, %v6711, %v6717
        %v6719 = vrot.slane %v6290, 5
        %v6720 = vsel %vm1412, %v6713, %v6719
        %v6721 = vrot.slane %v6412, 5
        %v6722 = vsel %vm1412, %v6715, %v6721
        %v6723 = vrot.slane %v6523, 5
        %v6724 = vsel %vm1412, %v6717, %v6723
        %v6725 = vrot.slane %v6292, 5
        %v6726 = vsel %vm1412, %v6719, %v6725
        %v6727 = vrot.slane %v6413, 5
        %v6728 = vsel %vm1412, %v6721, %v6727
        %v6729 = vrot.slane %v6524, 5
        %v6730 = vsel %vm1412, %v6723, %v6729
        %v6731 = vrot.slane %v6294, 5
        %v6732 = vsel %vm1412, %v6725, %v6731
        %v6733 = vrot.slane %v6414, 5
        %v6734 = vsel %vm1412, %v6727, %v6733
        %v6735 = vrot.slane %v6525, 5
        %v6736 = vsel %vm1412, %v6729, %v6735
        %v6737 = vrot.slane %v6296, 5
        %v6738 = vsel %vm1412, %v6731, %v6737
        %v6739 = vrot.slane %v6415, 5
        %v6740 = vsel %vm1412, %v6733, %v6739
        %v6741 = vrot.slane %v6526, 5
        %v6742 = vsel %vm1412, %v6735, %v6741
        %v6743 = vrot.slane %v6298, 5
        %v6744 = vsel %vm1412, %v6737, %v6743
        %v6745 = vrot.slane %v6416, 5
        %v6746 = vsel %vm1412, %v6739, %v6745
        %v6747 = vrot.slane %v6527, 5
        %v6748 = vsel %vm1412, %v6741, %v6747
        %v6749 = vrot.slane %v6300, 5
        %v6750 = vsel %vm1412, %v6743, %v6749
        %v6751 = vrot.slane %v6417, 5
        %v6752 = vsel %vm1412, %v6745, %v6751
        %v6753 = vrot.slane %v6528, 5
        %v6754 = vsel %vm1412, %v6747, %v6753
        %v6755 = vrot.slane %v6302, 5
        %v6756 = vsel %vm1412, %v6749, %v6755
        %v6757 = vrot.slane %v6418, 5
        %v6758 = vsel %vm1412, %v6751, %v6757
        %v6759 = vrot.slane %v6529, 5
        %v6760 = vsel %vm1412, %v6753, %v6759
        %v6761 = vrot.slane %v6304, 5
        %v6762 = vsel %vm1412, %v6755, %v6761
        %v6763 = vrot.slane %v6419, 5
        %v6764 = vsel %vm1412, %v6757, %v6763
        %v6765 = vrot.slane %v6530, 5
        %v6766 = vsel %vm1412, %v6759, %v6765
        %v6767 = vrot.slane %v6306, 5
        %v6768 = vsel %vm1412, %v6761, %v6767
        %v6769 = vrot.slane %v6420, 5
        %v6770 = vsel %vm1412, %v6763, %v6769
        %v6771 = vrot.slane %v6531, 5
        %v6772 = vsel %vm1412, %v6765, %v6771
        %v6773 = vrot.slane %v6308, 5
        %v6774 = vsel %vm1412, %v6767, %v6773
        %v6775 = vrot.slane %v6421, 5
        %v6776 = vsel %vm1412, %v6769, %v6775
        %v6777 = vrot.slane %v6532, 5
        %v6778 = vsel %vm1412, %v6771, %v6777
        %v6779 = vrot.slane %v6310, 5
        %v6780 = vsel %vm1412, %v6773, %v6779
        %v6781 = vrot.slane %v6422, 5
        %v6782 = vsel %vm1412, %v6775, %v6781
        %v6783 = vrot.slane %v6533, 5
        %v6784 = vsel %vm1412, %v6777, %v6783
        %v6785 = vrot.slane %v6312, 5
        %v6786 = vsel %vm1412, %v6779, %v6785
        %v6787 = vrot.slane %v6423, 5
        %v6788 = vsel %vm1412, %v6781, %v6787
        %v6789 = vrot.slane %v6534, 5
        %v6790 = vsel %vm1412, %v6783, %v6789
        %v6791 = vrot.slane %v6314, 5
        %v6792 = vsel %vm1412, %v6785, %v6791
        %v6793 = vrot.slane %v6424, 5
        %v6794 = vsel %vm1412, %v6787, %v6793
        %v6795 = vrot.slane %v6535, 5
        %v6796 = vsel %vm1412, %v6789, %v6795
        %v6797 = vrot.slane %v6316, 5
        %v6798 = vsel %vm1412, %v6791, %v6797
        %v6799 = vrot.slane %v6425, 5
        %v6800 = vsel %vm1412, %v6793, %v6799
        %v6801 = vrot.slane %v6536, 5
        %v6802 = vsel %vm1412, %v6795, %v6801
        %v6803 = vrot.slane %v6318, 5
        %v6804 = vsel %vm1412, %v6797, %v6803
        %v6805 = vrot.slane %v6426, 5
        %v6806 = vsel %vm1412, %v6799, %v6805
        %v6807 = vrot.slane %v6537, 5
        %v6808 = vsel %vm1412, %v6801, %v6807
        %v6809 = vrot.slane %v6320, 5
        %v6810 = vsel %vm1412, %v6803, %v6809
        %v6811 = vrot.slane %v6427, 5
        %v6812 = vsel %vm1412, %v6805, %v6811
        %v6813 = vrot.slane %v6538, 5
        %v6814 = vsel %vm1412, %v6807, %v6813
        %v6815 = vrot.slane %v6322, 5
        %v6816 = vsel %vm1412, %v6809, %v6815
        %v6817 = vrot.slane %v6428, 5
        %v6818 = vsel %vm1412, %v6811, %v6817
        %v6819 = vrot.slane %v6539, 5
        %v6820 = vsel %vm1412, %v6813, %v6819
        %v6821 = vrot.slane %v6323, 5
        %v6822 = vsel %vm1412, %v6815, %v6821
        %v6823 = vrot.slane %v6429, 5
        %v6824 = vsel %vm1412, %v6817, %v6823
        %v6825 = vrot.slane %v6540, 5
        %v6826 = vsel %vm1412, %v6819, %v6825
        %v6827 = vsel %vm1412, %v6821, %v4440
        %v6828 = vrot.slane %v6430, 5
        %v6829 = vsel %vm1412, %v6823, %v6828
        %v6830 = vrot.slane %v6541, 5
        %v6831 = vsel %vm1412, %v6825, %v6830
        %v6904 = vsel %vm1882, %v6624, 0
        %v6906 = vsel %vm1882, %v6630, 0
        %v6908 = vsel %vm1882, %v6636, 0
        %v6910 = vsel %vm1882, %v6642, 0
        %v6912 = vsel %vm1882, %v6648, 0
        %v6914 = vsel %vm1882, %v6654, 0
        %v6916 = vsel %vm1882, %v6660, 0
        %v6918 = vsel %vm1882, %v6666, 0
        %v6920 = vsel %vm1882, %v6672, 0
        %v6922 = vsel %vm1882, %v6678, 0
        %v6924 = vsel %vm1882, %v6684, 0
        %v6926 = vsel %vm1882, %v6690, 0
        %v6928 = vsel %vm1882, %v6696, 0
        %v6930 = vsel %vm1882, %v6702, 0
        %v6932 = vsel %vm1882, %v6708, 0
        %v6934 = vsel %vm1882, %v6714, 0
        %v6936 = vsel %vm1882, %v6720, 0
        %v6938 = vsel %vm1882, %v6726, 0
        %v6940 = vsel %vm1882, %v6732, 0
        %v6942 = vsel %vm1882, %v6738, 0
        %v6944 = vsel %vm1882, %v6744, 0
        %v6946 = vsel %vm1882, %v6750, 0
        %v6948 = vsel %vm1882, %v6756, 0
        %v6950 = vsel %vm1882, %v6762, 0
        %v6952 = vsel %vm1882, %v6768, 0
        %v6954 = vsel %vm1882, %v6774, 0
        %v6956 = vsel %vm1882, %v6780, 0
        %v6958 = vsel %vm1882, %v6786, 0
        %v6960 = vsel %vm1882, %v6792, 0
        %v6962 = vsel %vm1882, %v6798, 0
        %v6964 = vsel %vm1882, %v6804, 0
        %v6966 = vsel %vm1882, %v6810, 0
        %v6968 = vsel %vm1882, %v6816, 0
        %v6970 = vsel %vm1882, %v6822, 0
        %v6972 = vsel %vm1882, %v6827, 0
        %6974 = vmatprep.subr.mxu0 0.0
        %6975 = vmatpush1.msra.mxu0 %v5154
        %6976 = vmatprep.subr.mxu0 0.0
        %6977 = vmatpush1.msra.mxu0 %v5155
        %6978 = vmatprep.subr.mxu0 0.0
        %6979 = vmatpush1.msra.mxu0 %v5156
        %6980 = vmatprep.subr.mxu0 0.0
        %6981 = vmatpush1.msra.mxu0 %v5157
        %6982 = vmatprep.subr.mxu0 0.0
        %6983 = vmatpush1.msra.mxu0 %v5158
        %6984 = vmatprep.subr.mxu0 0.0
        %6985 = vmatpush1.msra.mxu0 %v5159
        %6986 = vmatprep.subr.mxu0 0.0
        %6987 = vmatpush1.msra.mxu0 %v5160
        %6988 = vmatprep.subr.mxu0 0.0
        %6989 = vmatpush1.msra.mxu0 %v5161
        %6990 = vmatprep.subr.mxu0 0.0
        %6991 = vmatpush1.msra.mxu0 %v5162
        %6992 = vmatprep.subr.mxu0 0.0
        %6993 = vmatpush1.msra.mxu0 %v5163
        %6994 = vmatprep.subr.mxu0 0.0
        %6995 = vmatpush1.msra.mxu0 %v5164
        %6996 = vmatprep.subr.mxu0 0.0
        %6997 = vmatpush1.msra.mxu0 %v5165
        %6998 = vmatprep.subr.mxu0 0.0
        %6999 = vmatpush1.msra.mxu0 %v5166
        %7000 = vmatprep.subr.mxu0 0.0
        %7001 = vmatpush1.msra.mxu0 %v5167
        %7002 = vmatprep.subr.mxu0 0.0
        %7003 = vmatpush1.msra.mxu0 %v5168
        %7004 = vmatprep.subr.mxu0 0.0
        %7005 = vmatpush1.msra.mxu0 %v5169
        %7006 = vmatprep.subr.mxu0 0.0
        %7007 = vmatpush1.msra.mxu0 %v5170
        %7008 = vmatprep.subr.mxu0 0.0
        %7009 = vmatpush1.msra.mxu0 %v5171
        %7010 = vmatprep.subr.mxu0 0.0
        %7011 = vmatpush1.msra.mxu0 %v5172
        %7012 = vmatprep.subr.mxu0 0.0
        %7013 = vmatpush1.msra.mxu0 %v5173
        %7014 = vmatprep.subr.mxu0 0.0
        %7015 = vmatpush1.msra.mxu0 %v5174
        %7016 = vmatprep.subr.mxu0 0.0
        %7017 = vmatpush1.msra.mxu0 %v5175
        %7018 = vmatprep.subr.mxu0 0.0
        %7019 = vmatpush1.msra.mxu0 %v5176
        %7020 = vmatprep.subr.mxu0 0.0
        %7021 = vmatpush1.msra.mxu0 %v5177
        %7022 = vmatprep.subr.mxu0 0.0
        %7023 = vmatpush1.msra.mxu0 %v5178
        %7024 = vmatprep.subr.mxu0 0.0
        %7025 = vmatpush1.msra.mxu0 %v5179
        %7026 = vmatprep.subr.mxu0 0.0
        %7027 = vmatpush1.msra.mxu0 %v5180
        %7028 = vmatprep.subr.mxu0 0.0
        %7029 = vmatpush1.msra.mxu0 %v5181
        %7030 = vmatprep.subr.mxu0 0.0
        %7031 = vmatpush1.msra.mxu0 %v5182
        %7032 = vmatprep.subr.mxu0 0.0
        %7033 = vmatpush1.msra.mxu0 %v5183
        %7034 = vmatprep.subr.mxu0 0.0
        %7035 = vmatpush1.msra.mxu0 %v5184
        %7036 = vmatprep.subr.mxu0 0.0
        %7037 = vmatpush1.msra.mxu0 %v5185
        %7038 = vmatprep.mubr.f32.mxu0 %v6621
        %7039 = vmatmul.mubr.f32.gmra.mrb[0].mxu0 %v6618
        %v7040 = vpop.f32.mrb[0].mxu0
        %v7041 = vadd.f32 0.0, %v7040
        %v7042 = vpop.f32.mrb[0].mxu0
        %7043 = vmatprep.mubr.f32.mxu0 %v6628
        %7044 = vmatmul.mubr.f32.gmra.mrb[0].mxu0 %v6626
        %v7045 = vpop.f32.mrb[0].mxu0
        %v7046 = vadd.f32 0.0, %v7045
        %v7047 = vpop.f32.mrb[0].mxu0
        %7048 = vmatprep.mubr.f32.mxu0 %v6634
        %7049 = vmatmul.mubr.f32.gmra.mrb[0].mxu0 %v6632
        %v7050 = vpop.f32.mrb[0].mxu0
        %v7051 = vadd.f32 0.0, %v7050
        %v7052 = vpop.f32.mrb[0].mxu0
        %7053 = vmatprep.mubr.f32.mxu0 %v6640
        %7054 = vmatmul.mubr.f32.gmra.mrb[0].mxu0 %v6638
        %v7055 = vpop.f32.mrb[0].mxu0
        %v7056 = vadd.f32 0.0, %v7055
        %v7057 = vpop.f32.mrb[0].mxu0
        %7058 = vmatprep.mubr.f32.mxu0 %v6646
        %7059 = vmatmul.mubr.f32.gmra.mrb[0].mxu0 %v6644
        %v7060 = vpop.f32.mrb[0].mxu0
        %v7061 = vadd.f32 0.0, %v7060
        %v7062 = vpop.f32.mrb[0].mxu0
        %7063 = vmatprep.mubr.f32.mxu0 %v6652
        %7064 = vmatmul.mubr.f32.gmra.mrb[0].mxu0 %v6650
        %v7065 = vpop.f32.mrb[0].mxu0
        %v7066 = vadd.f32 0.0, %v7065
        %v7067 = vpop.f32.mrb[0].mxu0
        %7068 = vmatprep.mubr.f32.mxu0 %v6658
        %7069 = vmatmul.mubr.f32.gmra.mrb[0].mxu0 %v6656
        %v7070 = vpop.f32.mrb[0].mxu0
        %v7071 = vadd.f32 0.0, %v7070
        %v7072 = vpop.f32.mrb[0].mxu0
        %7073 = vmatprep.mubr.f32.mxu0 %v6664
        %7074 = vmatmul.mubr.f32.gmra.mrb[0].mxu0 %v6662
        %v7075 = vpop.f32.mrb[0].mxu0
        %v7076 = vadd.f32 0.0, %v7075
        %v7077 = vpop.f32.mrb[0].mxu0
        %7078 = vmatprep.mubr.f32.mxu0 %v6670
        %7079 = vmatmul.mubr.f32.gmra.mrb[0].mxu0 %v6668
        %v7080 = vpop.f32.mrb[0].mxu0
        %v7081 = vadd.f32 0.0, %v7080
        %v7082 = vpop.f32.mrb[0].mxu0
        %7083 = vmatprep.mubr.f32.mxu0 %v6676
        %7084 = vmatmul.mubr.f32.gmra.mrb[0].mxu0 %v6674
        %v7085 = vpop.f32.mrb[0].mxu0
        %v7086 = vadd.f32 0.0, %v7085
        %v7087 = vpop.f32.mrb[0].mxu0
        %7088 = vmatprep.mubr.f32.mxu0 %v6682
        %7089 = vmatmul.mubr.f32.gmra.mrb[0].mxu0 %v6680
        %v7090 = vpop.f32.mrb[0].mxu0
        %v7091 = vadd.f32 0.0, %v7090
        %v7092 = vpop.f32.mrb[0].mxu0
        %7093 = vmatprep.mubr.f32.mxu0 %v6688
        %7094 = vmatmul.mubr.f32.gmra.mrb[0].mxu0 %v6686
        %v7095 = vpop.f32.mrb[0].mxu0
        %v7096 = vadd.f32 0.0, %v7095
        %v7097 = vpop.f32.mrb[0].mxu0
        %7098 = vmatprep.mubr.f32.mxu0 %v6694
        %7099 = vmatmul.mubr.f32.gmra.mrb[0].mxu0 %v6692
        %v7100 = vpop.f32.mrb[0].mxu0
        %v7101 = vadd.f32 0.0, %v7100
        %v7102 = vpop.f32.mrb[0].mxu0
        %7103 = vmatprep.mubr.f32.mxu0 %v6700
        %7104 = vmatmul.mubr.f32.gmra.mrb[0].mxu0 %v6698
        %v7105 = vpop.f32.mrb[0].mxu0
        %v7106 = vadd.f32 0.0, %v7105
        %v7107 = vpop.f32.mrb[0].mxu0
        %7108 = vmatprep.mubr.f32.mxu0 %v6706
        %7109 = vmatmul.mubr.f32.gmra.mrb[0].mxu0 %v6704
        %v7110 = vpop.f32.mrb[0].mxu0
        %v7111 = vadd.f32 0.0, %v7110
        %v7112 = vpop.f32.mrb[0].mxu0
        %7113 = vmatprep.mubr.f32.mxu0 %v6712
        %7114 = vmatmul.mubr.f32.gmra.mrb[0].mxu0 %v6710
        %v7115 = vpop.f32.mrb[0].mxu0
        %v7116 = vadd.f32 0.0, %v7115
        %v7117 = vpop.f32.mrb[0].mxu0
        %7118 = vmatprep.mubr.f32.mxu0 %v6718
        %7119 = vmatmul.mubr.f32.gmra.mrb[0].mxu0 %v6716
        %v7120 = vpop.f32.mrb[0].mxu0
        %v7121 = vadd.f32 0.0, %v7120
        %v7122 = vpop.f32.mrb[0].mxu0
        %7123 = vmatprep.mubr.f32.mxu0 %v6724
        %7124 = vmatmul.mubr.f32.gmra.mrb[0].mxu0 %v6722
        %v7125 = vpop.f32.mrb[0].mxu0
        %v7126 = vadd.f32 0.0, %v7125
        %v7127 = vpop.f32.mrb[0].mxu0
        %7128 = vmatprep.mubr.f32.mxu0 %v6730
        %7129 = vmatmul.mubr.f32.gmra.mrb[0].mxu0 %v6728
        %v7130 = vpop.f32.mrb[0].mxu0
        %v7131 = vadd.f32 0.0, %v7130
        %v7132 = vpop.f32.mrb[0].mxu0
        %7133 = vmatprep.mubr.f32.mxu0 %v6736
        %7134 = vmatmul.mubr.f32.gmra.mrb[0].mxu0 %v6734
        %v7135 = vpop.f32.mrb[0].mxu0
        %v7136 = vadd.f32 0.0, %v7135
        %v7137 = vpop.f32.mrb[0].mxu0
        %7138 = vmatprep.mubr.f32.mxu0 %v6742
        %7139 = vmatmul.mubr.f32.gmra.mrb[0].mxu0 %v6740
        %v7140 = vpop.f32.mrb[0].mxu0
        %v7141 = vadd.f32 0.0, %v7140
        %v7142 = vpop.f32.mrb[0].mxu0
        %7143 = vmatprep.mubr.f32.mxu0 %v6748
        %7144 = vmatmul.mubr.f32.gmra.mrb[0].mxu0 %v6746
        %v7145 = vpop.f32.mrb[0].mxu0
        %v7146 = vadd.f32 0.0, %v7145
        %v7147 = vpop.f32.mrb[0].mxu0
        %7148 = vmatprep.mubr.f32.mxu0 %v6754
        %7149 = vmatmul.mubr.f32.gmra.mrb[0].mxu0 %v6752
        %v7150 = vpop.f32.mrb[0].mxu0
        %v7151 = vadd.f32 0.0, %v7150
        %v7152 = vpop.f32.mrb[0].mxu0
        %7153 = vmatprep.mubr.f32.mxu0 %v6760
        %7154 = vmatmul.mubr.f32.gmra.mrb[0].mxu0 %v6758
        %v7155 = vpop.f32.mrb[0].mxu0
        %v7156 = vadd.f32 0.0, %v7155
        %v7157 = vpop.f32.mrb[0].mxu0
        %7158 = vmatprep.mubr.f32.mxu0 %v6766
        %7159 = vmatmul.mubr.f32.gmra.mrb[0].mxu0 %v6764
        %v7160 = vpop.f32.mrb[0].mxu0
        %v7161 = vadd.f32 0.0, %v7160
        %v7162 = vpop.f32.mrb[0].mxu0
        %7163 = vmatprep.mubr.f32.mxu0 %v6772
        %7164 = vmatmul.mubr.f32.gmra.mrb[0].mxu0 %v6770
        %v7165 = vpop.f32.mrb[0].mxu0
        %v7166 = vadd.f32 0.0, %v7165
        %v7167 = vpop.f32.mrb[0].mxu0
        %7168 = vmatprep.mubr.f32.mxu0 %v6778
        %7169 = vmatmul.mubr.f32.gmra.mrb[0].mxu0 %v6776
        %v7170 = vpop.f32.mrb[0].mxu0
        %v7171 = vadd.f32 0.0, %v7170
        %v7172 = vpop.f32.mrb[0].mxu0
        %7173 = vmatprep.mubr.f32.mxu0 %v6784
        %7174 = vmatmul.mubr.f32.gmra.mrb[0].mxu0 %v6782
        %v7175 = vpop.f32.mrb[0].mxu0
        %v7176 = vadd.f32 0.0, %v7175
        %v7177 = vpop.f32.mrb[0].mxu0
        %7178 = vmatprep.mubr.f32.mxu0 %v6790
        %7179 = vmatmul.mubr.f32.gmra.mrb[0].mxu0 %v6788
        %v7180 = vpop.f32.mrb[0].mxu0
        %v7181 = vadd.f32 0.0, %v7180
        %v7182 = vpop.f32.mrb[0].mxu0
        %7183 = vmatprep.mubr.f32.mxu0 %v6796
        %7184 = vmatmul.mubr.f32.gmra.mrb[0].mxu0 %v6794
        %v7185 = vpop.f32.mrb[0].mxu0
        %v7186 = vadd.f32 0.0, %v7185
        %v7187 = vpop.f32.mrb[0].mxu0
        %7188 = vmatprep.mubr.f32.mxu0 %v6802
        %7189 = vmatmul.mubr.f32.gmra.mrb[0].mxu0 %v6800
        %v7190 = vpop.f32.mrb[0].mxu0
        %v7191 = vadd.f32 0.0, %v7190
        %v7192 = vpop.f32.mrb[0].mxu0
        %7193 = vmatprep.mubr.f32.mxu0 %v6808
        %7194 = vmatmul.mubr.f32.gmra.mrb[0].mxu0 %v6806
        %v7195 = vpop.f32.mrb[0].mxu0
        %v7196 = vadd.f32 0.0, %v7195
        %v7197 = vpop.f32.mrb[0].mxu0
        %7198 = vmatprep.mubr.f32.mxu0 %v6814
        %7199 = vmatmul.mubr.f32.gmra.mrb[0].mxu0 %v6812
        %v7200 = vpop.f32.mrb[0].mxu0
        %v7201 = vadd.f32 0.0, %v7200
        %v7202 = vpop.f32.mrb[0].mxu0
        %7203 = vmatprep.mubr.f32.mxu0 %v6820
        %7204 = vmatmul.mubr.f32.gmra.mrb[0].mxu0 %v6818
        %v7205 = vpop.f32.mrb[0].mxu0
        %v7206 = vadd.f32 0.0, %v7205
        %v7207 = vpop.f32.mrb[0].mxu0
        %7208 = vmatprep.mubr.f32.mxu0 %v6826
        %7209 = vmatmul.mubr.f32.gmra.mrb[0].mxu0 %v6824
        %v7210 = vpop.f32.mrb[0].mxu0
        %v7211 = vadd.f32 0.0, %v7210
        %v7212 = vpop.f32.mrb[0].mxu0
        %7213 = vmatprep.mubr.f32.mxu0 %v6831
        %7214 = vmatmul.mubr.f32.gmra.mrb[0].mxu0 %v6829
        %v7215 = vpop.f32.mrb[0].mxu0
        %v7216 = vadd.f32 0.0, %v7215
        %v7217 = vpop.f32.mrb[0].mxu0
        %7218 = vdwg.mxu0
        %7219 = vmatprep.subr.mxu0 0.0
        %7220 = vmatpush1.msra.mxu0 %v5186
        %7221 = vmatprep.subr.mxu0 0.0
        %7222 = vmatpush1.msra.mxu0 %v5187
        %7223 = vmatprep.subr.mxu0 0.0
        %7224 = vmatpush1.msra.mxu0 %v5188
        %7225 = vmatprep.subr.mxu0 0.0
        %7226 = vmatpush1.msra.mxu0 %v5189
        %7227 = vmatprep.subr.mxu0 0.0
        %7228 = vmatpush1.msra.mxu0 0.0
        %7229 = vmatprep.subr.mxu0 0.0
        %7230 = vmatpush1.msra.mxu0 0.0
        %7231 = vmatprep.subr.mxu0 0.0
        %7232 = vmatpush1.msra.mxu0 0.0
        %7233 = vmatprep.subr.mxu0 0.0
        %7234 = vmatpush1.msra.mxu0 0.0
        %7235 = vmatprep.subr.mxu0 0.0
        %7236 = vmatpush1.msra.mxu0 0.0
        %7237 = vmatprep.subr.mxu0 0.0
        %7238 = vmatpush1.msra.mxu0 0.0
        %7239 = vmatprep.subr.mxu0 0.0
        %7240 = vmatpush1.msra.mxu0 0.0
        %7241 = vmatprep.subr.mxu0 0.0
        %7242 = vmatpush1.msra.mxu0 0.0
        %7243 = vmatprep.subr.mxu0 0.0
        %7244 = vmatpush1.msra.mxu0 0.0
        %7245 = vmatprep.subr.mxu0 0.0
        %7246 = vmatpush1.msra.mxu0 0.0
        %7247 = vmatprep.subr.mxu0 0.0
        %7248 = vmatpush1.msra.mxu0 0.0
        %7249 = vmatprep.subr.mxu0 0.0
        %7250 = vmatpush1.msra.mxu0 0.0
        %7251 = vmatprep.subr.mxu0 0.0
        %7252 = vmatpush1.msra.mxu0 0.0
        %7253 = vmatprep.subr.mxu0 0.0
        %7254 = vmatpush1.msra.mxu0 0.0
        %7255 = vmatprep.subr.mxu0 0.0
        %7256 = vmatpush1.msra.mxu0 0.0
        %7257 = vmatprep.subr.mxu0 0.0
        %7258 = vmatpush1.msra.mxu0 0.0
        %7259 = vmatprep.subr.mxu0 0.0
        %7260 = vmatpush1.msra.mxu0 0.0
        %7261 = vmatprep.subr.mxu0 0.0
        %7262 = vmatpush1.msra.mxu0 0.0
        %7263 = vmatprep.subr.mxu0 0.0
        %7264 = vmatpush1.msra.mxu0 0.0
        %7265 = vmatprep.subr.mxu0 0.0
        %7266 = vmatpush1.msra.mxu0 0.0
        %7267 = vmatprep.subr.mxu0 0.0
        %7268 = vmatpush1.msra.mxu0 0.0
        %7269 = vmatprep.subr.mxu0 0.0
        %7270 = vmatpush1.msra.mxu0 0.0
        %7271 = vmatprep.subr.mxu0 0.0
        %7272 = vmatpush1.msra.mxu0 0.0
        %7273 = vmatprep.subr.mxu0 0.0
        %7274 = vmatpush1.msra.mxu0 0.0
        %7275 = vmatprep.subr.mxu0 0.0
        %7276 = vmatpush1.msra.mxu0 0.0
        %7277 = vmatprep.subr.mxu0 0.0
        %7278 = vmatpush1.msra.mxu0 0.0
        %7279 = vmatprep.subr.mxu0 0.0
        %7280 = vmatpush1.msra.mxu0 0.0
        %7281 = vmatprep.subr.mxu0 0.0
        %7282 = vmatpush1.msra.mxu0 0.0
        %7283 = vmatprep.mubr.f32.mxu0 0.0
        %7284 = vmatmul.mubr.f32.gmra.mrb[0].mxu0 %v6904
        %v7285 = vpop.f32.mrb[0].mxu0
        %v7286 = vadd.f32 %v7041, %v7285
        %v7287 = vpop.f32.mrb[0].mxu0
        %7288 = vmatprep.mubr.f32.mxu0 0.0
        %7289 = vmatmul.mubr.f32.gmra.mrb[0].mxu0 %v6906
        %v7290 = vpop.f32.mrb[0].mxu0
        %v7291 = vadd.f32 %v7046, %v7290
        %v7292 = vpop.f32.mrb[0].mxu0
        %7293 = vmatprep.mubr.f32.mxu0 0.0
        %7294 = vmatmul.mubr.f32.gmra.mrb[0].mxu0 %v6908
        %v7295 = vpop.f32.mrb[0].mxu0
        %v7296 = vadd.f32 %v7051, %v7295
        %v7297 = vpop.f32.mrb[0].mxu0
        %7298 = vmatprep.mubr.f32.mxu0 0.0
        %7299 = vmatmul.mubr.f32.gmra.mrb[0].mxu0 %v6910
        %v7300 = vpop.f32.mrb[0].mxu0
        %v7301 = vadd.f32 %v7056, %v7300
        %v7302 = vpop.f32.mrb[0].mxu0
        %7303 = vmatprep.mubr.f32.mxu0 0.0
        %7304 = vmatmul.mubr.f32.gmra.mrb[0].mxu0 %v6912
        %v7305 = vpop.f32.mrb[0].mxu0
        %v7306 = vadd.f32 %v7061, %v7305
        %v7307 = vpop.f32.mrb[0].mxu0
        %7308 = vmatprep.mubr.f32.mxu0 0.0
        %7309 = vmatmul.mubr.f32.gmra.mrb[0].mxu0 %v6914
        %v7310 = vpop.f32.mrb[0].mxu0
        %v7311 = vadd.f32 %v7066, %v7310
        %v7312 = vpop.f32.mrb[0].mxu0
        %7313 = vmatprep.mubr.f32.mxu0 0.0
        %7314 = vmatmul.mubr.f32.gmra.mrb[0].mxu0 %v6916
        %v7315 = vpop.f32.mrb[0].mxu0
        %v7316 = vadd.f32 %v7071, %v7315
        %v7317 = vpop.f32.mrb[0].mxu0
        %7318 = vmatprep.mubr.f32.mxu0 0.0
        %7319 = vmatmul.mubr.f32.gmra.mrb[0].mxu0 %v6918
        %v7320 = vpop.f32.mrb[0].mxu0
        %v7321 = vadd.f32 %v7076, %v7320
        %v7322 = vpop.f32.mrb[0].mxu0
        %7323 = vmatprep.mubr.f32.mxu0 0.0
        %7324 = vmatmul.mubr.f32.gmra.mrb[0].mxu0 %v6920
        %v7325 = vpop.f32.mrb[0].mxu0
        %v7326 = vadd.f32 %v7081, %v7325
        %v7327 = vpop.f32.mrb[0].mxu0
        %7328 = vmatprep.mubr.f32.mxu0 0.0
        %7329 = vmatmul.mubr.f32.gmra.mrb[0].mxu0 %v6922
        %v7330 = vpop.f32.mrb[0].mxu0
        %v7331 = vadd.f32 %v7086, %v7330
        %v7332 = vpop.f32.mrb[0].mxu0
        %7333 = vmatprep.mubr.f32.mxu0 0.0
        %7334 = vmatmul.mubr.f32.gmra.mrb[0].mxu0 %v6924
        %v7335 = vpop.f32.mrb[0].mxu0
        %v7336 = vadd.f32 %v7091, %v7335
        %v7337 = vpop.f32.mrb[0].mxu0
        %7338 = vmatprep.mubr.f32.mxu0 0.0
        %7339 = vmatmul.mubr.f32.gmra.mrb[0].mxu0 %v6926
        %v7340 = vpop.f32.mrb[0].mxu0
        %v7341 = vadd.f32 %v7096, %v7340
        %v7342 = vpop.f32.mrb[0].mxu0
        %7343 = vmatprep.mubr.f32.mxu0 0.0
        %7344 = vmatmul.mubr.f32.gmra.mrb[0].mxu0 %v6928
        %v7345 = vpop.f32.mrb[0].mxu0
        %v7346 = vadd.f32 %v7101, %v7345
        %v7347 = vpop.f32.mrb[0].mxu0
        %7348 = vmatprep.mubr.f32.mxu0 0.0
        %7349 = vmatmul.mubr.f32.gmra.mrb[0].mxu0 %v6930
        %v7350 = vpop.f32.mrb[0].mxu0
        %v7351 = vadd.f32 %v7106, %v7350
        %v7352 = vpop.f32.mrb[0].mxu0
        %7353 = vmatprep.mubr.f32.mxu0 0.0
        %7354 = vmatmul.mubr.f32.gmra.mrb[0].mxu0 %v6932
        %v7355 = vpop.f32.mrb[0].mxu0
        %v7356 = vadd.f32 %v7111, %v7355
        %v7357 = vpop.f32.mrb[0].mxu0
        %7358 = vmatprep.mubr.f32.mxu0 0.0
        %7359 = vmatmul.mubr.f32.gmra.mrb[0].mxu0 %v6934
        %v7360 = vpop.f32.mrb[0].mxu0
        %v7361 = vadd.f32 %v7116, %v7360
        %v7362 = vpop.f32.mrb[0].mxu0
        %7363 = vmatprep.mubr.f32.mxu0 0.0
        %7364 = vmatmul.mubr.f32.gmra.mrb[0].mxu0 %v6936
        %v7365 = vpop.f32.mrb[0].mxu0
        %v7366 = vadd.f32 %v7121, %v7365
        %v7367 = vpop.f32.mrb[0].mxu0
        %7368 = vmatprep.mubr.f32.mxu0 0.0
        %7369 = vmatmul.mubr.f32.gmra.mrb[0].mxu0 %v6938
        %v7370 = vpop.f32.mrb[0].mxu0
        %v7371 = vadd.f32 %v7126, %v7370
        %v7372 = vpop.f32.mrb[0].mxu0
        %7373 = vmatprep.mubr.f32.mxu0 0.0
        %7374 = vmatmul.mubr.f32.gmra.mrb[0].mxu0 %v6940
        %v7375 = vpop.f32.mrb[0].mxu0
        %v7376 = vadd.f32 %v7131, %v7375
        %v7377 = vpop.f32.mrb[0].mxu0
        %7378 = vmatprep.mubr.f32.mxu0 0.0
        %7379 = vmatmul.mubr.f32.gmra.mrb[0].mxu0 %v6942
        %v7380 = vpop.f32.mrb[0].mxu0
        %v7381 = vadd.f32 %v7136, %v7380
        %v7382 = vpop.f32.mrb[0].mxu0
        %7383 = vmatprep.mubr.f32.mxu0 0.0
        %7384 = vmatmul.mubr.f32.gmra.mrb[0].mxu0 %v6944
        %v7385 = vpop.f32.mrb[0].mxu0
        %v7386 = vadd.f32 %v7141, %v7385
        %v7387 = vpop.f32.mrb[0].mxu0
        %7388 = vmatprep.mubr.f32.mxu0 0.0
        %7389 = vmatmul.mubr.f32.gmra.mrb[0].mxu0 %v6946
        %v7390 = vpop.f32.mrb[0].mxu0
        %v7391 = vadd.f32 %v7146, %v7390
        %v7392 = vpop.f32.mrb[0].mxu0
        %7393 = vmatprep.mubr.f32.mxu0 0.0
        %7394 = vmatmul.mubr.f32.gmra.mrb[0].mxu0 %v6948
        %v7395 = vpop.f32.mrb[0].mxu0
        %v7396 = vadd.f32 %v7151, %v7395
        %v7397 = vpop.f32.mrb[0].mxu0
        %7398 = vmatprep.mubr.f32.mxu0 0.0
        %7399 = vmatmul.mubr.f32.gmra.mrb[0].mxu0 %v6950
        %v7400 = vpop.f32.mrb[0].mxu0
        %v7401 = vadd.f32 %v7156, %v7400
        %v7402 = vpop.f32.mrb[0].mxu0
        %7403 = vmatprep.mubr.f32.mxu0 0.0
        %7404 = vmatmul.mubr.f32.gmra.mrb[0].mxu0 %v6952
        %v7405 = vpop.f32.mrb[0].mxu0
        %v7406 = vadd.f32 %v7161, %v7405
        %v7407 = vpop.f32.mrb[0].mxu0
        %7408 = vmatprep.mubr.f32.mxu0 0.0
        %7409 = vmatmul.mubr.f32.gmra.mrb[0].mxu0 %v6954
        %v7410 = vpop.f32.mrb[0].mxu0
        %v7411 = vadd.f32 %v7166, %v7410
        %v7412 = vpop.f32.mrb[0].mxu0
        %7413 = vmatprep.mubr.f32.mxu0 0.0
        %7414 = vmatmul.mubr.f32.gmra.mrb[0].mxu0 %v6956
        %v7415 = vpop.f32.mrb[0].mxu0
        %v7416 = vadd.f32 %v7171, %v7415
        %v7417 = vpop.f32.mrb[0].mxu0
        %7418 = vmatprep.mubr.f32.mxu0 0.0
        %7419 = vmatmul.mubr.f32.gmra.mrb[0].mxu0 %v6958
        %v7420 = vpop.f32.mrb[0].mxu0
        %v7421 = vadd.f32 %v7176, %v7420
        %v7422 = vpop.f32.mrb[0].mxu0
        %7423 = vmatprep.mubr.f32.mxu0 0.0
        %7424 = vmatmul.mubr.f32.gmra.mrb[0].mxu0 %v6960
        %v7425 = vpop.f32.mrb[0].mxu0
        %v7426 = vadd.f32 %v7181, %v7425
        %v7427 = vpop.f32.mrb[0].mxu0
        %7428 = vmatprep.mubr.f32.mxu0 0.0
        %7429 = vmatmul.mubr.f32.gmra.mrb[0].mxu0 %v6962
        %v7430 = vpop.f32.mrb[0].mxu0
        %v7431 = vadd.f32 %v7186, %v7430
        %v7432 = vpop.f32.mrb[0].mxu0
        %7433 = vmatprep.mubr.f32.mxu0 0.0
        %7434 = vmatmul.mubr.f32.gmra.mrb[0].mxu0 %v6964
        %v7435 = vpop.f32.mrb[0].mxu0
        %v7436 = vadd.f32 %v7191, %v7435
        %v7437 = vpop.f32.mrb[0].mxu0
        %7438 = vmatprep.mubr.f32.mxu0 0.0
        %7439 = vmatmul.mubr.f32.gmra.mrb[0].mxu0 %v6966
        %v7440 = vpop.f32.mrb[0].mxu0
        %v7441 = vadd.f32 %v7196, %v7440
        %v7442 = vpop.f32.mrb[0].mxu0
        %7443 = vmatprep.mubr.f32.mxu0 0.0
        %7444 = vmatmul.mubr.f32.gmra.mrb[0].mxu0 %v6968
        %v7445 = vpop.f32.mrb[0].mxu0
        %v7446 = vadd.f32 %v7201, %v7445
        %v7447 = vpop.f32.mrb[0].mxu0
        %7448 = vmatprep.mubr.f32.mxu0 0.0
        %7449 = vmatmul.mubr.f32.gmra.mrb[0].mxu0 %v6970
        %v7450 = vpop.f32.mrb[0].mxu0
        %v7451 = vadd.f32 %v7206, %v7450
        %v7452 = vpop.f32.mrb[0].mxu0
        %7453 = vmatprep.mubr.f32.mxu0 0.0
        %7454 = vmatmul.mubr.f32.gmra.mrb[0].mxu0 %v6972
        %v7455 = vpop.f32.mrb[0].mxu0
        %v7456 = vadd.f32 %v7211, %v7455
        %v7457 = vpop.f32.mrb[0].mxu0
        %7458 = vmatprep.mubr.f32.mxu0 0.0
        %7459 = vmatmul.mubr.f32.gmra.mrb[0].mxu0 %v4589
        %v7460 = vpop.f32.mrb[0].mxu0
        %v7461 = vadd.f32 %v7216, %v7460
        %v7462 = vpop.f32.mrb[0].mxu0
        %7463 = vdwg.mxu0
        %v7464 = vmax.f32 %v7286, 0.0
        %v7465 = vmax.f32 %v7291, 0.0
        %v7466 = vmax.f32 %v7296, 0.0
        %v7467 = vmax.f32 %v7301, 0.0
        %v7468 = vmax.f32 %v7306, 0.0
        %v7469 = vmax.f32 %v7311, 0.0
        %v7470 = vmax.f32 %v7316, 0.0
        %v7471 = vmax.f32 %v7321, 0.0
        %v7472 = vmax.f32 %v7326, 0.0
        %v7473 = vmax.f32 %v7331, 0.0
        %v7474 = vmax.f32 %v7336, 0.0
        %v7475 = vmax.f32 %v7341, 0.0
        %v7476 = vmax.f32 %v7346, 0.0
        %v7477 = vmax.f32 %v7351, 0.0
        %v7478 = vmax.f32 %v7356, 0.0
        %v7479 = vmax.f32 %v7361, 0.0
        %v7480 = vmax.f32 %v7366, 0.0
        %v7481 = vmax.f32 %v7371, 0.0
        %v7482 = vmax.f32 %v7376, 0.0
        %v7483 = vmax.f32 %v7381, 0.0
        %v7484 = vmax.f32 %v7386, 0.0
        %v7485 = vmax.f32 %v7391, 0.0
        %v7486 = vmax.f32 %v7396, 0.0
        %v7487 = vmax.f32 %v7401, 0.0
        %v7488 = vmax.f32 %v7406, 0.0
        %v7489 = vmax.f32 %v7411, 0.0
        %v7490 = vmax.f32 %v7416, 0.0
        %v7491 = vmax.f32 %v7421, 0.0
        %v7492 = vmax.f32 %v7426, 0.0
        %v7493 = vmax.f32 %v7431, 0.0
        %v7494 = vmax.f32 %v7436, 0.0
        %v7495 = vmax.f32 %v7441, 0.0
        %v7496 = vmax.f32 %v7446, 0.0
        %v7497 = vmax.f32 %v7451, 0.0
        %v7498 = vmax.f32 %v7456, 0.0
        %v7499 = vmax.f32 %v7461, 0.0
        %v7500 = vmul.f32 %v7464, %v2539
        %v7501 = vmul.f32 %v7465, %v2544
        %v7502 = vmul.f32 %v7466, %v2549
        %v7503 = vmul.f32 %v7467, %v2554
        %v7504 = vmul.f32 %v7468, %v2559
        %v7505 = vmul.f32 %v7469, %v2564
        %v7506 = vmul.f32 %v7470, %v2569
        %v7507 = vmul.f32 %v7471, %v2574
        %v7508 = vmul.f32 %v7472, %v2579
        %v7509 = vmul.f32 %v7473, %v2584
        %v7510 = vmul.f32 %v7474, %v2589
        %v7511 = vmul.f32 %v7475, %v2594
        %v7512 = vmul.f32 %v7476, %v2599
        %v7513 = vmul.f32 %v7477, %v2604
        %v7514 = vmul.f32 %v7478, %v2609
        %v7515 = vmul.f32 %v7479, %v2614
        %v7516 = vmul.f32 %v7480, %v2619
        %v7517 = vmul.f32 %v7481, %v2624
        %v7518 = vmul.f32 %v7482, %v2629
        %v7519 = vmul.f32 %v7483, %v2634
        %v7520 = vmul.f32 %v7484, %v2639
        %v7521 = vmul.f32 %v7485, %v2644
        %v7522 = vmul.f32 %v7486, %v2649
        %v7523 = vmul.f32 %v7487, %v2654
        %v7524 = vmul.f32 %v7488, %v2659
        %v7525 = vmul.f32 %v7489, %v2664
        %v7526 = vmul.f32 %v7490, %v2669
        %v7527 = vmul.f32 %v7491, %v2674
        %v7528 = vmul.f32 %v7492, %v2679
        %v7529 = vmul.f32 %v7493, %v2684
        %v7530 = vmul.f32 %v7494, %v2689
        %v7531 = vmul.f32 %v7495, %v2694
        %v7532 = vmul.f32 %v7496, %v2699
        %v7533 = vmul.f32 %v7497, %v2704
        %v7534 = vmul.f32 %v7498, %v2709
        %v7535 = vmul.f32 %v7499, %v2714
        %v7536 = vld [vmem:[#allocation10] sm:$0xff]
        %v7537 = vld [vmem:[#allocation10 + $0x8] sm:$0xff]
        %v7538 = vld [vmem:[#allocation10 + $0x10] sm:$0xff]
        %v7539 = vld [vmem:[#allocation10 + $0x18] sm:$0xff]
        %v7540 = vld [vmem:[#allocation10 + $0x20] sm:$0xff]
        %v7541 = vld [vmem:[#allocation10 + $0x28] sm:$0xff]
        %v7542 = vld [vmem:[#allocation10 + $0x30] sm:$0xff]
        %v7543 = vld [vmem:[#allocation10 + $0x38] sm:$0xff]
        %v7544 = vld [vmem:[#allocation10 + $0x40] sm:$0xff]
        %v7545 = vld [vmem:[#allocation10 + $0x48] sm:$0xff]
        %v7546 = vld [vmem:[#allocation10 + $0x50] sm:$0xff]
        %v7547 = vld [vmem:[#allocation10 + $0x58] sm:$0xff]
        %v7548 = vld [vmem:[#allocation10 + $0x60] sm:$0xff]
        %v7549 = vld [vmem:[#allocation10 + $0x68] sm:$0xff]
        %v7550 = vld [vmem:[#allocation10 + $0x70] sm:$0xff]
        %v7551 = vld [vmem:[#allocation10 + $0x78] sm:$0xff]
        %v7552 = vld [vmem:[#allocation10 + $0x80] sm:$0xff]
        %v7553 = vld [vmem:[#allocation10 + $0x88] sm:$0xff]
        %v7554 = vld [vmem:[#allocation10 + $0x90] sm:$0xff]
        %v7555 = vld [vmem:[#allocation10 + $0x98] sm:$0xff]
        %v7556 = vld [vmem:[#allocation10 + $0xa0] sm:$0xff]
        %v7557 = vld [vmem:[#allocation10 + $0xa8] sm:$0xff]
        %v7558 = vld [vmem:[#allocation10 + $0xb0] sm:$0xff]
        %v7559 = vld [vmem:[#allocation10 + $0xb8] sm:$0xff]
        %v7560 = vld [vmem:[#allocation10 + $0xc0] sm:$0xff]
        %v7561 = vld [vmem:[#allocation10 + $0xc8] sm:$0xff]
        %v7562 = vld [vmem:[#allocation10 + $0xd0] sm:$0xff]
        %v7563 = vld [vmem:[#allocation10 + $0xd8] sm:$0xff]
        %v7564 = vld [vmem:[#allocation10 + $0xe0] sm:$0xff]
        %v7565 = vld [vmem:[#allocation10 + $0xe8] sm:$0xff]
        %v7566 = vld [vmem:[#allocation10 + $0xf0] sm:$0xff]
        %v7567 = vld [vmem:[#allocation10 + $0xf8] sm:$0xff]
        %v7568 = vld [vmem:[#allocation10 + $0x100] sm:$0xff]
        %v7569 = vld [vmem:[#allocation10 + $0x108] sm:$0xff]
        %v7570 = vld [vmem:[#allocation10 + $0x110] sm:$0xff]
        %v7571 = vld [vmem:[#allocation10 + $0x118] sm:$0xff]
        %v7606 = vrot.slane %v7500, 1
        %v7607 = vsel %vm460, %v461, %v7606
        %v7608 = vrot.slane %v7501, 1
        %v7609 = vsel %vm460, %v7606, %v7608
        %v7610 = vrot.slane %v7502, 1
        %v7611 = vsel %vm460, %v7608, %v7610
        %v7612 = vrot.slane %v7503, 1
        %v7613 = vsel %vm460, %v7610, %v7612
        %v7614 = vrot.slane %v7504, 1
        %v7615 = vsel %vm460, %v7612, %v7614
        %v7616 = vrot.slane %v7505, 1
        %v7617 = vsel %vm460, %v7614, %v7616
        %v7618 = vrot.slane %v7506, 1
        %v7619 = vsel %vm460, %v7616, %v7618
        %v7620 = vrot.slane %v7507, 1
        %v7621 = vsel %vm460, %v7618, %v7620
        %v7622 = vrot.slane %v7508, 1
        %v7623 = vsel %vm460, %v7620, %v7622
        %v7624 = vrot.slane %v7509, 1
        %v7625 = vsel %vm460, %v7622, %v7624
        %v7626 = vrot.slane %v7510, 1
        %v7627 = vsel %vm460, %v7624, %v7626
        %v7628 = vrot.slane %v7511, 1
        %v7629 = vsel %vm460, %v7626, %v7628
        %v7630 = vrot.slane %v7512, 1
        %v7631 = vsel %vm460, %v7628, %v7630
        %v7632 = vrot.slane %v7513, 1
        %v7633 = vsel %vm460, %v7630, %v7632
        %v7634 = vrot.slane %v7514, 1
        %v7635 = vsel %vm460, %v7632, %v7634
        %v7636 = vrot.slane %v7515, 1
        %v7637 = vsel %vm460, %v7634, %v7636
        %v7638 = vrot.slane %v7516, 1
        %v7639 = vsel %vm460, %v7636, %v7638
        %v7640 = vrot.slane %v7517, 1
        %v7641 = vsel %vm460, %v7638, %v7640
        %v7642 = vrot.slane %v7518, 1
        %v7643 = vsel %vm460, %v7640, %v7642
        %v7644 = vrot.slane %v7519, 1
        %v7645 = vsel %vm460, %v7642, %v7644
        %v7646 = vrot.slane %v7520, 1
        %v7647 = vsel %vm460, %v7644, %v7646
        %v7648 = vrot.slane %v7521, 1
        %v7649 = vsel %vm460, %v7646, %v7648
        %v7650 = vrot.slane %v7522, 1
        %v7651 = vsel %vm460, %v7648, %v7650
        %v7652 = vrot.slane %v7523, 1
        %v7653 = vsel %vm460, %v7650, %v7652
        %v7654 = vrot.slane %v7524, 1
        %v7655 = vsel %vm460, %v7652, %v7654
        %v7656 = vrot.slane %v7525, 1
        %v7657 = vsel %vm460, %v7654, %v7656
        %v7658 = vrot.slane %v7526, 1
        %v7659 = vsel %vm460, %v7656, %v7658
        %v7660 = vrot.slane %v7527, 1
        %v7661 = vsel %vm460, %v7658, %v7660
        %v7662 = vrot.slane %v7528, 1
        %v7663 = vsel %vm460, %v7660, %v7662
        %v7664 = vrot.slane %v7529, 1
        %v7665 = vsel %vm460, %v7662, %v7664
        %v7666 = vrot.slane %v7530, 1
        %v7667 = vsel %vm460, %v7664, %v7666
        %v7668 = vrot.slane %v7531, 1
        %v7669 = vsel %vm460, %v7666, %v7668
        %v7670 = vrot.slane %v7532, 1
        %v7671 = vsel %vm460, %v7668, %v7670
        %v7672 = vrot.slane %v7533, 1
        %v7673 = vsel %vm460, %v7670, %v7672
        %7674 = vrot.lane.b32.xlu0 %v7607, 32
        %v7675 = vpop.permute.xlu0 %7674
        %7676 = vrot.lane.b32.xlu0 %v7609, 32
        %v7677 = vpop.permute.xlu0 %7676
        %7678 = vrot.lane.b32.xlu0 %v7611, 32
        %v7679 = vpop.permute.xlu0 %7678
        %7680 = vrot.lane.b32.xlu0 %v7613, 32
        %v7681 = vpop.permute.xlu0 %7680
        %7682 = vrot.lane.b32.xlu0 %v7615, 32
        %v7683 = vpop.permute.xlu0 %7682
        %7684 = vrot.lane.b32.xlu0 %v7617, 32
        %v7685 = vpop.permute.xlu0 %7684
        %7686 = vrot.lane.b32.xlu0 %v7619, 32
        %v7687 = vpop.permute.xlu0 %7686
        %7688 = vrot.lane.b32.xlu0 %v7621, 32
        %v7689 = vpop.permute.xlu0 %7688
        %7690 = vrot.lane.b32.xlu0 %v7623, 32
        %v7691 = vpop.permute.xlu0 %7690
        %7692 = vrot.lane.b32.xlu0 %v7625, 32
        %v7693 = vpop.permute.xlu0 %7692
        %7694 = vrot.lane.b32.xlu0 %v7627, 32
        %v7695 = vpop.permute.xlu0 %7694
        %7696 = vrot.lane.b32.xlu0 %v7629, 32
        %v7697 = vpop.permute.xlu0 %7696
        %7698 = vrot.lane.b32.xlu0 %v7631, 32
        %v7699 = vpop.permute.xlu0 %7698
        %7700 = vrot.lane.b32.xlu0 %v7633, 32
        %v7701 = vpop.permute.xlu0 %7700
        %7702 = vrot.lane.b32.xlu0 %v7635, 32
        %v7703 = vpop.permute.xlu0 %7702
        %7704 = vrot.lane.b32.xlu0 %v7637, 32
        %v7705 = vpop.permute.xlu0 %7704
        %7706 = vrot.lane.b32.xlu0 %v7639, 32
        %v7707 = vpop.permute.xlu0 %7706
        %7708 = vrot.lane.b32.xlu0 %v7641, 32
        %v7709 = vpop.permute.xlu0 %7708
        %7710 = vrot.lane.b32.xlu0 %v7643, 32
        %v7711 = vpop.permute.xlu0 %7710
        %7712 = vrot.lane.b32.xlu0 %v7645, 32
        %v7713 = vpop.permute.xlu0 %7712
        %7714 = vrot.lane.b32.xlu0 %v7647, 32
        %v7715 = vpop.permute.xlu0 %7714
        %7716 = vrot.lane.b32.xlu0 %v7649, 32
        %v7717 = vpop.permute.xlu0 %7716
        %7718 = vrot.lane.b32.xlu0 %v7651, 32
        %v7719 = vpop.permute.xlu0 %7718
        %7720 = vrot.lane.b32.xlu0 %v7653, 32
        %v7721 = vpop.permute.xlu0 %7720
        %7722 = vrot.lane.b32.xlu0 %v7655, 32
        %v7723 = vpop.permute.xlu0 %7722
        %7724 = vrot.lane.b32.xlu0 %v7657, 32
        %v7725 = vpop.permute.xlu0 %7724
        %7726 = vrot.lane.b32.xlu0 %v7659, 32
        %v7727 = vpop.permute.xlu0 %7726
        %7728 = vrot.lane.b32.xlu0 %v7661, 32
        %v7729 = vpop.permute.xlu0 %7728
        %7730 = vrot.lane.b32.xlu0 %v7663, 32
        %v7731 = vpop.permute.xlu0 %7730
        %7732 = vrot.lane.b32.xlu0 %v7665, 32
        %v7733 = vpop.permute.xlu0 %7732
        %7734 = vrot.lane.b32.xlu0 %v7667, 32
        %v7735 = vpop.permute.xlu0 %7734
        %7736 = vrot.lane.b32.xlu0 %v7669, 32
        %v7737 = vpop.permute.xlu0 %7736
        %7738 = vrot.lane.b32.xlu0 %v7671, 32
        %v7739 = vpop.permute.xlu0 %7738
        %7740 = vrot.lane.b32.xlu0 %v7673, 32
        %v7741 = vpop.permute.xlu0 %7740
        %7742 = vrot.lane.b32.xlu0 %v7672, 32
        %v7743 = vpop.permute.xlu0 %7742
        %v7779 = vrot.slane %v7500, 2
        %v7780 = vsel %vm639, %v640, %v7779
        %v7781 = vrot.slane %v7501, 2
        %v7782 = vsel %vm639, %v7779, %v7781
        %v7783 = vrot.slane %v7502, 2
        %v7784 = vsel %vm639, %v7781, %v7783
        %v7785 = vrot.slane %v7503, 2
        %v7786 = vsel %vm639, %v7783, %v7785
        %v7787 = vrot.slane %v7504, 2
        %v7788 = vsel %vm639, %v7785, %v7787
        %v7789 = vrot.slane %v7505, 2
        %v7790 = vsel %vm639, %v7787, %v7789
        %v7791 = vrot.slane %v7506, 2
        %v7792 = vsel %vm639, %v7789, %v7791
        %v7793 = vrot.slane %v7507, 2
        %v7794 = vsel %vm639, %v7791, %v7793
        %v7795 = vrot.slane %v7508, 2
        %v7796 = vsel %vm639, %v7793, %v7795
        %v7797 = vrot.slane %v7509, 2
        %v7798 = vsel %vm639, %v7795, %v7797
        %v7799 = vrot.slane %v7510, 2
        %v7800 = vsel %vm639, %v7797, %v7799
        %v7801 = vrot.slane %v7511, 2
        %v7802 = vsel %vm639, %v7799, %v7801
        %v7803 = vrot.slane %v7512, 2
        %v7804 = vsel %vm639, %v7801, %v7803
        %v7805 = vrot.slane %v7513, 2
        %v7806 = vsel %vm639, %v7803, %v7805
        %v7807 = vrot.slane %v7514, 2
        %v7808 = vsel %vm639, %v7805, %v7807
        %v7809 = vrot.slane %v7515, 2
        %v7810 = vsel %vm639, %v7807, %v7809
        %v7811 = vrot.slane %v7516, 2
        %v7812 = vsel %vm639, %v7809, %v7811
        %v7813 = vrot.slane %v7517, 2
        %v7814 = vsel %vm639, %v7811, %v7813
        %v7815 = vrot.slane %v7518, 2
        %v7816 = vsel %vm639, %v7813, %v7815
        %v7817 = vrot.slane %v7519, 2
        %v7818 = vsel %vm639, %v7815, %v7817
        %v7819 = vrot.slane %v7520, 2
        %v7820 = vsel %vm639, %v7817, %v7819
        %v7821 = vrot.slane %v7521, 2
        %v7822 = vsel %vm639, %v7819, %v7821
        %v7823 = vrot.slane %v7522, 2
        %v7824 = vsel %vm639, %v7821, %v7823
        %v7825 = vrot.slane %v7523, 2
        %v7826 = vsel %vm639, %v7823, %v7825
        %v7827 = vrot.slane %v7524, 2
        %v7828 = vsel %vm639, %v7825, %v7827
        %v7829 = vrot.slane %v7525, 2
        %v7830 = vsel %vm639, %v7827, %v7829
        %v7831 = vrot.slane %v7526, 2
        %v7832 = vsel %vm639, %v7829, %v7831
        %v7833 = vrot.slane %v7527, 2
        %v7834 = vsel %vm639, %v7831, %v7833
        %v7835 = vrot.slane %v7528, 2
        %v7836 = vsel %vm639, %v7833, %v7835
        %v7837 = vrot.slane %v7529, 2
        %v7838 = vsel %vm639, %v7835, %v7837
        %v7839 = vrot.slane %v7530, 2
        %v7840 = vsel %vm639, %v7837, %v7839
        %v7841 = vrot.slane %v7531, 2
        %v7842 = vsel %vm639, %v7839, %v7841
        %v7843 = vrot.slane %v7532, 2
        %v7844 = vsel %vm639, %v7841, %v7843
        %v7845 = vrot.slane %v7533, 2
        %v7846 = vsel %vm639, %v7843, %v7845
        %7847 = vrot.lane.b32.xlu0 %v7780, 64
        %v7848 = vpop.permute.xlu0 %7847
        %7849 = vrot.lane.b32.xlu0 %v7782, 64
        %v7850 = vpop.permute.xlu0 %7849
        %7851 = vrot.lane.b32.xlu0 %v7784, 64
        %v7852 = vpop.permute.xlu0 %7851
        %7853 = vrot.lane.b32.xlu0 %v7786, 64
        %v7854 = vpop.permute.xlu0 %7853
        %7855 = vrot.lane.b32.xlu0 %v7788, 64
        %v7856 = vpop.permute.xlu0 %7855
        %7857 = vrot.lane.b32.xlu0 %v7790, 64
        %v7858 = vpop.permute.xlu0 %7857
        %7859 = vrot.lane.b32.xlu0 %v7792, 64
        %v7860 = vpop.permute.xlu0 %7859
        %7861 = vrot.lane.b32.xlu0 %v7794, 64
        %v7862 = vpop.permute.xlu0 %7861
        %7863 = vrot.lane.b32.xlu0 %v7796, 64
        %v7864 = vpop.permute.xlu0 %7863
        %7865 = vrot.lane.b32.xlu0 %v7798, 64
        %v7866 = vpop.permute.xlu0 %7865
        %7867 = vrot.lane.b32.xlu0 %v7800, 64
        %v7868 = vpop.permute.xlu0 %7867
        %7869 = vrot.lane.b32.xlu0 %v7802, 64
        %v7870 = vpop.permute.xlu0 %7869
        %7871 = vrot.lane.b32.xlu0 %v7804, 64
        %v7872 = vpop.permute.xlu0 %7871
        %7873 = vrot.lane.b32.xlu0 %v7806, 64
        %v7874 = vpop.permute.xlu0 %7873
        %7875 = vrot.lane.b32.xlu0 %v7808, 64
        %v7876 = vpop.permute.xlu0 %7875
        %7877 = vrot.lane.b32.xlu0 %v7810, 64
        %v7878 = vpop.permute.xlu0 %7877
        %7879 = vrot.lane.b32.xlu0 %v7812, 64
        %v7880 = vpop.permute.xlu0 %7879
        %7881 = vrot.lane.b32.xlu0 %v7814, 64
        %v7882 = vpop.permute.xlu0 %7881
        %7883 = vrot.lane.b32.xlu0 %v7816, 64
        %v7884 = vpop.permute.xlu0 %7883
        %7885 = vrot.lane.b32.xlu0 %v7818, 64
        %v7886 = vpop.permute.xlu0 %7885
        %7887 = vrot.lane.b32.xlu0 %v7820, 64
        %v7888 = vpop.permute.xlu0 %7887
        %7889 = vrot.lane.b32.xlu0 %v7822, 64
        %v7890 = vpop.permute.xlu0 %7889
        %7891 = vrot.lane.b32.xlu0 %v7824, 64
        %v7892 = vpop.permute.xlu0 %7891
        %7893 = vrot.lane.b32.xlu0 %v7826, 64
        %v7894 = vpop.permute.xlu0 %7893
        %7895 = vrot.lane.b32.xlu0 %v7828, 64
        %v7896 = vpop.permute.xlu0 %7895
        %7897 = vrot.lane.b32.xlu0 %v7830, 64
        %v7898 = vpop.permute.xlu0 %7897
        %7899 = vrot.lane.b32.xlu0 %v7832, 64
        %v7900 = vpop.permute.xlu0 %7899
        %7901 = vrot.lane.b32.xlu0 %v7834, 64
        %v7902 = vpop.permute.xlu0 %7901
        %7903 = vrot.lane.b32.xlu0 %v7836, 64
        %v7904 = vpop.permute.xlu0 %7903
        %7905 = vrot.lane.b32.xlu0 %v7838, 64
        %v7906 = vpop.permute.xlu0 %7905
        %7907 = vrot.lane.b32.xlu0 %v7840, 64
        %v7908 = vpop.permute.xlu0 %7907
        %7909 = vrot.lane.b32.xlu0 %v7842, 64
        %v7910 = vpop.permute.xlu0 %7909
        %7911 = vrot.lane.b32.xlu0 %v7844, 64
        %v7912 = vpop.permute.xlu0 %7911
        %7913 = vrot.lane.b32.xlu0 %v7846, 64
        %v7914 = vpop.permute.xlu0 %7913
        %7915 = vrot.lane.b32.xlu0 %v7845, 64
        %v7916 = vpop.permute.xlu0 %7915
        %v7954 = vrot.slane %v7534, 2
        %v7955 = vsel %vm639, %v7845, %v7954
        %v7956 = vrot.slane %v7535, 2
        %v7957 = vsel %vm639, %v7954, %v7956
        %7958 = vrot.lane.b32.xlu0 %v7780, 96
        %v7959 = vpop.permute.xlu0 %7958
        %7960 = vrot.lane.b32.xlu0 %v7782, 96
        %v7961 = vpop.permute.xlu0 %7960
        %7962 = vrot.lane.b32.xlu0 %v7784, 96
        %v7963 = vpop.permute.xlu0 %7962
        %7964 = vrot.lane.b32.xlu0 %v7786, 96
        %v7965 = vpop.permute.xlu0 %7964
        %7966 = vrot.lane.b32.xlu0 %v7788, 96
        %v7967 = vpop.permute.xlu0 %7966
        %7968 = vrot.lane.b32.xlu0 %v7790, 96
        %v7969 = vpop.permute.xlu0 %7968
        %7970 = vrot.lane.b32.xlu0 %v7792, 96
        %v7971 = vpop.permute.xlu0 %7970
        %7972 = vrot.lane.b32.xlu0 %v7794, 96
        %v7973 = vpop.permute.xlu0 %7972
        %7974 = vrot.lane.b32.xlu0 %v7796, 96
        %v7975 = vpop.permute.xlu0 %7974
        %7976 = vrot.lane.b32.xlu0 %v7798, 96
        %v7977 = vpop.permute.xlu0 %7976
        %7978 = vrot.lane.b32.xlu0 %v7800, 96
        %v7979 = vpop.permute.xlu0 %7978
        %7980 = vrot.lane.b32.xlu0 %v7802, 96
        %v7981 = vpop.permute.xlu0 %7980
        %7982 = vrot.lane.b32.xlu0 %v7804, 96
        %v7983 = vpop.permute.xlu0 %7982
        %7984 = vrot.lane.b32.xlu0 %v7806, 96
        %v7985 = vpop.permute.xlu0 %7984
        %7986 = vrot.lane.b32.xlu0 %v7808, 96
        %v7987 = vpop.permute.xlu0 %7986
        %7988 = vrot.lane.b32.xlu0 %v7810, 96
        %v7989 = vpop.permute.xlu0 %7988
        %7990 = vrot.lane.b32.xlu0 %v7812, 96
        %v7991 = vpop.permute.xlu0 %7990
        %7992 = vrot.lane.b32.xlu0 %v7814, 96
        %v7993 = vpop.permute.xlu0 %7992
        %7994 = vrot.lane.b32.xlu0 %v7816, 96
        %v7995 = vpop.permute.xlu0 %7994
        %7996 = vrot.lane.b32.xlu0 %v7818, 96
        %v7997 = vpop.permute.xlu0 %7996
        %7998 = vrot.lane.b32.xlu0 %v7820, 96
        %v7999 = vpop.permute.xlu0 %7998
        %8000 = vrot.lane.b32.xlu0 %v7822, 96
        %v8001 = vpop.permute.xlu0 %8000
        %8002 = vrot.lane.b32.xlu0 %v7824, 96
        %v8003 = vpop.permute.xlu0 %8002
        %8004 = vrot.lane.b32.xlu0 %v7826, 96
        %v8005 = vpop.permute.xlu0 %8004
        %8006 = vrot.lane.b32.xlu0 %v7828, 96
        %v8007 = vpop.permute.xlu0 %8006
        %8008 = vrot.lane.b32.xlu0 %v7830, 96
        %v8009 = vpop.permute.xlu0 %8008
        %8010 = vrot.lane.b32.xlu0 %v7832, 96
        %v8011 = vpop.permute.xlu0 %8010
        %8012 = vrot.lane.b32.xlu0 %v7834, 96
        %v8013 = vpop.permute.xlu0 %8012
        %8014 = vrot.lane.b32.xlu0 %v7836, 96
        %v8015 = vpop.permute.xlu0 %8014
        %8016 = vrot.lane.b32.xlu0 %v7838, 96
        %v8017 = vpop.permute.xlu0 %8016
        %8018 = vrot.lane.b32.xlu0 %v7840, 96
        %v8019 = vpop.permute.xlu0 %8018
        %8020 = vrot.lane.b32.xlu0 %v7842, 96
        %v8021 = vpop.permute.xlu0 %8020
        %8022 = vrot.lane.b32.xlu0 %v7844, 96
        %v8023 = vpop.permute.xlu0 %8022
        %8024 = vrot.lane.b32.xlu0 %v7846, 96
        %v8025 = vpop.permute.xlu0 %8024
        %8026 = vrot.lane.b32.xlu0 %v7955, 96
        %v8027 = vpop.permute.xlu0 %8026
        %8028 = vrot.lane.b32.xlu0 %v7957, 96
        %v8029 = vpop.permute.xlu0 %8028
        %8030 = vrot.lane.b32.xlu0 %v7956, 96
        %v8031 = vpop.permute.xlu0 %8030
        %v8069 = vrot.slane %v7500, 3
        %v8070 = vrot.slane %v7501, 3
        %v8071 = vsel %vm935, %v8069, %v8070
        %v8072 = vrot.slane %v7502, 3
        %v8073 = vsel %vm935, %v8070, %v8072
        %v8074 = vrot.slane %v7503, 3
        %v8075 = vsel %vm935, %v8072, %v8074
        %v8076 = vrot.slane %v7504, 3
        %v8077 = vsel %vm935, %v8074, %v8076
        %v8078 = vrot.slane %v7505, 3
        %v8079 = vsel %vm935, %v8076, %v8078
        %v8080 = vrot.slane %v7506, 3
        %v8081 = vsel %vm935, %v8078, %v8080
        %v8082 = vrot.slane %v7507, 3
        %v8083 = vsel %vm935, %v8080, %v8082
        %v8084 = vrot.slane %v7508, 3
        %v8085 = vsel %vm935, %v8082, %v8084
        %v8086 = vrot.slane %v7509, 3
        %v8087 = vsel %vm935, %v8084, %v8086
        %v8088 = vrot.slane %v7510, 3
        %v8089 = vsel %vm935, %v8086, %v8088
        %v8090 = vrot.slane %v7511, 3
        %v8091 = vsel %vm935, %v8088, %v8090
        %v8092 = vrot.slane %v7512, 3
        %v8093 = vsel %vm935, %v8090, %v8092
        %v8094 = vrot.slane %v7513, 3
        %v8095 = vsel %vm935, %v8092, %v8094
        %v8096 = vrot.slane %v7514, 3
        %v8097 = vsel %vm935, %v8094, %v8096
        %v8098 = vrot.slane %v7515, 3
        %v8099 = vsel %vm935, %v8096, %v8098
        %v8100 = vrot.slane %v7516, 3
        %v8101 = vsel %vm935, %v8098, %v8100
        %v8102 = vrot.slane %v7517, 3
        %v8103 = vsel %vm935, %v8100, %v8102
        %v8104 = vrot.slane %v7518, 3
        %v8105 = vsel %vm935, %v8102, %v8104
        %v8106 = vrot.slane %v7519, 3
        %v8107 = vsel %vm935, %v8104, %v8106
        %v8108 = vrot.slane %v7520, 3
        %v8109 = vsel %vm935, %v8106, %v8108
        %v8110 = vrot.slane %v7521, 3
        %v8111 = vsel %vm935, %v8108, %v8110
        %v8112 = vrot.slane %v7522, 3
        %v8113 = vsel %vm935, %v8110, %v8112
        %v8114 = vrot.slane %v7523, 3
        %v8115 = vsel %vm935, %v8112, %v8114
        %v8116 = vrot.slane %v7524, 3
        %v8117 = vsel %vm935, %v8114, %v8116
        %v8118 = vrot.slane %v7525, 3
        %v8119 = vsel %vm935, %v8116, %v8118
        %v8120 = vrot.slane %v7526, 3
        %v8121 = vsel %vm935, %v8118, %v8120
        %v8122 = vrot.slane %v7527, 3
        %v8123 = vsel %vm935, %v8120, %v8122
        %v8124 = vrot.slane %v7528, 3
        %v8125 = vsel %vm935, %v8122, %v8124
        %v8126 = vrot.slane %v7529, 3
        %v8127 = vsel %vm935, %v8124, %v8126
        %v8128 = vrot.slane %v7530, 3
        %v8129 = vsel %vm935, %v8126, %v8128
        %v8130 = vrot.slane %v7531, 3
        %v8131 = vsel %vm935, %v8128, %v8130
        %v8132 = vrot.slane %v7532, 3
        %v8133 = vsel %vm935, %v8130, %v8132
        %v8134 = vrot.slane %v7533, 3
        %v8135 = vsel %vm935, %v8132, %v8134
        %v8136 = vrot.slane %v7534, 3
        %v8137 = vsel %vm935, %v8134, %v8136
        %v8138 = vrot.slane %v7535, 3
        %v8139 = vsel %vm935, %v8136, %v8138
        %v8177 = vrot.slane %v7500, 4
        %v8178 = vrot.slane %v7501, 4
        %v8179 = vsel %vm1118, %v8177, %v8178
        %v8180 = vrot.slane %v7502, 4
        %v8181 = vsel %vm1118, %v8178, %v8180
        %v8182 = vrot.slane %v7503, 4
        %v8183 = vsel %vm1118, %v8180, %v8182
        %v8184 = vrot.slane %v7504, 4
        %v8185 = vsel %vm1118, %v8182, %v8184
        %v8186 = vrot.slane %v7505, 4
        %v8187 = vsel %vm1118, %v8184, %v8186
        %v8188 = vrot.slane %v7506, 4
        %v8189 = vsel %vm1118, %v8186, %v8188
        %v8190 = vrot.slane %v7507, 4
        %v8191 = vsel %vm1118, %v8188, %v8190
        %v8192 = vrot.slane %v7508, 4
        %v8193 = vsel %vm1118, %v8190, %v8192
        %v8194 = vrot.slane %v7509, 4
        %v8195 = vsel %vm1118, %v8192, %v8194
        %v8196 = vrot.slane %v7510, 4
        %v8197 = vsel %vm1118, %v8194, %v8196
        %v8198 = vrot.slane %v7511, 4
        %v8199 = vsel %vm1118, %v8196, %v8198
        %v8200 = vrot.slane %v7512, 4
        %v8201 = vsel %vm1118, %v8198, %v8200
        %v8202 = vrot.slane %v7513, 4
        %v8203 = vsel %vm1118, %v8200, %v8202
        %v8204 = vrot.slane %v7514, 4
        %v8205 = vsel %vm1118, %v8202, %v8204
        %v8206 = vrot.slane %v7515, 4
        %v8207 = vsel %vm1118, %v8204, %v8206
        %v8208 = vrot.slane %v7516, 4
        %v8209 = vsel %vm1118, %v8206, %v8208
        %v8210 = vrot.slane %v7517, 4
        %v8211 = vsel %vm1118, %v8208, %v8210
        %v8212 = vrot.slane %v7518, 4
        %v8213 = vsel %vm1118, %v8210, %v8212
        %v8214 = vrot.slane %v7519, 4
        %v8215 = vsel %vm1118, %v8212, %v8214
        %v8216 = vrot.slane %v7520, 4
        %v8217 = vsel %vm1118, %v8214, %v8216
        %v8218 = vrot.slane %v7521, 4
        %v8219 = vsel %vm1118, %v8216, %v8218
        %v8220 = vrot.slane %v7522, 4
        %v8221 = vsel %vm1118, %v8218, %v8220
        %v8222 = vrot.slane %v7523, 4
        %v8223 = vsel %vm1118, %v8220, %v8222
        %v8224 = vrot.slane %v7524, 4
        %v8225 = vsel %vm1118, %v8222, %v8224
        %v8226 = vrot.slane %v7525, 4
        %v8227 = vsel %vm1118, %v8224, %v8226
        %v8228 = vrot.slane %v7526, 4
        %v8229 = vsel %vm1118, %v8226, %v8228
        %v8230 = vrot.slane %v7527, 4
        %v8231 = vsel %vm1118, %v8228, %v8230
        %v8232 = vrot.slane %v7528, 4
        %v8233 = vsel %vm1118, %v8230, %v8232
        %v8234 = vrot.slane %v7529, 4
        %v8235 = vsel %vm1118, %v8232, %v8234
        %v8236 = vrot.slane %v7530, 4
        %v8237 = vsel %vm1118, %v8234, %v8236
        %v8238 = vrot.slane %v7531, 4
        %v8239 = vsel %vm1118, %v8236, %v8238
        %v8240 = vrot.slane %v7532, 4
        %v8241 = vsel %vm1118, %v8238, %v8240
        %v8242 = vrot.slane %v7533, 4
        %v8243 = vsel %vm1118, %v8240, %v8242
        %v8244 = vrot.slane %v7534, 4
        %v8245 = vsel %vm1118, %v8242, %v8244
        %v8246 = vrot.slane %v7535, 4
        %v8247 = vsel %vm1118, %v8244, %v8246
        %v8248 = vsel %vm1118, %v8246, %v1190
        %8249 = vrot.lane.b32.xlu0 %v8177, 32
        %v8250 = vpop.permute.xlu0 %8249
        %8251 = vrot.lane.b32.xlu0 %v8179, 32
        %v8252 = vpop.permute.xlu0 %8251
        %8253 = vrot.lane.b32.xlu0 %v8181, 32
        %v8254 = vpop.permute.xlu0 %8253
        %8255 = vrot.lane.b32.xlu0 %v8183, 32
        %v8256 = vpop.permute.xlu0 %8255
        %8257 = vrot.lane.b32.xlu0 %v8185, 32
        %v8258 = vpop.permute.xlu0 %8257
        %8259 = vrot.lane.b32.xlu0 %v8187, 32
        %v8260 = vpop.permute.xlu0 %8259
        %8261 = vrot.lane.b32.xlu0 %v8189, 32
        %v8262 = vpop.permute.xlu0 %8261
        %8263 = vrot.lane.b32.xlu0 %v8191, 32
        %v8264 = vpop.permute.xlu0 %8263
        %8265 = vrot.lane.b32.xlu0 %v8193, 32
        %v8266 = vpop.permute.xlu0 %8265
        %8267 = vrot.lane.b32.xlu0 %v8195, 32
        %v8268 = vpop.permute.xlu0 %8267
        %8269 = vrot.lane.b32.xlu0 %v8197, 32
        %v8270 = vpop.permute.xlu0 %8269
        %8271 = vrot.lane.b32.xlu0 %v8199, 32
        %v8272 = vpop.permute.xlu0 %8271
        %8273 = vrot.lane.b32.xlu0 %v8201, 32
        %v8274 = vpop.permute.xlu0 %8273
        %8275 = vrot.lane.b32.xlu0 %v8203, 32
        %v8276 = vpop.permute.xlu0 %8275
        %8277 = vrot.lane.b32.xlu0 %v8205, 32
        %v8278 = vpop.permute.xlu0 %8277
        %8279 = vrot.lane.b32.xlu0 %v8207, 32
        %v8280 = vpop.permute.xlu0 %8279
        %8281 = vrot.lane.b32.xlu0 %v8209, 32
        %v8282 = vpop.permute.xlu0 %8281
        %8283 = vrot.lane.b32.xlu0 %v8211, 32
        %v8284 = vpop.permute.xlu0 %8283
        %8285 = vrot.lane.b32.xlu0 %v8213, 32
        %v8286 = vpop.permute.xlu0 %8285
        %8287 = vrot.lane.b32.xlu0 %v8215, 32
        %v8288 = vpop.permute.xlu0 %8287
        %8289 = vrot.lane.b32.xlu0 %v8217, 32
        %v8290 = vpop.permute.xlu0 %8289
        %8291 = vrot.lane.b32.xlu0 %v8219, 32
        %v8292 = vpop.permute.xlu0 %8291
        %8293 = vrot.lane.b32.xlu0 %v8221, 32
        %v8294 = vpop.permute.xlu0 %8293
        %8295 = vrot.lane.b32.xlu0 %v8223, 32
        %v8296 = vpop.permute.xlu0 %8295
        %8297 = vrot.lane.b32.xlu0 %v8225, 32
        %v8298 = vpop.permute.xlu0 %8297
        %8299 = vrot.lane.b32.xlu0 %v8227, 32
        %v8300 = vpop.permute.xlu0 %8299
        %8301 = vrot.lane.b32.xlu0 %v8229, 32
        %v8302 = vpop.permute.xlu0 %8301
        %8303 = vrot.lane.b32.xlu0 %v8231, 32
        %v8304 = vpop.permute.xlu0 %8303
        %8305 = vrot.lane.b32.xlu0 %v8233, 32
        %v8306 = vpop.permute.xlu0 %8305
        %8307 = vrot.lane.b32.xlu0 %v8235, 32
        %v8308 = vpop.permute.xlu0 %8307
        %8309 = vrot.lane.b32.xlu0 %v8237, 32
        %v8310 = vpop.permute.xlu0 %8309
        %8311 = vrot.lane.b32.xlu0 %v8239, 32
        %v8312 = vpop.permute.xlu0 %8311
        %8313 = vrot.lane.b32.xlu0 %v8241, 32
        %v8314 = vpop.permute.xlu0 %8313
        %8315 = vrot.lane.b32.xlu0 %v8243, 32
        %v8316 = vpop.permute.xlu0 %8315
        %8317 = vrot.lane.b32.xlu0 %v8245, 32
        %v8318 = vpop.permute.xlu0 %8317
        %8319 = vrot.lane.b32.xlu0 %v8247, 32
        %v8320 = vpop.permute.xlu0 %8319
        %8321 = vrot.lane.b32.xlu0 %v8248, 32
        %v8322 = vpop.permute.xlu0 %8321
        %8360 = vrot.lane.b32.xlu0 %v8180, 64
        %v8361 = vpop.permute.xlu0 %8360
        %8362 = vrot.lane.b32.xlu0 %v8183, 64
        %v8363 = vpop.permute.xlu0 %8362
        %8364 = vrot.lane.b32.xlu0 %v8185, 64
        %v8365 = vpop.permute.xlu0 %8364
        %8366 = vrot.lane.b32.xlu0 %v8187, 64
        %v8367 = vpop.permute.xlu0 %8366
        %8368 = vrot.lane.b32.xlu0 %v8189, 64
        %v8369 = vpop.permute.xlu0 %8368
        %8370 = vrot.lane.b32.xlu0 %v8191, 64
        %v8371 = vpop.permute.xlu0 %8370
        %8372 = vrot.lane.b32.xlu0 %v8193, 64
        %v8373 = vpop.permute.xlu0 %8372
        %8374 = vrot.lane.b32.xlu0 %v8195, 64
        %v8375 = vpop.permute.xlu0 %8374
        %8376 = vrot.lane.b32.xlu0 %v8197, 64
        %v8377 = vpop.permute.xlu0 %8376
        %8378 = vrot.lane.b32.xlu0 %v8199, 64
        %v8379 = vpop.permute.xlu0 %8378
        %8380 = vrot.lane.b32.xlu0 %v8201, 64
        %v8381 = vpop.permute.xlu0 %8380
        %8382 = vrot.lane.b32.xlu0 %v8203, 64
        %v8383 = vpop.permute.xlu0 %8382
        %8384 = vrot.lane.b32.xlu0 %v8205, 64
        %v8385 = vpop.permute.xlu0 %8384
        %8386 = vrot.lane.b32.xlu0 %v8207, 64
        %v8387 = vpop.permute.xlu0 %8386
        %8388 = vrot.lane.b32.xlu0 %v8209, 64
        %v8389 = vpop.permute.xlu0 %8388
        %8390 = vrot.lane.b32.xlu0 %v8211, 64
        %v8391 = vpop.permute.xlu0 %8390
        %8392 = vrot.lane.b32.xlu0 %v8213, 64
        %v8393 = vpop.permute.xlu0 %8392
        %8394 = vrot.lane.b32.xlu0 %v8215, 64
        %v8395 = vpop.permute.xlu0 %8394
        %8396 = vrot.lane.b32.xlu0 %v8217, 64
        %v8397 = vpop.permute.xlu0 %8396
        %8398 = vrot.lane.b32.xlu0 %v8219, 64
        %v8399 = vpop.permute.xlu0 %8398
        %8400 = vrot.lane.b32.xlu0 %v8221, 64
        %v8401 = vpop.permute.xlu0 %8400
        %8402 = vrot.lane.b32.xlu0 %v8223, 64
        %v8403 = vpop.permute.xlu0 %8402
        %8404 = vrot.lane.b32.xlu0 %v8225, 64
        %v8405 = vpop.permute.xlu0 %8404
        %8406 = vrot.lane.b32.xlu0 %v8227, 64
        %v8407 = vpop.permute.xlu0 %8406
        %8408 = vrot.lane.b32.xlu0 %v8229, 64
        %v8409 = vpop.permute.xlu0 %8408
        %8410 = vrot.lane.b32.xlu0 %v8231, 64
        %v8411 = vpop.permute.xlu0 %8410
        %8412 = vrot.lane.b32.xlu0 %v8233, 64
        %v8413 = vpop.permute.xlu0 %8412
        %8414 = vrot.lane.b32.xlu0 %v8235, 64
        %v8415 = vpop.permute.xlu0 %8414
        %8416 = vrot.lane.b32.xlu0 %v8237, 64
        %v8417 = vpop.permute.xlu0 %8416
        %8418 = vrot.lane.b32.xlu0 %v8239, 64
        %v8419 = vpop.permute.xlu0 %8418
        %8420 = vrot.lane.b32.xlu0 %v8241, 64
        %v8421 = vpop.permute.xlu0 %8420
        %8422 = vrot.lane.b32.xlu0 %v8243, 64
        %v8423 = vpop.permute.xlu0 %8422
        %8424 = vrot.lane.b32.xlu0 %v8245, 64
        %v8425 = vpop.permute.xlu0 %8424
        %8426 = vrot.lane.b32.xlu0 %v8247, 64
        %v8427 = vpop.permute.xlu0 %8426
        %8428 = vrot.lane.b32.xlu0 %v8248, 64
        %v8429 = vpop.permute.xlu0 %8428
        %v8465 = vrot.slane %v7502, 5
        %v8466 = vrot.slane %v7503, 5
        %v8467 = vsel %vm1412, %v8465, %v8466
        %v8468 = vrot.slane %v7504, 5
        %v8469 = vsel %vm1412, %v8466, %v8468
        %v8470 = vrot.slane %v7505, 5
        %v8471 = vsel %vm1412, %v8468, %v8470
        %v8472 = vrot.slane %v7506, 5
        %v8473 = vsel %vm1412, %v8470, %v8472
        %v8474 = vrot.slane %v7507, 5
        %v8475 = vsel %vm1412, %v8472, %v8474
        %v8476 = vrot.slane %v7508, 5
        %v8477 = vsel %vm1412, %v8474, %v8476
        %v8478 = vrot.slane %v7509, 5
        %v8479 = vsel %vm1412, %v8476, %v8478
        %v8480 = vrot.slane %v7510, 5
        %v8481 = vsel %vm1412, %v8478, %v8480
        %v8482 = vrot.slane %v7511, 5
        %v8483 = vsel %vm1412, %v8480, %v8482
        %v8484 = vrot.slane %v7512, 5
        %v8485 = vsel %vm1412, %v8482, %v8484
        %v8486 = vrot.slane %v7513, 5
        %v8487 = vsel %vm1412, %v8484, %v8486
        %v8488 = vrot.slane %v7514, 5
        %v8489 = vsel %vm1412, %v8486, %v8488
        %v8490 = vrot.slane %v7515, 5
        %v8491 = vsel %vm1412, %v8488, %v8490
        %v8492 = vrot.slane %v7516, 5
        %v8493 = vsel %vm1412, %v8490, %v8492
        %v8494 = vrot.slane %v7517, 5
        %v8495 = vsel %vm1412, %v8492, %v8494
        %v8496 = vrot.slane %v7518, 5
        %v8497 = vsel %vm1412, %v8494, %v8496
        %v8498 = vrot.slane %v7519, 5
        %v8499 = vsel %vm1412, %v8496, %v8498
        %v8500 = vrot.slane %v7520, 5
        %v8501 = vsel %vm1412, %v8498, %v8500
        %v8502 = vrot.slane %v7521, 5
        %v8503 = vsel %vm1412, %v8500, %v8502
        %v8504 = vrot.slane %v7522, 5
        %v8505 = vsel %vm1412, %v8502, %v8504
        %v8506 = vrot.slane %v7523, 5
        %v8507 = vsel %vm1412, %v8504, %v8506
        %v8508 = vrot.slane %v7524, 5
        %v8509 = vsel %vm1412, %v8506, %v8508
        %v8510 = vrot.slane %v7525, 5
        %v8511 = vsel %vm1412, %v8508, %v8510
        %v8512 = vrot.slane %v7526, 5
        %v8513 = vsel %vm1412, %v8510, %v8512
        %v8514 = vrot.slane %v7527, 5
        %v8515 = vsel %vm1412, %v8512, %v8514
        %v8516 = vrot.slane %v7528, 5
        %v8517 = vsel %vm1412, %v8514, %v8516
        %v8518 = vrot.slane %v7529, 5
        %v8519 = vsel %vm1412, %v8516, %v8518
        %v8520 = vrot.slane %v7530, 5
        %v8521 = vsel %vm1412, %v8518, %v8520
        %v8522 = vrot.slane %v7531, 5
        %v8523 = vsel %vm1412, %v8520, %v8522
        %v8524 = vrot.slane %v7532, 5
        %v8525 = vsel %vm1412, %v8522, %v8524
        %v8526 = vrot.slane %v7533, 5
        %v8527 = vsel %vm1412, %v8524, %v8526
        %v8528 = vrot.slane %v7534, 5
        %v8529 = vsel %vm1412, %v8526, %v8528
        %v8530 = vrot.slane %v7535, 5
        %v8531 = vsel %vm1412, %v8528, %v8530
        %v8532 = vsel %vm1412, %v8530, %v1480
        %8533 = vrot.lane.b32.xlu0 %v8465, 96
        %v8534 = vpop.permute.xlu0 %8533
        %8535 = vrot.lane.b32.xlu0 %v8467, 96
        %v8536 = vpop.permute.xlu0 %8535
        %8537 = vrot.lane.b32.xlu0 %v8469, 96
        %v8538 = vpop.permute.xlu0 %8537
        %8539 = vrot.lane.b32.xlu0 %v8471, 96
        %v8540 = vpop.permute.xlu0 %8539
        %8541 = vrot.lane.b32.xlu0 %v8473, 96
        %v8542 = vpop.permute.xlu0 %8541
        %8543 = vrot.lane.b32.xlu0 %v8475, 96
        %v8544 = vpop.permute.xlu0 %8543
        %8545 = vrot.lane.b32.xlu0 %v8477, 96
        %v8546 = vpop.permute.xlu0 %8545
        %8547 = vrot.lane.b32.xlu0 %v8479, 96
        %v8548 = vpop.permute.xlu0 %8547
        %8549 = vrot.lane.b32.xlu0 %v8481, 96
        %v8550 = vpop.permute.xlu0 %8549
        %8551 = vrot.lane.b32.xlu0 %v8483, 96
        %v8552 = vpop.permute.xlu0 %8551
        %8553 = vrot.lane.b32.xlu0 %v8485, 96
        %v8554 = vpop.permute.xlu0 %8553
        %8555 = vrot.lane.b32.xlu0 %v8487, 96
        %v8556 = vpop.permute.xlu0 %8555
        %8557 = vrot.lane.b32.xlu0 %v8489, 96
        %v8558 = vpop.permute.xlu0 %8557
        %8559 = vrot.lane.b32.xlu0 %v8491, 96
        %v8560 = vpop.permute.xlu0 %8559
        %8561 = vrot.lane.b32.xlu0 %v8493, 96
        %v8562 = vpop.permute.xlu0 %8561
        %8563 = vrot.lane.b32.xlu0 %v8495, 96
        %v8564 = vpop.permute.xlu0 %8563
        %8565 = vrot.lane.b32.xlu0 %v8497, 96
        %v8566 = vpop.permute.xlu0 %8565
        %8567 = vrot.lane.b32.xlu0 %v8499, 96
        %v8568 = vpop.permute.xlu0 %8567
        %8569 = vrot.lane.b32.xlu0 %v8501, 96
        %v8570 = vpop.permute.xlu0 %8569
        %8571 = vrot.lane.b32.xlu0 %v8503, 96
        %v8572 = vpop.permute.xlu0 %8571
        %8573 = vrot.lane.b32.xlu0 %v8505, 96
        %v8574 = vpop.permute.xlu0 %8573
        %8575 = vrot.lane.b32.xlu0 %v8507, 96
        %v8576 = vpop.permute.xlu0 %8575
        %8577 = vrot.lane.b32.xlu0 %v8509, 96
        %v8578 = vpop.permute.xlu0 %8577
        %8579 = vrot.lane.b32.xlu0 %v8511, 96
        %v8580 = vpop.permute.xlu0 %8579
        %8581 = vrot.lane.b32.xlu0 %v8513, 96
        %v8582 = vpop.permute.xlu0 %8581
        %8583 = vrot.lane.b32.xlu0 %v8515, 96
        %v8584 = vpop.permute.xlu0 %8583
        %8585 = vrot.lane.b32.xlu0 %v8517, 96
        %v8586 = vpop.permute.xlu0 %8585
        %8587 = vrot.lane.b32.xlu0 %v8519, 96
        %v8588 = vpop.permute.xlu0 %8587
        %8589 = vrot.lane.b32.xlu0 %v8521, 96
        %v8590 = vpop.permute.xlu0 %8589
        %8591 = vrot.lane.b32.xlu0 %v8523, 96
        %v8592 = vpop.permute.xlu0 %8591
        %8593 = vrot.lane.b32.xlu0 %v8525, 96
        %v8594 = vpop.permute.xlu0 %8593
        %8595 = vrot.lane.b32.xlu0 %v8527, 96
        %v8596 = vpop.permute.xlu0 %8595
        %8597 = vrot.lane.b32.xlu0 %v8529, 96
        %v8598 = vpop.permute.xlu0 %8597
        %8599 = vrot.lane.b32.xlu0 %v8531, 96
        %v8600 = vpop.permute.xlu0 %8599
        %8601 = vrot.lane.b32.xlu0 %v8532, 96
        %v8602 = vpop.permute.xlu0 %8601
        %v8638 = vrot.slane %v7502, 6
        %v8639 = vrot.slane %v7503, 6
        %v8640 = vsel %vm1591, %v8638, %v8639
        %v8641 = vrot.slane %v7504, 6
        %v8642 = vsel %vm1591, %v8639, %v8641
        %v8643 = vrot.slane %v7505, 6
        %v8644 = vsel %vm1591, %v8641, %v8643
        %v8645 = vrot.slane %v7506, 6
        %v8646 = vsel %vm1591, %v8643, %v8645
        %v8647 = vrot.slane %v7507, 6
        %v8648 = vsel %vm1591, %v8645, %v8647
        %v8649 = vrot.slane %v7508, 6
        %v8650 = vsel %vm1591, %v8647, %v8649
        %v8651 = vrot.slane %v7509, 6
        %v8652 = vsel %vm1591, %v8649, %v8651
        %v8653 = vrot.slane %v7510, 6
        %v8654 = vsel %vm1591, %v8651, %v8653
        %v8655 = vrot.slane %v7511, 6
        %v8656 = vsel %vm1591, %v8653, %v8655
        %v8657 = vrot.slane %v7512, 6
        %v8658 = vsel %vm1591, %v8655, %v8657
        %v8659 = vrot.slane %v7513, 6
        %v8660 = vsel %vm1591, %v8657, %v8659
        %v8661 = vrot.slane %v7514, 6
        %v8662 = vsel %vm1591, %v8659, %v8661
        %v8663 = vrot.slane %v7515, 6
        %v8664 = vsel %vm1591, %v8661, %v8663
        %v8665 = vrot.slane %v7516, 6
        %v8666 = vsel %vm1591, %v8663, %v8665
        %v8667 = vrot.slane %v7517, 6
        %v8668 = vsel %vm1591, %v8665, %v8667
        %v8669 = vrot.slane %v7518, 6
        %v8670 = vsel %vm1591, %v8667, %v8669
        %v8671 = vrot.slane %v7519, 6
        %v8672 = vsel %vm1591, %v8669, %v8671
        %v8673 = vrot.slane %v7520, 6
        %v8674 = vsel %vm1591, %v8671, %v8673
        %v8675 = vrot.slane %v7521, 6
        %v8676 = vsel %vm1591, %v8673, %v8675
        %v8677 = vrot.slane %v7522, 6
        %v8678 = vsel %vm1591, %v8675, %v8677
        %v8679 = vrot.slane %v7523, 6
        %v8680 = vsel %vm1591, %v8677, %v8679
        %v8681 = vrot.slane %v7524, 6
        %v8682 = vsel %vm1591, %v8679, %v8681
        %v8683 = vrot.slane %v7525, 6
        %v8684 = vsel %vm1591, %v8681, %v8683
        %v8685 = vrot.slane %v7526, 6
        %v8686 = vsel %vm1591, %v8683, %v8685
        %v8687 = vrot.slane %v7527, 6
        %v8688 = vsel %vm1591, %v8685, %v8687
        %v8689 = vrot.slane %v7528, 6
        %v8690 = vsel %vm1591, %v8687, %v8689
        %v8691 = vrot.slane %v7529, 6
        %v8692 = vsel %vm1591, %v8689, %v8691
        %v8693 = vrot.slane %v7530, 6
        %v8694 = vsel %vm1591, %v8691, %v8693
        %v8695 = vrot.slane %v7531, 6
        %v8696 = vsel %vm1591, %v8693, %v8695
        %v8697 = vrot.slane %v7532, 6
        %v8698 = vsel %vm1591, %v8695, %v8697
        %v8699 = vrot.slane %v7533, 6
        %v8700 = vsel %vm1591, %v8697, %v8699
        %v8701 = vrot.slane %v7534, 6
        %v8702 = vsel %vm1591, %v8699, %v8701
        %v8703 = vrot.slane %v7535, 6
        %v8704 = vsel %vm1591, %v8701, %v8703
        %v8705 = vsel %vm1591, %v8703, %v1659
        %v8706 = vsel %vm1882, 0.0, %v7675
        %v8707 = vsel %vm1882, %v7500, %v7677
        %v8708 = vsel %vm1882, %v7501, %v7679
        %v8709 = vsel %vm1882, %v7502, %v7681
        %v8710 = vsel %vm1882, %v7503, %v7683
        %v8711 = vsel %vm1882, %v7504, %v7685
        %v8712 = vsel %vm1882, %v7505, %v7687
        %v8713 = vsel %vm1882, %v7506, %v7689
        %v8714 = vsel %vm1882, %v7507, %v7691
        %v8715 = vsel %vm1882, %v7508, %v7693
        %v8716 = vsel %vm1882, %v7509, %v7695
        %v8717 = vsel %vm1882, %v7510, %v7697
        %v8718 = vsel %vm1882, %v7511, %v7699
        %v8719 = vsel %vm1882, %v7512, %v7701
        %v8720 = vsel %vm1882, %v7513, %v7703
        %v8721 = vsel %vm1882, %v7514, %v7705
        %v8722 = vsel %vm1882, %v7515, %v7707
        %v8723 = vsel %vm1882, %v7516, %v7709
        %v8724 = vsel %vm1882, %v7517, %v7711
        %v8725 = vsel %vm1882, %v7518, %v7713
        %v8726 = vsel %vm1882, %v7519, %v7715
        %v8727 = vsel %vm1882, %v7520, %v7717
        %v8728 = vsel %vm1882, %v7521, %v7719
        %v8729 = vsel %vm1882, %v7522, %v7721
        %v8730 = vsel %vm1882, %v7523, %v7723
        %v8731 = vsel %vm1882, %v7524, %v7725
        %v8732 = vsel %vm1882, %v7525, %v7727
        %v8733 = vsel %vm1882, %v7526, %v7729
        %v8734 = vsel %vm1882, %v7527, %v7731
        %v8735 = vsel %vm1882, %v7528, %v7733
        %v8736 = vsel %vm1882, %v7529, %v7735
        %v8737 = vsel %vm1882, %v7530, %v7737
        %v8738 = vsel %vm1882, %v7531, %v7739
        %v8739 = vsel %vm1882, %v7532, %v7741
        %v8740 = vsel %vm1882, %v7533, %v7743
        %v8741 = vsel %vm2034, %v8706, %v7848
        %v8742 = vsel %vm2034, %v8707, %v7850
        %v8743 = vsel %vm2034, %v8708, %v7852
        %v8744 = vsel %vm2034, %v8709, %v7854
        %v8745 = vsel %vm2034, %v8710, %v7856
        %v8746 = vsel %vm2034, %v8711, %v7858
        %v8747 = vsel %vm2034, %v8712, %v7860
        %v8748 = vsel %vm2034, %v8713, %v7862
        %v8749 = vsel %vm2034, %v8714, %v7864
        %v8750 = vsel %vm2034, %v8715, %v7866
        %v8751 = vsel %vm2034, %v8716, %v7868
        %v8752 = vsel %vm2034, %v8717, %v7870
        %v8753 = vsel %vm2034, %v8718, %v7872
        %v8754 = vsel %vm2034, %v8719, %v7874
        %v8755 = vsel %vm2034, %v8720, %v7876
        %v8756 = vsel %vm2034, %v8721, %v7878
        %v8757 = vsel %vm2034, %v8722, %v7880
        %v8758 = vsel %vm2034, %v8723, %v7882
        %v8759 = vsel %vm2034, %v8724, %v7884
        %v8760 = vsel %vm2034, %v8725, %v7886
        %v8761 = vsel %vm2034, %v8726, %v7888
        %v8762 = vsel %vm2034, %v8727, %v7890
        %v8763 = vsel %vm2034, %v8728, %v7892
        %v8764 = vsel %vm2034, %v8729, %v7894
        %v8765 = vsel %vm2034, %v8730, %v7896
        %v8766 = vsel %vm2034, %v8731, %v7898
        %v8767 = vsel %vm2034, %v8732, %v7900
        %v8768 = vsel %vm2034, %v8733, %v7902
        %v8769 = vsel %vm2034, %v8734, %v7904
        %v8770 = vsel %vm2034, %v8735, %v7906
        %v8771 = vsel %vm2034, %v8736, %v7908
        %v8772 = vsel %vm2034, %v8737, %v7910
        %v8773 = vsel %vm2034, %v8738, %v7912
        %v8774 = vsel %vm2034, %v8739, %v7914
        %v8775 = vsel %vm2034, %v8740, %v7916
        %v8776 = vsel %vm4006, %v3970, %v7959
        %v8777 = vsel %vm4006, %v3970, %v7961
        %v8778 = vsel %vm4006, %v8741, %v7963
        %v8779 = vsel %vm4006, %v8742, %v7965
        %v8780 = vsel %vm4006, %v8743, %v7967
        %v8781 = vsel %vm4006, %v8744, %v7969
        %v8782 = vsel %vm4006, %v8745, %v7971
        %v8783 = vsel %vm4006, %v8746, %v7973
        %v8784 = vsel %vm4006, %v8747, %v7975
        %v8785 = vsel %vm4006, %v8748, %v7977
        %v8786 = vsel %vm4006, %v8749, %v7979
        %v8787 = vsel %vm4006, %v8750, %v7981
        %v8788 = vsel %vm4006, %v8751, %v7983
        %v8789 = vsel %vm4006, %v8752, %v7985
        %v8790 = vsel %vm4006, %v8753, %v7987
        %v8791 = vsel %vm4006, %v8754, %v7989
        %v8792 = vsel %vm4006, %v8755, %v7991
        %v8793 = vsel %vm4006, %v8756, %v7993
        %v8794 = vsel %vm4006, %v8757, %v7995
        %v8795 = vsel %vm4006, %v8758, %v7997
        %v8796 = vsel %vm4006, %v8759, %v7999
        %v8797 = vsel %vm4006, %v8760, %v8001
        %v8798 = vsel %vm4006, %v8761, %v8003
        %v8799 = vsel %vm4006, %v8762, %v8005
        %v8800 = vsel %vm4006, %v8763, %v8007
        %v8801 = vsel %vm4006, %v8764, %v8009
        %v8802 = vsel %vm4006, %v8765, %v8011
        %v8803 = vsel %vm4006, %v8766, %v8013
        %v8804 = vsel %vm4006, %v8767, %v8015
        %v8805 = vsel %vm4006, %v8768, %v8017
        %v8806 = vsel %vm4006, %v8769, %v8019
        %v8807 = vsel %vm4006, %v8770, %v8021
        %v8808 = vsel %vm4006, %v8771, %v8023
        %v8809 = vsel %vm4006, %v8772, %v8025
        %v8810 = vsel %vm4006, %v8773, %v8027
        %v8811 = vsel %vm4006, %v8774, %v8029
        %v8812 = vsel %vm4006, %v8775, %v8031
        %v8813 = vsel %vm1882, %v8069, %v8250
        %v8814 = vsel %vm1882, %v8071, %v8252
        %v8815 = vsel %vm1882, %v8073, %v8254
        %v8816 = vsel %vm1882, %v8075, %v8256
        %v8817 = vsel %vm1882, %v8077, %v8258
        %v8818 = vsel %vm1882, %v8079, %v8260
        %v8819 = vsel %vm1882, %v8081, %v8262
        %v8820 = vsel %vm1882, %v8083, %v8264
        %v8821 = vsel %vm1882, %v8085, %v8266
        %v8822 = vsel %vm1882, %v8087, %v8268
        %v8823 = vsel %vm1882, %v8089, %v8270
        %v8824 = vsel %vm1882, %v8091, %v8272
        %v8825 = vsel %vm1882, %v8093, %v8274
        %v8826 = vsel %vm1882, %v8095, %v8276
        %v8827 = vsel %vm1882, %v8097, %v8278
        %v8828 = vsel %vm1882, %v8099, %v8280
        %v8829 = vsel %vm1882, %v8101, %v8282
        %v8830 = vsel %vm1882, %v8103, %v8284
        %v8831 = vsel %vm1882, %v8105, %v8286
        %v8832 = vsel %vm1882, %v8107, %v8288
        %v8833 = vsel %vm1882, %v8109, %v8290
        %v8834 = vsel %vm1882, %v8111, %v8292
        %v8835 = vsel %vm1882, %v8113, %v8294
        %v8836 = vsel %vm1882, %v8115, %v8296
        %v8837 = vsel %vm1882, %v8117, %v8298
        %v8838 = vsel %vm1882, %v8119, %v8300
        %v8839 = vsel %vm1882, %v8121, %v8302
        %v8840 = vsel %vm1882, %v8123, %v8304
        %v8841 = vsel %vm1882, %v8125, %v8306
        %v8842 = vsel %vm1882, %v8127, %v8308
        %v8843 = vsel %vm1882, %v8129, %v8310
        %v8844 = vsel %vm1882, %v8131, %v8312
        %v8845 = vsel %vm1882, %v8133, %v8314
        %v8846 = vsel %vm1882, %v8135, %v8316
        %v8847 = vsel %vm1882, %v8137, %v8318
        %v8848 = vsel %vm1882, %v8139, %v8320
        %v8849 = vsel %vm1882, %v8138, %v8322
        %v8850 = vsel %vm2034, %v8813, %v8361
        %v8851 = vsel %vm2034, %v8814, %v8363
        %v8852 = vsel %vm2034, %v8815, %v8365
        %v8853 = vsel %vm2034, %v8816, %v8367
        %v8854 = vsel %vm2034, %v8817, %v8369
        %v8855 = vsel %vm2034, %v8818, %v8371
        %v8856 = vsel %vm2034, %v8819, %v8373
        %v8857 = vsel %vm2034, %v8820, %v8375
        %v8858 = vsel %vm2034, %v8821, %v8377
        %v8859 = vsel %vm2034, %v8822, %v8379
        %v8860 = vsel %vm2034, %v8823, %v8381
        %v8861 = vsel %vm2034, %v8824, %v8383
        %v8862 = vsel %vm2034, %v8825, %v8385
        %v8863 = vsel %vm2034, %v8826, %v8387
        %v8864 = vsel %vm2034, %v8827, %v8389
        %v8865 = vsel %vm2034, %v8828, %v8391
        %v8866 = vsel %vm2034, %v8829, %v8393
        %v8867 = vsel %vm2034, %v8830, %v8395
        %v8868 = vsel %vm2034, %v8831, %v8397
        %v8869 = vsel %vm2034, %v8832, %v8399
        %v8870 = vsel %vm2034, %v8833, %v8401
        %v8871 = vsel %vm2034, %v8834, %v8403
        %v8872 = vsel %vm2034, %v8835, %v8405
        %v8873 = vsel %vm2034, %v8836, %v8407
        %v8874 = vsel %vm2034, %v8837, %v8409
        %v8875 = vsel %vm2034, %v8838, %v8411
        %v8876 = vsel %vm2034, %v8839, %v8413
        %v8877 = vsel %vm2034, %v8840, %v8415
        %v8878 = vsel %vm2034, %v8841, %v8417
        %v8879 = vsel %vm2034, %v8842, %v8419
        %v8880 = vsel %vm2034, %v8843, %v8421
        %v8881 = vsel %vm2034, %v8844, %v8423
        %v8882 = vsel %vm2034, %v8845, %v8425
        %v8883 = vsel %vm2034, %v8846, %v8427
        %v8884 = vsel %vm2034, %v8847, %v8429
        %v8885 = vsel %vm2034, %v8848, %v3653
        %v8886 = vsel %vm2034, %v8849, %v3653
        %v8887 = vsel %vm4006, %v8850, %v8534
        %v8888 = vsel %vm4006, %v8851, %v8536
        %v8889 = vsel %vm4006, %v8852, %v8538
        %v8890 = vsel %vm4006, %v8853, %v8540
        %v8891 = vsel %vm4006, %v8854, %v8542
        %v8892 = vsel %vm4006, %v8855, %v8544
        %v8893 = vsel %vm4006, %v8856, %v8546
        %v8894 = vsel %vm4006, %v8857, %v8548
        %v8895 = vsel %vm4006, %v8858, %v8550
        %v8896 = vsel %vm4006, %v8859, %v8552
        %v8897 = vsel %vm4006, %v8860, %v8554
        %v8898 = vsel %vm4006, %v8861, %v8556
        %v8899 = vsel %vm4006, %v8862, %v8558
        %v8900 = vsel %vm4006, %v8863, %v8560
        %v8901 = vsel %vm4006, %v8864, %v8562
        %v8902 = vsel %vm4006, %v8865, %v8564
        %v8903 = vsel %vm4006, %v8866, %v8566
        %v8904 = vsel %vm4006, %v8867, %v8568
        %v8905 = vsel %vm4006, %v8868, %v8570
        %v8906 = vsel %vm4006, %v8869, %v8572
        %v8907 = vsel %vm4006, %v8870, %v8574
        %v8908 = vsel %vm4006, %v8871, %v8576
        %v8909 = vsel %vm4006, %v8872, %v8578
        %v8910 = vsel %vm4006, %v8873, %v8580
        %v8911 = vsel %vm4006, %v8874, %v8582
        %v8912 = vsel %vm4006, %v8875, %v8584
        %v8913 = vsel %vm4006, %v8876, %v8586
        %v8914 = vsel %vm4006, %v8877, %v8588
        %v8915 = vsel %vm4006, %v8878, %v8590
        %v8916 = vsel %vm4006, %v8879, %v8592
        %v8917 = vsel %vm4006, %v8880, %v8594
        %v8918 = vsel %vm4006, %v8881, %v8596
        %v8919 = vsel %vm4006, %v8882, %v8598
        %v8920 = vsel %vm4006, %v8883, %v8600
        %v8921 = vsel %vm4006, %v8884, %v8602
        %v8922 = vsel %vm4006, %v8885, %v3829
        %v8923 = vsel %vm4006, %v8886, %v3829
        %v8998 = vrot.slane %v8776, 5
        %v8999 = vrot.slane %v8777, 5
        %v9000 = vsel %vm1412, %v8998, %v8999
        %v9001 = vrot.slane %v8887, 5
        %v9002 = vrot.slane %v8888, 5
        %v9003 = vsel %vm1412, %v9001, %v9002
        %v9004 = vrot.slane %v8638, 5
        %v9005 = vrot.slane %v8640, 5
        %v9006 = vsel %vm1412, %v9004, %v9005
        %v9007 = vrot.slane %v8778, 5
        %v9008 = vsel %vm1412, %v8999, %v9007
        %v9009 = vrot.slane %v8889, 5
        %v9010 = vsel %vm1412, %v9002, %v9009
        %v9011 = vrot.slane %v8642, 5
        %v9012 = vsel %vm1412, %v9005, %v9011
        %v9013 = vrot.slane %v8779, 5
        %v9014 = vsel %vm1412, %v9007, %v9013
        %v9015 = vrot.slane %v8890, 5
        %v9016 = vsel %vm1412, %v9009, %v9015
        %v9017 = vrot.slane %v8644, 5
        %v9018 = vsel %vm1412, %v9011, %v9017
        %v9019 = vrot.slane %v8780, 5
        %v9020 = vsel %vm1412, %v9013, %v9019
        %v9021 = vrot.slane %v8891, 5
        %v9022 = vsel %vm1412, %v9015, %v9021
        %v9023 = vrot.slane %v8646, 5
        %v9024 = vsel %vm1412, %v9017, %v9023
        %v9025 = vrot.slane %v8781, 5
        %v9026 = vsel %vm1412, %v9019, %v9025
        %v9027 = vrot.slane %v8892, 5
        %v9028 = vsel %vm1412, %v9021, %v9027
        %v9029 = vrot.slane %v8648, 5
        %v9030 = vsel %vm1412, %v9023, %v9029
        %v9031 = vrot.slane %v8782, 5
        %v9032 = vsel %vm1412, %v9025, %v9031
        %v9033 = vrot.slane %v8893, 5
        %v9034 = vsel %vm1412, %v9027, %v9033
        %v9035 = vrot.slane %v8650, 5
        %v9036 = vsel %vm1412, %v9029, %v9035
        %v9037 = vrot.slane %v8783, 5
        %v9038 = vsel %vm1412, %v9031, %v9037
        %v9039 = vrot.slane %v8894, 5
        %v9040 = vsel %vm1412, %v9033, %v9039
        %v9041 = vrot.slane %v8652, 5
        %v9042 = vsel %vm1412, %v9035, %v9041
        %v9043 = vrot.slane %v8784, 5
        %v9044 = vsel %vm1412, %v9037, %v9043
        %v9045 = vrot.slane %v8895, 5
        %v9046 = vsel %vm1412, %v9039, %v9045
        %v9047 = vrot.slane %v8654, 5
        %v9048 = vsel %vm1412, %v9041, %v9047
        %v9049 = vrot.slane %v8785, 5
        %v9050 = vsel %vm1412, %v9043, %v9049
        %v9051 = vrot.slane %v8896, 5
        %v9052 = vsel %vm1412, %v9045, %v9051
        %v9053 = vrot.slane %v8656, 5
        %v9054 = vsel %vm1412, %v9047, %v9053
        %v9055 = vrot.slane %v8786, 5
        %v9056 = vsel %vm1412, %v9049, %v9055
        %v9057 = vrot.slane %v8897, 5
        %v9058 = vsel %vm1412, %v9051, %v9057
        %v9059 = vrot.slane %v8658, 5
        %v9060 = vsel %vm1412, %v9053, %v9059
        %v9061 = vrot.slane %v8787, 5
        %v9062 = vsel %vm1412, %v9055, %v9061
        %v9063 = vrot.slane %v8898, 5
        %v9064 = vsel %vm1412, %v9057, %v9063
        %v9065 = vrot.slane %v8660, 5
        %v9066 = vsel %vm1412, %v9059, %v9065
        %v9067 = vrot.slane %v8788, 5
        %v9068 = vsel %vm1412, %v9061, %v9067
        %v9069 = vrot.slane %v8899, 5
        %v9070 = vsel %vm1412, %v9063, %v9069
        %v9071 = vrot.slane %v8662, 5
        %v9072 = vsel %vm1412, %v9065, %v9071
        %v9073 = vrot.slane %v8789, 5
        %v9074 = vsel %vm1412, %v9067, %v9073
        %v9075 = vrot.slane %v8900, 5
        %v9076 = vsel %vm1412, %v9069, %v9075
        %v9077 = vrot.slane %v8664, 5
        %v9078 = vsel %vm1412, %v9071, %v9077
        %v9079 = vrot.slane %v8790, 5
        %v9080 = vsel %vm1412, %v9073, %v9079
        %v9081 = vrot.slane %v8901, 5
        %v9082 = vsel %vm1412, %v9075, %v9081
        %v9083 = vrot.slane %v8666, 5
        %v9084 = vsel %vm1412, %v9077, %v9083
        %v9085 = vrot.slane %v8791, 5
        %v9086 = vsel %vm1412, %v9079, %v9085
        %v9087 = vrot.slane %v8902, 5
        %v9088 = vsel %vm1412, %v9081, %v9087
        %v9089 = vrot.slane %v8668, 5
        %v9090 = vsel %vm1412, %v9083, %v9089
        %v9091 = vrot.slane %v8792, 5
        %v9092 = vsel %vm1412, %v9085, %v9091
        %v9093 = vrot.slane %v8903, 5
        %v9094 = vsel %vm1412, %v9087, %v9093
        %v9095 = vrot.slane %v8670, 5
        %v9096 = vsel %vm1412, %v9089, %v9095
        %v9097 = vrot.slane %v8793, 5
        %v9098 = vsel %vm1412, %v9091, %v9097
        %v9099 = vrot.slane %v8904, 5
        %v9100 = vsel %vm1412, %v9093, %v9099
        %v9101 = vrot.slane %v8672, 5
        %v9102 = vsel %vm1412, %v9095, %v9101
        %v9103 = vrot.slane %v8794, 5
        %v9104 = vsel %vm1412, %v9097, %v9103
        %v9105 = vrot.slane %v8905, 5
        %v9106 = vsel %vm1412, %v9099, %v9105
        %v9107 = vrot.slane %v8674, 5
        %v9108 = vsel %vm1412, %v9101, %v9107
        %v9109 = vrot.slane %v8795, 5
        %v9110 = vsel %vm1412, %v9103, %v9109
        %v9111 = vrot.slane %v8906, 5
        %v9112 = vsel %vm1412, %v9105, %v9111
        %v9113 = vrot.slane %v8676, 5
        %v9114 = vsel %vm1412, %v9107, %v9113
        %v9115 = vrot.slane %v8796, 5
        %v9116 = vsel %vm1412, %v9109, %v9115
        %v9117 = vrot.slane %v8907, 5
        %v9118 = vsel %vm1412, %v9111, %v9117
        %v9119 = vrot.slane %v8678, 5
        %v9120 = vsel %vm1412, %v9113, %v9119
        %v9121 = vrot.slane %v8797, 5
        %v9122 = vsel %vm1412, %v9115, %v9121
        %v9123 = vrot.slane %v8908, 5
        %v9124 = vsel %vm1412, %v9117, %v9123
        %v9125 = vrot.slane %v8680, 5
        %v9126 = vsel %vm1412, %v9119, %v9125
        %v9127 = vrot.slane %v8798, 5
        %v9128 = vsel %vm1412, %v9121, %v9127
        %v9129 = vrot.slane %v8909, 5
        %v9130 = vsel %vm1412, %v9123, %v9129
        %v9131 = vrot.slane %v8682, 5
        %v9132 = vsel %vm1412, %v9125, %v9131
        %v9133 = vrot.slane %v8799, 5
        %v9134 = vsel %vm1412, %v9127, %v9133
        %v9135 = vrot.slane %v8910, 5
        %v9136 = vsel %vm1412, %v9129, %v9135
        %v9137 = vrot.slane %v8684, 5
        %v9138 = vsel %vm1412, %v9131, %v9137
        %v9139 = vrot.slane %v8800, 5
        %v9140 = vsel %vm1412, %v9133, %v9139
        %v9141 = vrot.slane %v8911, 5
        %v9142 = vsel %vm1412, %v9135, %v9141
        %v9143 = vrot.slane %v8686, 5
        %v9144 = vsel %vm1412, %v9137, %v9143
        %v9145 = vrot.slane %v8801, 5
        %v9146 = vsel %vm1412, %v9139, %v9145
        %v9147 = vrot.slane %v8912, 5
        %v9148 = vsel %vm1412, %v9141, %v9147
        %v9149 = vrot.slane %v8688, 5
        %v9150 = vsel %vm1412, %v9143, %v9149
        %v9151 = vrot.slane %v8802, 5
        %v9152 = vsel %vm1412, %v9145, %v9151
        %v9153 = vrot.slane %v8913, 5
        %v9154 = vsel %vm1412, %v9147, %v9153
        %v9155 = vrot.slane %v8690, 5
        %v9156 = vsel %vm1412, %v9149, %v9155
        %v9157 = vrot.slane %v8803, 5
        %v9158 = vsel %vm1412, %v9151, %v9157
        %v9159 = vrot.slane %v8914, 5
        %v9160 = vsel %vm1412, %v9153, %v9159
        %v9161 = vrot.slane %v8692, 5
        %v9162 = vsel %vm1412, %v9155, %v9161
        %v9163 = vrot.slane %v8804, 5
        %v9164 = vsel %vm1412, %v9157, %v9163
        %v9165 = vrot.slane %v8915, 5
        %v9166 = vsel %vm1412, %v9159, %v9165
        %v9167 = vrot.slane %v8694, 5
        %v9168 = vsel %vm1412, %v9161, %v9167
        %v9169 = vrot.slane %v8805, 5
        %v9170 = vsel %vm1412, %v9163, %v9169
        %v9171 = vrot.slane %v8916, 5
        %v9172 = vsel %vm1412, %v9165, %v9171
        %v9173 = vrot.slane %v8696, 5
        %v9174 = vsel %vm1412, %v9167, %v9173
        %v9175 = vrot.slane %v8806, 5
        %v9176 = vsel %vm1412, %v9169, %v9175
        %v9177 = vrot.slane %v8917, 5
        %v9178 = vsel %vm1412, %v9171, %v9177
        %v9179 = vrot.slane %v8698, 5
        %v9180 = vsel %vm1412, %v9173, %v9179
        %v9181 = vrot.slane %v8807, 5
        %v9182 = vsel %vm1412, %v9175, %v9181
        %v9183 = vrot.slane %v8918, 5
        %v9184 = vsel %vm1412, %v9177, %v9183
        %v9185 = vrot.slane %v8700, 5
        %v9186 = vsel %vm1412, %v9179, %v9185
        %v9187 = vrot.slane %v8808, 5
        %v9188 = vsel %vm1412, %v9181, %v9187
        %v9189 = vrot.slane %v8919, 5
        %v9190 = vsel %vm1412, %v9183, %v9189
        %v9191 = vrot.slane %v8702, 5
        %v9192 = vsel %vm1412, %v9185, %v9191
        %v9193 = vrot.slane %v8809, 5
        %v9194 = vsel %vm1412, %v9187, %v9193
        %v9195 = vrot.slane %v8920, 5
        %v9196 = vsel %vm1412, %v9189, %v9195
        %v9197 = vrot.slane %v8704, 5
        %v9198 = vsel %vm1412, %v9191, %v9197
        %v9199 = vrot.slane %v8810, 5
        %v9200 = vsel %vm1412, %v9193, %v9199
        %v9201 = vrot.slane %v8921, 5
        %v9202 = vsel %vm1412, %v9195, %v9201
        %v9203 = vrot.slane %v8705, 5
        %v9204 = vsel %vm1412, %v9197, %v9203
        %v9205 = vrot.slane %v8811, 5
        %v9206 = vsel %vm1412, %v9199, %v9205
        %v9207 = vrot.slane %v8922, 5
        %v9208 = vsel %vm1412, %v9201, %v9207
        %v9209 = vsel %vm1412, %v9203, %v4440
        %v9210 = vrot.slane %v8812, 5
        %v9211 = vsel %vm1412, %v9205, %v9210
        %v9212 = vrot.slane %v8923, 5
        %v9213 = vsel %vm1412, %v9207, %v9212
        %v9286 = vsel %vm1882, %v9006, 0
        %v9288 = vsel %vm1882, %v9012, 0
        %v9290 = vsel %vm1882, %v9018, 0
        %v9292 = vsel %vm1882, %v9024, 0
        %v9294 = vsel %vm1882, %v9030, 0
        %v9296 = vsel %vm1882, %v9036, 0
        %v9298 = vsel %vm1882, %v9042, 0
        %v9300 = vsel %vm1882, %v9048, 0
        %v9302 = vsel %vm1882, %v9054, 0
        %v9304 = vsel %vm1882, %v9060, 0
        %v9306 = vsel %vm1882, %v9066, 0
        %v9308 = vsel %vm1882, %v9072, 0
        %v9310 = vsel %vm1882, %v9078, 0
        %v9312 = vsel %vm1882, %v9084, 0
        %v9314 = vsel %vm1882, %v9090, 0
        %v9316 = vsel %vm1882, %v9096, 0
        %v9318 = vsel %vm1882, %v9102, 0
        %v9320 = vsel %vm1882, %v9108, 0
        %v9322 = vsel %vm1882, %v9114, 0
        %v9324 = vsel %vm1882, %v9120, 0
        %v9326 = vsel %vm1882, %v9126, 0
        %v9328 = vsel %vm1882, %v9132, 0
        %v9330 = vsel %vm1882, %v9138, 0
        %v9332 = vsel %vm1882, %v9144, 0
        %v9334 = vsel %vm1882, %v9150, 0
        %v9336 = vsel %vm1882, %v9156, 0
        %v9338 = vsel %vm1882, %v9162, 0
        %v9340 = vsel %vm1882, %v9168, 0
        %v9342 = vsel %vm1882, %v9174, 0
        %v9344 = vsel %vm1882, %v9180, 0
        %v9346 = vsel %vm1882, %v9186, 0
        %v9348 = vsel %vm1882, %v9192, 0
        %v9350 = vsel %vm1882, %v9198, 0
        %v9352 = vsel %vm1882, %v9204, 0
        %v9354 = vsel %vm1882, %v9209, 0
        %9356 = vmatprep.subr.mxu0 0.0
        %9357 = vmatpush1.msra.mxu0 %v7536
        %9358 = vmatprep.subr.mxu0 0.0
        %9359 = vmatpush1.msra.mxu0 %v7537
        %9360 = vmatprep.subr.mxu0 0.0
        %9361 = vmatpush1.msra.mxu0 %v7538
        %9362 = vmatprep.subr.mxu0 0.0
        %9363 = vmatpush1.msra.mxu0 %v7539
        %9364 = vmatprep.subr.mxu0 0.0
        %9365 = vmatpush1.msra.mxu0 %v7540
        %9366 = vmatprep.subr.mxu0 0.0
        %9367 = vmatpush1.msra.mxu0 %v7541
        %9368 = vmatprep.subr.mxu0 0.0
        %9369 = vmatpush1.msra.mxu0 %v7542
        %9370 = vmatprep.subr.mxu0 0.0
        %9371 = vmatpush1.msra.mxu0 %v7543
        %9372 = vmatprep.subr.mxu0 0.0
        %9373 = vmatpush1.msra.mxu0 %v7544
        %9374 = vmatprep.subr.mxu0 0.0
        %9375 = vmatpush1.msra.mxu0 %v7545
        %9376 = vmatprep.subr.mxu0 0.0
        %9377 = vmatpush1.msra.mxu0 %v7546
        %9378 = vmatprep.subr.mxu0 0.0
        %9379 = vmatpush1.msra.mxu0 %v7547
        %9380 = vmatprep.subr.mxu0 0.0
        %9381 = vmatpush1.msra.mxu0 %v7548
        %9382 = vmatprep.subr.mxu0 0.0
        %9383 = vmatpush1.msra.mxu0 %v7549
        %9384 = vmatprep.subr.mxu0 0.0
        %9385 = vmatpush1.msra.mxu0 %v7550
        %9386 = vmatprep.subr.mxu0 0.0
        %9387 = vmatpush1.msra.mxu0 %v7551
        %9388 = vmatprep.subr.mxu0 0.0
        %9389 = vmatpush1.msra.mxu0 %v7552
        %9390 = vmatprep.subr.mxu0 0.0
        %9391 = vmatpush1.msra.mxu0 %v7553
        %9392 = vmatprep.subr.mxu0 0.0
        %9393 = vmatpush1.msra.mxu0 %v7554
        %9394 = vmatprep.subr.mxu0 0.0
        %9395 = vmatpush1.msra.mxu0 %v7555
        %9396 = vmatprep.subr.mxu0 0.0
        %9397 = vmatpush1.msra.mxu0 %v7556
        %9398 = vmatprep.subr.mxu0 0.0
        %9399 = vmatpush1.msra.mxu0 %v7557
        %9400 = vmatprep.subr.mxu0 0.0
        %9401 = vmatpush1.msra.mxu0 %v7558
        %9402 = vmatprep.subr.mxu0 0.0
        %9403 = vmatpush1.msra.mxu0 %v7559
        %9404 = vmatprep.subr.mxu0 0.0
        %9405 = vmatpush1.msra.mxu0 %v7560
        %9406 = vmatprep.subr.mxu0 0.0
        %9407 = vmatpush1.msra.mxu0 %v7561
        %9408 = vmatprep.subr.mxu0 0.0
        %9409 = vmatpush1.msra.mxu0 %v7562
        %9410 = vmatprep.subr.mxu0 0.0
        %9411 = vmatpush1.msra.mxu0 %v7563
        %9412 = vmatprep.subr.mxu0 0.0
        %9413 = vmatpush1.msra.mxu0 %v7564
        %9414 = vmatprep.subr.mxu0 0.0
        %9415 = vmatpush1.msra.mxu0 %v7565
        %9416 = vmatprep.subr.mxu0 0.0
        %9417 = vmatpush1.msra.mxu0 %v7566
        %9418 = vmatprep.subr.mxu0 0.0
        %9419 = vmatpush1.msra.mxu0 %v7567
        %9420 = vmatprep.mubr.f32.mxu0 %v9003
        %9421 = vmatmul.mubr.f32.gmra.mrb[0].mxu0 %v9000
        %v9422 = vpop.f32.mrb[0].mxu0
        %v9423 = vadd.f32 0.0, %v9422
        %v9424 = vpop.f32.mrb[0].mxu0
        %9425 = vmatprep.mubr.f32.mxu0 %v9010
        %9426 = vmatmul.mubr.f32.gmra.mrb[0].mxu0 %v9008
        %v9427 = vpop.f32.mrb[0].mxu0
        %v9428 = vadd.f32 0.0, %v9427
        %v9429 = vpop.f32.mrb[0].mxu0
        %9430 = vmatprep.mubr.f32.mxu0 %v9016
        %9431 = vmatmul.mubr.f32.gmra.mrb[0].mxu0 %v9014
        %v9432 = vpop.f32.mrb[0].mxu0
        %v9433 = vadd.f32 0.0, %v9432
        %v9434 = vpop.f32.mrb[0].mxu0
        %9435 = vmatprep.mubr.f32.mxu0 %v9022
        %9436 = vmatmul.mubr.f32.gmra.mrb[0].mxu0 %v9020
        %v9437 = vpop.f32.mrb[0].mxu0
        %v9438 = vadd.f32 0.0, %v9437
        %v9439 = vpop.f32.mrb[0].mxu0
        %9440 = vmatprep.mubr.f32.mxu0 %v9028
        %9441 = vmatmul.mubr.f32.gmra.mrb[0].mxu0 %v9026
        %v9442 = vpop.f32.mrb[0].mxu0
        %v9443 = vadd.f32 0.0, %v9442
        %v9444 = vpop.f32.mrb[0].mxu0
        %9445 = vmatprep.mubr.f32.mxu0 %v9034
        %9446 = vmatmul.mubr.f32.gmra.mrb[0].mxu0 %v9032
        %v9447 = vpop.f32.mrb[0].mxu0
        %v9448 = vadd.f32 0.0, %v9447
        %v9449 = vpop.f32.mrb[0].mxu0
        %9450 = vmatprep.mubr.f32.mxu0 %v9040
        %9451 = vmatmul.mubr.f32.gmra.mrb[0].mxu0 %v9038
        %v9452 = vpop.f32.mrb[0].mxu0
        %v9453 = vadd.f32 0.0, %v9452
        %v9454 = vpop.f32.mrb[0].mxu0
        %9455 = vmatprep.mubr.f32.mxu0 %v9046
        %9456 = vmatmul.mubr.f32.gmra.mrb[0].mxu0 %v9044
        %v9457 = vpop.f32.mrb[0].mxu0
        %v9458 = vadd.f32 0.0, %v9457
        %v9459 = vpop.f32.mrb[0].mxu0
        %9460 = vmatprep.mubr.f32.mxu0 %v9052
        %9461 = vmatmul.mubr.f32.gmra.mrb[0].mxu0 %v9050
        %v9462 = vpop.f32.mrb[0].mxu0
        %v9463 = vadd.f32 0.0, %v9462
        %v9464 = vpop.f32.mrb[0].mxu0
        %9465 = vmatprep.mubr.f32.mxu0 %v9058
        %9466 = vmatmul.mubr.f32.gmra.mrb[0].mxu0 %v9056
        %v9467 = vpop.f32.mrb[0].mxu0
        %v9468 = vadd.f32 0.0, %v9467
        %v9469 = vpop.f32.mrb[0].mxu0
        %9470 = vmatprep.mubr.f32.mxu0 %v9064
        %9471 = vmatmul.mubr.f32.gmra.mrb[0].mxu0 %v9062
        %v9472 = vpop.f32.mrb[0].mxu0
        %v9473 = vadd.f32 0.0, %v9472
        %v9474 = vpop.f32.mrb[0].mxu0
        %9475 = vmatprep.mubr.f32.mxu0 %v9070
        %9476 = vmatmul.mubr.f32.gmra.mrb[0].mxu0 %v9068
        %v9477 = vpop.f32.mrb[0].mxu0
        %v9478 = vadd.f32 0.0, %v9477
        %v9479 = vpop.f32.mrb[0].mxu0
        %9480 = vmatprep.mubr.f32.mxu0 %v9076
        %9481 = vmatmul.mubr.f32.gmra.mrb[0].mxu0 %v9074
        %v9482 = vpop.f32.mrb[0].mxu0
        %v9483 = vadd.f32 0.0, %v9482
        %v9484 = vpop.f32.mrb[0].mxu0
        %9485 = vmatprep.mubr.f32.mxu0 %v9082
        %9486 = vmatmul.mubr.f32.gmra.mrb[0].mxu0 %v9080
        %v9487 = vpop.f32.mrb[0].mxu0
        %v9488 = vadd.f32 0.0, %v9487
        %v9489 = vpop.f32.mrb[0].mxu0
        %9490 = vmatprep.mubr.f32.mxu0 %v9088
        %9491 = vmatmul.mubr.f32.gmra.mrb[0].mxu0 %v9086
        %v9492 = vpop.f32.mrb[0].mxu0
        %v9493 = vadd.f32 0.0, %v9492
        %v9494 = vpop.f32.mrb[0].mxu0
        %9495 = vmatprep.mubr.f32.mxu0 %v9094
        %9496 = vmatmul.mubr.f32.gmra.mrb[0].mxu0 %v9092
        %v9497 = vpop.f32.mrb[0].mxu0
        %v9498 = vadd.f32 0.0, %v9497
        %v9499 = vpop.f32.mrb[0].mxu0
        %9500 = vmatprep.mubr.f32.mxu0 %v9100
        %9501 = vmatmul.mubr.f32.gmra.mrb[0].mxu0 %v9098
        %v9502 = vpop.f32.mrb[0].mxu0
        %v9503 = vadd.f32 0.0, %v9502
        %v9504 = vpop.f32.mrb[0].mxu0
        %9505 = vmatprep.mubr.f32.mxu0 %v9106
        %9506 = vmatmul.mubr.f32.gmra.mrb[0].mxu0 %v9104
        %v9507 = vpop.f32.mrb[0].mxu0
        %v9508 = vadd.f32 0.0, %v9507
        %v9509 = vpop.f32.mrb[0].mxu0
        %9510 = vmatprep.mubr.f32.mxu0 %v9112
        %9511 = vmatmul.mubr.f32.gmra.mrb[0].mxu0 %v9110
        %v9512 = vpop.f32.mrb[0].mxu0
        %v9513 = vadd.f32 0.0, %v9512
        %v9514 = vpop.f32.mrb[0].mxu0
        %9515 = vmatprep.mubr.f32.mxu0 %v9118
        %9516 = vmatmul.mubr.f32.gmra.mrb[0].mxu0 %v9116
        %v9517 = vpop.f32.mrb[0].mxu0
        %v9518 = vadd.f32 0.0, %v9517
        %v9519 = vpop.f32.mrb[0].mxu0
        %9520 = vmatprep.mubr.f32.mxu0 %v9124
        %9521 = vmatmul.mubr.f32.gmra.mrb[0].mxu0 %v9122
        %v9522 = vpop.f32.mrb[0].mxu0
        %v9523 = vadd.f32 0.0, %v9522
        %v9524 = vpop.f32.mrb[0].mxu0
        %9525 = vmatprep.mubr.f32.mxu0 %v9130
        %9526 = vmatmul.mubr.f32.gmra.mrb[0].mxu0 %v9128
        %v9527 = vpop.f32.mrb[0].mxu0
        %v9528 = vadd.f32 0.0, %v9527
        %v9529 = vpop.f32.mrb[0].mxu0
        %9530 = vmatprep.mubr.f32.mxu0 %v9136
        %9531 = vmatmul.mubr.f32.gmra.mrb[0].mxu0 %v9134
        %v9532 = vpop.f32.mrb[0].mxu0
        %v9533 = vadd.f32 0.0, %v9532
        %v9534 = vpop.f32.mrb[0].mxu0
        %9535 = vmatprep.mubr.f32.mxu0 %v9142
        %9536 = vmatmul.mubr.f32.gmra.mrb[0].mxu0 %v9140
        %v9537 = vpop.f32.mrb[0].mxu0
        %v9538 = vadd.f32 0.0, %v9537
        %v9539 = vpop.f32.mrb[0].mxu0
        %9540 = vmatprep.mubr.f32.mxu0 %v9148
        %9541 = vmatmul.mubr.f32.gmra.mrb[0].mxu0 %v9146
        %v9542 = vpop.f32.mrb[0].mxu0
        %v9543 = vadd.f32 0.0, %v9542
        %v9544 = vpop.f32.mrb[0].mxu0
        %9545 = vmatprep.mubr.f32.mxu0 %v9154
        %9546 = vmatmul.mubr.f32.gmra.mrb[0].mxu0 %v9152
        %v9547 = vpop.f32.mrb[0].mxu0
        %v9548 = vadd.f32 0.0, %v9547
        %v9549 = vpop.f32.mrb[0].mxu0
        %9550 = vmatprep.mubr.f32.mxu0 %v9160
        %9551 = vmatmul.mubr.f32.gmra.mrb[0].mxu0 %v9158
        %v9552 = vpop.f32.mrb[0].mxu0
        %v9553 = vadd.f32 0.0, %v9552
        %v9554 = vpop.f32.mrb[0].mxu0
        %9555 = vmatprep.mubr.f32.mxu0 %v9166
        %9556 = vmatmul.mubr.f32.gmra.mrb[0].mxu0 %v9164
        %v9557 = vpop.f32.mrb[0].mxu0
        %v9558 = vadd.f32 0.0, %v9557
        %v9559 = vpop.f32.mrb[0].mxu0
        %9560 = vmatprep.mubr.f32.mxu0 %v9172
        %9561 = vmatmul.mubr.f32.gmra.mrb[0].mxu0 %v9170
        %v9562 = vpop.f32.mrb[0].mxu0
        %v9563 = vadd.f32 0.0, %v9562
        %v9564 = vpop.f32.mrb[0].mxu0
        %9565 = vmatprep.mubr.f32.mxu0 %v9178
        %9566 = vmatmul.mubr.f32.gmra.mrb[0].mxu0 %v9176
        %v9567 = vpop.f32.mrb[0].mxu0
        %v9568 = vadd.f32 0.0, %v9567
        %v9569 = vpop.f32.mrb[0].mxu0
        %9570 = vmatprep.mubr.f32.mxu0 %v9184
        %9571 = vmatmul.mubr.f32.gmra.mrb[0].mxu0 %v9182
        %v9572 = vpop.f32.mrb[0].mxu0
        %v9573 = vadd.f32 0.0, %v9572
        %v9574 = vpop.f32.mrb[0].mxu0
        %9575 = vmatprep.mubr.f32.mxu0 %v9190
        %9576 = vmatmul.mubr.f32.gmra.mrb[0].mxu0 %v9188
        %v9577 = vpop.f32.mrb[0].mxu0
        %v9578 = vadd.f32 0.0, %v9577
        %v9579 = vpop.f32.mrb[0].mxu0
        %9580 = vmatprep.mubr.f32.mxu0 %v9196
        %9581 = vmatmul.mubr.f32.gmra.mrb[0].mxu0 %v9194
        %v9582 = vpop.f32.mrb[0].mxu0
        %v9583 = vadd.f32 0.0, %v9582
        %v9584 = vpop.f32.mrb[0].mxu0
        %9585 = vmatprep.mubr.f32.mxu0 %v9202
        %9586 = vmatmul.mubr.f32.gmra.mrb[0].mxu0 %v9200
        %v9587 = vpop.f32.mrb[0].mxu0
        %v9588 = vadd.f32 0.0, %v9587
        %v9589 = vpop.f32.mrb[0].mxu0
        %9590 = vmatprep.mubr.f32.mxu0 %v9208
        %9591 = vmatmul.mubr.f32.gmra.mrb[0].mxu0 %v9206
        %v9592 = vpop.f32.mrb[0].mxu0
        %v9593 = vadd.f32 0.0, %v9592
        %v9594 = vpop.f32.mrb[0].mxu0
        %9595 = vmatprep.mubr.f32.mxu0 %v9213
        %9596 = vmatmul.mubr.f32.gmra.mrb[0].mxu0 %v9211
        %v9597 = vpop.f32.mrb[0].mxu0
        %v9598 = vadd.f32 0.0, %v9597
        %v9599 = vpop.f32.mrb[0].mxu0
        %9600 = vdwg.mxu0
        %9601 = vmatprep.subr.mxu0 0.0
        %9602 = vmatpush1.msra.mxu0 %v7568
        %9603 = vmatprep.subr.mxu0 0.0
        %9604 = vmatpush1.msra.mxu0 %v7569
        %9605 = vmatprep.subr.mxu0 0.0
        %9606 = vmatpush1.msra.mxu0 %v7570
        %9607 = vmatprep.subr.mxu0 0.0
        %9608 = vmatpush1.msra.mxu0 %v7571
        %9609 = vmatprep.subr.mxu0 0.0
        %9610 = vmatpush1.msra.mxu0 0.0
        %9611 = vmatprep.subr.mxu0 0.0
        %9612 = vmatpush1.msra.mxu0 0.0
        %9613 = vmatprep.subr.mxu0 0.0
        %9614 = vmatpush1.msra.mxu0 0.0
        %9615 = vmatprep.subr.mxu0 0.0
        %9616 = vmatpush1.msra.mxu0 0.0
        %9617 = vmatprep.subr.mxu0 0.0
        %9618 = vmatpush1.msra.mxu0 0.0
        %9619 = vmatprep.subr.mxu0 0.0
        %9620 = vmatpush1.msra.mxu0 0.0
        %9621 = vmatprep.subr.mxu0 0.0
        %9622 = vmatpush1.msra.mxu0 0.0
        %9623 = vmatprep.subr.mxu0 0.0
        %9624 = vmatpush1.msra.mxu0 0.0
        %9625 = vmatprep.subr.mxu0 0.0
        %9626 = vmatpush1.msra.mxu0 0.0
        %9627 = vmatprep.subr.mxu0 0.0
        %9628 = vmatpush1.msra.mxu0 0.0
        %9629 = vmatprep.subr.mxu0 0.0
        %9630 = vmatpush1.msra.mxu0 0.0
        %9631 = vmatprep.subr.mxu0 0.0
        %9632 = vmatpush1.msra.mxu0 0.0
        %9633 = vmatprep.subr.mxu0 0.0
        %9634 = vmatpush1.msra.mxu0 0.0
        %9635 = vmatprep.subr.mxu0 0.0
        %9636 = vmatpush1.msra.mxu0 0.0
        %9637 = vmatprep.subr.mxu0 0.0
        %9638 = vmatpush1.msra.mxu0 0.0
        %9639 = vmatprep.subr.mxu0 0.0
        %9640 = vmatpush1.msra.mxu0 0.0
        %9641 = vmatprep.subr.mxu0 0.0
        %9642 = vmatpush1.msra.mxu0 0.0
        %9643 = vmatprep.subr.mxu0 0.0
        %9644 = vmatpush1.msra.mxu0 0.0
        %9645 = vmatprep.subr.mxu0 0.0
        %9646 = vmatpush1.msra.mxu0 0.0
        %9647 = vmatprep.subr.mxu0 0.0
        %9648 = vmatpush1.msra.mxu0 0.0
        %9649 = vmatprep.subr.mxu0 0.0
        %9650 = vmatpush1.msra.mxu0 0.0
        %9651 = vmatprep.subr.mxu0 0.0
        %9652 = vmatpush1.msra.mxu0 0.0
        %9653 = vmatprep.subr.mxu0 0.0
        %9654 = vmatpush1.msra.mxu0 0.0
        %9655 = vmatprep.subr.mxu0 0.0
        %9656 = vmatpush1.msra.mxu0 0.0
        %9657 = vmatprep.subr.mxu0 0.0
        %9658 = vmatpush1.msra.mxu0 0.0
        %9659 = vmatprep.subr.mxu0 0.0
        %9660 = vmatpush1.msra.mxu0 0.0
        %9661 = vmatprep.subr.mxu0 0.0
        %9662 = vmatpush1.msra.mxu0 0.0
        %9663 = vmatprep.subr.mxu0 0.0
        %9664 = vmatpush1.msra.mxu0 0.0
        %9665 = vmatprep.mubr.f32.mxu0 0.0
        %9666 = vmatmul.mubr.f32.gmra.mrb[0].mxu0 %v9286
        %v9667 = vpop.f32.mrb[0].mxu0
        %v9668 = vadd.f32 %v9423, %v9667
        %v9669 = vpop.f32.mrb[0].mxu0
        %9670 = vmatprep.mubr.f32.mxu0 0.0
        %9671 = vmatmul.mubr.f32.gmra.mrb[0].mxu0 %v9288
        %v9672 = vpop.f32.mrb[0].mxu0
        %v9673 = vadd.f32 %v9428, %v9672
        %v9674 = vpop.f32.mrb[0].mxu0
        %9675 = vmatprep.mubr.f32.mxu0 0.0
        %9676 = vmatmul.mubr.f32.gmra.mrb[0].mxu0 %v9290
        %v9677 = vpop.f32.mrb[0].mxu0
        %v9678 = vadd.f32 %v9433, %v9677
        %v9679 = vpop.f32.mrb[0].mxu0
        %9680 = vmatprep.mubr.f32.mxu0 0.0
        %9681 = vmatmul.mubr.f32.gmra.mrb[0].mxu0 %v9292
        %v9682 = vpop.f32.mrb[0].mxu0
        %v9683 = vadd.f32 %v9438, %v9682
        %v9684 = vpop.f32.mrb[0].mxu0
        %9685 = vmatprep.mubr.f32.mxu0 0.0
        %9686 = vmatmul.mubr.f32.gmra.mrb[0].mxu0 %v9294
        %v9687 = vpop.f32.mrb[0].mxu0
        %v9688 = vadd.f32 %v9443, %v9687
        %v9689 = vpop.f32.mrb[0].mxu0
        %9690 = vmatprep.mubr.f32.mxu0 0.0
        %9691 = vmatmul.mubr.f32.gmra.mrb[0].mxu0 %v9296
        %v9692 = vpop.f32.mrb[0].mxu0
        %v9693 = vadd.f32 %v9448, %v9692
        %v9694 = vpop.f32.mrb[0].mxu0
        %9695 = vmatprep.mubr.f32.mxu0 0.0
        %9696 = vmatmul.mubr.f32.gmra.mrb[0].mxu0 %v9298
        %v9697 = vpop.f32.mrb[0].mxu0
        %v9698 = vadd.f32 %v9453, %v9697
        %v9699 = vpop.f32.mrb[0].mxu0
        %9700 = vmatprep.mubr.f32.mxu0 0.0
        %9701 = vmatmul.mubr.f32.gmra.mrb[0].mxu0 %v9300
        %v9702 = vpop.f32.mrb[0].mxu0
        %v9703 = vadd.f32 %v9458, %v9702
        %v9704 = vpop.f32.mrb[0].mxu0
        %9705 = vmatprep.mubr.f32.mxu0 0.0
        %9706 = vmatmul.mubr.f32.gmra.mrb[0].mxu0 %v9302
        %v9707 = vpop.f32.mrb[0].mxu0
        %v9708 = vadd.f32 %v9463, %v9707
        %v9709 = vpop.f32.mrb[0].mxu0
        %9710 = vmatprep.mubr.f32.mxu0 0.0
        %9711 = vmatmul.mubr.f32.gmra.mrb[0].mxu0 %v9304
        %v9712 = vpop.f32.mrb[0].mxu0
        %v9713 = vadd.f32 %v9468, %v9712
        %v9714 = vpop.f32.mrb[0].mxu0
        %9715 = vmatprep.mubr.f32.mxu0 0.0
        %9716 = vmatmul.mubr.f32.gmra.mrb[0].mxu0 %v9306
        %v9717 = vpop.f32.mrb[0].mxu0
        %v9718 = vadd.f32 %v9473, %v9717
        %v9719 = vpop.f32.mrb[0].mxu0
        %9720 = vmatprep.mubr.f32.mxu0 0.0
        %9721 = vmatmul.mubr.f32.gmra.mrb[0].mxu0 %v9308
        %v9722 = vpop.f32.mrb[0].mxu0
        %v9723 = vadd.f32 %v9478, %v9722
        %v9724 = vpop.f32.mrb[0].mxu0
        %9725 = vmatprep.mubr.f32.mxu0 0.0
        %9726 = vmatmul.mubr.f32.gmra.mrb[0].mxu0 %v9310
        %v9727 = vpop.f32.mrb[0].mxu0
        %v9728 = vadd.f32 %v9483, %v9727
        %v9729 = vpop.f32.mrb[0].mxu0
        %9730 = vmatprep.mubr.f32.mxu0 0.0
        %9731 = vmatmul.mubr.f32.gmra.mrb[0].mxu0 %v9312
        %v9732 = vpop.f32.mrb[0].mxu0
        %v9733 = vadd.f32 %v9488, %v9732
        %v9734 = vpop.f32.mrb[0].mxu0
        %9735 = vmatprep.mubr.f32.mxu0 0.0
        %9736 = vmatmul.mubr.f32.gmra.mrb[0].mxu0 %v9314
        %v9737 = vpop.f32.mrb[0].mxu0
        %v9738 = vadd.f32 %v9493, %v9737
        %v9739 = vpop.f32.mrb[0].mxu0
        %9740 = vmatprep.mubr.f32.mxu0 0.0
        %9741 = vmatmul.mubr.f32.gmra.mrb[0].mxu0 %v9316
        %v9742 = vpop.f32.mrb[0].mxu0
        %v9743 = vadd.f32 %v9498, %v9742
        %v9744 = vpop.f32.mrb[0].mxu0
        %9745 = vmatprep.mubr.f32.mxu0 0.0
        %9746 = vmatmul.mubr.f32.gmra.mrb[0].mxu0 %v9318
        %v9747 = vpop.f32.mrb[0].mxu0
        %v9748 = vadd.f32 %v9503, %v9747
        %v9749 = vpop.f32.mrb[0].mxu0
        %9750 = vmatprep.mubr.f32.mxu0 0.0
        %9751 = vmatmul.mubr.f32.gmra.mrb[0].mxu0 %v9320
        %v9752 = vpop.f32.mrb[0].mxu0
        %v9753 = vadd.f32 %v9508, %v9752
        %v9754 = vpop.f32.mrb[0].mxu0
        %9755 = vmatprep.mubr.f32.mxu0 0.0
        %9756 = vmatmul.mubr.f32.gmra.mrb[0].mxu0 %v9322
        %v9757 = vpop.f32.mrb[0].mxu0
        %v9758 = vadd.f32 %v9513, %v9757
        %v9759 = vpop.f32.mrb[0].mxu0
        %9760 = vmatprep.mubr.f32.mxu0 0.0
        %9761 = vmatmul.mubr.f32.gmra.mrb[0].mxu0 %v9324
        %v9762 = vpop.f32.mrb[0].mxu0
        %v9763 = vadd.f32 %v9518, %v9762
        %v9764 = vpop.f32.mrb[0].mxu0
        %9765 = vmatprep.mubr.f32.mxu0 0.0
        %9766 = vmatmul.mubr.f32.gmra.mrb[0].mxu0 %v9326
        %v9767 = vpop.f32.mrb[0].mxu0
        %v9768 = vadd.f32 %v9523, %v9767
        %v9769 = vpop.f32.mrb[0].mxu0
        %9770 = vmatprep.mubr.f32.mxu0 0.0
        %9771 = vmatmul.mubr.f32.gmra.mrb[0].mxu0 %v9328
        %v9772 = vpop.f32.mrb[0].mxu0
        %v9773 = vadd.f32 %v9528, %v9772
        %v9774 = vpop.f32.mrb[0].mxu0
        %9775 = vmatprep.mubr.f32.mxu0 0.0
        %9776 = vmatmul.mubr.f32.gmra.mrb[0].mxu0 %v9330
        %v9777 = vpop.f32.mrb[0].mxu0
        %v9778 = vadd.f32 %v9533, %v9777
        %v9779 = vpop.f32.mrb[0].mxu0
        %9780 = vmatprep.mubr.f32.mxu0 0.0
        %9781 = vmatmul.mubr.f32.gmra.mrb[0].mxu0 %v9332
        %v9782 = vpop.f32.mrb[0].mxu0
        %v9783 = vadd.f32 %v9538, %v9782
        %v9784 = vpop.f32.mrb[0].mxu0
        %9785 = vmatprep.mubr.f32.mxu0 0.0
        %9786 = vmatmul.mubr.f32.gmra.mrb[0].mxu0 %v9334
        %v9787 = vpop.f32.mrb[0].mxu0
        %v9788 = vadd.f32 %v9543, %v9787
        %v9789 = vpop.f32.mrb[0].mxu0
        %9790 = vmatprep.mubr.f32.mxu0 0.0
        %9791 = vmatmul.mubr.f32.gmra.mrb[0].mxu0 %v9336
        %v9792 = vpop.f32.mrb[0].mxu0
        %v9793 = vadd.f32 %v9548, %v9792
        %v9794 = vpop.f32.mrb[0].mxu0
        %9795 = vmatprep.mubr.f32.mxu0 0.0
        %9796 = vmatmul.mubr.f32.gmra.mrb[0].mxu0 %v9338
        %v9797 = vpop.f32.mrb[0].mxu0
        %v9798 = vadd.f32 %v9553, %v9797
        %v9799 = vpop.f32.mrb[0].mxu0
        %9800 = vmatprep.mubr.f32.mxu0 0.0
        %9801 = vmatmul.mubr.f32.gmra.mrb[0].mxu0 %v9340
        %v9802 = vpop.f32.mrb[0].mxu0
        %v9803 = vadd.f32 %v9558, %v9802
        %v9804 = vpop.f32.mrb[0].mxu0
        %9805 = vmatprep.mubr.f32.mxu0 0.0
        %9806 = vmatmul.mubr.f32.gmra.mrb[0].mxu0 %v9342
        %v9807 = vpop.f32.mrb[0].mxu0
        %v9808 = vadd.f32 %v9563, %v9807
        %v9809 = vpop.f32.mrb[0].mxu0
        %9810 = vmatprep.mubr.f32.mxu0 0.0
        %9811 = vmatmul.mubr.f32.gmra.mrb[0].mxu0 %v9344
        %v9812 = vpop.f32.mrb[0].mxu0
        %v9813 = vadd.f32 %v9568, %v9812
        %v9814 = vpop.f32.mrb[0].mxu0
        %9815 = vmatprep.mubr.f32.mxu0 0.0
        %9816 = vmatmul.mubr.f32.gmra.mrb[0].mxu0 %v9346
        %v9817 = vpop.f32.mrb[0].mxu0
        %v9818 = vadd.f32 %v9573, %v9817
        %v9819 = vpop.f32.mrb[0].mxu0
        %9820 = vmatprep.mubr.f32.mxu0 0.0
        %9821 = vmatmul.mubr.f32.gmra.mrb[0].mxu0 %v9348
        %v9822 = vpop.f32.mrb[0].mxu0
        %v9823 = vadd.f32 %v9578, %v9822
        %v9824 = vpop.f32.mrb[0].mxu0
        %9825 = vmatprep.mubr.f32.mxu0 0.0
        %9826 = vmatmul.mubr.f32.gmra.mrb[0].mxu0 %v9350
        %v9827 = vpop.f32.mrb[0].mxu0
        %v9828 = vadd.f32 %v9583, %v9827
        %v9829 = vpop.f32.mrb[0].mxu0
        %9830 = vmatprep.mubr.f32.mxu0 0.0
        %9831 = vmatmul.mubr.f32.gmra.mrb[0].mxu0 %v9352
        %v9832 = vpop.f32.mrb[0].mxu0
        %v9833 = vadd.f32 %v9588, %v9832
        %v9834 = vpop.f32.mrb[0].mxu0
        %9835 = vmatprep.mubr.f32.mxu0 0.0
        %9836 = vmatmul.mubr.f32.gmra.mrb[0].mxu0 %v9354
        %v9837 = vpop.f32.mrb[0].mxu0
        %v9838 = vadd.f32 %v9593, %v9837
        %v9839 = vpop.f32.mrb[0].mxu0
        %9840 = vmatprep.mubr.f32.mxu0 0.0
        %9841 = vmatmul.mubr.f32.gmra.mrb[0].mxu0 %v4589
        %v9842 = vpop.f32.mrb[0].mxu0
        %v9843 = vadd.f32 %v9598, %v9842
        %v9844 = vpop.f32.mrb[0].mxu0
        %9845 = vdwg.mxu0
        %v9846 = vadd.f32 %v344, %v9668
        %v9847 = vadd.f32 %v345, %v9673
        %v9848 = vadd.f32 %v346, %v9678
        %v9849 = vadd.f32 %v347, %v9683
        %v9850 = vadd.f32 %v348, %v9688
        %v9851 = vadd.f32 %v349, %v9693
        %v9852 = vadd.f32 %v350, %v9698
        %v9853 = vadd.f32 %v351, %v9703
        %v9854 = vadd.f32 %v352, %v9708
        %v9855 = vadd.f32 %v353, %v9713
        %v9856 = vadd.f32 %v354, %v9718
        %v9857 = vadd.f32 %v355, %v9723
        %v9858 = vadd.f32 %v356, %v9728
        %v9859 = vadd.f32 %v357, %v9733
        %v9860 = vadd.f32 %v358, %v9738
        %v9861 = vadd.f32 %v359, %v9743
        %v9862 = vadd.f32 %v360, %v9748
        %v9863 = vadd.f32 %v361, %v9753
        %v9864 = vadd.f32 %v362, %v9758
        %v9865 = vadd.f32 %v363, %v9763
        %v9866 = vadd.f32 %v364, %v9768
        %v9867 = vadd.f32 %v365, %v9773
        %v9868 = vadd.f32 %v366, %v9778
        %v9869 = vadd.f32 %v367, %v9783
        %v9870 = vadd.f32 %v368, %v9788
        %v9871 = vadd.f32 %v369, %v9793
        %v9872 = vadd.f32 %v370, %v9798
        %v9873 = vadd.f32 %v371, %v9803
        %v9874 = vadd.f32 %v372, %v9808
        %v9875 = vadd.f32 %v373, %v9813
        %v9876 = vadd.f32 %v374, %v9818
        %v9877 = vadd.f32 %v375, %v9823
        %v9878 = vadd.f32 %v376, %v9828
        %v9879 = vadd.f32 %v377, %v9833
        %v9880 = vadd.f32 %v378, %v9838
        %v9881 = vadd.f32 %v379, %v9843
        %vm9882 = vcmask 23552
        %9883 = vst.msk [vmem:[%s343] sm:$0xff] %vm9882, %v9846
        %9884 = vst.msk [vmem:[%s343 + $0x8] sm:$0xff] %vm9882, %v9847
        %9885 = vst.msk [vmem:[%s343 + $0x10] sm:$0xff] %vm9882, %v9848
        %9886 = vst.msk [vmem:[%s343 + $0x18] sm:$0xff] %vm9882, %v9849
        %9887 = vst.msk [vmem:[%s343 + $0x20] sm:$0xff] %vm9882, %v9850
        %9888 = vst.msk [vmem:[%s343 + $0x28] sm:$0xff] %vm9882, %v9851
        %9889 = vst.msk [vmem:[%s343 + $0x30] sm:$0xff] %vm9882, %v9852
        %9890 = vst.msk [vmem:[%s343 + $0x38] sm:$0xff] %vm9882, %v9853
        %9891 = vst.msk [vmem:[%s343 + $0x40] sm:$0xff] %vm9882, %v9854
        %9892 = vst.msk [vmem:[%s343 + $0x48] sm:$0xff] %vm9882, %v9855
        %9893 = vst.msk [vmem:[%s343 + $0x50] sm:$0xff] %vm9882, %v9856
        %9894 = vst.msk [vmem:[%s343 + $0x58] sm:$0xff] %vm9882, %v9857
        %9895 = vst.msk [vmem:[%s343 + $0x60] sm:$0xff] %vm9882, %v9858
        %9896 = vst.msk [vmem:[%s343 + $0x68] sm:$0xff] %vm9882, %v9859
        %9897 = vst.msk [vmem:[%s343 + $0x70] sm:$0xff] %vm9882, %v9860
        %9898 = vst.msk [vmem:[%s343 + $0x78] sm:$0xff] %vm9882, %v9861
        %9899 = vst.msk [vmem:[%s343 + $0x80] sm:$0xff] %vm9882, %v9862
        %9900 = vst.msk [vmem:[%s343 + $0x88] sm:$0xff] %vm9882, %v9863
        %9901 = vst.msk [vmem:[%s343 + $0x90] sm:$0xff] %vm9882, %v9864
        %9902 = vst.msk [vmem:[%s343 + $0x98] sm:$0xff] %vm9882, %v9865
        %9903 = vst.msk [vmem:[%s343 + $0xa0] sm:$0xff] %vm9882, %v9866
        %9904 = vst.msk [vmem:[%s343 + $0xa8] sm:$0xff] %vm9882, %v9867
        %9905 = vst.msk [vmem:[%s343 + $0xb0] sm:$0xff] %vm9882, %v9868
        %9906 = vst.msk [vmem:[%s343 + $0xb8] sm:$0xff] %vm9882, %v9869
        %9907 = vst.msk [vmem:[%s343 + $0xc0] sm:$0xff] %vm9882, %v9870
        %9908 = vst.msk [vmem:[%s343 + $0xc8] sm:$0xff] %vm9882, %v9871
        %9909 = vst.msk [vmem:[%s343 + $0xd0] sm:$0xff] %vm9882, %v9872
        %9910 = vst.msk [vmem:[%s343 + $0xd8] sm:$0xff] %vm9882, %v9873
        %9911 = vst.msk [vmem:[%s343 + $0xe0] sm:$0xff] %vm9882, %v9874
        %9912 = vst.msk [vmem:[%s343 + $0xe8] sm:$0xff] %vm9882, %v9875
        %9913 = vst.msk [vmem:[%s343 + $0xf0] sm:$0xff] %vm9882, %v9876
        %9914 = vst.msk [vmem:[%s343 + $0xf8] sm:$0xff] %vm9882, %v9877
        %9915 = vst.msk [vmem:[%s343 + $0x100] sm:$0xff] %vm9882, %v9878
        %9916 = vst.msk [vmem:[%s343 + $0x108] sm:$0xff] %vm9882, %v9879
        %9917 = vst.msk [vmem:[%s343 + $0x110] sm:$0xff] %vm9882, %v9880
        %9918 = vst.msk [vmem:[%s343 + $0x118] sm:$0xff] %vm9882, %v9881
        %s9919 = sand.u32 %s165, 1
        %s9920 = scalar_lea.sflag [#allocation4], %s9919
        %s9921 = sand.u32 %s165, 1
        %s9922 = smul.addr %s9921, 288
        %s9923 = scalar_lea.vmem [#allocation11], %s9922
        // Predicated region
        $region61: #{tpu_custom_call.1} parent=39 // pred_check
          %p9924 = pneg %p175
        $region62: #{tpu_custom_call.1} parent=39 // pred_check_branch
          %9926 = sbr.rel (%p9924) target = $region64
        $region63: #{tpu_custom_call.1} parent=39 // pred_region
          %s9928 = ssub.s32 4608, 4608
          %9929 = vsyncadd %s9920, %s9928
          %s9930 = smul.addr %s31, 36
          %s9931 = smul.addr %s30, 72
          %s9932 = sadd.s32 %s9930, %s9931
          %s9933 = smul.addr %s9932, 128
          %s9934 = scalar_lea.hbm %s5, %s9933
          %s9935 = sshll.u32 %s9923, 4
          %s9936 = int_to_ptr.vmem [resolvable:$true] %s9935
          %9941 = dma.vmem_to_hbm [thread:$0]  %s9936, 4608, %s9934, %s9920, 128, 128, 8
        $region64: #{tpu_custom_call.1} parent=39 // pred_fallthru
          _
      $region40: #{tpu_custom_call.1} parent=5 // pred_fallthru
        _
      %p9942 = scmp.le.s32.totalorder 2, %s21
      // Predicated region
      $region65: #{tpu_custom_call.1} parent=5 // pred_check
        %p9943 = pneg %p9942
      $region66: #{tpu_custom_call.1} parent=5 // pred_check_branch
        %9945 = sbr.rel (%p9943) target = $region68
      $region67: #{tpu_custom_call.1} parent=5 // pred_region
        %s9946 = ssub.s32 %s21, 2
        // Predicated region
        $region69: #{tpu_custom_call.1} parent=67 // pred_check
          %p9947 = pneg %p181
        $region70: #{tpu_custom_call.1} parent=67 // pred_check_branch
          %9949 = sbr.rel (%p9947) target = $region72
        $region71: #{tpu_custom_call.1} parent=67 // pred_region
          %s9950 = sand.u32 %s166, 1
          %s9951 = scalar_lea.sflag [#allocation4], %s9950
          %s9952 = sand.u32 %s166, 1
          %s9953 = smul.addr %s9952, 288
          %s9954 = scalar_lea.vmem [#allocation11], %s9953
          %9955 = dma.done %s9951, 4608
        $region72: #{tpu_custom_call.1} parent=67 // pred_fallthru
          _
      $region68: #{tpu_custom_call.1} parent=5 // pred_fallthru
        _
    $region6: #{tpu_custom_call.1} parent=1 // loop_footer
      %s25 = sadd.s32 1, %s21
    $region7: #{tpu_custom_call.1} parent=1 // loop_footer_branch
      %20 = sbr.rel target = $region3
    $region8: #{tpu_custom_call.1} parent=1 // loop_exit
      _
    %9956 = vsyncpa [#allocation3], 1
    %s9957 = scalar_lea.sflag [#allocation3], 1
    %9958 = vsyncpa %s9957, 1
    %9959 = vsyncpa [#allocation6], 1
    %s9960 = scalar_lea.sflag [#allocation6], 1
    %9961 = vsyncpa %s9960, 1
    %9962 = vsyncpa [#allocation9], 1
    %9963 = vsyncpa [#allocation4], 1
    %s9964 = scalar_lea.sflag [#allocation4], 1
    %9965 = vsyncpa %s9964, 1

</llo_original>
